<compile_context>
chip_gen: v6e
topology: v6e:2x2x1
jax: 0.10.0
libtpu: 0.0.40
codegen_flags: <defaults>
</compile_context>

<pallas_src>
import math
import functools

import jax
import jax.numpy as jnp
from jax.experimental import pallas as pl
from jax.experimental.pallas import tpu as pltpu

# ---------------- hyper-parameters (synthetic, small) ----------------
B = 2            # batch
T = 256          # audio length (lane-aligned)
C = 32           # residual_channels
E = 32           # pos_emb_dim
NCH = 32         # pos_emb_channels
HALF = NCH // 2
SCALE = 1000.0   # pos_emb_scale (original NuWave uses 50000; smaller here)
N_LAYERS = 4     # residual_layers
DIL_CYCLE = 2    # dilation_cycle_length

_INV_SQRT2 = 1.0 / math.sqrt(2.0)
_INV_SQRT_L = 1.0 / math.sqrt(N_LAYERS)


def _silu(v):
    return v * jax.nn.sigmoid(v)


# ---------------------------------------------------------------------------
# Fused forward kernel: ONE invocation == whole network, batch folded into
# lanes.  Activation shapes inside the kernel are (C, B*T).
# ---------------------------------------------------------------------------
def nuwave_kernel(a_ref, al_ref, nz_ref,
                  inw_ref, inb_ref, lpw_ref, lpb_ref,
                  cw_ref, cb_ref, ow_ref, ob_ref,
                  sw_ref, sb_ref, hw_ref, hb_ref,
                  o_ref, stk_ref, skip_ref, *, dilations, seg_len):
    Cn = inw_ref.shape[0]
    BT = a_ref.shape[1]

    # --- input 1x1 projections (1 -> C) + SiLU: pure VPU broadcast math ---
    x = _silu(inw_ref[...] * a_ref[...] + inb_ref[...])          # (C, BT) f32
    x_low = _silu(lpw_ref[...] * al_ref[...] + lpb_ref[...])     # (C, BT) f32

    # x_low's centre tap is constant across layers: keep exactly one bf16 copy
    # resident in the stacked-operand scratch; its shifted taps are recomputed
    # per layer from that copy (nothing shifted is hoisted across the loop).
    stk_ref[4 * Cn:5 * Cn, :] = x_low.astype(jnp.bfloat16)

    # lane position inside each batch segment + per-dilation edge masks.
    # (pos % seg_len also guarantees rolls never leak across batch boundaries)
    pos = jax.lax.broadcasted_iota(jnp.int32, (Cn, BT), 1) % seg_len
    masks = {d: (pos >= d, pos < seg_len - d) for d in sorted(set(dilations))}

    skip_ref[...] = jnp.zeros_like(skip_ref)

    for l, d in enumerate(dilations):                            # unrolled
        m_lo, m_hi = masks[d]
        y = x + nz_ref[l]                                        # (C,BT)+(C,BT)
        y_bf = y.astype(jnp.bfloat16)

        # assemble the (6C, BT) bf16 stacked operand directly in VMEM scratch:
        # rows = [y(t-d); y(t); y(t+d); xl(t-d); xl(t); xl(t+d)]
        stk_ref[Cn:2 * Cn, :] = y_bf
        stk_ref[0:Cn, :] = jnp.where(m_lo, jnp.roll(y_bf, d, axis=1), 0.0)
        stk_ref[2 * Cn:3 * Cn, :] = jnp.where(m_hi, jnp.roll(y_bf, -d, axis=1), 0.0)
        xl_bf = stk_ref[4 * Cn:5 * Cn, :]
        stk_ref[3 * Cn:4 * Cn, :] = jnp.where(m_lo, jnp.roll(xl_bf, d, axis=1), 0.0)
        stk_ref[5 * Cn:6 * Cn, :] = jnp.where(m_hi, jnp.roll(xl_bf, -d, axis=1), 0.0)

        # fused dilated_conv + low_projection: (2C, 6C) @ (6C, BT) on the MXU
        ysum = jnp.dot(cw_ref[l], stk_ref[...],
                       preferred_element_type=jnp.float32) + cb_ref[l]
        g = jax.nn.sigmoid(ysum[:Cn, :]) * jnp.tanh(ysum[Cn:, :])   # (C,BT) f32
        o = jnp.dot(ow_ref[l], g.astype(jnp.bfloat16),
                    preferred_element_type=jnp.float32) + ob_ref[l]  # (2C, BT)
        x = (x + o[:Cn, :]) * _INV_SQRT2
        skip_ref[...] = skip_ref[...] + o[Cn:, :]

    # --- output head ---------------------------------------------------------
    # 1/sqrt(N_LAYERS) is folded into sw in the wrapper; the final (1, C)
    # projection is a VPU multiply + sublane reduce (no M=1 MXU matmul).
    h = _silu(jnp.dot(sw_ref[...], skip_ref[...].astype(jnp.bfloat16),
                      preferred_element_type=jnp.float32) + sb_ref[...])
    o_ref[...] = jnp.sum(hw_ref[...] * h, axis=0, keepdims=True) + hb_ref[...]


# ---------------------------------------------------------------------------
# Wrapper: tiny embedding math + weight stacking in XLA, one pallas_call.
# ---------------------------------------------------------------------------
def nuwave_forward(params, audio, audio_low, noise_level):
    Bn, Tn = audio.shape
    Cn = C
    BT = Bn * Tn

    # ---- diffusion embedding + per-layer noise projections (plain XLA) ----
    nl = noise_level.reshape(Bn, 1).astype(jnp.float32)
    e = SCALE * nl * params["exponents"][None, :]
    e = jnp.concatenate([jnp.sin(e), jnp.cos(e)], axis=-1)
    e = _silu(e @ params["p1_w"].T + params["p1_b"])
    e = _silu(e @ params["p2_w"].T + params["p2_b"])              # (B, E)

    dp_w = jnp.stack([lp["dp_w"] for lp in params["layers"]])     # (L, C, E)
    dp_b = jnp.stack([lp["dp_b"] for lp in params["layers"]])     # (L, C)
    noise = jnp.einsum("lce,be->lcb", dp_w, e) + dp_b[:, :, None]  # (L, C, B)
    # broadcast along T and fold batch into the lane axis -> (L, C, B*T)
    noise = jnp.broadcast_to(noise[:, :, :, None], (N_LAYERS, Cn, Bn, Tn))
    noise = noise.reshape(N_LAYERS, Cn, BT).astype(jnp.float32)

    # ---- stacked / fused conv weights (3 taps x {dil,low} laid out on K) ----
    def taps(w):   # (2C, C, 3) -> (2C, 3C): [w(t-d) | w(t) | w(t+d)]
        return jnp.concatenate([w[:, :, 0], w[:, :, 1], w[:, :, 2]], axis=1)

    cw = jnp.stack(
        [jnp.concatenate([taps(lp["dil_w"]), taps(lp["low_w"])], axis=1)
         for lp in params["layers"]]).astype(jnp.bfloat16)        # (L, 2C, 6C)
    cb = jnp.stack([lp["dil_b"] + lp["low_b"]
                    for lp in params["layers"]]).reshape(N_LAYERS, 2 * Cn, 1)
    ow = jnp.stack([lp["out_w"].reshape(2 * Cn, Cn)
                    for lp in params["layers"]]).astype(jnp.bfloat16)
    ob = jnp.stack([lp["out_b"]
                    for lp in params["layers"]]).reshape(N_LAYERS, 2 * Cn, 1)

    inw = params["in_w"].reshape(Cn, 1)
    inb = params["in_b"].reshape(Cn, 1)
    lpw = params["low_w"].reshape(Cn, 1)
    lpb = params["low_b"].reshape(Cn, 1)
    # fold the 1/sqrt(N_LAYERS) skip normalisation into the skip-proj weight
    sw = (params["skip_w"].reshape(Cn, Cn) * _INV_SQRT_L).astype(jnp.bfloat16)
    sb = params["skip_b"].reshape(Cn, 1)
    hw = params["outp_w"].reshape(Cn, 1)          # head as VPU mul + reduce
    hb = params["outp_b"].reshape(1, 1)

    # fold batch into lanes: activations presented to the kernel as (1, B*T)
    a2 = audio.reshape(1, BT).astype(jnp.float32)
    al2 = audio_low.reshape(1, BT).astype(jnp.float32)

    dilations = tuple(2 ** (i % DIL_CYCLE) for i in range(N_LAYERS))
    kern = functools.partial(nuwave_kernel, dilations=dilations, seg_len=Tn)

    operands = (a2, al2, noise, inw, inb, lpw, lpb, cw, cb, ow, ob, sw, sb, hw, hb)
    flops = (2 * BT * (N_LAYERS * (2 * Cn * 6 * Cn + 2 * Cn * Cn) + Cn * Cn + Cn)
             + 16 * N_LAYERS * Cn * BT)
    transcendentals = BT * Cn * (2 * N_LAYERS + 3) + BT
    bytes_accessed = int(sum(int(op.size) * op.dtype.itemsize for op in operands)
                         + BT * 4)

    out = pl.pallas_call(
        kern,
        out_shape=jax.ShapeDtypeStruct((1, BT), jnp.float32),
        scratch_shapes=[
            pltpu.VMEM((6 * Cn, BT), jnp.bfloat16),   # stacked matmul operand
            pltpu.VMEM((Cn, BT), jnp.float32),        # skip accumulator
        ],
        cost_estimate=pl.CostEstimate(
            flops=flops, transcendentals=transcendentals,
            bytes_accessed=bytes_accessed),
    )(*operands)
    return out.reshape(Bn, Tn)


# ---------------------------------------------------------------------------
# Deterministic parameter init (shapes match the PyTorch module __init__)
# ---------------------------------------------------------------------------
def init_params(key):
    keys = jax.random.split(key, 64)
    it = iter(keys)

    def kaiming_conv(shape):  # (out, in, k)
        fan_in = shape[1] * shape[2]
        return jax.random.normal(next(it), shape, jnp.float32) * math.sqrt(2.0 / fan_in)

    def linear_w(shape):      # (out, in)
        return jax.random.normal(next(it), shape, jnp.float32) * (1.0 / math.sqrt(shape[1]))

    def bias(shape):
        return jax.random.normal(next(it), shape, jnp.float32) * 0.05

    params = {
        "in_w": kaiming_conv((C, 1, 1)), "in_b": bias((C,)),
        "low_w": kaiming_conv((C, 1, 1)), "low_b": bias((C,)),
        "exponents": (0.0001 ** (jnp.arange(HALF, dtype=jnp.float32) / float(HALF))),
        "p1_w": linear_w((E, NCH)), "p1_b": bias((E,)),
        "p2_w": linear_w((E, E)), "p2_b": bias((E,)),
        "skip_w": kaiming_conv((C, C, 1)), "skip_b": bias((C,)),
        "outp_w": kaiming_conv((1, C, 1)), "outp_b": bias((1,)),
        "layers": [],
    }
    for _ in range(N_LAYERS):
        params["layers"].append({
            "dil_w": kaiming_conv((2 * C, C, 3)), "dil_b": bias((2 * C,)),
            "low_w": kaiming_conv((2 * C, C, 3)), "low_b": bias((2 * C,)),
            "out_w": kaiming_conv((2 * C, C, 1)), "out_b": bias((2 * C,)),
            "dp_w": linear_w((C, E)), "dp_b": bias((C,)),
        })
    return params


# ---------------------------------------------------------------------------
# Pure-JAX reference (f32, for correctness check)
# ---------------------------------------------------------------------------
def ref_forward(params, audio, audio_low, noise_level):
    def conv1d(x, w, b, dilation=1, padding=0):
        y = jax.lax.conv_general_dilated(
            x, w, window_strides=(1,), padding=[(padding, padding)],
            rhs_dilation=(dilation,), dimension_numbers=("NCH", "OIH", "NCH"))
        return y + b[None, :, None]

    x = _silu(conv1d(audio[:, None, :], params["in_w"], params["in_b"]))
    x_low = _silu(conv1d(audio_low[:, None, :], params["low_w"], params["low_b"]))

    nl = noise_level.reshape(-1, 1)
    e = SCALE * nl * params["exponents"][None, :]
    e = jnp.concatenate([jnp.sin(e), jnp.cos(e)], axis=-1)
    e = _silu(e @ params["p1_w"].T + params["p1_b"])
    e = _silu(e @ params["p2_w"].T + params["p2_b"])

    skip = 0.0
    for i in range(N_LAYERS):
        d = 2 ** (i % DIL_CYCLE)
        lp = params["layers"][i]
        noise = (e @ lp["dp_w"].T + lp["dp_b"])[:, :, None]
        y = x + noise
        y = conv1d(y, lp["dil_w"], lp["dil_b"], dilation=d, padding=d)
        y = y + conv1d(x_low, lp["low_w"], lp["low_b"], dilation=d, padding=d)
        gate, filt = jnp.split(y, 2, axis=1)
        y = jax.nn.sigmoid(gate) * jnp.tanh(filt)
        y = conv1d(y, lp["out_w"], lp["out_b"])
        residual, s = jnp.split(y, 2, axis=1)
        x = (x + residual) / math.sqrt(2.0)
        skip = skip + s

    xs = skip / math.sqrt(N_LAYERS)
    xs = _silu(conv1d(xs, params["skip_w"], params["skip_b"]))
    out = conv1d(xs, params["outp_w"], params["outp_b"])[:, 0, :]
    return out


# ---------------------------------------------------------------------------
if __name__ == "__main__":
    key = jax.random.PRNGKey(0)
    kp, ka, kl, kn = jax.random.split(key, 4)
    params = init_params(kp)

    audio = jax.random.normal(ka, (B, T), jnp.float32)
    audio_low = jax.random.normal(kl, (B, T), jnp.float32)
    noise_level = jax.random.uniform(kn, (B, 1), jnp.float32)

    fwd = jax.jit(nuwave_forward)
    out = jax.block_until_ready(fwd(params, audio, audio_low, noise_level))
    assert out.shape == (B, T)

    ref = jax.block_until_ready(ref_forward(params, audio, audio_low, noise_level))
    max_err = float(jnp.max(jnp.abs(out - ref)))
    scale = float(jnp.max(jnp.abs(ref)))
    # bf16 MXU matmuls with f32 accumulation: allow ~3% of the output scale.
    if max_err > 3e-2 * max(1.0, scale):
        raise AssertionError(
            f"Pallas output mismatch vs reference: max abs err {max_err}, "
            f"output scale {scale}")

    print("KERNEL_OK")
</pallas_src>

<mosaic_0001>
module attributes {stable_mosaic.version = 11 : i64} {
  func.func @nuwave_kernel(%arg0: memref<1x512xf32, #tpu.memory_space<vmem>>, %arg1: memref<1x512xf32, #tpu.memory_space<vmem>>, %arg2: memref<4x32x512xf32, #tpu.memory_space<vmem>>, %arg3: memref<32x1xf32, #tpu.memory_space<vmem>>, %arg4: memref<32x1xf32, #tpu.memory_space<vmem>>, %arg5: memref<32x1xf32, #tpu.memory_space<vmem>>, %arg6: memref<32x1xf32, #tpu.memory_space<vmem>>, %arg7: memref<4x64x192xbf16, #tpu.memory_space<vmem>>, %arg8: memref<4x64x1xf32, #tpu.memory_space<vmem>>, %arg9: memref<4x64x32xbf16, #tpu.memory_space<vmem>>, %arg10: memref<4x64x1xf32, #tpu.memory_space<vmem>>, %arg11: memref<32x32xbf16, #tpu.memory_space<vmem>>, %arg12: memref<32x1xf32, #tpu.memory_space<vmem>>, %arg13: memref<32x1xf32, #tpu.memory_space<vmem>>, %arg14: memref<1x1xf32, #tpu.memory_space<vmem>>, %arg15: memref<1x512xf32, #tpu.memory_space<vmem>>, %arg16: memref<192x512xbf16, #tpu.memory_space<vmem>>, %arg17: memref<32x512xf32, #tpu.memory_space<vmem>>) attributes {dimension_semantics = [], scalar_prefetch = 0 : i64, scratch_operands = 2 : i64, tpu.core_type = #tpu.core_type<tc>} {
    %c0 = arith.constant 0 : index
    %c0_0 = arith.constant 0 : index
    %0 = vector.load %arg3[%c0, %c0_0] : memref<32x1xf32, #tpu.memory_space<vmem>>, vector<32x1xf32>
    %c0_1 = arith.constant 0 : index
    %c0_2 = arith.constant 0 : index
    %1 = vector.load %arg0[%c0_1, %c0_2] : memref<1x512xf32, #tpu.memory_space<vmem>>, vector<1x512xf32>
    %2 = vector.broadcast %0 : vector<32x1xf32> to vector<32x512xf32>
    %3 = vector.broadcast %1 : vector<1x512xf32> to vector<32x512xf32>
    %4 = arith.mulf %2, %3 : vector<32x512xf32>
    %c0_3 = arith.constant 0 : index
    %c0_4 = arith.constant 0 : index
    %5 = vector.load %arg4[%c0_3, %c0_4] : memref<32x1xf32, #tpu.memory_space<vmem>>, vector<32x1xf32>
    %6 = vector.broadcast %5 : vector<32x1xf32> to vector<32x512xf32>
    %7 = arith.addf %4, %6 : vector<32x512xf32>
    %8 = arith.negf %7 : vector<32x512xf32>
    %9 = math.exp %8 : vector<32x512xf32>
    %cst = arith.constant 1.000000e+00 : f32
    %10 = vector.broadcast %cst : f32 to vector<32x512xf32>
    %11 = arith.addf %10, %9 : vector<32x512xf32>
    %12 = arith.divf %10, %11 : vector<32x512xf32>
    %13 = arith.mulf %7, %12 : vector<32x512xf32>
    %c0_5 = arith.constant 0 : index
    %c0_6 = arith.constant 0 : index
    %14 = vector.load %arg5[%c0_5, %c0_6] : memref<32x1xf32, #tpu.memory_space<vmem>>, vector<32x1xf32>
    %c0_7 = arith.constant 0 : index
    %c0_8 = arith.constant 0 : index
    %15 = vector.load %arg1[%c0_7, %c0_8] : memref<1x512xf32, #tpu.memory_space<vmem>>, vector<1x512xf32>
    %16 = vector.broadcast %14 : vector<32x1xf32> to vector<32x512xf32>
    %17 = vector.broadcast %15 : vector<1x512xf32> to vector<32x512xf32>
    %18 = arith.mulf %16, %17 : vector<32x512xf32>
    %c0_9 = arith.constant 0 : index
    %c0_10 = arith.constant 0 : index
    %19 = vector.load %arg6[%c0_9, %c0_10] : memref<32x1xf32, #tpu.memory_space<vmem>>, vector<32x1xf32>
    %20 = vector.broadcast %19 : vector<32x1xf32> to vector<32x512xf32>
    %21 = arith.addf %18, %20 : vector<32x512xf32>
    %22 = arith.negf %21 : vector<32x512xf32>
    %23 = math.exp %22 : vector<32x512xf32>
    %cst_11 = arith.constant 1.000000e+00 : f32
    %24 = vector.broadcast %cst_11 : f32 to vector<32x512xf32>
    %25 = arith.addf %24, %23 : vector<32x512xf32>
    %26 = arith.divf %24, %25 : vector<32x512xf32>
    %27 = arith.mulf %21, %26 : vector<32x512xf32>
    %28 = arith.truncf %27 : vector<32x512xf32> to vector<32x512xbf16>
    %c128 = arith.constant 128 : index
    %c0_12 = arith.constant 0 : index
    %29 = vector.load %arg16[%c128, %c0_12] : memref<192x512xbf16, #tpu.memory_space<vmem>>, vector<32x512xbf16>
    tpu.vector_store %arg16[%c128, %c0_12], %28 {strides = array<i32>} : memref<192x512xbf16, #tpu.memory_space<vmem>>, vector<32x512xbf16>,
    %30 = tpu.iota {dimensions = array<i32: 1>} : vector<32x512xi32>
    %c256_i32 = arith.constant 256 : i32
    %c0_i32 = arith.constant 0 : i32
    %31 = arith.cmpi eq, %c256_i32, %c0_i32 : i32
    %c1_i32 = arith.constant 1 : i32
    %32 = arith.select %31, %c1_i32, %c256_i32 : i32
    %33 = vector.broadcast %32 : i32 to vector<32x512xi32>
    %34 = arith.remsi %30, %33 : vector<32x512xi32>
    %c0_i32_13 = arith.constant 0 : i32
    %35 = vector.broadcast %c0_i32_13 : i32 to vector<32x512xi32>
    %36 = arith.cmpi ne, %34, %35 : vector<32x512xi32>
    %c0_i32_14 = arith.constant 0 : i32
    %37 = vector.broadcast %c0_i32_14 : i32 to vector<32x512xi32>
    %38 = arith.cmpi slt, %34, %37 : vector<32x512xi32>
    %c0_i32_15 = arith.constant 0 : i32
    %39 = arith.cmpi slt, %32, %c0_i32_15 : i32
    %40 = vector.broadcast %39 : i1 to vector<32x512xi1>
    %41 = vector.broadcast %40 : vector<32x512xi1> to vector<32x512xi1>
    %42 = arith.xori %38, %41 : vector<32x512xi1>
    %43 = arith.andi %42, %36 : vector<32x512xi1>
    %44 = vector.broadcast %32 : i32 to vector<32x512xi32>
    %45 = arith.addi %34, %44 : vector<32x512xi32>
    %46 = arith.select %43, %45, %34 : vector<32x512xi1>, vector<32x512xi32>
    %c1_i32_16 = arith.constant 1 : i32
    %47 = vector.broadcast %c1_i32_16 : i32 to vector<32x512xi32>
    %48 = arith.cmpi sge, %46, %47 : vector<32x512xi32>
    %c255_i32 = arith.constant 255 : i32
    %49 = vector.broadcast %c255_i32 : i32 to vector<32x512xi32>
    %50 = arith.cmpi slt, %46, %49 : vector<32x512xi32>
    %c2_i32 = arith.constant 2 : i32
    %51 = vector.broadcast %c2_i32 : i32 to vector<32x512xi32>
    %52 = arith.cmpi sge, %46, %51 : vector<32x512xi32>
    %c254_i32 = arith.constant 254 : i32
    %53 = vector.broadcast %c254_i32 : i32 to vector<32x512xi32>
    %54 = arith.cmpi slt, %46, %53 : vector<32x512xi32>
    %cst_17 = arith.constant 0.000000e+00 : f32
    %55 = vector.broadcast %cst_17 : f32 to vector<32x512xf32>
    %c0_18 = arith.constant 0 : index
    %c0_19 = arith.constant 0 : index
    %56 = vector.load %arg17[%c0_18, %c0_19] : memref<32x512xf32, #tpu.memory_space<vmem>>, vector<32x512xf32>
    tpu.vector_store %arg17[%c0_18, %c0_19], %55 {strides = array<i32>} : memref<32x512xf32, #tpu.memory_space<vmem>>, vector<32x512xf32>,
    %c0_20 = arith.constant 0 : index
    %c0_21 = arith.constant 0 : index
    %c0_22 = arith.constant 0 : index
    %57 = vector.load %arg2[%c0_20, %c0_21, %c0_22] : memref<4x32x512xf32, #tpu.memory_space<vmem>>, vector<1x32x512xf32>
    %58 = vector.shape_cast %57 : vector<1x32x512xf32> to vector<32x512xf32>
    %59 = arith.addf %13, %58 : vector<32x512xf32>
    %60 = arith.truncf %59 : vector<32x512xf32> to vector<32x512xbf16>
    %c32 = arith.constant 32 : index
    %c0_23 = arith.constant 0 : index
    %61 = vector.load %arg16[%c32, %c0_23] : memref<192x512xbf16, #tpu.memory_space<vmem>>, vector<32x512xbf16>
    tpu.vector_store %arg16[%c32, %c0_23], %60 {strides = array<i32>} : memref<192x512xbf16, #tpu.memory_space<vmem>>, vector<32x512xbf16>,
    %62 = vector.extract_strided_slice %60 {offsets = [0, 511], sizes = [32, 1], strides = [1, 1]} : vector<32x512xbf16> to vector<32x1xbf16>
    %63 = vector.extract_strided_slice %60 {offsets = [0, 0], sizes = [32, 511], strides = [1, 1]} : vector<32x512xbf16> to vector<32x511xbf16>
    %64 = tpu.concatenate %62, %63 in 1 : vector<32x1xbf16>, vector<32x511xbf16> -> vector<32x512xbf16>
    %cst_24 = arith.constant 0.000000e+00 : f32
    %65 = arith.truncf %cst_24 : f32 to bf16
    %66 = vector.broadcast %65 : bf16 to vector<32x512xbf16>
    %67 = arith.select %48, %64, %66 : vector<32x512xi1>, vector<32x512xbf16>
    %c0_25 = arith.constant 0 : index
    %c0_26 = arith.constant 0 : index
    %68 = vector.load %arg16[%c0_25, %c0_26] : memref<192x512xbf16, #tpu.memory_space<vmem>>, vector<32x512xbf16>
    tpu.vector_store %arg16[%c0_25, %c0_26], %67 {strides = array<i32>} : memref<192x512xbf16, #tpu.memory_space<vmem>>, vector<32x512xbf16>,
    %69 = vector.extract_strided_slice %60 {offsets = [0, 1], sizes = [32, 511], strides = [1, 1]} : vector<32x512xbf16> to vector<32x511xbf16>
    %70 = vector.extract_strided_slice %60 {offsets = [0, 0], sizes = [32, 1], strides = [1, 1]} : vector<32x512xbf16> to vector<32x1xbf16>
    %71 = tpu.concatenate %69, %70 in 1 : vector<32x511xbf16>, vector<32x1xbf16> -> vector<32x512xbf16>
    %cst_27 = arith.constant 0.000000e+00 : f32
    %72 = arith.truncf %cst_27 : f32 to bf16
    %73 = vector.broadcast %72 : bf16 to vector<32x512xbf16>
    %74 = arith.select %50, %71, %73 : vector<32x512xi1>, vector<32x512xbf16>
    %c64 = arith.constant 64 : index
    %c0_28 = arith.constant 0 : index
    %75 = vector.load %arg16[%c64, %c0_28] : memref<192x512xbf16, #tpu.memory_space<vmem>>, vector<32x512xbf16>
    tpu.vector_store %arg16[%c64, %c0_28], %74 {strides = array<i32>} : memref<192x512xbf16, #tpu.memory_space<vmem>>, vector<32x512xbf16>,
    %c128_29 = arith.constant 128 : index
    %c0_30 = arith.constant 0 : index
    %76 = vector.load %arg16[%c128_29, %c0_30] : memref<192x512xbf16, #tpu.memory_space<vmem>>, vector<32x512xbf16>
    %77 = vector.extract_strided_slice %76 {offsets = [0, 511], sizes = [32, 1], strides = [1, 1]} : vector<32x512xbf16> to vector<32x1xbf16>
    %78 = vector.extract_strided_slice %76 {offsets = [0, 0], sizes = [32, 511], strides = [1, 1]} : vector<32x512xbf16> to vector<32x511xbf16>
    %79 = tpu.concatenate %77, %78 in 1 : vector<32x1xbf16>, vector<32x511xbf16> -> vector<32x512xbf16>
    %cst_31 = arith.constant 0.000000e+00 : f32
    %80 = arith.truncf %cst_31 : f32 to bf16
    %81 = vector.broadcast %80 : bf16 to vector<32x512xbf16>
    %82 = arith.select %48, %79, %81 : vector<32x512xi1>, vector<32x512xbf16>
    %c96 = arith.constant 96 : index
    %c0_32 = arith.constant 0 : index
    %83 = vector.load %arg16[%c96, %c0_32] : memref<192x512xbf16, #tpu.memory_space<vmem>>, vector<32x512xbf16>
    tpu.vector_store %arg16[%c96, %c0_32], %82 {strides = array<i32>} : memref<192x512xbf16, #tpu.memory_space<vmem>>, vector<32x512xbf16>,
    %84 = vector.extract_strided_slice %76 {offsets = [0, 1], sizes = [32, 511], strides = [1, 1]} : vector<32x512xbf16> to vector<32x511xbf16>
    %85 = vector.extract_strided_slice %76 {offsets = [0, 0], sizes = [32, 1], strides = [1, 1]} : vector<32x512xbf16> to vector<32x1xbf16>
    %86 = tpu.concatenate %84, %85 in 1 : vector<32x511xbf16>, vector<32x1xbf16> -> vector<32x512xbf16>
    %cst_33 = arith.constant 0.000000e+00 : f32
    %87 = arith.truncf %cst_33 : f32 to bf16
    %88 = vector.broadcast %87 : bf16 to vector<32x512xbf16>
    %89 = arith.select %50, %86, %88 : vector<32x512xi1>, vector<32x512xbf16>
    %c160 = arith.constant 160 : index
    %c0_34 = arith.constant 0 : index
    %90 = vector.load %arg16[%c160, %c0_34] : memref<192x512xbf16, #tpu.memory_space<vmem>>, vector<32x512xbf16>
    tpu.vector_store %arg16[%c160, %c0_34], %89 {strides = array<i32>} : memref<192x512xbf16, #tpu.memory_space<vmem>>, vector<32x512xbf16>,
    %c0_35 = arith.constant 0 : index
    %c0_36 = arith.constant 0 : index
    %c0_37 = arith.constant 0 : index
    %91 = vector.load %arg7[%c0_35, %c0_36, %c0_37] : memref<4x64x192xbf16, #tpu.memory_space<vmem>>, vector<1x64x192xbf16>
    %92 = vector.shape_cast %91 : vector<1x64x192xbf16> to vector<64x192xbf16>
    %c0_38 = arith.constant 0 : index
    %c0_39 = arith.constant 0 : index
    %93 = vector.load %arg16[%c0_38, %c0_39] : memref<192x512xbf16, #tpu.memory_space<vmem>>, vector<192x512xbf16>
    %cst_40 = arith.constant dense<0.000000e+00> : vector<64x512xf32>
    %94 = tpu.matmul %92, %93, %cst_40 {dimension_numbers = #tpu.dot_dimension_numbers<[1], [0], [0], [1], [0, 0, 1, 1], [], []>} : vector<64x192xbf16>, vector<192x512xbf16>, vector<64x512xf32> -> vector<64x512xf32>
    %c0_41 = arith.constant 0 : index
    %c0_42 = arith.constant 0 : index
    %c0_43 = arith.constant 0 : index
    %95 = vector.load %arg8[%c0_41, %c0_42, %c0_43] : memref<4x64x1xf32, #tpu.memory_space<vmem>>, vector<1x64x1xf32>
    %96 = vector.shape_cast %95 : vector<1x64x1xf32> to vector<64x1xf32>
    %97 = vector.broadcast %96 : vector<64x1xf32> to vector<64x512xf32>
    %98 = arith.addf %94, %97 : vector<64x512xf32>
    %99 = vector.extract_strided_slice %98 {offsets = [0, 0], sizes = [32, 512], strides = [1, 1]} : vector<64x512xf32> to vector<32x512xf32>
    %100 = arith.negf %99 : vector<32x512xf32>
    %101 = math.exp %100 : vector<32x512xf32>
    %cst_44 = arith.constant 1.000000e+00 : f32
    %102 = vector.broadcast %cst_44 : f32 to vector<32x512xf32>
    %103 = arith.addf %102, %101 : vector<32x512xf32>
    %104 = arith.divf %102, %103 : vector<32x512xf32>
    %105 = vector.extract_strided_slice %98 {offsets = [32, 0], sizes = [32, 512], strides = [1, 1]} : vector<64x512xf32> to vector<32x512xf32>
    %106 = math.tanh %105 : vector<32x512xf32>
    %107 = arith.mulf %104, %106 : vector<32x512xf32>
    %c0_45 = arith.constant 0 : index
    %c0_46 = arith.constant 0 : index
    %c0_47 = arith.constant 0 : index
    %108 = vector.load %arg9[%c0_45, %c0_46, %c0_47] : memref<4x64x32xbf16, #tpu.memory_space<vmem>>, vector<1x64x32xbf16>
    %109 = vector.shape_cast %108 : vector<1x64x32xbf16> to vector<64x32xbf16>
    %110 = arith.truncf %107 : vector<32x512xf32> to vector<32x512xbf16>
    %cst_48 = arith.constant dense<0.000000e+00> : vector<64x512xf32>
    %111 = tpu.matmul %109, %110, %cst_48 {dimension_numbers = #tpu.dot_dimension_numbers<[1], [0], [0], [1], [0, 0, 1, 1], [], []>} : vector<64x32xbf16>, vector<32x512xbf16>, vector<64x512xf32> -> vector<64x512xf32>
    %c0_49 = arith.constant 0 : index
    %c0_50 = arith.constant 0 : index
    %c0_51 = arith.constant 0 : index
    %112 = vector.load %arg10[%c0_49, %c0_50, %c0_51] : memref<4x64x1xf32, #tpu.memory_space<vmem>>, vector<1x64x1xf32>
    %113 = vector.shape_cast %112 : vector<1x64x1xf32> to vector<64x1xf32>
    %114 = vector.broadcast %113 : vector<64x1xf32> to vector<64x512xf32>
    %115 = arith.addf %111, %114 : vector<64x512xf32>
    %116 = vector.extract_strided_slice %115 {offsets = [0, 0], sizes = [32, 512], strides = [1, 1]} : vector<64x512xf32> to vector<32x512xf32>
    %117 = arith.addf %13, %116 : vector<32x512xf32>
    %cst_52 = arith.constant 0.707106769 : f32
    %118 = vector.broadcast %cst_52 : f32 to vector<32x512xf32>
    %119 = arith.mulf %117, %118 : vector<32x512xf32>
    %c0_53 = arith.constant 0 : index
    %c0_54 = arith.constant 0 : index
    %120 = vector.load %arg17[%c0_53, %c0_54] : memref<32x512xf32, #tpu.memory_space<vmem>>, vector<32x512xf32>
    %121 = vector.extract_strided_slice %115 {offsets = [32, 0], sizes = [32, 512], strides = [1, 1]} : vector<64x512xf32> to vector<32x512xf32>
    %122 = arith.addf %120, %121 : vector<32x512xf32>
    %c0_55 = arith.constant 0 : index
    %c0_56 = arith.constant 0 : index
    %123 = vector.load %arg17[%c0_55, %c0_56] : memref<32x512xf32, #tpu.memory_space<vmem>>, vector<32x512xf32>
    tpu.vector_store %arg17[%c0_55, %c0_56], %122 {strides = array<i32>} : memref<32x512xf32, #tpu.memory_space<vmem>>, vector<32x512xf32>,
    %c1 = arith.constant 1 : index
    %c0_57 = arith.constant 0 : index
    %c0_58 = arith.constant 0 : index
    %124 = vector.load %arg2[%c1, %c0_57, %c0_58] : memref<4x32x512xf32, #tpu.memory_space<vmem>>, vector<1x32x512xf32>
    %125 = vector.shape_cast %124 : vector<1x32x512xf32> to vector<32x512xf32>
    %126 = arith.addf %119, %125 : vector<32x512xf32>
    %127 = arith.truncf %126 : vector<32x512xf32> to vector<32x512xbf16>
    %c32_59 = arith.constant 32 : index
    %c0_60 = arith.constant 0 : index
    %128 = vector.load %arg16[%c32_59, %c0_60] : memref<192x512xbf16, #tpu.memory_space<vmem>>, vector<32x512xbf16>
    tpu.vector_store %arg16[%c32_59, %c0_60], %127 {strides = array<i32>} : memref<192x512xbf16, #tpu.memory_space<vmem>>, vector<32x512xbf16>,
    %129 = vector.extract_strided_slice %127 {offsets = [0, 510], sizes = [32, 2], strides = [1, 1]} : vector<32x512xbf16> to vector<32x2xbf16>
    %130 = vector.extract_strided_slice %127 {offsets = [0, 0], sizes = [32, 510], strides = [1, 1]} : vector<32x512xbf16> to vector<32x510xbf16>
    %131 = tpu.concatenate %129, %130 in 1 : vector<32x2xbf16>, vector<32x510xbf16> -> vector<32x512xbf16>
    %cst_61 = arith.constant 0.000000e+00 : f32
    %132 = arith.truncf %cst_61 : f32 to bf16
    %133 = vector.broadcast %132 : bf16 to vector<32x512xbf16>
    %134 = arith.select %52, %131, %133 : vector<32x512xi1>, vector<32x512xbf16>
    %c0_62 = arith.constant 0 : index
    %c0_63 = arith.constant 0 : index
    %135 = vector.load %arg16[%c0_62, %c0_63] : memref<192x512xbf16, #tpu.memory_space<vmem>>, vector<32x512xbf16>
    tpu.vector_store %arg16[%c0_62, %c0_63], %134 {strides = array<i32>} : memref<192x512xbf16, #tpu.memory_space<vmem>>, vector<32x512xbf16>,
    %136 = vector.extract_strided_slice %127 {offsets = [0, 2], sizes = [32, 510], strides = [1, 1]} : vector<32x512xbf16> to vector<32x510xbf16>
    %137 = vector.extract_strided_slice %127 {offsets = [0, 0], sizes = [32, 2], strides = [1, 1]} : vector<32x512xbf16> to vector<32x2xbf16>
    %138 = tpu.concatenate %136, %137 in 1 : vector<32x510xbf16>, vector<32x2xbf16> -> vector<32x512xbf16>
    %cst_64 = arith.constant 0.000000e+00 : f32
    %139 = arith.truncf %cst_64 : f32 to bf16
    %140 = vector.broadcast %139 : bf16 to vector<32x512xbf16>
    %141 = arith.select %54, %138, %140 : vector<32x512xi1>, vector<32x512xbf16>
    %c64_65 = arith.constant 64 : index
    %c0_66 = arith.constant 0 : index
    %142 = vector.load %arg16[%c64_65, %c0_66] : memref<192x512xbf16, #tpu.memory_space<vmem>>, vector<32x512xbf16>
    tpu.vector_store %arg16[%c64_65, %c0_66], %141 {strides = array<i32>} : memref<192x512xbf16, #tpu.memory_space<vmem>>, vector<32x512xbf16>,
    %c128_67 = arith.constant 128 : index
    %c0_68 = arith.constant 0 : index
    %143 = vector.load %arg16[%c128_67, %c0_68] : memref<192x512xbf16, #tpu.memory_space<vmem>>, vector<32x512xbf16>
    %144 = vector.extract_strided_slice %143 {offsets = [0, 510], sizes = [32, 2], strides = [1, 1]} : vector<32x512xbf16> to vector<32x2xbf16>
    %145 = vector.extract_strided_slice %143 {offsets = [0, 0], sizes = [32, 510], strides = [1, 1]} : vector<32x512xbf16> to vector<32x510xbf16>
    %146 = tpu.concatenate %144, %145 in 1 : vector<32x2xbf16>, vector<32x510xbf16> -> vector<32x512xbf16>
    %cst_69 = arith.constant 0.000000e+00 : f32
    %147 = arith.truncf %cst_69 : f32 to bf16
    %148 = vector.broadcast %147 : bf16 to vector<32x512xbf16>
    %149 = arith.select %52, %146, %148 : vector<32x512xi1>, vector<32x512xbf16>
    %c96_70 = arith.constant 96 : index
    %c0_71 = arith.constant 0 : index
    %150 = vector.load %arg16[%c96_70, %c0_71] : memref<192x512xbf16, #tpu.memory_space<vmem>>, vector<32x512xbf16>
    tpu.vector_store %arg16[%c96_70, %c0_71], %149 {strides = array<i32>} : memref<192x512xbf16, #tpu.memory_space<vmem>>, vector<32x512xbf16>,
    %151 = vector.extract_strided_slice %143 {offsets = [0, 2], sizes = [32, 510], strides = [1, 1]} : vector<32x512xbf16> to vector<32x510xbf16>
    %152 = vector.extract_strided_slice %143 {offsets = [0, 0], sizes = [32, 2], strides = [1, 1]} : vector<32x512xbf16> to vector<32x2xbf16>
    %153 = tpu.concatenate %151, %152 in 1 : vector<32x510xbf16>, vector<32x2xbf16> -> vector<32x512xbf16>
    %cst_72 = arith.constant 0.000000e+00 : f32
    %154 = arith.truncf %cst_72 : f32 to bf16
    %155 = vector.broadcast %154 : bf16 to vector<32x512xbf16>
    %156 = arith.select %54, %153, %155 : vector<32x512xi1>, vector<32x512xbf16>
    %c160_73 = arith.constant 160 : index
    %c0_74 = arith.constant 0 : index
    %157 = vector.load %arg16[%c160_73, %c0_74] : memref<192x512xbf16, #tpu.memory_space<vmem>>, vector<32x512xbf16>
    tpu.vector_store %arg16[%c160_73, %c0_74], %156 {strides = array<i32>} : memref<192x512xbf16, #tpu.memory_space<vmem>>, vector<32x512xbf16>,
    %c1_75 = arith.constant 1 : index
    %c0_76 = arith.constant 0 : index
    %c0_77 = arith.constant 0 : index
    %158 = vector.load %arg7[%c1_75, %c0_76, %c0_77] : memref<4x64x192xbf16, #tpu.memory_space<vmem>>, vector<1x64x192xbf16>
    %159 = vector.shape_cast %158 : vector<1x64x192xbf16> to vector<64x192xbf16>
    %c0_78 = arith.constant 0 : index
    %c0_79 = arith.constant 0 : index
    %160 = vector.load %arg16[%c0_78, %c0_79] : memref<192x512xbf16, #tpu.memory_space<vmem>>, vector<192x512xbf16>
    %cst_80 = arith.constant dense<0.000000e+00> : vector<64x512xf32>
    %161 = tpu.matmul %159, %160, %cst_80 {dimension_numbers = #tpu.dot_dimension_numbers<[1], [0], [0], [1], [0, 0, 1, 1], [], []>} : vector<64x192xbf16>, vector<192x512xbf16>, vector<64x512xf32> -> vector<64x512xf32>
    %c1_81 = arith.constant 1 : index
    %c0_82 = arith.constant 0 : index
    %c0_83 = arith.constant 0 : index
    %162 = vector.load %arg8[%c1_81, %c0_82, %c0_83] : memref<4x64x1xf32, #tpu.memory_space<vmem>>, vector<1x64x1xf32>
    %163 = vector.shape_cast %162 : vector<1x64x1xf32> to vector<64x1xf32>
    %164 = vector.broadcast %163 : vector<64x1xf32> to vector<64x512xf32>
    %165 = arith.addf %161, %164 : vector<64x512xf32>
    %166 = vector.extract_strided_slice %165 {offsets = [0, 0], sizes = [32, 512], strides = [1, 1]} : vector<64x512xf32> to vector<32x512xf32>
    %167 = arith.negf %166 : vector<32x512xf32>
    %168 = math.exp %167 : vector<32x512xf32>
    %cst_84 = arith.constant 1.000000e+00 : f32
    %169 = vector.broadcast %cst_84 : f32 to vector<32x512xf32>
    %170 = arith.addf %169, %168 : vector<32x512xf32>
    %171 = arith.divf %169, %170 : vector<32x512xf32>
    %172 = vector.extract_strided_slice %165 {offsets = [32, 0], sizes = [32, 512], strides = [1, 1]} : vector<64x512xf32> to vector<32x512xf32>
    %173 = math.tanh %172 : vector<32x512xf32>
    %174 = arith.mulf %171, %173 : vector<32x512xf32>
    %c1_85 = arith.constant 1 : index
    %c0_86 = arith.constant 0 : index
    %c0_87 = arith.constant 0 : index
    %175 = vector.load %arg9[%c1_85, %c0_86, %c0_87] : memref<4x64x32xbf16, #tpu.memory_space<vmem>>, vector<1x64x32xbf16>
    %176 = vector.shape_cast %175 : vector<1x64x32xbf16> to vector<64x32xbf16>
    %177 = arith.truncf %174 : vector<32x512xf32> to vector<32x512xbf16>
    %cst_88 = arith.constant dense<0.000000e+00> : vector<64x512xf32>
    %178 = tpu.matmul %176, %177, %cst_88 {dimension_numbers = #tpu.dot_dimension_numbers<[1], [0], [0], [1], [0, 0, 1, 1], [], []>} : vector<64x32xbf16>, vector<32x512xbf16>, vector<64x512xf32> -> vector<64x512xf32>
    %c1_89 = arith.constant 1 : index
    %c0_90 = arith.constant 0 : index
    %c0_91 = arith.constant 0 : index
    %179 = vector.load %arg10[%c1_89, %c0_90, %c0_91] : memref<4x64x1xf32, #tpu.memory_space<vmem>>, vector<1x64x1xf32>
    %180 = vector.shape_cast %179 : vector<1x64x1xf32> to vector<64x1xf32>
    %181 = vector.broadcast %180 : vector<64x1xf32> to vector<64x512xf32>
    %182 = arith.addf %178, %181 : vector<64x512xf32>
    %183 = vector.extract_strided_slice %182 {offsets = [0, 0], sizes = [32, 512], strides = [1, 1]} : vector<64x512xf32> to vector<32x512xf32>
    %184 = arith.addf %119, %183 : vector<32x512xf32>
    %cst_92 = arith.constant 0.707106769 : f32
    %185 = vector.broadcast %cst_92 : f32 to vector<32x512xf32>
    %186 = arith.mulf %184, %185 : vector<32x512xf32>
    %c0_93 = arith.constant 0 : index
    %c0_94 = arith.constant 0 : index
    %187 = vector.load %arg17[%c0_93, %c0_94] : memref<32x512xf32, #tpu.memory_space<vmem>>, vector<32x512xf32>
    %188 = vector.extract_strided_slice %182 {offsets = [32, 0], sizes = [32, 512], strides = [1, 1]} : vector<64x512xf32> to vector<32x512xf32>
    %189 = arith.addf %187, %188 : vector<32x512xf32>
    %c0_95 = arith.constant 0 : index
    %c0_96 = arith.constant 0 : index
    %190 = vector.load %arg17[%c0_95, %c0_96] : memref<32x512xf32, #tpu.memory_space<vmem>>, vector<32x512xf32>
    tpu.vector_store %arg17[%c0_95, %c0_96], %189 {strides = array<i32>} : memref<32x512xf32, #tpu.memory_space<vmem>>, vector<32x512xf32>,
    %c2 = arith.constant 2 : index
    %c0_97 = arith.constant 0 : index
    %c0_98 = arith.constant 0 : index
    %191 = vector.load %arg2[%c2, %c0_97, %c0_98] : memref<4x32x512xf32, #tpu.memory_space<vmem>>, vector<1x32x512xf32>
    %192 = vector.shape_cast %191 : vector<1x32x512xf32> to vector<32x512xf32>
    %193 = arith.addf %186, %192 : vector<32x512xf32>
    %194 = arith.truncf %193 : vector<32x512xf32> to vector<32x512xbf16>
    %c32_99 = arith.constant 32 : index
    %c0_100 = arith.constant 0 : index
    %195 = vector.load %arg16[%c32_99, %c0_100] : memref<192x512xbf16, #tpu.memory_space<vmem>>, vector<32x512xbf16>
    tpu.vector_store %arg16[%c32_99, %c0_100], %194 {strides = array<i32>} : memref<192x512xbf16, #tpu.memory_space<vmem>>, vector<32x512xbf16>,
    %196 = vector.extract_strided_slice %194 {offsets = [0, 511], sizes = [32, 1], strides = [1, 1]} : vector<32x512xbf16> to vector<32x1xbf16>
    %197 = vector.extract_strided_slice %194 {offsets = [0, 0], sizes = [32, 511], strides = [1, 1]} : vector<32x512xbf16> to vector<32x511xbf16>
    %198 = tpu.concatenate %196, %197 in 1 : vector<32x1xbf16>, vector<32x511xbf16> -> vector<32x512xbf16>
    %cst_101 = arith.constant 0.000000e+00 : f32
    %199 = arith.truncf %cst_101 : f32 to bf16
    %200 = vector.broadcast %199 : bf16 to vector<32x512xbf16>
    %201 = arith.select %48, %198, %200 : vector<32x512xi1>, vector<32x512xbf16>
    %c0_102 = arith.constant 0 : index
    %c0_103 = arith.constant 0 : index
    %202 = vector.load %arg16[%c0_102, %c0_103] : memref<192x512xbf16, #tpu.memory_space<vmem>>, vector<32x512xbf16>
    tpu.vector_store %arg16[%c0_102, %c0_103], %201 {strides = array<i32>} : memref<192x512xbf16, #tpu.memory_space<vmem>>, vector<32x512xbf16>,
    %203 = vector.extract_strided_slice %194 {offsets = [0, 1], sizes = [32, 511], strides = [1, 1]} : vector<32x512xbf16> to vector<32x511xbf16>
    %204 = vector.extract_strided_slice %194 {offsets = [0, 0], sizes = [32, 1], strides = [1, 1]} : vector<32x512xbf16> to vector<32x1xbf16>
    %205 = tpu.concatenate %203, %204 in 1 : vector<32x511xbf16>, vector<32x1xbf16> -> vector<32x512xbf16>
    %cst_104 = arith.constant 0.000000e+00 : f32
    %206 = arith.truncf %cst_104 : f32 to bf16
    %207 = vector.broadcast %206 : bf16 to vector<32x512xbf16>
    %208 = arith.select %50, %205, %207 : vector<32x512xi1>, vector<32x512xbf16>
    %c64_105 = arith.constant 64 : index
    %c0_106 = arith.constant 0 : index
    %209 = vector.load %arg16[%c64_105, %c0_106] : memref<192x512xbf16, #tpu.memory_space<vmem>>, vector<32x512xbf16>
    tpu.vector_store %arg16[%c64_105, %c0_106], %208 {strides = array<i32>} : memref<192x512xbf16, #tpu.memory_space<vmem>>, vector<32x512xbf16>,
    %c128_107 = arith.constant 128 : index
    %c0_108 = arith.constant 0 : index
    %210 = vector.load %arg16[%c128_107, %c0_108] : memref<192x512xbf16, #tpu.memory_space<vmem>>, vector<32x512xbf16>
    %211 = vector.extract_strided_slice %210 {offsets = [0, 511], sizes = [32, 1], strides = [1, 1]} : vector<32x512xbf16> to vector<32x1xbf16>
    %212 = vector.extract_strided_slice %210 {offsets = [0, 0], sizes = [32, 511], strides = [1, 1]} : vector<32x512xbf16> to vector<32x511xbf16>
    %213 = tpu.concatenate %211, %212 in 1 : vector<32x1xbf16>, vector<32x511xbf16> -> vector<32x512xbf16>
    %cst_109 = arith.constant 0.000000e+00 : f32
    %214 = arith.truncf %cst_109 : f32 to bf16
    %215 = vector.broadcast %214 : bf16 to vector<32x512xbf16>
    %216 = arith.select %48, %213, %215 : vector<32x512xi1>, vector<32x512xbf16>
    %c96_110 = arith.constant 96 : index
    %c0_111 = arith.constant 0 : index
    %217 = vector.load %arg16[%c96_110, %c0_111] : memref<192x512xbf16, #tpu.memory_space<vmem>>, vector<32x512xbf16>
    tpu.vector_store %arg16[%c96_110, %c0_111], %216 {strides = array<i32>} : memref<192x512xbf16, #tpu.memory_space<vmem>>, vector<32x512xbf16>,
    %218 = vector.extract_strided_slice %210 {offsets = [0, 1], sizes = [32, 511], strides = [1, 1]} : vector<32x512xbf16> to vector<32x511xbf16>
    %219 = vector.extract_strided_slice %210 {offsets = [0, 0], sizes = [32, 1], strides = [1, 1]} : vector<32x512xbf16> to vector<32x1xbf16>
    %220 = tpu.concatenate %218, %219 in 1 : vector<32x511xbf16>, vector<32x1xbf16> -> vector<32x512xbf16>
    %cst_112 = arith.constant 0.000000e+00 : f32
    %221 = arith.truncf %cst_112 : f32 to bf16
    %222 = vector.broadcast %221 : bf16 to vector<32x512xbf16>
    %223 = arith.select %50, %220, %222 : vector<32x512xi1>, vector<32x512xbf16>
    %c160_113 = arith.constant 160 : index
    %c0_114 = arith.constant 0 : index
    %224 = vector.load %arg16[%c160_113, %c0_114] : memref<192x512xbf16, #tpu.memory_space<vmem>>, vector<32x512xbf16>
    tpu.vector_store %arg16[%c160_113, %c0_114], %223 {strides = array<i32>} : memref<192x512xbf16, #tpu.memory_space<vmem>>, vector<32x512xbf16>,
    %c2_115 = arith.constant 2 : index
    %c0_116 = arith.constant 0 : index
    %c0_117 = arith.constant 0 : index
    %225 = vector.load %arg7[%c2_115, %c0_116, %c0_117] : memref<4x64x192xbf16, #tpu.memory_space<vmem>>, vector<1x64x192xbf16>
    %226 = vector.shape_cast %225 : vector<1x64x192xbf16> to vector<64x192xbf16>
    %c0_118 = arith.constant 0 : index
    %c0_119 = arith.constant 0 : index
    %227 = vector.load %arg16[%c0_118, %c0_119] : memref<192x512xbf16, #tpu.memory_space<vmem>>, vector<192x512xbf16>
    %cst_120 = arith.constant dense<0.000000e+00> : vector<64x512xf32>
    %228 = tpu.matmul %226, %227, %cst_120 {dimension_numbers = #tpu.dot_dimension_numbers<[1], [0], [0], [1], [0, 0, 1, 1], [], []>} : vector<64x192xbf16>, vector<192x512xbf16>, vector<64x512xf32> -> vector<64x512xf32>
    %c2_121 = arith.constant 2 : index
    %c0_122 = arith.constant 0 : index
    %c0_123 = arith.constant 0 : index
    %229 = vector.load %arg8[%c2_121, %c0_122, %c0_123] : memref<4x64x1xf32, #tpu.memory_space<vmem>>, vector<1x64x1xf32>
    %230 = vector.shape_cast %229 : vector<1x64x1xf32> to vector<64x1xf32>
    %231 = vector.broadcast %230 : vector<64x1xf32> to vector<64x512xf32>
    %232 = arith.addf %228, %231 : vector<64x512xf32>
    %233 = vector.extract_strided_slice %232 {offsets = [0, 0], sizes = [32, 512], strides = [1, 1]} : vector<64x512xf32> to vector<32x512xf32>
    %234 = arith.negf %233 : vector<32x512xf32>
    %235 = math.exp %234 : vector<32x512xf32>
    %cst_124 = arith.constant 1.000000e+00 : f32
    %236 = vector.broadcast %cst_124 : f32 to vector<32x512xf32>
    %237 = arith.addf %236, %235 : vector<32x512xf32>
    %238 = arith.divf %236, %237 : vector<32x512xf32>
    %239 = vector.extract_strided_slice %232 {offsets = [32, 0], sizes = [32, 512], strides = [1, 1]} : vector<64x512xf32> to vector<32x512xf32>
    %240 = math.tanh %239 : vector<32x512xf32>
    %241 = arith.mulf %238, %240 : vector<32x512xf32>
    %c2_125 = arith.constant 2 : index
    %c0_126 = arith.constant 0 : index
    %c0_127 = arith.constant 0 : index
    %242 = vector.load %arg9[%c2_125, %c0_126, %c0_127] : memref<4x64x32xbf16, #tpu.memory_space<vmem>>, vector<1x64x32xbf16>
    %243 = vector.shape_cast %242 : vector<1x64x32xbf16> to vector<64x32xbf16>
    %244 = arith.truncf %241 : vector<32x512xf32> to vector<32x512xbf16>
    %cst_128 = arith.constant dense<0.000000e+00> : vector<64x512xf32>
    %245 = tpu.matmul %243, %244, %cst_128 {dimension_numbers = #tpu.dot_dimension_numbers<[1], [0], [0], [1], [0, 0, 1, 1], [], []>} : vector<64x32xbf16>, vector<32x512xbf16>, vector<64x512xf32> -> vector<64x512xf32>
    %c2_129 = arith.constant 2 : index
    %c0_130 = arith.constant 0 : index
    %c0_131 = arith.constant 0 : index
    %246 = vector.load %arg10[%c2_129, %c0_130, %c0_131] : memref<4x64x1xf32, #tpu.memory_space<vmem>>, vector<1x64x1xf32>
    %247 = vector.shape_cast %246 : vector<1x64x1xf32> to vector<64x1xf32>
    %248 = vector.broadcast %247 : vector<64x1xf32> to vector<64x512xf32>
    %249 = arith.addf %245, %248 : vector<64x512xf32>
    %250 = vector.extract_strided_slice %249 {offsets = [0, 0], sizes = [32, 512], strides = [1, 1]} : vector<64x512xf32> to vector<32x512xf32>
    %251 = arith.addf %186, %250 : vector<32x512xf32>
    %cst_132 = arith.constant 0.707106769 : f32
    %252 = vector.broadcast %cst_132 : f32 to vector<32x512xf32>
    %253 = arith.mulf %251, %252 : vector<32x512xf32>
    %c0_133 = arith.constant 0 : index
    %c0_134 = arith.constant 0 : index
    %254 = vector.load %arg17[%c0_133, %c0_134] : memref<32x512xf32, #tpu.memory_space<vmem>>, vector<32x512xf32>
    %255 = vector.extract_strided_slice %249 {offsets = [32, 0], sizes = [32, 512], strides = [1, 1]} : vector<64x512xf32> to vector<32x512xf32>
    %256 = arith.addf %254, %255 : vector<32x512xf32>
    %c0_135 = arith.constant 0 : index
    %c0_136 = arith.constant 0 : index
    %257 = vector.load %arg17[%c0_135, %c0_136] : memref<32x512xf32, #tpu.memory_space<vmem>>, vector<32x512xf32>
    tpu.vector_store %arg17[%c0_135, %c0_136], %256 {strides = array<i32>} : memref<32x512xf32, #tpu.memory_space<vmem>>, vector<32x512xf32>,
    %c3 = arith.constant 3 : index
    %c0_137 = arith.constant 0 : index
    %c0_138 = arith.constant 0 : index
    %258 = vector.load %arg2[%c3, %c0_137, %c0_138] : memref<4x32x512xf32, #tpu.memory_space<vmem>>, vector<1x32x512xf32>
    %259 = vector.shape_cast %258 : vector<1x32x512xf32> to vector<32x512xf32>
    %260 = arith.addf %253, %259 : vector<32x512xf32>
    %261 = arith.truncf %260 : vector<32x512xf32> to vector<32x512xbf16>
    %c32_139 = arith.constant 32 : index
    %c0_140 = arith.constant 0 : index
    %262 = vector.load %arg16[%c32_139, %c0_140] : memref<192x512xbf16, #tpu.memory_space<vmem>>, vector<32x512xbf16>
    tpu.vector_store %arg16[%c32_139, %c0_140], %261 {strides = array<i32>} : memref<192x512xbf16, #tpu.memory_space<vmem>>, vector<32x512xbf16>,
    %263 = vector.extract_strided_slice %261 {offsets = [0, 510], sizes = [32, 2], strides = [1, 1]} : vector<32x512xbf16> to vector<32x2xbf16>
    %264 = vector.extract_strided_slice %261 {offsets = [0, 0], sizes = [32, 510], strides = [1, 1]} : vector<32x512xbf16> to vector<32x510xbf16>
    %265 = tpu.concatenate %263, %264 in 1 : vector<32x2xbf16>, vector<32x510xbf16> -> vector<32x512xbf16>
    %cst_141 = arith.constant 0.000000e+00 : f32
    %266 = arith.truncf %cst_141 : f32 to bf16
    %267 = vector.broadcast %266 : bf16 to vector<32x512xbf16>
    %268 = arith.select %52, %265, %267 : vector<32x512xi1>, vector<32x512xbf16>
    %c0_142 = arith.constant 0 : index
    %c0_143 = arith.constant 0 : index
    %269 = vector.load %arg16[%c0_142, %c0_143] : memref<192x512xbf16, #tpu.memory_space<vmem>>, vector<32x512xbf16>
    tpu.vector_store %arg16[%c0_142, %c0_143], %268 {strides = array<i32>} : memref<192x512xbf16, #tpu.memory_space<vmem>>, vector<32x512xbf16>,
    %270 = vector.extract_strided_slice %261 {offsets = [0, 2], sizes = [32, 510], strides = [1, 1]} : vector<32x512xbf16> to vector<32x510xbf16>
    %271 = vector.extract_strided_slice %261 {offsets = [0, 0], sizes = [32, 2], strides = [1, 1]} : vector<32x512xbf16> to vector<32x2xbf16>
    %272 = tpu.concatenate %270, %271 in 1 : vector<32x510xbf16>, vector<32x2xbf16> -> vector<32x512xbf16>
    %cst_144 = arith.constant 0.000000e+00 : f32
    %273 = arith.truncf %cst_144 : f32 to bf16
    %274 = vector.broadcast %273 : bf16 to vector<32x512xbf16>
    %275 = arith.select %54, %272, %274 : vector<32x512xi1>, vector<32x512xbf16>
    %c64_145 = arith.constant 64 : index
    %c0_146 = arith.constant 0 : index
    %276 = vector.load %arg16[%c64_145, %c0_146] : memref<192x512xbf16, #tpu.memory_space<vmem>>, vector<32x512xbf16>
    tpu.vector_store %arg16[%c64_145, %c0_146], %275 {strides = array<i32>} : memref<192x512xbf16, #tpu.memory_space<vmem>>, vector<32x512xbf16>,
    %c128_147 = arith.constant 128 : index
    %c0_148 = arith.constant 0 : index
    %277 = vector.load %arg16[%c128_147, %c0_148] : memref<192x512xbf16, #tpu.memory_space<vmem>>, vector<32x512xbf16>
    %278 = vector.extract_strided_slice %277 {offsets = [0, 510], sizes = [32, 2], strides = [1, 1]} : vector<32x512xbf16> to vector<32x2xbf16>
    %279 = vector.extract_strided_slice %277 {offsets = [0, 0], sizes = [32, 510], strides = [1, 1]} : vector<32x512xbf16> to vector<32x510xbf16>
    %280 = tpu.concatenate %278, %279 in 1 : vector<32x2xbf16>, vector<32x510xbf16> -> vector<32x512xbf16>
    %cst_149 = arith.constant 0.000000e+00 : f32
    %281 = arith.truncf %cst_149 : f32 to bf16
    %282 = vector.broadcast %281 : bf16 to vector<32x512xbf16>
    %283 = arith.select %52, %280, %282 : vector<32x512xi1>, vector<32x512xbf16>
    %c96_150 = arith.constant 96 : index
    %c0_151 = arith.constant 0 : index
    %284 = vector.load %arg16[%c96_150, %c0_151] : memref<192x512xbf16, #tpu.memory_space<vmem>>, vector<32x512xbf16>
    tpu.vector_store %arg16[%c96_150, %c0_151], %283 {strides = array<i32>} : memref<192x512xbf16, #tpu.memory_space<vmem>>, vector<32x512xbf16>,
    %285 = vector.extract_strided_slice %277 {offsets = [0, 2], sizes = [32, 510], strides = [1, 1]} : vector<32x512xbf16> to vector<32x510xbf16>
    %286 = vector.extract_strided_slice %277 {offsets = [0, 0], sizes = [32, 2], strides = [1, 1]} : vector<32x512xbf16> to vector<32x2xbf16>
    %287 = tpu.concatenate %285, %286 in 1 : vector<32x510xbf16>, vector<32x2xbf16> -> vector<32x512xbf16>
    %cst_152 = arith.constant 0.000000e+00 : f32
    %288 = arith.truncf %cst_152 : f32 to bf16
    %289 = vector.broadcast %288 : bf16 to vector<32x512xbf16>
    %290 = arith.select %54, %287, %289 : vector<32x512xi1>, vector<32x512xbf16>
    %c160_153 = arith.constant 160 : index
    %c0_154 = arith.constant 0 : index
    %291 = vector.load %arg16[%c160_153, %c0_154] : memref<192x512xbf16, #tpu.memory_space<vmem>>, vector<32x512xbf16>
    tpu.vector_store %arg16[%c160_153, %c0_154], %290 {strides = array<i32>} : memref<192x512xbf16, #tpu.memory_space<vmem>>, vector<32x512xbf16>,
    %c3_155 = arith.constant 3 : index
    %c0_156 = arith.constant 0 : index
    %c0_157 = arith.constant 0 : index
    %292 = vector.load %arg7[%c3_155, %c0_156, %c0_157] : memref<4x64x192xbf16, #tpu.memory_space<vmem>>, vector<1x64x192xbf16>
    %293 = vector.shape_cast %292 : vector<1x64x192xbf16> to vector<64x192xbf16>
    %c0_158 = arith.constant 0 : index
    %c0_159 = arith.constant 0 : index
    %294 = vector.load %arg16[%c0_158, %c0_159] : memref<192x512xbf16, #tpu.memory_space<vmem>>, vector<192x512xbf16>
    %cst_160 = arith.constant dense<0.000000e+00> : vector<64x512xf32>
    %295 = tpu.matmul %293, %294, %cst_160 {dimension_numbers = #tpu.dot_dimension_numbers<[1], [0], [0], [1], [0, 0, 1, 1], [], []>} : vector<64x192xbf16>, vector<192x512xbf16>, vector<64x512xf32> -> vector<64x512xf32>
    %c3_161 = arith.constant 3 : index
    %c0_162 = arith.constant 0 : index
    %c0_163 = arith.constant 0 : index
    %296 = vector.load %arg8[%c3_161, %c0_162, %c0_163] : memref<4x64x1xf32, #tpu.memory_space<vmem>>, vector<1x64x1xf32>
    %297 = vector.shape_cast %296 : vector<1x64x1xf32> to vector<64x1xf32>
    %298 = vector.broadcast %297 : vector<64x1xf32> to vector<64x512xf32>
    %299 = arith.addf %295, %298 : vector<64x512xf32>
    %300 = vector.extract_strided_slice %299 {offsets = [0, 0], sizes = [32, 512], strides = [1, 1]} : vector<64x512xf32> to vector<32x512xf32>
    %301 = arith.negf %300 : vector<32x512xf32>
    %302 = math.exp %301 : vector<32x512xf32>
    %cst_164 = arith.constant 1.000000e+00 : f32
    %303 = vector.broadcast %cst_164 : f32 to vector<32x512xf32>
    %304 = arith.addf %303, %302 : vector<32x512xf32>
    %305 = arith.divf %303, %304 : vector<32x512xf32>
    %306 = vector.extract_strided_slice %299 {offsets = [32, 0], sizes = [32, 512], strides = [1, 1]} : vector<64x512xf32> to vector<32x512xf32>
    %307 = math.tanh %306 : vector<32x512xf32>
    %308 = arith.mulf %305, %307 : vector<32x512xf32>
    %c3_165 = arith.constant 3 : index
    %c0_166 = arith.constant 0 : index
    %c0_167 = arith.constant 0 : index
    %309 = vector.load %arg9[%c3_165, %c0_166, %c0_167] : memref<4x64x32xbf16, #tpu.memory_space<vmem>>, vector<1x64x32xbf16>
    %310 = vector.shape_cast %309 : vector<1x64x32xbf16> to vector<64x32xbf16>
    %311 = arith.truncf %308 : vector<32x512xf32> to vector<32x512xbf16>
    %cst_168 = arith.constant dense<0.000000e+00> : vector<64x512xf32>
    %312 = tpu.matmul %310, %311, %cst_168 {dimension_numbers = #tpu.dot_dimension_numbers<[1], [0], [0], [1], [0, 0, 1, 1], [], []>} : vector<64x32xbf16>, vector<32x512xbf16>, vector<64x512xf32> -> vector<64x512xf32>
    %c3_169 = arith.constant 3 : index
    %c0_170 = arith.constant 0 : index
    %c0_171 = arith.constant 0 : index
    %313 = vector.load %arg10[%c3_169, %c0_170, %c0_171] : memref<4x64x1xf32, #tpu.memory_space<vmem>>, vector<1x64x1xf32>
    %314 = vector.shape_cast %313 : vector<1x64x1xf32> to vector<64x1xf32>
    %315 = vector.broadcast %314 : vector<64x1xf32> to vector<64x512xf32>
    %316 = arith.addf %312, %315 : vector<64x512xf32>
    %c0_172 = arith.constant 0 : index
    %c0_173 = arith.constant 0 : index
    %317 = vector.load %arg17[%c0_172, %c0_173] : memref<32x512xf32, #tpu.memory_space<vmem>>, vector<32x512xf32>
    %318 = vector.extract_strided_slice %316 {offsets = [32, 0], sizes = [32, 512], strides = [1, 1]} : vector<64x512xf32> to vector<32x512xf32>
    %319 = arith.addf %317, %318 : vector<32x512xf32>
    %c0_174 = arith.constant 0 : index
    %c0_175 = arith.constant 0 : index
    %320 = vector.load %arg17[%c0_174, %c0_175] : memref<32x512xf32, #tpu.memory_space<vmem>>, vector<32x512xf32>
    tpu.vector_store %arg17[%c0_174, %c0_175], %319 {strides = array<i32>} : memref<32x512xf32, #tpu.memory_space<vmem>>, vector<32x512xf32>,
    %c0_176 = arith.constant 0 : index
    %c0_177 = arith.constant 0 : index
    %321 = vector.load %arg11[%c0_176, %c0_177] : memref<32x32xbf16, #tpu.memory_space<vmem>>, vector<32x32xbf16>
    %c0_178 = arith.constant 0 : index
    %c0_179 = arith.constant 0 : index
    %322 = vector.load %arg17[%c0_178, %c0_179] : memref<32x512xf32, #tpu.memory_space<vmem>>, vector<32x512xf32>
    %323 = arith.truncf %322 : vector<32x512xf32> to vector<32x512xbf16>
    %cst_180 = arith.constant dense<0.000000e+00> : vector<32x512xf32>
    %324 = tpu.matmul %321, %323, %cst_180 {dimension_numbers = #tpu.dot_dimension_numbers<[1], [0], [0], [1], [0, 0, 1, 1], [], []>} : vector<32x32xbf16>, vector<32x512xbf16>, vector<32x512xf32> -> vector<32x512xf32>
    %c0_181 = arith.constant 0 : index
    %c0_182 = arith.constant 0 : index
    %325 = vector.load %arg12[%c0_181, %c0_182] : memref<32x1xf32, #tpu.memory_space<vmem>>, vector<32x1xf32>
    %326 = vector.broadcast %325 : vector<32x1xf32> to vector<32x512xf32>
    %327 = arith.addf %324, %326 : vector<32x512xf32>
    %328 = arith.negf %327 : vector<32x512xf32>
    %329 = math.exp %328 : vector<32x512xf32>
    %cst_183 = arith.constant 1.000000e+00 : f32
    %330 = vector.broadcast %cst_183 : f32 to vector<32x512xf32>
    %331 = arith.addf %330, %329 : vector<32x512xf32>
    %332 = arith.divf %330, %331 : vector<32x512xf32>
    %333 = arith.mulf %327, %332 : vector<32x512xf32>
    %c0_184 = arith.constant 0 : index
    %c0_185 = arith.constant 0 : index
    %334 = vector.load %arg13[%c0_184, %c0_185] : memref<32x1xf32, #tpu.memory_space<vmem>>, vector<32x1xf32>
    %335 = vector.broadcast %334 : vector<32x1xf32> to vector<32x512xf32>
    %336 = arith.mulf %335, %333 : vector<32x512xf32>
    %cst_186 = arith.constant dense<0.000000e+00> : vector<512xf32>
    %337 = vector.multi_reduction <add>, %336, %cst_186 [0] : vector<32x512xf32> to vector<512xf32>
    %338 = vector.shape_cast %337 : vector<512xf32> to vector<1x512xf32>
    %c0_187 = arith.constant 0 : index
    %c0_188 = arith.constant 0 : index
    %339 = vector.load %arg14[%c0_187, %c0_188] : memref<1x1xf32, #tpu.memory_space<vmem>>, vector<1x1xf32>
    %340 = vector.broadcast %339 : vector<1x1xf32> to vector<1x512xf32>
    %341 = arith.addf %338, %340 : vector<1x512xf32>
    %c0_189 = arith.constant 0 : index
    %c0_190 = arith.constant 0 : index
    %342 = vector.load %arg15[%c0_189, %c0_190] : memref<1x512xf32, #tpu.memory_space<vmem>>, vector<1x512xf32>
    tpu.vector_store %arg15[%c0_189, %c0_190], %341 {strides = array<i32>} : memref<1x512xf32, #tpu.memory_space<vmem>>, vector<1x512xf32>,
    return
  }
}

</mosaic_0001>

<llo_original>
// kernel: nuwave_forward.1
$region0: #{nuwave_forward.1}
  #allocation0 [shape = 'u32[]', space=smem, size = 0x4, offset = 0x4, fixed_abs, tag = 'smem constant byte address 0x4 - core index']
  #allocation1 [shape = 'u32[144,128]{1,0:T(1,128)}', space=vmem, size = 0x12000, scoped, tag = 'internal scratch']
  #allocation2 [shape = 'bf16[192,512]{1,0:T(8,128)(2,1)}', space=vmem, size = 0x30000, scoped, tag = 'scratch operand']
  #allocation3 [shape = 'f32[32,512]{1,0:T(8,128)}', space=vmem, size = 0x10000, scoped, tag = 'scratch operand']
  #allocation4 [shape = 'f32[1,1]{1,0:T(1,128)S(1)}', space=vmem, size = 0x200, scoped, tag = 'scoped memory for nuwave_forward.1']
  %s0 = inlined_call_operand.vmem [shape: f32[1,512], index: 0, kind: input, shape index: {}]
  %s1 = inlined_call_operand.vmem [shape: f32[1,512], index: 1, kind: input, shape index: {}]
  %s2 = inlined_call_operand.vmem [shape: f32[4,32,512], index: 2, kind: input, shape index: {}]
  %s3 = inlined_call_operand.vmem [shape: f32[32,1], index: 3, kind: input, shape index: {}]
  %s4 = inlined_call_operand.vmem [shape: f32[32,1], index: 4, kind: input, shape index: {}]
  %s5 = inlined_call_operand.vmem [shape: f32[32,1], index: 5, kind: input, shape index: {}]
  %s6 = inlined_call_operand.vmem [shape: f32[32,1], index: 6, kind: input, shape index: {}]
  %s7 = inlined_call_operand.vmem [shape: bf16[4,64,192], index: 7, kind: input, shape index: {}]
  %s8 = inlined_call_operand.vmem [shape: f32[4,64,1], index: 8, kind: input, shape index: {}]
  %s9 = inlined_call_operand.vmem [shape: bf16[4,64,32], index: 9, kind: input, shape index: {}]
  %s10 = inlined_call_operand.vmem [shape: f32[4,64,1], index: 10, kind: input, shape index: {}]
  %s11 = inlined_call_operand.vmem [shape: bf16[32,32], index: 11, kind: input, shape index: {}]
  %s12 = inlined_call_operand.vmem [shape: f32[32,1], index: 12, kind: input, shape index: {}]
  %s13 = inlined_call_operand.vmem [shape: f32[32,1], index: 13, kind: input, shape index: {}]
  %s14 = inlined_call_operand.<no memory space> [shape: f32[1,1], index: 14, kind: input, shape index: {}]
  %s15 = inlined_call_operand.vmem [shape: f32[1,512], index: 15, kind: output, shape index: {}]
  %s16 = sld [smem:[#allocation0]]
  $region70: #{nuwave_forward.1} parent=0
    _
  %s18 = ssub.s32 1, %s16
  %s19 = scalar_select 0, %s18, %s16
  %v20 = vstv %s14
  %21 = vst [vmem:[#allocation4] sm:$0x1] %v20
  // Predicated region
  $region2: #{nuwave_forward.1} parent=0 // pred_check
    _
  $region3: #{nuwave_forward.1} parent=0 // pred_check_branch
    %23 = sbr.rel (0) target = $region5
  $region4: #{nuwave_forward.1} parent=0 // pred_region
    _
  $region5: #{nuwave_forward.1} parent=0 // pred_fallthru
    _
  // Predicated region
  $region6: #{nuwave_forward.1} parent=0 // pred_check
    _
  $region7: #{nuwave_forward.1} parent=0 // pred_check_branch
    %25 = sbr.rel (0) target = $region9
  $region8: #{nuwave_forward.1} parent=0 // pred_region
    _
  $region9: #{nuwave_forward.1} parent=0 // pred_fallthru
    _
  // Predicated region
  $region10: #{nuwave_forward.1} parent=0 // pred_check
    _
  $region11: #{nuwave_forward.1} parent=0 // pred_check_branch
    %27 = sbr.rel (0) target = $region13
  $region12: #{nuwave_forward.1} parent=0 // pred_region
    _
  $region13: #{nuwave_forward.1} parent=0 // pred_fallthru
    _
  // Predicated region
  $region14: #{nuwave_forward.1} parent=0 // pred_check
    _
  $region15: #{nuwave_forward.1} parent=0 // pred_check_branch
    %29 = sbr.rel (0) target = $region17
  $region16: #{nuwave_forward.1} parent=0 // pred_region
    _
  $region17: #{nuwave_forward.1} parent=0 // pred_fallthru
    _
  // Predicated region
  $region18: #{nuwave_forward.1} parent=0 // pred_check
    _
  $region19: #{nuwave_forward.1} parent=0 // pred_check_branch
    %31 = sbr.rel (0) target = $region21
  $region20: #{nuwave_forward.1} parent=0 // pred_region
    _
  $region21: #{nuwave_forward.1} parent=0 // pred_fallthru
    _
  // Predicated region
  $region22: #{nuwave_forward.1} parent=0 // pred_check
    _
  $region23: #{nuwave_forward.1} parent=0 // pred_check_branch
    %33 = sbr.rel (0) target = $region25
  $region24: #{nuwave_forward.1} parent=0 // pred_region
    _
  $region25: #{nuwave_forward.1} parent=0 // pred_fallthru
    _
  // Predicated region
  $region26: #{nuwave_forward.1} parent=0 // pred_check
    _
  $region27: #{nuwave_forward.1} parent=0 // pred_check_branch
    %35 = sbr.rel (0) target = $region29
  $region28: #{nuwave_forward.1} parent=0 // pred_region
    _
  $region29: #{nuwave_forward.1} parent=0 // pred_fallthru
    _
  // Predicated region
  $region30: #{nuwave_forward.1} parent=0 // pred_check
    _
  $region31: #{nuwave_forward.1} parent=0 // pred_check_branch
    %37 = sbr.rel (0) target = $region33
  $region32: #{nuwave_forward.1} parent=0 // pred_region
    _
  $region33: #{nuwave_forward.1} parent=0 // pred_fallthru
    _
  // Predicated region
  $region34: #{nuwave_forward.1} parent=0 // pred_check
    _
  $region35: #{nuwave_forward.1} parent=0 // pred_check_branch
    %39 = sbr.rel (0) target = $region37
  $region36: #{nuwave_forward.1} parent=0 // pred_region
    _
  $region37: #{nuwave_forward.1} parent=0 // pred_fallthru
    _
  // Predicated region
  $region38: #{nuwave_forward.1} parent=0 // pred_check
    _
  $region39: #{nuwave_forward.1} parent=0 // pred_check_branch
    %41 = sbr.rel (0) target = $region41
  $region40: #{nuwave_forward.1} parent=0 // pred_region
    _
  $region41: #{nuwave_forward.1} parent=0 // pred_fallthru
    _
  // Predicated region
  $region42: #{nuwave_forward.1} parent=0 // pred_check
    _
  $region43: #{nuwave_forward.1} parent=0 // pred_check_branch
    %43 = sbr.rel (0) target = $region45
  $region44: #{nuwave_forward.1} parent=0 // pred_region
    _
  $region45: #{nuwave_forward.1} parent=0 // pred_fallthru
    _
  // Predicated region
  $region46: #{nuwave_forward.1} parent=0 // pred_check
    _
  $region47: #{nuwave_forward.1} parent=0 // pred_check_branch
    %45 = sbr.rel (0) target = $region49
  $region48: #{nuwave_forward.1} parent=0 // pred_region
    _
  $region49: #{nuwave_forward.1} parent=0 // pred_fallthru
    _
  // Predicated region
  $region50: #{nuwave_forward.1} parent=0 // pred_check
    _
  $region51: #{nuwave_forward.1} parent=0 // pred_check_branch
    %47 = sbr.rel (0) target = $region53
  $region52: #{nuwave_forward.1} parent=0 // pred_region
    _
  $region53: #{nuwave_forward.1} parent=0 // pred_fallthru
    _
  // Predicated region
  $region54: #{nuwave_forward.1} parent=0 // pred_check
    _
  $region55: #{nuwave_forward.1} parent=0 // pred_check_branch
    %49 = sbr.rel (0) target = $region57
  $region56: #{nuwave_forward.1} parent=0 // pred_region
    _
  $region57: #{nuwave_forward.1} parent=0 // pred_fallthru
    _
  // Predicated region
  $region58: #{nuwave_forward.1} parent=0 // pred_check
    _
  $region59: #{nuwave_forward.1} parent=0 // pred_check_branch
    %51 = sbr.rel (0) target = $region61
  $region60: #{nuwave_forward.1} parent=0 // pred_region
    _
  $region61: #{nuwave_forward.1} parent=0 // pred_fallthru
    _
  %v55 = vld [vmem:[%s3] sm:$0xff]
  %v56 = vld [vmem:[%s3 + $0x8] sm:$0xff]
  %v57 = vld [vmem:[%s3 + $0x10] sm:$0xff]
  %v58 = vld [vmem:[%s3 + $0x18] sm:$0xff]
  %v59 = vld [vmem:[%s0] sm:$0xf]
  %61 = vset.pattern.permute.xlu0 0
  %62 = vperm.xlu0 %61, %v55
  %v63 = vpop.permute.xlu0 %62
  %66 = vset.pattern.permute.xlu0 0
  %67 = vperm.xlu0 %66, %v56
  %v68 = vpop.permute.xlu0 %67
  %71 = vset.pattern.permute.xlu0 0
  %72 = vperm.xlu0 %71, %v57
  %v73 = vpop.permute.xlu0 %72
  %76 = vset.pattern.permute.xlu0 0
  %77 = vperm.xlu0 %76, %v58
  %v78 = vpop.permute.xlu0 %77
  %v81 = vlaneseq
  %v82 = vshrl.u32 %v81, 7
  %v83 = vsub.s32 0, %v82
  %v84 = vrot.slane %v59, %v83
  %v85 = vlaneseq
  %v86 = vshrl.u32 %v85, 7
  %v87 = vsub.s32 1, %v86
  %v88 = vrot.slane %v59, %v87
  %v89 = vlaneseq
  %v90 = vshrl.u32 %v89, 7
  %v91 = vsub.s32 2, %v90
  %v92 = vrot.slane %v59, %v91
  %v93 = vlaneseq
  %v94 = vshrl.u32 %v93, 7
  %v95 = vsub.s32 3, %v94
  %v96 = vrot.slane %v59, %v95
  %v101 = vmul.f32 %v63, %v84
  %v102 = vmul.f32 %v63, %v88
  %v103 = vmul.f32 %v63, %v92
  %v104 = vmul.f32 %v63, %v96
  %v105 = vmul.f32 %v68, %v84
  %v106 = vmul.f32 %v68, %v88
  %v107 = vmul.f32 %v68, %v92
  %v108 = vmul.f32 %v68, %v96
  %v109 = vmul.f32 %v73, %v84
  %v110 = vmul.f32 %v73, %v88
  %v111 = vmul.f32 %v73, %v92
  %v112 = vmul.f32 %v73, %v96
  %v113 = vmul.f32 %v78, %v84
  %v114 = vmul.f32 %v78, %v88
  %v115 = vmul.f32 %v78, %v92
  %v116 = vmul.f32 %v78, %v96
  %v117 = vld [vmem:[%s4] sm:$0xff]
  %v118 = vld [vmem:[%s4 + $0x8] sm:$0xff]
  %v119 = vld [vmem:[%s4 + $0x10] sm:$0xff]
  %v120 = vld [vmem:[%s4 + $0x18] sm:$0xff]
  %122 = vset.pattern.permute.xlu0 0
  %123 = vperm.xlu0 %122, %v117
  %v124 = vpop.permute.xlu0 %123
  %127 = vset.pattern.permute.xlu0 0
  %128 = vperm.xlu0 %127, %v118
  %v129 = vpop.permute.xlu0 %128
  %132 = vset.pattern.permute.xlu0 0
  %133 = vperm.xlu0 %132, %v119
  %v134 = vpop.permute.xlu0 %133
  %137 = vset.pattern.permute.xlu0 0
  %138 = vperm.xlu0 %137, %v120
  %v139 = vpop.permute.xlu0 %138
  %v141 = vadd.f32 %v101, %v124
  %v142 = vadd.f32 %v102, %v124
  %v143 = vadd.f32 %v103, %v124
  %v144 = vadd.f32 %v104, %v124
  %v145 = vadd.f32 %v105, %v129
  %v146 = vadd.f32 %v106, %v129
  %v147 = vadd.f32 %v107, %v129
  %v148 = vadd.f32 %v108, %v129
  %v149 = vadd.f32 %v109, %v134
  %v150 = vadd.f32 %v110, %v134
  %v151 = vadd.f32 %v111, %v134
  %v152 = vadd.f32 %v112, %v134
  %v153 = vadd.f32 %v113, %v139
  %v154 = vadd.f32 %v114, %v139
  %v155 = vadd.f32 %v115, %v139
  %v156 = vadd.f32 %v116, %v139
  %v157 = vxor.u32 %v141, 2147483648
  %v158 = vxor.u32 %v142, 2147483648
  %v159 = vxor.u32 %v143, 2147483648
  %v160 = vxor.u32 %v144, 2147483648
  %v161 = vxor.u32 %v145, 2147483648
  %v162 = vxor.u32 %v146, 2147483648
  %v163 = vxor.u32 %v147, 2147483648
  %v164 = vxor.u32 %v148, 2147483648
  %v165 = vxor.u32 %v149, 2147483648
  %v166 = vxor.u32 %v150, 2147483648
  %v167 = vxor.u32 %v151, 2147483648
  %v168 = vxor.u32 %v152, 2147483648
  %v169 = vxor.u32 %v153, 2147483648
  %v170 = vxor.u32 %v154, 2147483648
  %v171 = vxor.u32 %v155, 2147483648
  %v172 = vxor.u32 %v156, 2147483648
  %v173 = vmul.f32 %v157, 1.442695
  %v174 = vpow.pop %v173
  %v175 = vmul.f32 %v158, 1.442695
  %v176 = vpow.pop %v175
  %v177 = vmul.f32 %v159, 1.442695
  %v178 = vpow.pop %v177
  %v179 = vmul.f32 %v160, 1.442695
  %v180 = vpow.pop %v179
  %v181 = vmul.f32 %v161, 1.442695
  %v182 = vpow.pop %v181
  %v183 = vmul.f32 %v162, 1.442695
  %v184 = vpow.pop %v183
  %v185 = vmul.f32 %v163, 1.442695
  %v186 = vpow.pop %v185
  %v187 = vmul.f32 %v164, 1.442695
  %v188 = vpow.pop %v187
  %v189 = vmul.f32 %v165, 1.442695
  %v190 = vpow.pop %v189
  %v191 = vmul.f32 %v166, 1.442695
  %v192 = vpow.pop %v191
  %v193 = vmul.f32 %v167, 1.442695
  %v194 = vpow.pop %v193
  %v195 = vmul.f32 %v168, 1.442695
  %v196 = vpow.pop %v195
  %v197 = vmul.f32 %v169, 1.442695
  %v198 = vpow.pop %v197
  %v199 = vmul.f32 %v170, 1.442695
  %v200 = vpow.pop %v199
  %v201 = vmul.f32 %v171, 1.442695
  %v202 = vpow.pop %v201
  %v203 = vmul.f32 %v172, 1.442695
  %v204 = vpow.pop %v203
  %v205 = vadd.f32 %v174, 1.0
  %v206 = vadd.f32 %v176, 1.0
  %v207 = vadd.f32 %v178, 1.0
  %v208 = vadd.f32 %v180, 1.0
  %v209 = vadd.f32 %v182, 1.0
  %v210 = vadd.f32 %v184, 1.0
  %v211 = vadd.f32 %v186, 1.0
  %v212 = vadd.f32 %v188, 1.0
  %v213 = vadd.f32 %v190, 1.0
  %v214 = vadd.f32 %v192, 1.0
  %v215 = vadd.f32 %v194, 1.0
  %v216 = vadd.f32 %v196, 1.0
  %v217 = vadd.f32 %v198, 1.0
  %v218 = vadd.f32 %v200, 1.0
  %v219 = vadd.f32 %v202, 1.0
  %v220 = vadd.f32 %v204, 1.0
  %v221 = vrcp.pop %v205
  %v222 = vmul.f32 1.0, %v221
  %v223 = vrcp.pop %v206
  %v224 = vmul.f32 1.0, %v223
  %v225 = vrcp.pop %v207
  %v226 = vmul.f32 1.0, %v225
  %v227 = vrcp.pop %v208
  %v228 = vmul.f32 1.0, %v227
  %v229 = vrcp.pop %v209
  %v230 = vmul.f32 1.0, %v229
  %v231 = vrcp.pop %v210
  %v232 = vmul.f32 1.0, %v231
  %v233 = vrcp.pop %v211
  %v234 = vmul.f32 1.0, %v233
  %v235 = vrcp.pop %v212
  %v236 = vmul.f32 1.0, %v235
  %v237 = vrcp.pop %v213
  %v238 = vmul.f32 1.0, %v237
  %v239 = vrcp.pop %v214
  %v240 = vmul.f32 1.0, %v239
  %v241 = vrcp.pop %v215
  %v242 = vmul.f32 1.0, %v241
  %v243 = vrcp.pop %v216
  %v244 = vmul.f32 1.0, %v243
  %v245 = vrcp.pop %v217
  %v246 = vmul.f32 1.0, %v245
  %v247 = vrcp.pop %v218
  %v248 = vmul.f32 1.0, %v247
  %v249 = vrcp.pop %v219
  %v250 = vmul.f32 1.0, %v249
  %v251 = vrcp.pop %v220
  %v252 = vmul.f32 1.0, %v251
  %v253 = vmul.f32 %v141, %v222
  %v254 = vmul.f32 %v142, %v224
  %v255 = vmul.f32 %v143, %v226
  %v256 = vmul.f32 %v144, %v228
  %v257 = vmul.f32 %v145, %v230
  %v258 = vmul.f32 %v146, %v232
  %v259 = vmul.f32 %v147, %v234
  %v260 = vmul.f32 %v148, %v236
  %v261 = vmul.f32 %v149, %v238
  %v262 = vmul.f32 %v150, %v240
  %v263 = vmul.f32 %v151, %v242
  %v264 = vmul.f32 %v152, %v244
  %v265 = vmul.f32 %v153, %v246
  %v266 = vmul.f32 %v154, %v248
  %v267 = vmul.f32 %v155, %v250
  %v268 = vmul.f32 %v156, %v252
  %v269 = vld [vmem:[%s5] sm:$0xff]
  %v270 = vld [vmem:[%s5 + $0x8] sm:$0xff]
  %v271 = vld [vmem:[%s5 + $0x10] sm:$0xff]
  %v272 = vld [vmem:[%s5 + $0x18] sm:$0xff]
  %v273 = vld [vmem:[%s1] sm:$0xf]
  %275 = vset.pattern.permute.xlu0 0
  %276 = vperm.xlu0 %275, %v269
  %v277 = vpop.permute.xlu0 %276
  %280 = vset.pattern.permute.xlu0 0
  %281 = vperm.xlu0 %280, %v270
  %v282 = vpop.permute.xlu0 %281
  %285 = vset.pattern.permute.xlu0 0
  %286 = vperm.xlu0 %285, %v271
  %v287 = vpop.permute.xlu0 %286
  %290 = vset.pattern.permute.xlu0 0
  %291 = vperm.xlu0 %290, %v272
  %v292 = vpop.permute.xlu0 %291
  %v295 = vlaneseq
  %v296 = vshrl.u32 %v295, 7
  %v297 = vsub.s32 0, %v296
  %v298 = vrot.slane %v273, %v297
  %v299 = vlaneseq
  %v300 = vshrl.u32 %v299, 7
  %v301 = vsub.s32 1, %v300
  %v302 = vrot.slane %v273, %v301
  %v303 = vlaneseq
  %v304 = vshrl.u32 %v303, 7
  %v305 = vsub.s32 2, %v304
  %v306 = vrot.slane %v273, %v305
  %v307 = vlaneseq
  %v308 = vshrl.u32 %v307, 7
  %v309 = vsub.s32 3, %v308
  %v310 = vrot.slane %v273, %v309
  %v315 = vmul.f32 %v277, %v298
  %v316 = vmul.f32 %v277, %v302
  %v317 = vmul.f32 %v277, %v306
  %v318 = vmul.f32 %v277, %v310
  %v319 = vmul.f32 %v282, %v298
  %v320 = vmul.f32 %v282, %v302
  %v321 = vmul.f32 %v282, %v306
  %v322 = vmul.f32 %v282, %v310
  %v323 = vmul.f32 %v287, %v298
  %v324 = vmul.f32 %v287, %v302
  %v325 = vmul.f32 %v287, %v306
  %v326 = vmul.f32 %v287, %v310
  %v327 = vmul.f32 %v292, %v298
  %v328 = vmul.f32 %v292, %v302
  %v329 = vmul.f32 %v292, %v306
  %v330 = vmul.f32 %v292, %v310
  %v331 = vld [vmem:[%s6] sm:$0xff]
  %v332 = vld [vmem:[%s6 + $0x8] sm:$0xff]
  %v333 = vld [vmem:[%s6 + $0x10] sm:$0xff]
  %v334 = vld [vmem:[%s6 + $0x18] sm:$0xff]
  %336 = vset.pattern.permute.xlu0 0
  %337 = vperm.xlu0 %336, %v331
  %v338 = vpop.permute.xlu0 %337
  %341 = vset.pattern.permute.xlu0 0
  %342 = vperm.xlu0 %341, %v332
  %v343 = vpop.permute.xlu0 %342
  %346 = vset.pattern.permute.xlu0 0
  %347 = vperm.xlu0 %346, %v333
  %v348 = vpop.permute.xlu0 %347
  %351 = vset.pattern.permute.xlu0 0
  %352 = vperm.xlu0 %351, %v334
  %v353 = vpop.permute.xlu0 %352
  %v355 = vadd.f32 %v315, %v338
  %v356 = vadd.f32 %v316, %v338
  %v357 = vadd.f32 %v317, %v338
  %v358 = vadd.f32 %v318, %v338
  %v359 = vadd.f32 %v319, %v343
  %v360 = vadd.f32 %v320, %v343
  %v361 = vadd.f32 %v321, %v343
  %v362 = vadd.f32 %v322, %v343
  %v363 = vadd.f32 %v323, %v348
  %v364 = vadd.f32 %v324, %v348
  %v365 = vadd.f32 %v325, %v348
  %v366 = vadd.f32 %v326, %v348
  %v367 = vadd.f32 %v327, %v353
  %v368 = vadd.f32 %v328, %v353
  %v369 = vadd.f32 %v329, %v353
  %v370 = vadd.f32 %v330, %v353
  %v371 = vxor.u32 %v355, 2147483648
  %v372 = vxor.u32 %v356, 2147483648
  %v373 = vxor.u32 %v357, 2147483648
  %v374 = vxor.u32 %v358, 2147483648
  %v375 = vxor.u32 %v359, 2147483648
  %v376 = vxor.u32 %v360, 2147483648
  %v377 = vxor.u32 %v361, 2147483648
  %v378 = vxor.u32 %v362, 2147483648
  %v379 = vxor.u32 %v363, 2147483648
  %v380 = vxor.u32 %v364, 2147483648
  %v381 = vxor.u32 %v365, 2147483648
  %v382 = vxor.u32 %v366, 2147483648
  %v383 = vxor.u32 %v367, 2147483648
  %v384 = vxor.u32 %v368, 2147483648
  %v385 = vxor.u32 %v369, 2147483648
  %v386 = vxor.u32 %v370, 2147483648
  %v387 = vmul.f32 %v371, 1.442695
  %v388 = vpow.pop %v387
  %v389 = vmul.f32 %v372, 1.442695
  %v390 = vpow.pop %v389
  %v391 = vmul.f32 %v373, 1.442695
  %v392 = vpow.pop %v391
  %v393 = vmul.f32 %v374, 1.442695
  %v394 = vpow.pop %v393
  %v395 = vmul.f32 %v375, 1.442695
  %v396 = vpow.pop %v395
  %v397 = vmul.f32 %v376, 1.442695
  %v398 = vpow.pop %v397
  %v399 = vmul.f32 %v377, 1.442695
  %v400 = vpow.pop %v399
  %v401 = vmul.f32 %v378, 1.442695
  %v402 = vpow.pop %v401
  %v403 = vmul.f32 %v379, 1.442695
  %v404 = vpow.pop %v403
  %v405 = vmul.f32 %v380, 1.442695
  %v406 = vpow.pop %v405
  %v407 = vmul.f32 %v381, 1.442695
  %v408 = vpow.pop %v407
  %v409 = vmul.f32 %v382, 1.442695
  %v410 = vpow.pop %v409
  %v411 = vmul.f32 %v383, 1.442695
  %v412 = vpow.pop %v411
  %v413 = vmul.f32 %v384, 1.442695
  %v414 = vpow.pop %v413
  %v415 = vmul.f32 %v385, 1.442695
  %v416 = vpow.pop %v415
  %v417 = vmul.f32 %v386, 1.442695
  %v418 = vpow.pop %v417
  %v419 = vadd.f32 %v388, 1.0
  %v420 = vadd.f32 %v390, 1.0
  %v421 = vadd.f32 %v392, 1.0
  %v422 = vadd.f32 %v394, 1.0
  %v423 = vadd.f32 %v396, 1.0
  %v424 = vadd.f32 %v398, 1.0
  %v425 = vadd.f32 %v400, 1.0
  %v426 = vadd.f32 %v402, 1.0
  %v427 = vadd.f32 %v404, 1.0
  %v428 = vadd.f32 %v406, 1.0
  %v429 = vadd.f32 %v408, 1.0
  %v430 = vadd.f32 %v410, 1.0
  %v431 = vadd.f32 %v412, 1.0
  %v432 = vadd.f32 %v414, 1.0
  %v433 = vadd.f32 %v416, 1.0
  %v434 = vadd.f32 %v418, 1.0
  %v435 = vrcp.pop %v419
  %v436 = vmul.f32 1.0, %v435
  %v437 = vrcp.pop %v420
  %v438 = vmul.f32 1.0, %v437
  %v439 = vrcp.pop %v421
  %v440 = vmul.f32 1.0, %v439
  %v441 = vrcp.pop %v422
  %v442 = vmul.f32 1.0, %v441
  %v443 = vrcp.pop %v423
  %v444 = vmul.f32 1.0, %v443
  %v445 = vrcp.pop %v424
  %v446 = vmul.f32 1.0, %v445
  %v447 = vrcp.pop %v425
  %v448 = vmul.f32 1.0, %v447
  %v449 = vrcp.pop %v426
  %v450 = vmul.f32 1.0, %v449
  %v451 = vrcp.pop %v427
  %v452 = vmul.f32 1.0, %v451
  %v453 = vrcp.pop %v428
  %v454 = vmul.f32 1.0, %v453
  %v455 = vrcp.pop %v429
  %v456 = vmul.f32 1.0, %v455
  %v457 = vrcp.pop %v430
  %v458 = vmul.f32 1.0, %v457
  %v459 = vrcp.pop %v431
  %v460 = vmul.f32 1.0, %v459
  %v461 = vrcp.pop %v432
  %v462 = vmul.f32 1.0, %v461
  %v463 = vrcp.pop %v433
  %v464 = vmul.f32 1.0, %v463
  %v465 = vrcp.pop %v434
  %v466 = vmul.f32 1.0, %v465
  %v467 = vmul.f32 %v355, %v436
  %v468 = vmul.f32 %v356, %v438
  %v469 = vmul.f32 %v357, %v440
  %v470 = vmul.f32 %v358, %v442
  %v471 = vmul.f32 %v359, %v444
  %v472 = vmul.f32 %v360, %v446
  %v473 = vmul.f32 %v361, %v448
  %v474 = vmul.f32 %v362, %v450
  %v475 = vmul.f32 %v363, %v452
  %v476 = vmul.f32 %v364, %v454
  %v477 = vmul.f32 %v365, %v456
  %v478 = vmul.f32 %v366, %v458
  %v479 = vmul.f32 %v367, %v460
  %v480 = vmul.f32 %v368, %v462
  %v481 = vmul.f32 %v369, %v464
  %v482 = vmul.f32 %v370, %v466
  %v483 = vpack.c.bf16 %v471, %v467
  %v484 = vpack.c.bf16 %v472, %v468
  %v485 = vpack.c.bf16 %v473, %v469
  %v486 = vpack.c.bf16 %v474, %v470
  %v487 = vpack.c.bf16 %v479, %v475
  %v488 = vpack.c.bf16 %v480, %v476
  %v489 = vpack.c.bf16 %v481, %v477
  %v490 = vpack.c.bf16 %v482, %v478
  %v499 = vunpack.c.l.b16 %v483
  %v500 = vunpack.c.l.b16 %v484
  %v501 = vunpack.c.l.b16 %v485
  %v502 = vunpack.c.l.b16 %v486
  %v503 = vunpack.c.h.b16 %v483
  %v504 = vunpack.c.h.b16 %v484
  %v505 = vunpack.c.h.b16 %v485
  %v506 = vunpack.c.h.b16 %v486
  %v507 = vunpack.c.l.b16 %v487
  %v508 = vunpack.c.l.b16 %v488
  %v509 = vunpack.c.l.b16 %v489
  %v510 = vunpack.c.l.b16 %v490
  %v511 = vunpack.c.h.b16 %v487
  %v512 = vunpack.c.h.b16 %v488
  %v513 = vunpack.c.h.b16 %v489
  %v514 = vunpack.c.h.b16 %v490
  %v515 = vpack.c.b16 %v500, %v499
  %v516 = vpack.c.b16 %v502, %v501
  %v517 = vpack.c.b16 %v504, %v503
  %v518 = vpack.c.b16 %v506, %v505
  %v519 = vpack.c.b16 %v508, %v507
  %v520 = vpack.c.b16 %v510, %v509
  %v521 = vpack.c.b16 %v512, %v511
  %v522 = vpack.c.b16 %v514, %v513
  %531 = vst [vmem:[#allocation2 + $0x100] sm:$0xff] %v515
  %532 = vst [vmem:[#allocation2 + $0x108] sm:$0xff] %v516
  %533 = vst [vmem:[#allocation2 + $0x110] sm:$0xff] %v517
  %534 = vst [vmem:[#allocation2 + $0x118] sm:$0xff] %v518
  %535 = vst [vmem:[#allocation2 + $0x120] sm:$0xff] %v519
  %536 = vst [vmem:[#allocation2 + $0x128] sm:$0xff] %v520
  %537 = vst [vmem:[#allocation2 + $0x130] sm:$0xff] %v521
  %538 = vst [vmem:[#allocation2 + $0x138] sm:$0xff] %v522
  %v539 = vlaneseq
  %v540 = vand.u32 %v539, 127
  %v541 = vadd.s32 %v540, 128
  %v542 = vadd.s32 %v540, 256
  %v543 = vadd.s32 %v540, 384
  %vm544 = vcmp.lt.s32.totalorder %v540, 0
  %v545 = vsub.s32 0, %v540
  %v546 = vsel %vm544, %v545, %v540
  %v547 = vshrl.u32 %v546, 8
  %v548 = vand.u32 %v546, 255
  %v549 = vsub.s32 0, %v548
  %v550 = vsel %vm544, %v549, %v548
  %vm551 = vcmp.lt.s32.totalorder %v541, 0
  %v552 = vsub.s32 0, %v541
  %v553 = vsel %vm551, %v552, %v541
  %v554 = vshrl.u32 %v553, 8
  %v555 = vand.u32 %v553, 255
  %v556 = vsub.s32 0, %v555
  %v557 = vsel %vm551, %v556, %v555
  %vm558 = vcmp.lt.s32.totalorder %v542, 0
  %v559 = vsub.s32 0, %v542
  %v560 = vsel %vm558, %v559, %v542
  %v561 = vshrl.u32 %v560, 8
  %v562 = vand.u32 %v560, 255
  %v563 = vsub.s32 0, %v562
  %v564 = vsel %vm558, %v563, %v562
  %vm565 = vcmp.lt.s32.totalorder %v543, 0
  %v566 = vsub.s32 0, %v543
  %v567 = vsel %vm565, %v566, %v543
  %v568 = vshrl.u32 %v567, 8
  %v569 = vand.u32 %v567, 255
  %v570 = vsub.s32 0, %v569
  %v571 = vsel %vm565, %v570, %v569
  %vm572 = vcmp.ne.s32.totalorder %v550, 0
  %vm573 = vcmp.ne.s32.totalorder %v557, 0
  %vm574 = vcmp.ne.s32.totalorder %v564, 0
  %vm575 = vcmp.ne.s32.totalorder %v571, 0
  %vm576 = vcmp.lt.s32.totalorder %v550, 0
  %vm577 = vcmp.lt.s32.totalorder %v557, 0
  %vm578 = vcmp.lt.s32.totalorder %v564, 0
  %vm579 = vcmp.lt.s32.totalorder %v571, 0
  %vm580 = vmand %vm576, %vm572
  %vm581 = vmand %vm577, %vm573
  %vm582 = vmand %vm578, %vm574
  %vm583 = vmand %vm579, %vm575
  %v584 = vadd.s32 %v550, 256
  %v585 = vadd.s32 %v557, 256
  %v586 = vadd.s32 %v564, 256
  %v587 = vadd.s32 %v571, 256
  %v588 = vsel %vm580, %v584, %v550
  %v589 = vsel %vm581, %v585, %v557
  %v590 = vsel %vm582, %v586, %v564
  %v591 = vsel %vm583, %v587, %v571
  %vm592 = vcmp.ge.s32.totalorder %v588, 1
  %vm593 = vcmp.ge.s32.totalorder %v589, 1
  %vm594 = vcmp.ge.s32.totalorder %v590, 1
  %vm595 = vcmp.ge.s32.totalorder %v591, 1
  %vm596 = vcmp.lt.s32.totalorder %v588, 255
  %vm597 = vcmp.lt.s32.totalorder %v589, 255
  %vm598 = vcmp.lt.s32.totalorder %v590, 255
  %vm599 = vcmp.lt.s32.totalorder %v591, 255
  %vm600 = vcmp.ge.s32.totalorder %v588, 2
  %vm601 = vcmp.ge.s32.totalorder %v589, 2
  %vm602 = vcmp.ge.s32.totalorder %v590, 2
  %vm603 = vcmp.ge.s32.totalorder %v591, 2
  %vm604 = vcmp.lt.s32.totalorder %v588, 254
  %vm605 = vcmp.lt.s32.totalorder %v589, 254
  %vm606 = vcmp.lt.s32.totalorder %v590, 254
  %vm607 = vcmp.lt.s32.totalorder %v591, 254
  %608 = vst [vmem:[#allocation3] sm:$0xff] 0.0
  %609 = vst [vmem:[#allocation3 + $0x8] sm:$0xff] 0.0
  %610 = vst [vmem:[#allocation3 + $0x10] sm:$0xff] 0.0
  %611 = vst [vmem:[#allocation3 + $0x18] sm:$0xff] 0.0
  %612 = vst [vmem:[#allocation3 + $0x20] sm:$0xff] 0.0
  %613 = vst [vmem:[#allocation3 + $0x28] sm:$0xff] 0.0
  %614 = vst [vmem:[#allocation3 + $0x30] sm:$0xff] 0.0
  %615 = vst [vmem:[#allocation3 + $0x38] sm:$0xff] 0.0
  %616 = vst [vmem:[#allocation3 + $0x40] sm:$0xff] 0.0
  %617 = vst [vmem:[#allocation3 + $0x48] sm:$0xff] 0.0
  %618 = vst [vmem:[#allocation3 + $0x50] sm:$0xff] 0.0
  %619 = vst [vmem:[#allocation3 + $0x58] sm:$0xff] 0.0
  %620 = vst [vmem:[#allocation3 + $0x60] sm:$0xff] 0.0
  %621 = vst [vmem:[#allocation3 + $0x68] sm:$0xff] 0.0
  %622 = vst [vmem:[#allocation3 + $0x70] sm:$0xff] 0.0
  %623 = vst [vmem:[#allocation3 + $0x78] sm:$0xff] 0.0
  %v624 = vld [vmem:[%s2] sm:$0xff]
  %v625 = vld [vmem:[%s2 + $0x8] sm:$0xff]
  %v626 = vld [vmem:[%s2 + $0x10] sm:$0xff]
  %v627 = vld [vmem:[%s2 + $0x18] sm:$0xff]
  %v628 = vld [vmem:[%s2 + $0x20] sm:$0xff]
  %v629 = vld [vmem:[%s2 + $0x28] sm:$0xff]
  %v630 = vld [vmem:[%s2 + $0x30] sm:$0xff]
  %v631 = vld [vmem:[%s2 + $0x38] sm:$0xff]
  %v632 = vld [vmem:[%s2 + $0x40] sm:$0xff]
  %v633 = vld [vmem:[%s2 + $0x48] sm:$0xff]
  %v634 = vld [vmem:[%s2 + $0x50] sm:$0xff]
  %v635 = vld [vmem:[%s2 + $0x58] sm:$0xff]
  %v636 = vld [vmem:[%s2 + $0x60] sm:$0xff]
  %v637 = vld [vmem:[%s2 + $0x68] sm:$0xff]
  %v638 = vld [vmem:[%s2 + $0x70] sm:$0xff]
  %v639 = vld [vmem:[%s2 + $0x78] sm:$0xff]
  %v640 = vadd.f32 %v253, %v624
  %v641 = vadd.f32 %v254, %v625
  %v642 = vadd.f32 %v255, %v626
  %v643 = vadd.f32 %v256, %v627
  %v644 = vadd.f32 %v257, %v628
  %v645 = vadd.f32 %v258, %v629
  %v646 = vadd.f32 %v259, %v630
  %v647 = vadd.f32 %v260, %v631
  %v648 = vadd.f32 %v261, %v632
  %v649 = vadd.f32 %v262, %v633
  %v650 = vadd.f32 %v263, %v634
  %v651 = vadd.f32 %v264, %v635
  %v652 = vadd.f32 %v265, %v636
  %v653 = vadd.f32 %v266, %v637
  %v654 = vadd.f32 %v267, %v638
  %v655 = vadd.f32 %v268, %v639
  %v656 = vpack.c.bf16 %v644, %v640
  %v657 = vpack.c.bf16 %v645, %v641
  %v658 = vpack.c.bf16 %v646, %v642
  %v659 = vpack.c.bf16 %v647, %v643
  %v660 = vpack.c.bf16 %v652, %v648
  %v661 = vpack.c.bf16 %v653, %v649
  %v662 = vpack.c.bf16 %v654, %v650
  %v663 = vpack.c.bf16 %v655, %v651
  %v672 = vunpack.c.l.b16 %v656
  %v673 = vunpack.c.l.b16 %v657
  %v674 = vunpack.c.l.b16 %v658
  %v675 = vunpack.c.l.b16 %v659
  %v676 = vunpack.c.h.b16 %v656
  %v677 = vunpack.c.h.b16 %v657
  %v678 = vunpack.c.h.b16 %v658
  %v679 = vunpack.c.h.b16 %v659
  %v680 = vunpack.c.l.b16 %v660
  %v681 = vunpack.c.l.b16 %v661
  %v682 = vunpack.c.l.b16 %v662
  %v683 = vunpack.c.l.b16 %v663
  %v684 = vunpack.c.h.b16 %v660
  %v685 = vunpack.c.h.b16 %v661
  %v686 = vunpack.c.h.b16 %v662
  %v687 = vunpack.c.h.b16 %v663
  %v688 = vpack.c.b16 %v673, %v672
  %v689 = vpack.c.b16 %v675, %v674
  %v690 = vpack.c.b16 %v677, %v676
  %v691 = vpack.c.b16 %v679, %v678
  %v692 = vpack.c.b16 %v681, %v680
  %v693 = vpack.c.b16 %v683, %v682
  %v694 = vpack.c.b16 %v685, %v684
  %v695 = vpack.c.b16 %v687, %v686
  %704 = vst [vmem:[#allocation2 + $0x40] sm:$0xff] %v688
  %705 = vst [vmem:[#allocation2 + $0x48] sm:$0xff] %v689
  %706 = vst [vmem:[#allocation2 + $0x50] sm:$0xff] %v690
  %707 = vst [vmem:[#allocation2 + $0x58] sm:$0xff] %v691
  %708 = vst [vmem:[#allocation2 + $0x60] sm:$0xff] %v692
  %709 = vst [vmem:[#allocation2 + $0x68] sm:$0xff] %v693
  %710 = vst [vmem:[#allocation2 + $0x70] sm:$0xff] %v694
  %711 = vst [vmem:[#allocation2 + $0x78] sm:$0xff] %v695
  %712 = vrot.lane.b32.xlu0 %v659, 1
  %v713 = vpop.permute.xlu0 %712
  %714 = vrot.lane.b32.xlu0 %v663, 1
  %v715 = vpop.permute.xlu0 %714
  %716 = vrot.lane.b32.xlu0 %v656, 1
  %v717 = vpop.permute.xlu0 %716
  %718 = vrot.lane.b32.xlu0 %v657, 1
  %v719 = vpop.permute.xlu0 %718
  %720 = vrot.lane.b32.xlu0 %v658, 1
  %v721 = vpop.permute.xlu0 %720
  %722 = vrot.lane.b32.xlu0 %v660, 1
  %v723 = vpop.permute.xlu0 %722
  %724 = vrot.lane.b32.xlu0 %v661, 1
  %v725 = vpop.permute.xlu0 %724
  %726 = vrot.lane.b32.xlu0 %v662, 1
  %v727 = vpop.permute.xlu0 %726
  %vm728 = vcmask 7168
  %v729 = vsel %vm728, %v717, %v719
  %v730 = vsel %vm728, %v719, %v721
  %v731 = vsel %vm728, %v721, %v713
  %v732 = vsel %vm728, %v723, %v725
  %v733 = vsel %vm728, %v725, %v727
  %v734 = vsel %vm728, %v727, %v715
  %vm741 = vcmask 7168
  %v744 = vsel %vm741, %v713, %v717
  %v748 = vsel %vm741, %v715, %v723
  %vm750 = vmpackc.low %vm593, %vm592
  %vm751 = vmpackc.low %vm595, %vm594
  %v752 = vsel %vm750, 65537, 0
  %v753 = vsel %vm751, 65537, 0
  %v754 = vlaneseq
  %v755 = vshrl.u32 %v754, 7
  %v756 = vsub.s32 0, %v755
  %v757 = vrot.slane %v752, %v756
  %v758 = vlaneseq
  %v759 = vshrl.u32 %v758, 7
  %v760 = vsub.s32 4, %v759
  %v761 = vrot.slane %v752, %v760
  %v762 = vlaneseq
  %v763 = vshrl.u32 %v762, 7
  %v764 = vsub.s32 0, %v763
  %v765 = vrot.slane %v753, %v764
  %v766 = vlaneseq
  %v767 = vshrl.u32 %v766, 7
  %v768 = vsub.s32 4, %v767
  %v769 = vrot.slane %v753, %v768
  %vm770 = vcmp.ne.s16.totalorder %v757, 0
  %vm771 = vcmp.ne.s16.totalorder %v761, 0
  %vm772 = vcmp.ne.s16.totalorder %v765, 0
  %vm773 = vcmp.ne.s16.totalorder %v769, 0
  %v774 = vsel %vm770, %v744, 0
  %v775 = vsel %vm771, %v729, 0
  %v776 = vsel %vm772, %v730, 0
  %v777 = vsel %vm773, %v731, 0
  %v778 = vsel %vm770, %v748, 0
  %v779 = vsel %vm771, %v732, 0
  %v780 = vsel %vm772, %v733, 0
  %v781 = vsel %vm773, %v734, 0
  %v790 = vunpack.c.l.b16 %v774
  %v791 = vunpack.c.l.b16 %v775
  %v792 = vunpack.c.l.b16 %v776
  %v793 = vunpack.c.l.b16 %v777
  %v794 = vunpack.c.h.b16 %v774
  %v795 = vunpack.c.h.b16 %v775
  %v796 = vunpack.c.h.b16 %v776
  %v797 = vunpack.c.h.b16 %v777
  %v798 = vunpack.c.l.b16 %v778
  %v799 = vunpack.c.l.b16 %v779
  %v800 = vunpack.c.l.b16 %v780
  %v801 = vunpack.c.l.b16 %v781
  %v802 = vunpack.c.h.b16 %v778
  %v803 = vunpack.c.h.b16 %v779
  %v804 = vunpack.c.h.b16 %v780
  %v805 = vunpack.c.h.b16 %v781
  %v806 = vpack.c.b16 %v791, %v790
  %v807 = vpack.c.b16 %v793, %v792
  %v808 = vpack.c.b16 %v795, %v794
  %v809 = vpack.c.b16 %v797, %v796
  %v810 = vpack.c.b16 %v799, %v798
  %v811 = vpack.c.b16 %v801, %v800
  %v812 = vpack.c.b16 %v803, %v802
  %v813 = vpack.c.b16 %v805, %v804
  %822 = vst [vmem:[#allocation2] sm:$0xff] %v806
  %823 = vst [vmem:[#allocation2 + $0x8] sm:$0xff] %v807
  %824 = vst [vmem:[#allocation2 + $0x10] sm:$0xff] %v808
  %825 = vst [vmem:[#allocation2 + $0x18] sm:$0xff] %v809
  %826 = vst [vmem:[#allocation2 + $0x20] sm:$0xff] %v810
  %827 = vst [vmem:[#allocation2 + $0x28] sm:$0xff] %v811
  %828 = vst [vmem:[#allocation2 + $0x30] sm:$0xff] %v812
  %829 = vst [vmem:[#allocation2 + $0x38] sm:$0xff] %v813
  %830 = vrot.lane.b32.xlu0 %v656, 127
  %v831 = vpop.permute.xlu0 %830
  %832 = vrot.lane.b32.xlu0 %v657, 127
  %v833 = vpop.permute.xlu0 %832
  %834 = vrot.lane.b32.xlu0 %v658, 127
  %v835 = vpop.permute.xlu0 %834
  %836 = vrot.lane.b32.xlu0 %v659, 127
  %v837 = vpop.permute.xlu0 %836
  %838 = vrot.lane.b32.xlu0 %v660, 127
  %v839 = vpop.permute.xlu0 %838
  %840 = vrot.lane.b32.xlu0 %v661, 127
  %v841 = vpop.permute.xlu0 %840
  %842 = vrot.lane.b32.xlu0 %v662, 127
  %v843 = vpop.permute.xlu0 %842
  %844 = vrot.lane.b32.xlu0 %v663, 127
  %v845 = vpop.permute.xlu0 %844
  %vm846 = vcmask 1039360
  %v847 = vsel %vm846, %v831, %v833
  %v848 = vsel %vm846, %v833, %v835
  %v849 = vsel %vm846, %v835, %v837
  %v850 = vsel %vm846, %v839, %v841
  %v851 = vsel %vm846, %v841, %v843
  %v852 = vsel %vm846, %v843, %v845
  %vm859 = vcmask 1039360
  %v862 = vsel %vm859, %v837, %v831
  %v866 = vsel %vm859, %v845, %v839
  %vm868 = vmpackc.low %vm597, %vm596
  %vm869 = vmpackc.low %vm599, %vm598
  %v870 = vsel %vm868, 65537, 0
  %v871 = vsel %vm869, 65537, 0
  %v872 = vlaneseq
  %v873 = vshrl.u32 %v872, 7
  %v874 = vsub.s32 0, %v873
  %v875 = vrot.slane %v870, %v874
  %v876 = vlaneseq
  %v877 = vshrl.u32 %v876, 7
  %v878 = vsub.s32 4, %v877
  %v879 = vrot.slane %v870, %v878
  %v880 = vlaneseq
  %v881 = vshrl.u32 %v880, 7
  %v882 = vsub.s32 0, %v881
  %v883 = vrot.slane %v871, %v882
  %v884 = vlaneseq
  %v885 = vshrl.u32 %v884, 7
  %v886 = vsub.s32 4, %v885
  %v887 = vrot.slane %v871, %v886
  %vm888 = vcmp.ne.s16.totalorder %v875, 0
  %vm889 = vcmp.ne.s16.totalorder %v879, 0
  %vm890 = vcmp.ne.s16.totalorder %v883, 0
  %vm891 = vcmp.ne.s16.totalorder %v887, 0
  %v892 = vsel %vm888, %v847, 0
  %v893 = vsel %vm889, %v848, 0
  %v894 = vsel %vm890, %v849, 0
  %v895 = vsel %vm891, %v862, 0
  %v896 = vsel %vm888, %v850, 0
  %v897 = vsel %vm889, %v851, 0
  %v898 = vsel %vm890, %v852, 0
  %v899 = vsel %vm891, %v866, 0
  %v908 = vunpack.c.l.b16 %v892
  %v909 = vunpack.c.l.b16 %v893
  %v910 = vunpack.c.l.b16 %v894
  %v911 = vunpack.c.l.b16 %v895
  %v912 = vunpack.c.h.b16 %v892
  %v913 = vunpack.c.h.b16 %v893
  %v914 = vunpack.c.h.b16 %v894
  %v915 = vunpack.c.h.b16 %v895
  %v916 = vunpack.c.l.b16 %v896
  %v917 = vunpack.c.l.b16 %v897
  %v918 = vunpack.c.l.b16 %v898
  %v919 = vunpack.c.l.b16 %v899
  %v920 = vunpack.c.h.b16 %v896
  %v921 = vunpack.c.h.b16 %v897
  %v922 = vunpack.c.h.b16 %v898
  %v923 = vunpack.c.h.b16 %v899
  %v924 = vpack.c.b16 %v909, %v908
  %v925 = vpack.c.b16 %v911, %v910
  %v926 = vpack.c.b16 %v913, %v912
  %v927 = vpack.c.b16 %v915, %v914
  %v928 = vpack.c.b16 %v917, %v916
  %v929 = vpack.c.b16 %v919, %v918
  %v930 = vpack.c.b16 %v921, %v920
  %v931 = vpack.c.b16 %v923, %v922
  %940 = vst [vmem:[#allocation2 + $0x80] sm:$0xff] %v924
  %941 = vst [vmem:[#allocation2 + $0x88] sm:$0xff] %v925
  %942 = vst [vmem:[#allocation2 + $0x90] sm:$0xff] %v926
  %943 = vst [vmem:[#allocation2 + $0x98] sm:$0xff] %v927
  %944 = vst [vmem:[#allocation2 + $0xa0] sm:$0xff] %v928
  %945 = vst [vmem:[#allocation2 + $0xa8] sm:$0xff] %v929
  %946 = vst [vmem:[#allocation2 + $0xb0] sm:$0xff] %v930
  %947 = vst [vmem:[#allocation2 + $0xb8] sm:$0xff] %v931
  %v948 = vld [vmem:[#allocation2 + $0x100] sm:$0xff]
  %v949 = vld [vmem:[#allocation2 + $0x108] sm:$0xff]
  %v950 = vld [vmem:[#allocation2 + $0x110] sm:$0xff]
  %v951 = vld [vmem:[#allocation2 + $0x118] sm:$0xff]
  %v952 = vld [vmem:[#allocation2 + $0x120] sm:$0xff]
  %v953 = vld [vmem:[#allocation2 + $0x128] sm:$0xff]
  %v954 = vld [vmem:[#allocation2 + $0x130] sm:$0xff]
  %v955 = vld [vmem:[#allocation2 + $0x138] sm:$0xff]
  %v960 = vunpack.c.h.b16 %v949
  %v961 = vunpack.c.h.b16 %v951
  %v962 = vunpack.c.h.b16 %v953
  %v963 = vunpack.c.h.b16 %v955
  %v964 = vpack.c.b16 %v961, %v960
  %v965 = vpack.c.b16 %v963, %v962
  %966 = vrot.lane.b32.xlu0 %v964, 1
  %v967 = vpop.permute.xlu0 %966
  %968 = vrot.lane.b32.xlu0 %v965, 1
  %v969 = vpop.permute.xlu0 %968
  %v974 = vunpack.c.l.b16 %v948
  %v975 = vunpack.c.h.b16 %v948
  %v976 = vunpack.c.l.b16 %v949
  %v977 = vunpack.c.l.b16 %v950
  %v978 = vunpack.c.h.b16 %v950
  %v979 = vunpack.c.l.b16 %v951
  %v980 = vunpack.c.l.b16 %v952
  %v981 = vunpack.c.h.b16 %v952
  %v982 = vunpack.c.l.b16 %v953
  %v983 = vunpack.c.l.b16 %v954
  %v984 = vunpack.c.h.b16 %v954
  %v985 = vunpack.c.l.b16 %v955
  %v986 = vpack.c.b16 %v977, %v974
  %v987 = vpack.c.b16 %v978, %v975
  %v988 = vpack.c.b16 %v979, %v976
  %v989 = vpack.c.b16 %v983, %v980
  %v990 = vpack.c.b16 %v984, %v981
  %v991 = vpack.c.b16 %v985, %v982
  %992 = vrot.lane.b32.xlu0 %v986, 1
  %v993 = vpop.permute.xlu0 %992
  %994 = vrot.lane.b32.xlu0 %v987, 1
  %v995 = vpop.permute.xlu0 %994
  %996 = vrot.lane.b32.xlu0 %v988, 1
  %v997 = vpop.permute.xlu0 %996
  %998 = vrot.lane.b32.xlu0 %v989, 1
  %v999 = vpop.permute.xlu0 %998
  %1000 = vrot.lane.b32.xlu0 %v990, 1
  %v1001 = vpop.permute.xlu0 %1000
  %1002 = vrot.lane.b32.xlu0 %v991, 1
  %v1003 = vpop.permute.xlu0 %1002
  %v1004 = vsel %vm728, %v993, %v995
  %v1005 = vsel %vm728, %v995, %v997
  %v1006 = vsel %vm728, %v997, %v967
  %v1007 = vsel %vm728, %v999, %v1001
  %v1008 = vsel %vm728, %v1001, %v1003
  %v1009 = vsel %vm728, %v1003, %v969
  %v1018 = vsel %vm741, %v967, %v993
  %v1022 = vsel %vm741, %v969, %v999
  %v1024 = vsel %vm770, %v1018, 0
  %v1025 = vsel %vm771, %v1004, 0
  %v1026 = vsel %vm772, %v1005, 0
  %v1027 = vsel %vm773, %v1006, 0
  %v1028 = vsel %vm770, %v1022, 0
  %v1029 = vsel %vm771, %v1007, 0
  %v1030 = vsel %vm772, %v1008, 0
  %v1031 = vsel %vm773, %v1009, 0
  %v1040 = vunpack.c.l.b16 %v1024
  %v1041 = vunpack.c.l.b16 %v1025
  %v1042 = vunpack.c.l.b16 %v1026
  %v1043 = vunpack.c.l.b16 %v1027
  %v1044 = vunpack.c.h.b16 %v1024
  %v1045 = vunpack.c.h.b16 %v1025
  %v1046 = vunpack.c.h.b16 %v1026
  %v1047 = vunpack.c.h.b16 %v1027
  %v1048 = vunpack.c.l.b16 %v1028
  %v1049 = vunpack.c.l.b16 %v1029
  %v1050 = vunpack.c.l.b16 %v1030
  %v1051 = vunpack.c.l.b16 %v1031
  %v1052 = vunpack.c.h.b16 %v1028
  %v1053 = vunpack.c.h.b16 %v1029
  %v1054 = vunpack.c.h.b16 %v1030
  %v1055 = vunpack.c.h.b16 %v1031
  %v1056 = vpack.c.b16 %v1041, %v1040
  %v1057 = vpack.c.b16 %v1043, %v1042
  %v1058 = vpack.c.b16 %v1045, %v1044
  %v1059 = vpack.c.b16 %v1047, %v1046
  %v1060 = vpack.c.b16 %v1049, %v1048
  %v1061 = vpack.c.b16 %v1051, %v1050
  %v1062 = vpack.c.b16 %v1053, %v1052
  %v1063 = vpack.c.b16 %v1055, %v1054
  %1072 = vst [vmem:[#allocation2 + $0xc0] sm:$0xff] %v1056
  %1073 = vst [vmem:[#allocation2 + $0xc8] sm:$0xff] %v1057
  %1074 = vst [vmem:[#allocation2 + $0xd0] sm:$0xff] %v1058
  %1075 = vst [vmem:[#allocation2 + $0xd8] sm:$0xff] %v1059
  %1076 = vst [vmem:[#allocation2 + $0xe0] sm:$0xff] %v1060
  %1077 = vst [vmem:[#allocation2 + $0xe8] sm:$0xff] %v1061
  %1078 = vst [vmem:[#allocation2 + $0xf0] sm:$0xff] %v1062
  %1079 = vst [vmem:[#allocation2 + $0xf8] sm:$0xff] %v1063
  %1080 = vrot.lane.b32.xlu0 %v986, 127
  %v1081 = vpop.permute.xlu0 %1080
  %1082 = vrot.lane.b32.xlu0 %v987, 127
  %v1083 = vpop.permute.xlu0 %1082
  %1084 = vrot.lane.b32.xlu0 %v988, 127
  %v1085 = vpop.permute.xlu0 %1084
  %1086 = vrot.lane.b32.xlu0 %v964, 127
  %v1087 = vpop.permute.xlu0 %1086
  %1088 = vrot.lane.b32.xlu0 %v989, 127
  %v1089 = vpop.permute.xlu0 %1088
  %1090 = vrot.lane.b32.xlu0 %v990, 127
  %v1091 = vpop.permute.xlu0 %1090
  %1092 = vrot.lane.b32.xlu0 %v991, 127
  %v1093 = vpop.permute.xlu0 %1092
  %1094 = vrot.lane.b32.xlu0 %v965, 127
  %v1095 = vpop.permute.xlu0 %1094
  %v1096 = vsel %vm846, %v1081, %v1083
  %v1097 = vsel %vm846, %v1083, %v1085
  %v1098 = vsel %vm846, %v1085, %v1087
  %v1099 = vsel %vm846, %v1089, %v1091
  %v1100 = vsel %vm846, %v1091, %v1093
  %v1101 = vsel %vm846, %v1093, %v1095
  %v1110 = vsel %vm859, %v1087, %v1081
  %v1114 = vsel %vm859, %v1095, %v1089
  %v1116 = vsel %vm888, %v1096, 0
  %v1117 = vsel %vm889, %v1097, 0
  %v1118 = vsel %vm890, %v1098, 0
  %v1119 = vsel %vm891, %v1110, 0
  %v1120 = vsel %vm888, %v1099, 0
  %v1121 = vsel %vm889, %v1100, 0
  %v1122 = vsel %vm890, %v1101, 0
  %v1123 = vsel %vm891, %v1114, 0
  %v1132 = vunpack.c.l.b16 %v1116
  %v1133 = vunpack.c.l.b16 %v1117
  %v1134 = vunpack.c.l.b16 %v1118
  %v1135 = vunpack.c.l.b16 %v1119
  %v1136 = vunpack.c.h.b16 %v1116
  %v1137 = vunpack.c.h.b16 %v1117
  %v1138 = vunpack.c.h.b16 %v1118
  %v1139 = vunpack.c.h.b16 %v1119
  %v1140 = vunpack.c.l.b16 %v1120
  %v1141 = vunpack.c.l.b16 %v1121
  %v1142 = vunpack.c.l.b16 %v1122
  %v1143 = vunpack.c.l.b16 %v1123
  %v1144 = vunpack.c.h.b16 %v1120
  %v1145 = vunpack.c.h.b16 %v1121
  %v1146 = vunpack.c.h.b16 %v1122
  %v1147 = vunpack.c.h.b16 %v1123
  %v1148 = vpack.c.b16 %v1133, %v1132
  %v1149 = vpack.c.b16 %v1135, %v1134
  %v1150 = vpack.c.b16 %v1137, %v1136
  %v1151 = vpack.c.b16 %v1139, %v1138
  %v1152 = vpack.c.b16 %v1141, %v1140
  %v1153 = vpack.c.b16 %v1143, %v1142
  %v1154 = vpack.c.b16 %v1145, %v1144
  %v1155 = vpack.c.b16 %v1147, %v1146
  %1164 = vst [vmem:[#allocation2 + $0x140] sm:$0xff] %v1148
  %1165 = vst [vmem:[#allocation2 + $0x148] sm:$0xff] %v1149
  %1166 = vst [vmem:[#allocation2 + $0x150] sm:$0xff] %v1150
  %1167 = vst [vmem:[#allocation2 + $0x158] sm:$0xff] %v1151
  %1168 = vst [vmem:[#allocation2 + $0x160] sm:$0xff] %v1152
  %1169 = vst [vmem:[#allocation2 + $0x168] sm:$0xff] %v1153
  %1170 = vst [vmem:[#allocation2 + $0x170] sm:$0xff] %v1154
  %1171 = vst [vmem:[#allocation2 + $0x178] sm:$0xff] %v1155
  %v1172 = vld [vmem:[%s7] sm:$0xff]
  %v1173 = vld [vmem:[%s7 + $0x8] sm:$0xff]
  %v1174 = vld [vmem:[%s7 + $0x10] sm:$0xff]
  %v1175 = vld [vmem:[%s7 + $0x18] sm:$0xff]
  %v1176 = vld [vmem:[%s7 + $0x20] sm:$0xff]
  %v1177 = vld [vmem:[%s7 + $0x28] sm:$0xff]
  %v1178 = vld [vmem:[%s7 + $0x30] sm:$0xff]
  %v1179 = vld [vmem:[%s7 + $0x38] sm:$0xff]
  %v1180 = vld [vmem:[#allocation2] sm:$0xff]
  %v1181 = vld [vmem:[#allocation2 + $0x8] sm:$0xff]
  %v1182 = vld [vmem:[#allocation2 + $0x10] sm:$0xff]
  %v1183 = vld [vmem:[#allocation2 + $0x18] sm:$0xff]
  %v1184 = vld [vmem:[#allocation2 + $0x20] sm:$0xff]
  %v1185 = vld [vmem:[#allocation2 + $0x28] sm:$0xff]
  %v1186 = vld [vmem:[#allocation2 + $0x30] sm:$0xff]
  %v1187 = vld [vmem:[#allocation2 + $0x38] sm:$0xff]
  %v1188 = vld [vmem:[#allocation2 + $0x40] sm:$0xff]
  %v1189 = vld [vmem:[#allocation2 + $0x48] sm:$0xff]
  %v1190 = vld [vmem:[#allocation2 + $0x50] sm:$0xff]
  %v1191 = vld [vmem:[#allocation2 + $0x58] sm:$0xff]
  %v1192 = vld [vmem:[#allocation2 + $0x60] sm:$0xff]
  %v1193 = vld [vmem:[#allocation2 + $0x68] sm:$0xff]
  %v1194 = vld [vmem:[#allocation2 + $0x70] sm:$0xff]
  %v1195 = vld [vmem:[#allocation2 + $0x78] sm:$0xff]
  %v1196 = vld [vmem:[#allocation2 + $0x80] sm:$0xff]
  %v1197 = vld [vmem:[#allocation2 + $0x88] sm:$0xff]
  %v1198 = vld [vmem:[#allocation2 + $0x90] sm:$0xff]
  %v1199 = vld [vmem:[#allocation2 + $0x98] sm:$0xff]
  %v1200 = vld [vmem:[#allocation2 + $0xa0] sm:$0xff]
  %v1201 = vld [vmem:[#allocation2 + $0xa8] sm:$0xff]
  %v1202 = vld [vmem:[#allocation2 + $0xb0] sm:$0xff]
  %v1203 = vld [vmem:[#allocation2 + $0xb8] sm:$0xff]
  %v1204 = vld [vmem:[#allocation2 + $0xc0] sm:$0xff]
  %v1205 = vld [vmem:[#allocation2 + $0xc8] sm:$0xff]
  %v1206 = vld [vmem:[#allocation2 + $0xd0] sm:$0xff]
  %v1207 = vld [vmem:[#allocation2 + $0xd8] sm:$0xff]
  %v1208 = vld [vmem:[#allocation2 + $0xe0] sm:$0xff]
  %v1209 = vld [vmem:[#allocation2 + $0xe8] sm:$0xff]
  %v1210 = vld [vmem:[#allocation2 + $0xf0] sm:$0xff]
  %v1211 = vld [vmem:[#allocation2 + $0xf8] sm:$0xff]
  %v1212 = vld [vmem:[#allocation2 + $0x100] sm:$0xff]
  %v1213 = vld [vmem:[#allocation2 + $0x108] sm:$0xff]
  %v1214 = vld [vmem:[#allocation2 + $0x110] sm:$0xff]
  %v1215 = vld [vmem:[#allocation2 + $0x118] sm:$0xff]
  %v1216 = vld [vmem:[#allocation2 + $0x120] sm:$0xff]
  %v1217 = vld [vmem:[#allocation2 + $0x128] sm:$0xff]
  %v1218 = vld [vmem:[#allocation2 + $0x130] sm:$0xff]
  %v1219 = vld [vmem:[#allocation2 + $0x138] sm:$0xff]
  %v1220 = vld [vmem:[#allocation2 + $0x140] sm:$0xff]
  %v1221 = vld [vmem:[#allocation2 + $0x148] sm:$0xff]
  %v1222 = vld [vmem:[#allocation2 + $0x150] sm:$0xff]
  %v1223 = vld [vmem:[#allocation2 + $0x158] sm:$0xff]
  %v1224 = vld [vmem:[#allocation2 + $0x160] sm:$0xff]
  %v1225 = vld [vmem:[#allocation2 + $0x168] sm:$0xff]
  %v1226 = vld [vmem:[#allocation2 + $0x170] sm:$0xff]
  %v1227 = vld [vmem:[#allocation2 + $0x178] sm:$0xff]
  %v1228 = vld [vmem:[%s8] sm:$0xff]
  %v1229 = vld [vmem:[%s8 + $0x8] sm:$0xff]
  %v1230 = vld [vmem:[%s8 + $0x10] sm:$0xff]
  %v1231 = vld [vmem:[%s8 + $0x18] sm:$0xff]
  %v1232 = vld [vmem:[%s8 + $0x20] sm:$0xff]
  %v1233 = vld [vmem:[%s8 + $0x28] sm:$0xff]
  %v1234 = vld [vmem:[%s8 + $0x30] sm:$0xff]
  %v1235 = vld [vmem:[%s8 + $0x38] sm:$0xff]
  %1237 = vset.pattern.permute.xlu0 0
  %1238 = vperm.xlu0 %1237, %v1228
  %v1239 = vpop.permute.xlu0 %1238
  %1242 = vset.pattern.permute.xlu0 0
  %1243 = vperm.xlu0 %1242, %v1229
  %v1244 = vpop.permute.xlu0 %1243
  %1247 = vset.pattern.permute.xlu0 0
  %1248 = vperm.xlu0 %1247, %v1230
  %v1249 = vpop.permute.xlu0 %1248
  %1252 = vset.pattern.permute.xlu0 0
  %1253 = vperm.xlu0 %1252, %v1231
  %v1254 = vpop.permute.xlu0 %1253
  %1257 = vset.pattern.permute.xlu0 0
  %1258 = vperm.xlu0 %1257, %v1232
  %v1259 = vpop.permute.xlu0 %1258
  %1262 = vset.pattern.permute.xlu0 0
  %1263 = vperm.xlu0 %1262, %v1233
  %v1264 = vpop.permute.xlu0 %1263
  %1267 = vset.pattern.permute.xlu0 0
  %1268 = vperm.xlu0 %1267, %v1234
  %v1269 = vpop.permute.xlu0 %1268
  %1272 = vset.pattern.permute.xlu0 0
  %1273 = vperm.xlu0 %1272, %v1235
  %v1274 = vpop.permute.xlu0 %1273
  %v1284 = vunpack.c.l.b16 %v1172
  %v1285 = vunpack.c.h.b16 %v1172
  %v1286 = vunpack.c.l.b16 %v1173
  %v1287 = vunpack.c.h.b16 %v1173
  %v1288 = vunpack.c.l.b16 %v1174
  %v1289 = vunpack.c.h.b16 %v1174
  %v1290 = vunpack.c.l.b16 %v1175
  %v1291 = vunpack.c.h.b16 %v1175
  %v1292 = vunpack.c.l.b16 %v1176
  %v1293 = vunpack.c.h.b16 %v1176
  %v1294 = vunpack.c.l.b16 %v1177
  %v1295 = vunpack.c.h.b16 %v1177
  %v1296 = vunpack.c.l.b16 %v1178
  %v1297 = vunpack.c.h.b16 %v1178
  %v1298 = vunpack.c.l.b16 %v1179
  %v1299 = vunpack.c.h.b16 %v1179
  %v1300 = vpack.c.b16 %v1286, %v1284
  %v1301 = vpack.c.b16 %v1287, %v1285
  %v1302 = vpack.c.b16 %v1290, %v1288
  %v1303 = vpack.c.b16 %v1291, %v1289
  %v1304 = vpack.c.b16 %v1294, %v1292
  %v1305 = vpack.c.b16 %v1295, %v1293
  %v1306 = vpack.c.b16 %v1298, %v1296
  %v1307 = vpack.c.b16 %v1299, %v1297
  %v1360 = vunpack.c.l.b16 %v1180
  %v1361 = vunpack.c.h.b16 %v1180
  %v1362 = vunpack.c.l.b16 %v1181
  %v1363 = vunpack.c.h.b16 %v1181
  %v1364 = vunpack.c.l.b16 %v1182
  %v1365 = vunpack.c.h.b16 %v1182
  %v1366 = vunpack.c.l.b16 %v1183
  %v1367 = vunpack.c.h.b16 %v1183
  %v1368 = vunpack.c.l.b16 %v1184
  %v1369 = vunpack.c.h.b16 %v1184
  %v1370 = vunpack.c.l.b16 %v1185
  %v1371 = vunpack.c.h.b16 %v1185
  %v1372 = vunpack.c.l.b16 %v1186
  %v1373 = vunpack.c.h.b16 %v1186
  %v1374 = vunpack.c.l.b16 %v1187
  %v1375 = vunpack.c.h.b16 %v1187
  %v1376 = vunpack.c.l.b16 %v1188
  %v1377 = vunpack.c.h.b16 %v1188
  %v1378 = vunpack.c.l.b16 %v1189
  %v1379 = vunpack.c.h.b16 %v1189
  %v1380 = vunpack.c.l.b16 %v1190
  %v1381 = vunpack.c.h.b16 %v1190
  %v1382 = vunpack.c.l.b16 %v1191
  %v1383 = vunpack.c.h.b16 %v1191
  %v1384 = vunpack.c.l.b16 %v1192
  %v1385 = vunpack.c.h.b16 %v1192
  %v1386 = vunpack.c.l.b16 %v1193
  %v1387 = vunpack.c.h.b16 %v1193
  %v1388 = vunpack.c.l.b16 %v1194
  %v1389 = vunpack.c.h.b16 %v1194
  %v1390 = vunpack.c.l.b16 %v1195
  %v1391 = vunpack.c.h.b16 %v1195
  %v1392 = vunpack.c.l.b16 %v1196
  %v1393 = vunpack.c.h.b16 %v1196
  %v1394 = vunpack.c.l.b16 %v1197
  %v1395 = vunpack.c.h.b16 %v1197
  %v1396 = vunpack.c.l.b16 %v1198
  %v1397 = vunpack.c.h.b16 %v1198
  %v1398 = vunpack.c.l.b16 %v1199
  %v1399 = vunpack.c.h.b16 %v1199
  %v1400 = vunpack.c.l.b16 %v1200
  %v1401 = vunpack.c.h.b16 %v1200
  %v1402 = vunpack.c.l.b16 %v1201
  %v1403 = vunpack.c.h.b16 %v1201
  %v1404 = vunpack.c.l.b16 %v1202
  %v1405 = vunpack.c.h.b16 %v1202
  %v1406 = vunpack.c.l.b16 %v1203
  %v1407 = vunpack.c.h.b16 %v1203
  %v1408 = vunpack.c.l.b16 %v1204
  %v1409 = vunpack.c.h.b16 %v1204
  %v1410 = vunpack.c.l.b16 %v1205
  %v1411 = vunpack.c.h.b16 %v1205
  %v1412 = vunpack.c.l.b16 %v1206
  %v1413 = vunpack.c.h.b16 %v1206
  %v1414 = vunpack.c.l.b16 %v1207
  %v1415 = vunpack.c.h.b16 %v1207
  %v1416 = vunpack.c.l.b16 %v1208
  %v1417 = vunpack.c.h.b16 %v1208
  %v1418 = vunpack.c.l.b16 %v1209
  %v1419 = vunpack.c.h.b16 %v1209
  %v1420 = vunpack.c.l.b16 %v1210
  %v1421 = vunpack.c.h.b16 %v1210
  %v1422 = vunpack.c.l.b16 %v1211
  %v1423 = vunpack.c.h.b16 %v1211
  %v1424 = vunpack.c.l.b16 %v1212
  %v1425 = vunpack.c.h.b16 %v1212
  %v1426 = vunpack.c.l.b16 %v1213
  %v1427 = vunpack.c.h.b16 %v1213
  %v1428 = vunpack.c.l.b16 %v1214
  %v1429 = vunpack.c.h.b16 %v1214
  %v1430 = vunpack.c.l.b16 %v1215
  %v1431 = vunpack.c.h.b16 %v1215
  %v1432 = vunpack.c.l.b16 %v1216
  %v1433 = vunpack.c.h.b16 %v1216
  %v1434 = vunpack.c.l.b16 %v1217
  %v1435 = vunpack.c.h.b16 %v1217
  %v1436 = vunpack.c.l.b16 %v1218
  %v1437 = vunpack.c.h.b16 %v1218
  %v1438 = vunpack.c.l.b16 %v1219
  %v1439 = vunpack.c.h.b16 %v1219
  %v1440 = vunpack.c.l.b16 %v1220
  %v1441 = vunpack.c.h.b16 %v1220
  %v1442 = vunpack.c.l.b16 %v1221
  %v1443 = vunpack.c.h.b16 %v1221
  %v1444 = vunpack.c.l.b16 %v1222
  %v1445 = vunpack.c.h.b16 %v1222
  %v1446 = vunpack.c.l.b16 %v1223
  %v1447 = vunpack.c.h.b16 %v1223
  %v1448 = vunpack.c.l.b16 %v1224
  %v1449 = vunpack.c.h.b16 %v1224
  %v1450 = vunpack.c.l.b16 %v1225
  %v1451 = vunpack.c.h.b16 %v1225
  %v1452 = vunpack.c.l.b16 %v1226
  %v1453 = vunpack.c.h.b16 %v1226
  %v1454 = vunpack.c.l.b16 %v1227
  %v1455 = vunpack.c.h.b16 %v1227
  %v1456 = vpack.c.b16 %v1364, %v1360
  %v1457 = vpack.c.b16 %v1365, %v1361
  %v1458 = vpack.c.b16 %v1366, %v1362
  %v1459 = vpack.c.b16 %v1367, %v1363
  %v1460 = vpack.c.b16 %v1372, %v1368
  %v1461 = vpack.c.b16 %v1373, %v1369
  %v1462 = vpack.c.b16 %v1374, %v1370
  %v1463 = vpack.c.b16 %v1375, %v1371
  %v1464 = vpack.c.b16 %v1380, %v1376
  %v1465 = vpack.c.b16 %v1381, %v1377
  %v1466 = vpack.c.b16 %v1382, %v1378
  %v1467 = vpack.c.b16 %v1383, %v1379
  %v1468 = vpack.c.b16 %v1388, %v1384
  %v1469 = vpack.c.b16 %v1389, %v1385
  %v1470 = vpack.c.b16 %v1390, %v1386
  %v1471 = vpack.c.b16 %v1391, %v1387
  %v1472 = vpack.c.b16 %v1396, %v1392
  %v1473 = vpack.c.b16 %v1397, %v1393
  %v1474 = vpack.c.b16 %v1398, %v1394
  %v1475 = vpack.c.b16 %v1399, %v1395
  %v1476 = vpack.c.b16 %v1404, %v1400
  %v1477 = vpack.c.b16 %v1405, %v1401
  %v1478 = vpack.c.b16 %v1406, %v1402
  %v1479 = vpack.c.b16 %v1407, %v1403
  %v1480 = vpack.c.b16 %v1412, %v1408
  %v1481 = vpack.c.b16 %v1413, %v1409
  %v1482 = vpack.c.b16 %v1414, %v1410
  %v1483 = vpack.c.b16 %v1415, %v1411
  %v1484 = vpack.c.b16 %v1420, %v1416
  %v1485 = vpack.c.b16 %v1421, %v1417
  %v1486 = vpack.c.b16 %v1422, %v1418
  %v1487 = vpack.c.b16 %v1423, %v1419
  %v1488 = vpack.c.b16 %v1428, %v1424
  %v1489 = vpack.c.b16 %v1429, %v1425
  %v1490 = vpack.c.b16 %v1430, %v1426
  %v1491 = vpack.c.b16 %v1431, %v1427
  %v1492 = vpack.c.b16 %v1436, %v1432
  %v1493 = vpack.c.b16 %v1437, %v1433
  %v1494 = vpack.c.b16 %v1438, %v1434
  %v1495 = vpack.c.b16 %v1439, %v1435
  %v1496 = vpack.c.b16 %v1444, %v1440
  %v1497 = vpack.c.b16 %v1445, %v1441
  %v1498 = vpack.c.b16 %v1446, %v1442
  %v1499 = vpack.c.b16 %v1447, %v1443
  %v1500 = vpack.c.b16 %v1452, %v1448
  %v1501 = vpack.c.b16 %v1453, %v1449
  %v1502 = vpack.c.b16 %v1454, %v1450
  %v1503 = vpack.c.b16 %v1455, %v1451
  %vm1552 = vcmask 523264
  %v1554 = vsel %vm1552, %v1301, 0
  %v1557 = vsel %vm1552, %v1303, 0
  %v1560 = vsel %vm1552, %v1305, 0
  %v1563 = vsel %vm1552, %v1307, 0
  %1565 = vmatprep.subr.bf16.mxu0 %v1485
  %1566 = vmatpush1.bf16.msra.mxu0 %v1484
  %1567 = vmatprep.subr.bf16.mxu0 %v1481
  %1568 = vmatpush1.bf16.msra.mxu0 %v1480
  %1569 = vmatprep.subr.bf16.mxu0 %v1477
  %1570 = vmatpush1.bf16.msra.mxu0 %v1476
  %1571 = vmatprep.subr.bf16.mxu0 %v1473
  %1572 = vmatpush1.bf16.msra.mxu0 %v1472
  %1573 = vmatprep.subr.bf16.mxu0 %v1469
  %1574 = vmatpush1.bf16.msra.mxu0 %v1468
  %1575 = vmatprep.subr.bf16.mxu0 %v1465
  %1576 = vmatpush1.bf16.msra.mxu0 %v1464
  %1577 = vmatprep.subr.bf16.mxu0 %v1461
  %1578 = vmatpush1.bf16.msra.mxu0 %v1460
  %1579 = vmatprep.subr.bf16.mxu0 %v1457
  %1580 = vmatpush1.bf16.msra.mxu0 %v1456
  %1581 = vmatprep.subr.bf16.mxu0 0
  %1582 = vmatpush2.bf16.msra.mxu0 0
  %1583 = vmatprep.subr.bf16.mxu0 0
  %1584 = vmatpush2.bf16.msra.mxu0 0
  %1585 = vmatprep.subr.bf16.mxu0 0
  %1586 = vmatpush2.bf16.msra.mxu0 0
  %1587 = vmatprep.subr.bf16.mxu0 0
  %1588 = vmatpush2.bf16.msra.mxu0 0
  %1589 = vmatprep.subr.bf16.mxu0 %v1501
  %1590 = vmatpush2.bf16.msra.mxu0 %v1500
  %1591 = vmatprep.subr.bf16.mxu0 %v1497
  %1592 = vmatpush2.bf16.msra.mxu0 %v1496
  %1593 = vmatprep.subr.bf16.mxu0 %v1493
  %1594 = vmatpush2.bf16.msra.mxu0 %v1492
  %1595 = vmatprep.subr.bf16.mxu0 %v1489
  %1596 = vmatpush2.bf16.msra.mxu0 %v1488
  %1597 = vmatprep.mubr.bf16.mxu0 %v1554
  %1598 = vmatmul.mubr.bf16.gmra.mxu0 %v1300
  %v1599 = vpop.f32.mrf.mxu0
  %v1600 = vadd.f32 %v1239, %v1599
  %v1601 = vpop.f32.mrf.mxu0
  %v1602 = vadd.f32 %v1239, %v1601
  %v1603 = vpop.f32.mrf.mxu0
  %v1604 = vadd.f32 %v1244, %v1603
  %v1605 = vpop.f32.mrf.mxu0
  %v1606 = vadd.f32 %v1244, %v1605
  %1607 = vmatprep.mubr.bf16.mxu0 %v1557
  %1608 = vmatmul.mubr.bf16.gmra.mxu0 %v1302
  %v1609 = vpop.f32.mrf.mxu0
  %v1610 = vadd.f32 %v1249, %v1609
  %v1611 = vpop.f32.mrf.mxu0
  %v1612 = vadd.f32 %v1249, %v1611
  %v1613 = vpop.f32.mrf.mxu0
  %v1614 = vadd.f32 %v1254, %v1613
  %v1615 = vpop.f32.mrf.mxu0
  %v1616 = vadd.f32 %v1254, %v1615
  %1617 = vmatprep.mubr.bf16.mxu0 %v1560
  %1618 = vmatmul.mubr.bf16.gmra.mxu0 %v1304
  %v1619 = vpop.f32.mrf.mxu0
  %v1620 = vadd.f32 %v1259, %v1619
  %v1621 = vpop.f32.mrf.mxu0
  %v1622 = vadd.f32 %v1259, %v1621
  %v1623 = vpop.f32.mrf.mxu0
  %v1624 = vadd.f32 %v1264, %v1623
  %v1625 = vpop.f32.mrf.mxu0
  %v1626 = vadd.f32 %v1264, %v1625
  %1627 = vmatprep.mubr.bf16.mxu0 %v1563
  %1628 = vmatmul.mubr.bf16.gmra.mxu0 %v1306
  %v1629 = vpop.f32.mrf.mxu0
  %v1630 = vadd.f32 %v1269, %v1629
  %v1631 = vpop.f32.mrf.mxu0
  %v1632 = vadd.f32 %v1269, %v1631
  %v1633 = vpop.f32.mrf.mxu0
  %v1634 = vadd.f32 %v1274, %v1633
  %v1635 = vpop.f32.mrf.mxu0
  %v1636 = vadd.f32 %v1274, %v1635
  %1637 = vdwg.mxu0
  %1638 = vmatprep.subr.bf16.mxu0 %v1487
  %1639 = vmatpush1.bf16.msra.mxu0 %v1486
  %1640 = vmatprep.subr.bf16.mxu0 %v1483
  %1641 = vmatpush1.bf16.msra.mxu0 %v1482
  %1642 = vmatprep.subr.bf16.mxu0 %v1479
  %1643 = vmatpush1.bf16.msra.mxu0 %v1478
  %1644 = vmatprep.subr.bf16.mxu0 %v1475
  %1645 = vmatpush1.bf16.msra.mxu0 %v1474
  %1646 = vmatprep.subr.bf16.mxu0 %v1471
  %1647 = vmatpush1.bf16.msra.mxu0 %v1470
  %1648 = vmatprep.subr.bf16.mxu0 %v1467
  %1649 = vmatpush1.bf16.msra.mxu0 %v1466
  %1650 = vmatprep.subr.bf16.mxu0 %v1463
  %1651 = vmatpush1.bf16.msra.mxu0 %v1462
  %1652 = vmatprep.subr.bf16.mxu0 %v1459
  %1653 = vmatpush1.bf16.msra.mxu0 %v1458
  %1654 = vmatprep.subr.bf16.mxu0 0
  %1655 = vmatpush2.bf16.msra.mxu0 0
  %1656 = vmatprep.subr.bf16.mxu0 0
  %1657 = vmatpush2.bf16.msra.mxu0 0
  %1658 = vmatprep.subr.bf16.mxu0 0
  %1659 = vmatpush2.bf16.msra.mxu0 0
  %1660 = vmatprep.subr.bf16.mxu0 0
  %1661 = vmatpush2.bf16.msra.mxu0 0
  %1662 = vmatprep.subr.bf16.mxu0 %v1503
  %1663 = vmatpush2.bf16.msra.mxu0 %v1502
  %1664 = vmatprep.subr.bf16.mxu0 %v1499
  %1665 = vmatpush2.bf16.msra.mxu0 %v1498
  %1666 = vmatprep.subr.bf16.mxu0 %v1495
  %1667 = vmatpush2.bf16.msra.mxu0 %v1494
  %1668 = vmatprep.subr.bf16.mxu0 %v1491
  %1669 = vmatpush2.bf16.msra.mxu0 %v1490
  %1670 = vmatprep.mubr.bf16.mxu0 %v1554
  %1671 = vmatmul.mubr.bf16.gmra.mxu0 %v1300
  %v1672 = vpop.f32.mrf.mxu0
  %v1673 = vadd.f32 %v1239, %v1672
  %v1674 = vpop.f32.mrf.mxu0
  %v1675 = vadd.f32 %v1239, %v1674
  %v1676 = vpop.f32.mrf.mxu0
  %v1677 = vadd.f32 %v1244, %v1676
  %v1678 = vpop.f32.mrf.mxu0
  %v1679 = vadd.f32 %v1244, %v1678
  %1680 = vmatprep.mubr.bf16.mxu0 %v1557
  %1681 = vmatmul.mubr.bf16.gmra.mxu0 %v1302
  %v1682 = vpop.f32.mrf.mxu0
  %v1683 = vadd.f32 %v1249, %v1682
  %v1684 = vpop.f32.mrf.mxu0
  %v1685 = vadd.f32 %v1249, %v1684
  %v1686 = vpop.f32.mrf.mxu0
  %v1687 = vadd.f32 %v1254, %v1686
  %v1688 = vpop.f32.mrf.mxu0
  %v1689 = vadd.f32 %v1254, %v1688
  %1690 = vmatprep.mubr.bf16.mxu0 %v1560
  %1691 = vmatmul.mubr.bf16.gmra.mxu0 %v1304
  %v1692 = vpop.f32.mrf.mxu0
  %v1693 = vadd.f32 %v1259, %v1692
  %v1694 = vpop.f32.mrf.mxu0
  %v1695 = vadd.f32 %v1259, %v1694
  %v1696 = vpop.f32.mrf.mxu0
  %v1697 = vadd.f32 %v1264, %v1696
  %v1698 = vpop.f32.mrf.mxu0
  %v1699 = vadd.f32 %v1264, %v1698
  %1700 = vmatprep.mubr.bf16.mxu0 %v1563
  %1701 = vmatmul.mubr.bf16.gmra.mxu0 %v1306
  %v1702 = vpop.f32.mrf.mxu0
  %v1703 = vadd.f32 %v1269, %v1702
  %v1704 = vpop.f32.mrf.mxu0
  %v1705 = vadd.f32 %v1269, %v1704
  %v1706 = vpop.f32.mrf.mxu0
  %v1707 = vadd.f32 %v1274, %v1706
  %v1708 = vpop.f32.mrf.mxu0
  %v1709 = vadd.f32 %v1274, %v1708
  %1710 = vdwg.mxu0
  %v1711 = vxor.u32 %v1600, 2147483648
  %v1712 = vxor.u32 %v1602, 2147483648
  %v1713 = vxor.u32 %v1673, 2147483648
  %v1714 = vxor.u32 %v1675, 2147483648
  %v1715 = vxor.u32 %v1604, 2147483648
  %v1716 = vxor.u32 %v1606, 2147483648
  %v1717 = vxor.u32 %v1677, 2147483648
  %v1718 = vxor.u32 %v1679, 2147483648
  %v1719 = vxor.u32 %v1610, 2147483648
  %v1720 = vxor.u32 %v1612, 2147483648
  %v1721 = vxor.u32 %v1683, 2147483648
  %v1722 = vxor.u32 %v1685, 2147483648
  %v1723 = vxor.u32 %v1614, 2147483648
  %v1724 = vxor.u32 %v1616, 2147483648
  %v1725 = vxor.u32 %v1687, 2147483648
  %v1726 = vxor.u32 %v1689, 2147483648
  %v1727 = vmul.f32 %v1711, 1.442695
  %v1728 = vpow.pop %v1727
  %v1729 = vmul.f32 %v1712, 1.442695
  %v1730 = vpow.pop %v1729
  %v1731 = vmul.f32 %v1713, 1.442695
  %v1732 = vpow.pop %v1731
  %v1733 = vmul.f32 %v1714, 1.442695
  %v1734 = vpow.pop %v1733
  %v1735 = vmul.f32 %v1715, 1.442695
  %v1736 = vpow.pop %v1735
  %v1737 = vmul.f32 %v1716, 1.442695
  %v1738 = vpow.pop %v1737
  %v1739 = vmul.f32 %v1717, 1.442695
  %v1740 = vpow.pop %v1739
  %v1741 = vmul.f32 %v1718, 1.442695
  %v1742 = vpow.pop %v1741
  %v1743 = vmul.f32 %v1719, 1.442695
  %v1744 = vpow.pop %v1743
  %v1745 = vmul.f32 %v1720, 1.442695
  %v1746 = vpow.pop %v1745
  %v1747 = vmul.f32 %v1721, 1.442695
  %v1748 = vpow.pop %v1747
  %v1749 = vmul.f32 %v1722, 1.442695
  %v1750 = vpow.pop %v1749
  %v1751 = vmul.f32 %v1723, 1.442695
  %v1752 = vpow.pop %v1751
  %v1753 = vmul.f32 %v1724, 1.442695
  %v1754 = vpow.pop %v1753
  %v1755 = vmul.f32 %v1725, 1.442695
  %v1756 = vpow.pop %v1755
  %v1757 = vmul.f32 %v1726, 1.442695
  %v1758 = vpow.pop %v1757
  %v1759 = vadd.f32 %v1728, 1.0
  %v1760 = vadd.f32 %v1730, 1.0
  %v1761 = vadd.f32 %v1732, 1.0
  %v1762 = vadd.f32 %v1734, 1.0
  %v1763 = vadd.f32 %v1736, 1.0
  %v1764 = vadd.f32 %v1738, 1.0
  %v1765 = vadd.f32 %v1740, 1.0
  %v1766 = vadd.f32 %v1742, 1.0
  %v1767 = vadd.f32 %v1744, 1.0
  %v1768 = vadd.f32 %v1746, 1.0
  %v1769 = vadd.f32 %v1748, 1.0
  %v1770 = vadd.f32 %v1750, 1.0
  %v1771 = vadd.f32 %v1752, 1.0
  %v1772 = vadd.f32 %v1754, 1.0
  %v1773 = vadd.f32 %v1756, 1.0
  %v1774 = vadd.f32 %v1758, 1.0
  %v1775 = vrcp.pop %v1759
  %v1776 = vmul.f32 1.0, %v1775
  %v1777 = vrcp.pop %v1760
  %v1778 = vmul.f32 1.0, %v1777
  %v1779 = vrcp.pop %v1761
  %v1780 = vmul.f32 1.0, %v1779
  %v1781 = vrcp.pop %v1762
  %v1782 = vmul.f32 1.0, %v1781
  %v1783 = vrcp.pop %v1763
  %v1784 = vmul.f32 1.0, %v1783
  %v1785 = vrcp.pop %v1764
  %v1786 = vmul.f32 1.0, %v1785
  %v1787 = vrcp.pop %v1765
  %v1788 = vmul.f32 1.0, %v1787
  %v1789 = vrcp.pop %v1766
  %v1790 = vmul.f32 1.0, %v1789
  %v1791 = vrcp.pop %v1767
  %v1792 = vmul.f32 1.0, %v1791
  %v1793 = vrcp.pop %v1768
  %v1794 = vmul.f32 1.0, %v1793
  %v1795 = vrcp.pop %v1769
  %v1796 = vmul.f32 1.0, %v1795
  %v1797 = vrcp.pop %v1770
  %v1798 = vmul.f32 1.0, %v1797
  %v1799 = vrcp.pop %v1771
  %v1800 = vmul.f32 1.0, %v1799
  %v1801 = vrcp.pop %v1772
  %v1802 = vmul.f32 1.0, %v1801
  %v1803 = vrcp.pop %v1773
  %v1804 = vmul.f32 1.0, %v1803
  %v1805 = vrcp.pop %v1774
  %v1806 = vmul.f32 1.0, %v1805
  %v1807 = vtanh.pop %v1620
  %v1808 = vtanh.pop %v1622
  %v1809 = vtanh.pop %v1693
  %v1810 = vtanh.pop %v1695
  %v1811 = vtanh.pop %v1624
  %v1812 = vtanh.pop %v1626
  %v1813 = vtanh.pop %v1697
  %v1814 = vtanh.pop %v1699
  %v1815 = vtanh.pop %v1630
  %v1816 = vtanh.pop %v1632
  %v1817 = vtanh.pop %v1703
  %v1818 = vtanh.pop %v1705
  %v1819 = vtanh.pop %v1634
  %v1820 = vtanh.pop %v1636
  %v1821 = vtanh.pop %v1707
  %v1822 = vtanh.pop %v1709
  %v1823 = vmul.f32 %v1776, %v1807
  %v1824 = vmul.f32 %v1778, %v1808
  %v1825 = vmul.f32 %v1780, %v1809
  %v1826 = vmul.f32 %v1782, %v1810
  %v1827 = vmul.f32 %v1784, %v1811
  %v1828 = vmul.f32 %v1786, %v1812
  %v1829 = vmul.f32 %v1788, %v1813
  %v1830 = vmul.f32 %v1790, %v1814
  %v1831 = vmul.f32 %v1792, %v1815
  %v1832 = vmul.f32 %v1794, %v1816
  %v1833 = vmul.f32 %v1796, %v1817
  %v1834 = vmul.f32 %v1798, %v1818
  %v1835 = vmul.f32 %v1800, %v1819
  %v1836 = vmul.f32 %v1802, %v1820
  %v1837 = vmul.f32 %v1804, %v1821
  %v1838 = vmul.f32 %v1806, %v1822
  %v1839 = vld [vmem:[%s9] sm:$0xf]
  %v1840 = vld [vmem:[%s9 + $0x4] sm:$0xf]
  %v1841 = vld [vmem:[%s9 + $0x8] sm:$0xf]
  %v1842 = vld [vmem:[%s9 + $0xc] sm:$0xf]
  %v1843 = vld [vmem:[%s9 + $0x10] sm:$0xf]
  %v1844 = vld [vmem:[%s9 + $0x14] sm:$0xf]
  %v1845 = vld [vmem:[%s9 + $0x18] sm:$0xf]
  %v1846 = vld [vmem:[%s9 + $0x1c] sm:$0xf]
  %v1847 = vpack.c.bf16 %v1827, %v1823
  %v1848 = vpack.c.bf16 %v1828, %v1824
  %v1849 = vpack.c.bf16 %v1829, %v1825
  %v1850 = vpack.c.bf16 %v1830, %v1826
  %v1851 = vpack.c.bf16 %v1835, %v1831
  %v1852 = vpack.c.bf16 %v1836, %v1832
  %v1853 = vpack.c.bf16 %v1837, %v1833
  %v1854 = vpack.c.bf16 %v1838, %v1834
  %v1855 = vld [vmem:[%s10] sm:$0xff]
  %v1856 = vld [vmem:[%s10 + $0x8] sm:$0xff]
  %v1857 = vld [vmem:[%s10 + $0x10] sm:$0xff]
  %v1858 = vld [vmem:[%s10 + $0x18] sm:$0xff]
  %v1859 = vld [vmem:[%s10 + $0x20] sm:$0xff]
  %v1860 = vld [vmem:[%s10 + $0x28] sm:$0xff]
  %v1861 = vld [vmem:[%s10 + $0x30] sm:$0xff]
  %v1862 = vld [vmem:[%s10 + $0x38] sm:$0xff]
  %1864 = vset.pattern.permute.xlu0 0
  %1865 = vperm.xlu0 %1864, %v1855
  %v1866 = vpop.permute.xlu0 %1865
  %1869 = vset.pattern.permute.xlu0 0
  %1870 = vperm.xlu0 %1869, %v1856
  %v1871 = vpop.permute.xlu0 %1870
  %1874 = vset.pattern.permute.xlu0 0
  %1875 = vperm.xlu0 %1874, %v1857
  %v1876 = vpop.permute.xlu0 %1875
  %1879 = vset.pattern.permute.xlu0 0
  %1880 = vperm.xlu0 %1879, %v1858
  %v1881 = vpop.permute.xlu0 %1880
  %1884 = vset.pattern.permute.xlu0 0
  %1885 = vperm.xlu0 %1884, %v1859
  %v1886 = vpop.permute.xlu0 %1885
  %1889 = vset.pattern.permute.xlu0 0
  %1890 = vperm.xlu0 %1889, %v1860
  %v1891 = vpop.permute.xlu0 %1890
  %1894 = vset.pattern.permute.xlu0 0
  %1895 = vperm.xlu0 %1894, %v1861
  %v1896 = vpop.permute.xlu0 %1895
  %1899 = vset.pattern.permute.xlu0 0
  %1900 = vperm.xlu0 %1899, %v1862
  %v1901 = vpop.permute.xlu0 %1900
  %v1911 = vunpack.c.l.b16 %v1839
  %v1912 = vunpack.c.l.b16 %v1840
  %v1913 = vunpack.c.l.b16 %v1841
  %v1914 = vunpack.c.l.b16 %v1842
  %v1915 = vunpack.c.l.b16 %v1843
  %v1916 = vunpack.c.l.b16 %v1844
  %v1917 = vunpack.c.l.b16 %v1845
  %v1918 = vunpack.c.l.b16 %v1846
  %v1919 = vpack.c.b16 %v1912, %v1911
  %v1920 = vpack.c.b16 %v1914, %v1913
  %v1921 = vpack.c.b16 %v1916, %v1915
  %v1922 = vpack.c.b16 %v1918, %v1917
  %vm1923 = vcmask 261120
  %v1925 = vsel %vm1923, %v1919, 0
  %v1928 = vsel %vm1923, %v1920, 0
  %v1931 = vsel %vm1923, %v1921, 0
  %v1934 = vsel %vm1923, %v1922, 0
  %1936 = vmatprep.subr.bf16.mxu0 0
  %1937 = vmatpush1.bf16.msra.mxu0 0
  %1938 = vmatprep.subr.bf16.mxu0 0
  %1939 = vmatpush1.bf16.msra.mxu0 0
  %1940 = vmatprep.subr.bf16.mxu0 0
  %1941 = vmatpush1.bf16.msra.mxu0 0
  %1942 = vmatprep.subr.bf16.mxu0 0
  %1943 = vmatpush1.bf16.msra.mxu0 0
  %1944 = vmatprep.subr.bf16.mxu0 0
  %1945 = vmatpush1.bf16.msra.mxu0 0
  %1946 = vmatprep.subr.bf16.mxu0 0
  %1947 = vmatpush1.bf16.msra.mxu0 0
  %1948 = vmatprep.subr.bf16.mxu0 %v1852
  %1949 = vmatpush1.bf16.msra.mxu0 %v1851
  %1950 = vmatprep.subr.bf16.mxu0 %v1848
  %1951 = vmatpush1.bf16.msra.mxu0 %v1847
  %1952 = vmatprep.subr.bf16.mxu0 0
  %1953 = vmatpush2.bf16.msra.mxu0 0
  %1954 = vmatprep.subr.bf16.mxu0 0
  %1955 = vmatpush2.bf16.msra.mxu0 0
  %1956 = vmatprep.subr.bf16.mxu0 0
  %1957 = vmatpush2.bf16.msra.mxu0 0
  %1958 = vmatprep.subr.bf16.mxu0 0
  %1959 = vmatpush2.bf16.msra.mxu0 0
  %1960 = vmatprep.subr.bf16.mxu0 0
  %1961 = vmatpush2.bf16.msra.mxu0 0
  %1962 = vmatprep.subr.bf16.mxu0 0
  %1963 = vmatpush2.bf16.msra.mxu0 0
  %1964 = vmatprep.subr.bf16.mxu0 0
  %1965 = vmatpush2.bf16.msra.mxu0 0
  %1966 = vmatprep.subr.bf16.mxu0 0
  %1967 = vmatpush2.bf16.msra.mxu0 0
  %1968 = vmatprep.mubr.bf16.mxu0 0
  %1969 = vmatmul.mubr.bf16.gmra.mxu0 %v1925
  %v1970 = vpop.f32.mrf.mxu0
  %v1971 = vadd.f32 %v1866, %v1970
  %v1972 = vpop.f32.mrf.mxu0
  %v1973 = vadd.f32 %v1866, %v1972
  %v1974 = vpop.f32.mrf.mxu0
  %v1975 = vadd.f32 %v1871, %v1974
  %v1976 = vpop.f32.mrf.mxu0
  %v1977 = vadd.f32 %v1871, %v1976
  %1978 = vmatprep.mubr.bf16.mxu0 0
  %1979 = vmatmul.mubr.bf16.gmra.mxu0 %v1928
  %v1980 = vpop.f32.mrf.mxu0
  %v1981 = vadd.f32 %v1876, %v1980
  %v1982 = vpop.f32.mrf.mxu0
  %v1983 = vadd.f32 %v1876, %v1982
  %v1984 = vpop.f32.mrf.mxu0
  %v1985 = vadd.f32 %v1881, %v1984
  %v1986 = vpop.f32.mrf.mxu0
  %v1987 = vadd.f32 %v1881, %v1986
  %1988 = vmatprep.mubr.bf16.mxu0 0
  %1989 = vmatmul.mubr.bf16.gmra.mxu0 %v1931
  %v1990 = vpop.f32.mrf.mxu0
  %v1991 = vadd.f32 %v1886, %v1990
  %v1992 = vpop.f32.mrf.mxu0
  %v1993 = vadd.f32 %v1886, %v1992
  %v1994 = vpop.f32.mrf.mxu0
  %v1995 = vadd.f32 %v1891, %v1994
  %v1996 = vpop.f32.mrf.mxu0
  %v1997 = vadd.f32 %v1891, %v1996
  %1998 = vmatprep.mubr.bf16.mxu0 0
  %1999 = vmatmul.mubr.bf16.gmra.mxu0 %v1934
  %v2000 = vpop.f32.mrf.mxu0
  %v2001 = vadd.f32 %v1896, %v2000
  %v2002 = vpop.f32.mrf.mxu0
  %v2003 = vadd.f32 %v1896, %v2002
  %v2004 = vpop.f32.mrf.mxu0
  %v2005 = vadd.f32 %v1901, %v2004
  %v2006 = vpop.f32.mrf.mxu0
  %v2007 = vadd.f32 %v1901, %v2006
  %2008 = vdwg.mxu0
  %2009 = vmatprep.subr.bf16.mxu0 0
  %2010 = vmatpush1.bf16.msra.mxu0 0
  %2011 = vmatprep.subr.bf16.mxu0 0
  %2012 = vmatpush1.bf16.msra.mxu0 0
  %2013 = vmatprep.subr.bf16.mxu0 0
  %2014 = vmatpush1.bf16.msra.mxu0 0
  %2015 = vmatprep.subr.bf16.mxu0 0
  %2016 = vmatpush1.bf16.msra.mxu0 0
  %2017 = vmatprep.subr.bf16.mxu0 0
  %2018 = vmatpush1.bf16.msra.mxu0 0
  %2019 = vmatprep.subr.bf16.mxu0 0
  %2020 = vmatpush1.bf16.msra.mxu0 0
  %2021 = vmatprep.subr.bf16.mxu0 %v1854
  %2022 = vmatpush1.bf16.msra.mxu0 %v1853
  %2023 = vmatprep.subr.bf16.mxu0 %v1850
  %2024 = vmatpush1.bf16.msra.mxu0 %v1849
  %2025 = vmatprep.subr.bf16.mxu0 0
  %2026 = vmatpush2.bf16.msra.mxu0 0
  %2027 = vmatprep.subr.bf16.mxu0 0
  %2028 = vmatpush2.bf16.msra.mxu0 0
  %2029 = vmatprep.subr.bf16.mxu0 0
  %2030 = vmatpush2.bf16.msra.mxu0 0
  %2031 = vmatprep.subr.bf16.mxu0 0
  %2032 = vmatpush2.bf16.msra.mxu0 0
  %2033 = vmatprep.subr.bf16.mxu0 0
  %2034 = vmatpush2.bf16.msra.mxu0 0
  %2035 = vmatprep.subr.bf16.mxu0 0
  %2036 = vmatpush2.bf16.msra.mxu0 0
  %2037 = vmatprep.subr.bf16.mxu0 0
  %2038 = vmatpush2.bf16.msra.mxu0 0
  %2039 = vmatprep.subr.bf16.mxu0 0
  %2040 = vmatpush2.bf16.msra.mxu0 0
  %2041 = vmatprep.mubr.bf16.mxu0 0
  %2042 = vmatmul.mubr.bf16.gmra.mxu0 %v1925
  %v2043 = vpop.f32.mrf.mxu0
  %v2044 = vadd.f32 %v1866, %v2043
  %v2045 = vpop.f32.mrf.mxu0
  %v2046 = vadd.f32 %v1866, %v2045
  %v2047 = vpop.f32.mrf.mxu0
  %v2048 = vadd.f32 %v1871, %v2047
  %v2049 = vpop.f32.mrf.mxu0
  %v2050 = vadd.f32 %v1871, %v2049
  %2051 = vmatprep.mubr.bf16.mxu0 0
  %2052 = vmatmul.mubr.bf16.gmra.mxu0 %v1928
  %v2053 = vpop.f32.mrf.mxu0
  %v2054 = vadd.f32 %v1876, %v2053
  %v2055 = vpop.f32.mrf.mxu0
  %v2056 = vadd.f32 %v1876, %v2055
  %v2057 = vpop.f32.mrf.mxu0
  %v2058 = vadd.f32 %v1881, %v2057
  %v2059 = vpop.f32.mrf.mxu0
  %v2060 = vadd.f32 %v1881, %v2059
  %2061 = vmatprep.mubr.bf16.mxu0 0
  %2062 = vmatmul.mubr.bf16.gmra.mxu0 %v1931
  %v2063 = vpop.f32.mrf.mxu0
  %v2064 = vadd.f32 %v1886, %v2063
  %v2065 = vpop.f32.mrf.mxu0
  %v2066 = vadd.f32 %v1886, %v2065
  %v2067 = vpop.f32.mrf.mxu0
  %v2068 = vadd.f32 %v1891, %v2067
  %v2069 = vpop.f32.mrf.mxu0
  %v2070 = vadd.f32 %v1891, %v2069
  %2071 = vmatprep.mubr.bf16.mxu0 0
  %2072 = vmatmul.mubr.bf16.gmra.mxu0 %v1934
  %v2073 = vpop.f32.mrf.mxu0
  %v2074 = vadd.f32 %v1896, %v2073
  %v2075 = vpop.f32.mrf.mxu0
  %v2076 = vadd.f32 %v1896, %v2075
  %v2077 = vpop.f32.mrf.mxu0
  %v2078 = vadd.f32 %v1901, %v2077
  %v2079 = vpop.f32.mrf.mxu0
  %v2080 = vadd.f32 %v1901, %v2079
  %2081 = vdwg.mxu0
  %v2082 = vadd.f32 %v253, %v1971
  %v2083 = vadd.f32 %v254, %v1973
  %v2084 = vadd.f32 %v255, %v2044
  %v2085 = vadd.f32 %v256, %v2046
  %v2086 = vadd.f32 %v257, %v1975
  %v2087 = vadd.f32 %v258, %v1977
  %v2088 = vadd.f32 %v259, %v2048
  %v2089 = vadd.f32 %v260, %v2050
  %v2090 = vadd.f32 %v261, %v1981
  %v2091 = vadd.f32 %v262, %v1983
  %v2092 = vadd.f32 %v263, %v2054
  %v2093 = vadd.f32 %v264, %v2056
  %v2094 = vadd.f32 %v265, %v1985
  %v2095 = vadd.f32 %v266, %v1987
  %v2096 = vadd.f32 %v267, %v2058
  %v2097 = vadd.f32 %v268, %v2060
  %v2098 = vmul.f32 %v2082, 0.70710677
  %v2099 = vmul.f32 %v2083, 0.70710677
  %v2100 = vmul.f32 %v2084, 0.70710677
  %v2101 = vmul.f32 %v2085, 0.70710677
  %v2102 = vmul.f32 %v2086, 0.70710677
  %v2103 = vmul.f32 %v2087, 0.70710677
  %v2104 = vmul.f32 %v2088, 0.70710677
  %v2105 = vmul.f32 %v2089, 0.70710677
  %v2106 = vmul.f32 %v2090, 0.70710677
  %v2107 = vmul.f32 %v2091, 0.70710677
  %v2108 = vmul.f32 %v2092, 0.70710677
  %v2109 = vmul.f32 %v2093, 0.70710677
  %v2110 = vmul.f32 %v2094, 0.70710677
  %v2111 = vmul.f32 %v2095, 0.70710677
  %v2112 = vmul.f32 %v2096, 0.70710677
  %v2113 = vmul.f32 %v2097, 0.70710677
  %v2114 = vld [vmem:[#allocation3] sm:$0xff]
  %v2115 = vld [vmem:[#allocation3 + $0x8] sm:$0xff]
  %v2116 = vld [vmem:[#allocation3 + $0x10] sm:$0xff]
  %v2117 = vld [vmem:[#allocation3 + $0x18] sm:$0xff]
  %v2118 = vld [vmem:[#allocation3 + $0x20] sm:$0xff]
  %v2119 = vld [vmem:[#allocation3 + $0x28] sm:$0xff]
  %v2120 = vld [vmem:[#allocation3 + $0x30] sm:$0xff]
  %v2121 = vld [vmem:[#allocation3 + $0x38] sm:$0xff]
  %v2122 = vld [vmem:[#allocation3 + $0x40] sm:$0xff]
  %v2123 = vld [vmem:[#allocation3 + $0x48] sm:$0xff]
  %v2124 = vld [vmem:[#allocation3 + $0x50] sm:$0xff]
  %v2125 = vld [vmem:[#allocation3 + $0x58] sm:$0xff]
  %v2126 = vld [vmem:[#allocation3 + $0x60] sm:$0xff]
  %v2127 = vld [vmem:[#allocation3 + $0x68] sm:$0xff]
  %v2128 = vld [vmem:[#allocation3 + $0x70] sm:$0xff]
  %v2129 = vld [vmem:[#allocation3 + $0x78] sm:$0xff]
  %v2130 = vadd.f32 %v2114, %v1991
  %v2131 = vadd.f32 %v2115, %v1993
  %v2132 = vadd.f32 %v2116, %v2064
  %v2133 = vadd.f32 %v2117, %v2066
  %v2134 = vadd.f32 %v2118, %v1995
  %v2135 = vadd.f32 %v2119, %v1997
  %v2136 = vadd.f32 %v2120, %v2068
  %v2137 = vadd.f32 %v2121, %v2070
  %v2138 = vadd.f32 %v2122, %v2001
  %v2139 = vadd.f32 %v2123, %v2003
  %v2140 = vadd.f32 %v2124, %v2074
  %v2141 = vadd.f32 %v2125, %v2076
  %v2142 = vadd.f32 %v2126, %v2005
  %v2143 = vadd.f32 %v2127, %v2007
  %v2144 = vadd.f32 %v2128, %v2078
  %v2145 = vadd.f32 %v2129, %v2080
  %2146 = vst [vmem:[#allocation3] sm:$0xff] %v2130
  %2147 = vst [vmem:[#allocation3 + $0x8] sm:$0xff] %v2131
  %2148 = vst [vmem:[#allocation3 + $0x10] sm:$0xff] %v2132
  %2149 = vst [vmem:[#allocation3 + $0x18] sm:$0xff] %v2133
  %2150 = vst [vmem:[#allocation3 + $0x20] sm:$0xff] %v2134
  %2151 = vst [vmem:[#allocation3 + $0x28] sm:$0xff] %v2135
  %2152 = vst [vmem:[#allocation3 + $0x30] sm:$0xff] %v2136
  %2153 = vst [vmem:[#allocation3 + $0x38] sm:$0xff] %v2137
  %2154 = vst [vmem:[#allocation3 + $0x40] sm:$0xff] %v2138
  %2155 = vst [vmem:[#allocation3 + $0x48] sm:$0xff] %v2139
  %2156 = vst [vmem:[#allocation3 + $0x50] sm:$0xff] %v2140
  %2157 = vst [vmem:[#allocation3 + $0x58] sm:$0xff] %v2141
  %2158 = vst [vmem:[#allocation3 + $0x60] sm:$0xff] %v2142
  %2159 = vst [vmem:[#allocation3 + $0x68] sm:$0xff] %v2143
  %2160 = vst [vmem:[#allocation3 + $0x70] sm:$0xff] %v2144
  %2161 = vst [vmem:[#allocation3 + $0x78] sm:$0xff] %v2145
  %s2162 = scalar_lea.vmem %s2, 128
  %v2163 = vld [vmem:[%s2162] sm:$0xff]
  %v2164 = vld [vmem:[%s2162 + $0x8] sm:$0xff]
  %v2165 = vld [vmem:[%s2162 + $0x10] sm:$0xff]
  %v2166 = vld [vmem:[%s2162 + $0x18] sm:$0xff]
  %v2167 = vld [vmem:[%s2162 + $0x20] sm:$0xff]
  %v2168 = vld [vmem:[%s2162 + $0x28] sm:$0xff]
  %v2169 = vld [vmem:[%s2162 + $0x30] sm:$0xff]
  %v2170 = vld [vmem:[%s2162 + $0x38] sm:$0xff]
  %v2171 = vld [vmem:[%s2162 + $0x40] sm:$0xff]
  %v2172 = vld [vmem:[%s2162 + $0x48] sm:$0xff]
  %v2173 = vld [vmem:[%s2162 + $0x50] sm:$0xff]
  %v2174 = vld [vmem:[%s2162 + $0x58] sm:$0xff]
  %v2175 = vld [vmem:[%s2162 + $0x60] sm:$0xff]
  %v2176 = vld [vmem:[%s2162 + $0x68] sm:$0xff]
  %v2177 = vld [vmem:[%s2162 + $0x70] sm:$0xff]
  %v2178 = vld [vmem:[%s2162 + $0x78] sm:$0xff]
  %v2179 = vadd.f32 %v2098, %v2163
  %v2180 = vadd.f32 %v2099, %v2164
  %v2181 = vadd.f32 %v2100, %v2165
  %v2182 = vadd.f32 %v2101, %v2166
  %v2183 = vadd.f32 %v2102, %v2167
  %v2184 = vadd.f32 %v2103, %v2168
  %v2185 = vadd.f32 %v2104, %v2169
  %v2186 = vadd.f32 %v2105, %v2170
  %v2187 = vadd.f32 %v2106, %v2171
  %v2188 = vadd.f32 %v2107, %v2172
  %v2189 = vadd.f32 %v2108, %v2173
  %v2190 = vadd.f32 %v2109, %v2174
  %v2191 = vadd.f32 %v2110, %v2175
  %v2192 = vadd.f32 %v2111, %v2176
  %v2193 = vadd.f32 %v2112, %v2177
  %v2194 = vadd.f32 %v2113, %v2178
  %v2195 = vpack.c.bf16 %v2183, %v2179
  %v2196 = vpack.c.bf16 %v2184, %v2180
  %v2197 = vpack.c.bf16 %v2185, %v2181
  %v2198 = vpack.c.bf16 %v2186, %v2182
  %v2199 = vpack.c.bf16 %v2191, %v2187
  %v2200 = vpack.c.bf16 %v2192, %v2188
  %v2201 = vpack.c.bf16 %v2193, %v2189
  %v2202 = vpack.c.bf16 %v2194, %v2190
  %v2211 = vunpack.c.l.b16 %v2195
  %v2212 = vunpack.c.l.b16 %v2196
  %v2213 = vunpack.c.l.b16 %v2197
  %v2214 = vunpack.c.l.b16 %v2198
  %v2215 = vunpack.c.h.b16 %v2195
  %v2216 = vunpack.c.h.b16 %v2196
  %v2217 = vunpack.c.h.b16 %v2197
  %v2218 = vunpack.c.h.b16 %v2198
  %v2219 = vunpack.c.l.b16 %v2199
  %v2220 = vunpack.c.l.b16 %v2200
  %v2221 = vunpack.c.l.b16 %v2201
  %v2222 = vunpack.c.l.b16 %v2202
  %v2223 = vunpack.c.h.b16 %v2199
  %v2224 = vunpack.c.h.b16 %v2200
  %v2225 = vunpack.c.h.b16 %v2201
  %v2226 = vunpack.c.h.b16 %v2202
  %v2227 = vpack.c.b16 %v2212, %v2211
  %v2228 = vpack.c.b16 %v2214, %v2213
  %v2229 = vpack.c.b16 %v2216, %v2215
  %v2230 = vpack.c.b16 %v2218, %v2217
  %v2231 = vpack.c.b16 %v2220, %v2219
  %v2232 = vpack.c.b16 %v2222, %v2221
  %v2233 = vpack.c.b16 %v2224, %v2223
  %v2234 = vpack.c.b16 %v2226, %v2225
  %2243 = vst [vmem:[#allocation2 + $0x40] sm:$0xff] %v2227
  %2244 = vst [vmem:[#allocation2 + $0x48] sm:$0xff] %v2228
  %2245 = vst [vmem:[#allocation2 + $0x50] sm:$0xff] %v2229
  %2246 = vst [vmem:[#allocation2 + $0x58] sm:$0xff] %v2230
  %2247 = vst [vmem:[#allocation2 + $0x60] sm:$0xff] %v2231
  %2248 = vst [vmem:[#allocation2 + $0x68] sm:$0xff] %v2232
  %2249 = vst [vmem:[#allocation2 + $0x70] sm:$0xff] %v2233
  %2250 = vst [vmem:[#allocation2 + $0x78] sm:$0xff] %v2234
  %2251 = vrot.lane.b32.xlu0 %v2198, 2
  %v2252 = vpop.permute.xlu0 %2251
  %2253 = vrot.lane.b32.xlu0 %v2202, 2
  %v2254 = vpop.permute.xlu0 %2253
  %2255 = vrot.lane.b32.xlu0 %v2195, 2
  %v2256 = vpop.permute.xlu0 %2255
  %2257 = vrot.lane.b32.xlu0 %v2196, 2
  %v2258 = vpop.permute.xlu0 %2257
  %2259 = vrot.lane.b32.xlu0 %v2197, 2
  %v2260 = vpop.permute.xlu0 %2259
  %2261 = vrot.lane.b32.xlu0 %v2199, 2
  %v2262 = vpop.permute.xlu0 %2261
  %2263 = vrot.lane.b32.xlu0 %v2200, 2
  %v2264 = vpop.permute.xlu0 %2263
  %2265 = vrot.lane.b32.xlu0 %v2201, 2
  %v2266 = vpop.permute.xlu0 %2265
  %vm2267 = vcmask 15360
  %v2268 = vsel %vm2267, %v2256, %v2258
  %v2269 = vsel %vm2267, %v2258, %v2260
  %v2270 = vsel %vm2267, %v2260, %v2252
  %v2271 = vsel %vm2267, %v2262, %v2264
  %v2272 = vsel %vm2267, %v2264, %v2266
  %v2273 = vsel %vm2267, %v2266, %v2254
  %vm2280 = vcmask 15360
  %v2283 = vsel %vm2280, %v2252, %v2256
  %v2287 = vsel %vm2280, %v2254, %v2262
  %vm2289 = vmpackc.low %vm601, %vm600
  %vm2290 = vmpackc.low %vm603, %vm602
  %v2291 = vsel %vm2289, 65537, 0
  %v2292 = vsel %vm2290, 65537, 0
  %v2293 = vlaneseq
  %v2294 = vshrl.u32 %v2293, 7
  %v2295 = vsub.s32 0, %v2294
  %v2296 = vrot.slane %v2291, %v2295
  %v2297 = vlaneseq
  %v2298 = vshrl.u32 %v2297, 7
  %v2299 = vsub.s32 4, %v2298
  %v2300 = vrot.slane %v2291, %v2299
  %v2301 = vlaneseq
  %v2302 = vshrl.u32 %v2301, 7
  %v2303 = vsub.s32 0, %v2302
  %v2304 = vrot.slane %v2292, %v2303
  %v2305 = vlaneseq
  %v2306 = vshrl.u32 %v2305, 7
  %v2307 = vsub.s32 4, %v2306
  %v2308 = vrot.slane %v2292, %v2307
  %vm2309 = vcmp.ne.s16.totalorder %v2296, 0
  %vm2310 = vcmp.ne.s16.totalorder %v2300, 0
  %vm2311 = vcmp.ne.s16.totalorder %v2304, 0
  %vm2312 = vcmp.ne.s16.totalorder %v2308, 0
  %v2313 = vsel %vm2309, %v2283, 0
  %v2314 = vsel %vm2310, %v2268, 0
  %v2315 = vsel %vm2311, %v2269, 0
  %v2316 = vsel %vm2312, %v2270, 0
  %v2317 = vsel %vm2309, %v2287, 0
  %v2318 = vsel %vm2310, %v2271, 0
  %v2319 = vsel %vm2311, %v2272, 0
  %v2320 = vsel %vm2312, %v2273, 0
  %v2329 = vunpack.c.l.b16 %v2313
  %v2330 = vunpack.c.l.b16 %v2314
  %v2331 = vunpack.c.l.b16 %v2315
  %v2332 = vunpack.c.l.b16 %v2316
  %v2333 = vunpack.c.h.b16 %v2313
  %v2334 = vunpack.c.h.b16 %v2314
  %v2335 = vunpack.c.h.b16 %v2315
  %v2336 = vunpack.c.h.b16 %v2316
  %v2337 = vunpack.c.l.b16 %v2317
  %v2338 = vunpack.c.l.b16 %v2318
  %v2339 = vunpack.c.l.b16 %v2319
  %v2340 = vunpack.c.l.b16 %v2320
  %v2341 = vunpack.c.h.b16 %v2317
  %v2342 = vunpack.c.h.b16 %v2318
  %v2343 = vunpack.c.h.b16 %v2319
  %v2344 = vunpack.c.h.b16 %v2320
  %v2345 = vpack.c.b16 %v2330, %v2329
  %v2346 = vpack.c.b16 %v2332, %v2331
  %v2347 = vpack.c.b16 %v2334, %v2333
  %v2348 = vpack.c.b16 %v2336, %v2335
  %v2349 = vpack.c.b16 %v2338, %v2337
  %v2350 = vpack.c.b16 %v2340, %v2339
  %v2351 = vpack.c.b16 %v2342, %v2341
  %v2352 = vpack.c.b16 %v2344, %v2343
  %2361 = vst [vmem:[#allocation2] sm:$0xff] %v2345
  %2362 = vst [vmem:[#allocation2 + $0x8] sm:$0xff] %v2346
  %2363 = vst [vmem:[#allocation2 + $0x10] sm:$0xff] %v2347
  %2364 = vst [vmem:[#allocation2 + $0x18] sm:$0xff] %v2348
  %2365 = vst [vmem:[#allocation2 + $0x20] sm:$0xff] %v2349
  %2366 = vst [vmem:[#allocation2 + $0x28] sm:$0xff] %v2350
  %2367 = vst [vmem:[#allocation2 + $0x30] sm:$0xff] %v2351
  %2368 = vst [vmem:[#allocation2 + $0x38] sm:$0xff] %v2352
  %2369 = vrot.lane.b32.xlu0 %v2195, 126
  %v2370 = vpop.permute.xlu0 %2369
  %2371 = vrot.lane.b32.xlu0 %v2196, 126
  %v2372 = vpop.permute.xlu0 %2371
  %2373 = vrot.lane.b32.xlu0 %v2197, 126
  %v2374 = vpop.permute.xlu0 %2373
  %2375 = vrot.lane.b32.xlu0 %v2198, 126
  %v2376 = vpop.permute.xlu0 %2375
  %2377 = vrot.lane.b32.xlu0 %v2199, 126
  %v2378 = vpop.permute.xlu0 %2377
  %2379 = vrot.lane.b32.xlu0 %v2200, 126
  %v2380 = vpop.permute.xlu0 %2379
  %2381 = vrot.lane.b32.xlu0 %v2201, 126
  %v2382 = vpop.permute.xlu0 %2381
  %2383 = vrot.lane.b32.xlu0 %v2202, 126
  %v2384 = vpop.permute.xlu0 %2383
  %vm2385 = vcmask 1031168
  %v2386 = vsel %vm2385, %v2370, %v2372
  %v2387 = vsel %vm2385, %v2372, %v2374
  %v2388 = vsel %vm2385, %v2374, %v2376
  %v2389 = vsel %vm2385, %v2378, %v2380
  %v2390 = vsel %vm2385, %v2380, %v2382
  %v2391 = vsel %vm2385, %v2382, %v2384
  %vm2398 = vcmask 1031168
  %v2401 = vsel %vm2398, %v2376, %v2370
  %v2405 = vsel %vm2398, %v2384, %v2378
  %vm2407 = vmpackc.low %vm605, %vm604
  %vm2408 = vmpackc.low %vm607, %vm606
  %v2409 = vsel %vm2407, 65537, 0
  %v2410 = vsel %vm2408, 65537, 0
  %v2411 = vlaneseq
  %v2412 = vshrl.u32 %v2411, 7
  %v2413 = vsub.s32 0, %v2412
  %v2414 = vrot.slane %v2409, %v2413
  %v2415 = vlaneseq
  %v2416 = vshrl.u32 %v2415, 7
  %v2417 = vsub.s32 4, %v2416
  %v2418 = vrot.slane %v2409, %v2417
  %v2419 = vlaneseq
  %v2420 = vshrl.u32 %v2419, 7
  %v2421 = vsub.s32 0, %v2420
  %v2422 = vrot.slane %v2410, %v2421
  %v2423 = vlaneseq
  %v2424 = vshrl.u32 %v2423, 7
  %v2425 = vsub.s32 4, %v2424
  %v2426 = vrot.slane %v2410, %v2425
  %vm2427 = vcmp.ne.s16.totalorder %v2414, 0
  %vm2428 = vcmp.ne.s16.totalorder %v2418, 0
  %vm2429 = vcmp.ne.s16.totalorder %v2422, 0
  %vm2430 = vcmp.ne.s16.totalorder %v2426, 0
  %v2431 = vsel %vm2427, %v2386, 0
  %v2432 = vsel %vm2428, %v2387, 0
  %v2433 = vsel %vm2429, %v2388, 0
  %v2434 = vsel %vm2430, %v2401, 0
  %v2435 = vsel %vm2427, %v2389, 0
  %v2436 = vsel %vm2428, %v2390, 0
  %v2437 = vsel %vm2429, %v2391, 0
  %v2438 = vsel %vm2430, %v2405, 0
  %v2447 = vunpack.c.l.b16 %v2431
  %v2448 = vunpack.c.l.b16 %v2432
  %v2449 = vunpack.c.l.b16 %v2433
  %v2450 = vunpack.c.l.b16 %v2434
  %v2451 = vunpack.c.h.b16 %v2431
  %v2452 = vunpack.c.h.b16 %v2432
  %v2453 = vunpack.c.h.b16 %v2433
  %v2454 = vunpack.c.h.b16 %v2434
  %v2455 = vunpack.c.l.b16 %v2435
  %v2456 = vunpack.c.l.b16 %v2436
  %v2457 = vunpack.c.l.b16 %v2437
  %v2458 = vunpack.c.l.b16 %v2438
  %v2459 = vunpack.c.h.b16 %v2435
  %v2460 = vunpack.c.h.b16 %v2436
  %v2461 = vunpack.c.h.b16 %v2437
  %v2462 = vunpack.c.h.b16 %v2438
  %v2463 = vpack.c.b16 %v2448, %v2447
  %v2464 = vpack.c.b16 %v2450, %v2449
  %v2465 = vpack.c.b16 %v2452, %v2451
  %v2466 = vpack.c.b16 %v2454, %v2453
  %v2467 = vpack.c.b16 %v2456, %v2455
  %v2468 = vpack.c.b16 %v2458, %v2457
  %v2469 = vpack.c.b16 %v2460, %v2459
  %v2470 = vpack.c.b16 %v2462, %v2461
  %2479 = vst [vmem:[#allocation2 + $0x80] sm:$0xff] %v2463
  %2480 = vst [vmem:[#allocation2 + $0x88] sm:$0xff] %v2464
  %2481 = vst [vmem:[#allocation2 + $0x90] sm:$0xff] %v2465
  %2482 = vst [vmem:[#allocation2 + $0x98] sm:$0xff] %v2466
  %2483 = vst [vmem:[#allocation2 + $0xa0] sm:$0xff] %v2467
  %2484 = vst [vmem:[#allocation2 + $0xa8] sm:$0xff] %v2468
  %2485 = vst [vmem:[#allocation2 + $0xb0] sm:$0xff] %v2469
  %2486 = vst [vmem:[#allocation2 + $0xb8] sm:$0xff] %v2470
  %v2487 = vld [vmem:[#allocation2 + $0x100] sm:$0xff]
  %v2488 = vld [vmem:[#allocation2 + $0x108] sm:$0xff]
  %v2489 = vld [vmem:[#allocation2 + $0x110] sm:$0xff]
  %v2490 = vld [vmem:[#allocation2 + $0x118] sm:$0xff]
  %v2491 = vld [vmem:[#allocation2 + $0x120] sm:$0xff]
  %v2492 = vld [vmem:[#allocation2 + $0x128] sm:$0xff]
  %v2493 = vld [vmem:[#allocation2 + $0x130] sm:$0xff]
  %v2494 = vld [vmem:[#allocation2 + $0x138] sm:$0xff]
  %v2499 = vunpack.c.h.b16 %v2488
  %v2500 = vunpack.c.h.b16 %v2490
  %v2501 = vunpack.c.h.b16 %v2492
  %v2502 = vunpack.c.h.b16 %v2494
  %v2503 = vpack.c.b16 %v2500, %v2499
  %v2504 = vpack.c.b16 %v2502, %v2501
  %2505 = vrot.lane.b32.xlu0 %v2503, 2
  %v2506 = vpop.permute.xlu0 %2505
  %2507 = vrot.lane.b32.xlu0 %v2504, 2
  %v2508 = vpop.permute.xlu0 %2507
  %v2513 = vunpack.c.l.b16 %v2487
  %v2514 = vunpack.c.h.b16 %v2487
  %v2515 = vunpack.c.l.b16 %v2488
  %v2516 = vunpack.c.l.b16 %v2489
  %v2517 = vunpack.c.h.b16 %v2489
  %v2518 = vunpack.c.l.b16 %v2490
  %v2519 = vunpack.c.l.b16 %v2491
  %v2520 = vunpack.c.h.b16 %v2491
  %v2521 = vunpack.c.l.b16 %v2492
  %v2522 = vunpack.c.l.b16 %v2493
  %v2523 = vunpack.c.h.b16 %v2493
  %v2524 = vunpack.c.l.b16 %v2494
  %v2525 = vpack.c.b16 %v2516, %v2513
  %v2526 = vpack.c.b16 %v2517, %v2514
  %v2527 = vpack.c.b16 %v2518, %v2515
  %v2528 = vpack.c.b16 %v2522, %v2519
  %v2529 = vpack.c.b16 %v2523, %v2520
  %v2530 = vpack.c.b16 %v2524, %v2521
  %2531 = vrot.lane.b32.xlu0 %v2525, 2
  %v2532 = vpop.permute.xlu0 %2531
  %2533 = vrot.lane.b32.xlu0 %v2526, 2
  %v2534 = vpop.permute.xlu0 %2533
  %2535 = vrot.lane.b32.xlu0 %v2527, 2
  %v2536 = vpop.permute.xlu0 %2535
  %2537 = vrot.lane.b32.xlu0 %v2528, 2
  %v2538 = vpop.permute.xlu0 %2537
  %2539 = vrot.lane.b32.xlu0 %v2529, 2
  %v2540 = vpop.permute.xlu0 %2539
  %2541 = vrot.lane.b32.xlu0 %v2530, 2
  %v2542 = vpop.permute.xlu0 %2541
  %v2543 = vsel %vm2267, %v2532, %v2534
  %v2544 = vsel %vm2267, %v2534, %v2536
  %v2545 = vsel %vm2267, %v2536, %v2506
  %v2546 = vsel %vm2267, %v2538, %v2540
  %v2547 = vsel %vm2267, %v2540, %v2542
  %v2548 = vsel %vm2267, %v2542, %v2508
  %v2557 = vsel %vm2280, %v2506, %v2532
  %v2561 = vsel %vm2280, %v2508, %v2538
  %v2563 = vsel %vm2309, %v2557, 0
  %v2564 = vsel %vm2310, %v2543, 0
  %v2565 = vsel %vm2311, %v2544, 0
  %v2566 = vsel %vm2312, %v2545, 0
  %v2567 = vsel %vm2309, %v2561, 0
  %v2568 = vsel %vm2310, %v2546, 0
  %v2569 = vsel %vm2311, %v2547, 0
  %v2570 = vsel %vm2312, %v2548, 0
  %v2579 = vunpack.c.l.b16 %v2563
  %v2580 = vunpack.c.l.b16 %v2564
  %v2581 = vunpack.c.l.b16 %v2565
  %v2582 = vunpack.c.l.b16 %v2566
  %v2583 = vunpack.c.h.b16 %v2563
  %v2584 = vunpack.c.h.b16 %v2564
  %v2585 = vunpack.c.h.b16 %v2565
  %v2586 = vunpack.c.h.b16 %v2566
  %v2587 = vunpack.c.l.b16 %v2567
  %v2588 = vunpack.c.l.b16 %v2568
  %v2589 = vunpack.c.l.b16 %v2569
  %v2590 = vunpack.c.l.b16 %v2570
  %v2591 = vunpack.c.h.b16 %v2567
  %v2592 = vunpack.c.h.b16 %v2568
  %v2593 = vunpack.c.h.b16 %v2569
  %v2594 = vunpack.c.h.b16 %v2570
  %v2595 = vpack.c.b16 %v2580, %v2579
  %v2596 = vpack.c.b16 %v2582, %v2581
  %v2597 = vpack.c.b16 %v2584, %v2583
  %v2598 = vpack.c.b16 %v2586, %v2585
  %v2599 = vpack.c.b16 %v2588, %v2587
  %v2600 = vpack.c.b16 %v2590, %v2589
  %v2601 = vpack.c.b16 %v2592, %v2591
  %v2602 = vpack.c.b16 %v2594, %v2593
  %2611 = vst [vmem:[#allocation2 + $0xc0] sm:$0xff] %v2595
  %2612 = vst [vmem:[#allocation2 + $0xc8] sm:$0xff] %v2596
  %2613 = vst [vmem:[#allocation2 + $0xd0] sm:$0xff] %v2597
  %2614 = vst [vmem:[#allocation2 + $0xd8] sm:$0xff] %v2598
  %2615 = vst [vmem:[#allocation2 + $0xe0] sm:$0xff] %v2599
  %2616 = vst [vmem:[#allocation2 + $0xe8] sm:$0xff] %v2600
  %2617 = vst [vmem:[#allocation2 + $0xf0] sm:$0xff] %v2601
  %2618 = vst [vmem:[#allocation2 + $0xf8] sm:$0xff] %v2602
  %2619 = vrot.lane.b32.xlu0 %v2525, 126
  %v2620 = vpop.permute.xlu0 %2619
  %2621 = vrot.lane.b32.xlu0 %v2526, 126
  %v2622 = vpop.permute.xlu0 %2621
  %2623 = vrot.lane.b32.xlu0 %v2527, 126
  %v2624 = vpop.permute.xlu0 %2623
  %2625 = vrot.lane.b32.xlu0 %v2503, 126
  %v2626 = vpop.permute.xlu0 %2625
  %2627 = vrot.lane.b32.xlu0 %v2528, 126
  %v2628 = vpop.permute.xlu0 %2627
  %2629 = vrot.lane.b32.xlu0 %v2529, 126
  %v2630 = vpop.permute.xlu0 %2629
  %2631 = vrot.lane.b32.xlu0 %v2530, 126
  %v2632 = vpop.permute.xlu0 %2631
  %2633 = vrot.lane.b32.xlu0 %v2504, 126
  %v2634 = vpop.permute.xlu0 %2633
  %v2635 = vsel %vm2385, %v2620, %v2622
  %v2636 = vsel %vm2385, %v2622, %v2624
  %v2637 = vsel %vm2385, %v2624, %v2626
  %v2638 = vsel %vm2385, %v2628, %v2630
  %v2639 = vsel %vm2385, %v2630, %v2632
  %v2640 = vsel %vm2385, %v2632, %v2634
  %v2649 = vsel %vm2398, %v2626, %v2620
  %v2653 = vsel %vm2398, %v2634, %v2628
  %v2655 = vsel %vm2427, %v2635, 0
  %v2656 = vsel %vm2428, %v2636, 0
  %v2657 = vsel %vm2429, %v2637, 0
  %v2658 = vsel %vm2430, %v2649, 0
  %v2659 = vsel %vm2427, %v2638, 0
  %v2660 = vsel %vm2428, %v2639, 0
  %v2661 = vsel %vm2429, %v2640, 0
  %v2662 = vsel %vm2430, %v2653, 0
  %v2671 = vunpack.c.l.b16 %v2655
  %v2672 = vunpack.c.l.b16 %v2656
  %v2673 = vunpack.c.l.b16 %v2657
  %v2674 = vunpack.c.l.b16 %v2658
  %v2675 = vunpack.c.h.b16 %v2655
  %v2676 = vunpack.c.h.b16 %v2656
  %v2677 = vunpack.c.h.b16 %v2657
  %v2678 = vunpack.c.h.b16 %v2658
  %v2679 = vunpack.c.l.b16 %v2659
  %v2680 = vunpack.c.l.b16 %v2660
  %v2681 = vunpack.c.l.b16 %v2661
  %v2682 = vunpack.c.l.b16 %v2662
  %v2683 = vunpack.c.h.b16 %v2659
  %v2684 = vunpack.c.h.b16 %v2660
  %v2685 = vunpack.c.h.b16 %v2661
  %v2686 = vunpack.c.h.b16 %v2662
  %v2687 = vpack.c.b16 %v2672, %v2671
  %v2688 = vpack.c.b16 %v2674, %v2673
  %v2689 = vpack.c.b16 %v2676, %v2675
  %v2690 = vpack.c.b16 %v2678, %v2677
  %v2691 = vpack.c.b16 %v2680, %v2679
  %v2692 = vpack.c.b16 %v2682, %v2681
  %v2693 = vpack.c.b16 %v2684, %v2683
  %v2694 = vpack.c.b16 %v2686, %v2685
  %2703 = vst [vmem:[#allocation2 + $0x140] sm:$0xff] %v2687
  %2704 = vst [vmem:[#allocation2 + $0x148] sm:$0xff] %v2688
  %2705 = vst [vmem:[#allocation2 + $0x150] sm:$0xff] %v2689
  %2706 = vst [vmem:[#allocation2 + $0x158] sm:$0xff] %v2690
  %2707 = vst [vmem:[#allocation2 + $0x160] sm:$0xff] %v2691
  %2708 = vst [vmem:[#allocation2 + $0x168] sm:$0xff] %v2692
  %2709 = vst [vmem:[#allocation2 + $0x170] sm:$0xff] %v2693
  %2710 = vst [vmem:[#allocation2 + $0x178] sm:$0xff] %v2694
  %s2711 = scalar_lea.vmem %s7, 64
  %v2712 = vld [vmem:[%s2711] sm:$0xff]
  %v2713 = vld [vmem:[%s2711 + $0x8] sm:$0xff]
  %v2714 = vld [vmem:[%s2711 + $0x10] sm:$0xff]
  %v2715 = vld [vmem:[%s2711 + $0x18] sm:$0xff]
  %v2716 = vld [vmem:[%s2711 + $0x20] sm:$0xff]
  %v2717 = vld [vmem:[%s2711 + $0x28] sm:$0xff]
  %v2718 = vld [vmem:[%s2711 + $0x30] sm:$0xff]
  %v2719 = vld [vmem:[%s2711 + $0x38] sm:$0xff]
  %v2720 = vld [vmem:[#allocation2] sm:$0xff]
  %v2721 = vld [vmem:[#allocation2 + $0x8] sm:$0xff]
  %v2722 = vld [vmem:[#allocation2 + $0x10] sm:$0xff]
  %v2723 = vld [vmem:[#allocation2 + $0x18] sm:$0xff]
  %v2724 = vld [vmem:[#allocation2 + $0x20] sm:$0xff]
  %v2725 = vld [vmem:[#allocation2 + $0x28] sm:$0xff]
  %v2726 = vld [vmem:[#allocation2 + $0x30] sm:$0xff]
  %v2727 = vld [vmem:[#allocation2 + $0x38] sm:$0xff]
  %v2728 = vld [vmem:[#allocation2 + $0x40] sm:$0xff]
  %v2729 = vld [vmem:[#allocation2 + $0x48] sm:$0xff]
  %v2730 = vld [vmem:[#allocation2 + $0x50] sm:$0xff]
  %v2731 = vld [vmem:[#allocation2 + $0x58] sm:$0xff]
  %v2732 = vld [vmem:[#allocation2 + $0x60] sm:$0xff]
  %v2733 = vld [vmem:[#allocation2 + $0x68] sm:$0xff]
  %v2734 = vld [vmem:[#allocation2 + $0x70] sm:$0xff]
  %v2735 = vld [vmem:[#allocation2 + $0x78] sm:$0xff]
  %v2736 = vld [vmem:[#allocation2 + $0x80] sm:$0xff]
  %v2737 = vld [vmem:[#allocation2 + $0x88] sm:$0xff]
  %v2738 = vld [vmem:[#allocation2 + $0x90] sm:$0xff]
  %v2739 = vld [vmem:[#allocation2 + $0x98] sm:$0xff]
  %v2740 = vld [vmem:[#allocation2 + $0xa0] sm:$0xff]
  %v2741 = vld [vmem:[#allocation2 + $0xa8] sm:$0xff]
  %v2742 = vld [vmem:[#allocation2 + $0xb0] sm:$0xff]
  %v2743 = vld [vmem:[#allocation2 + $0xb8] sm:$0xff]
  %v2744 = vld [vmem:[#allocation2 + $0xc0] sm:$0xff]
  %v2745 = vld [vmem:[#allocation2 + $0xc8] sm:$0xff]
  %v2746 = vld [vmem:[#allocation2 + $0xd0] sm:$0xff]
  %v2747 = vld [vmem:[#allocation2 + $0xd8] sm:$0xff]
  %v2748 = vld [vmem:[#allocation2 + $0xe0] sm:$0xff]
  %v2749 = vld [vmem:[#allocation2 + $0xe8] sm:$0xff]
  %v2750 = vld [vmem:[#allocation2 + $0xf0] sm:$0xff]
  %v2751 = vld [vmem:[#allocation2 + $0xf8] sm:$0xff]
  %v2752 = vld [vmem:[#allocation2 + $0x100] sm:$0xff]
  %v2753 = vld [vmem:[#allocation2 + $0x108] sm:$0xff]
  %v2754 = vld [vmem:[#allocation2 + $0x110] sm:$0xff]
  %v2755 = vld [vmem:[#allocation2 + $0x118] sm:$0xff]
  %v2756 = vld [vmem:[#allocation2 + $0x120] sm:$0xff]
  %v2757 = vld [vmem:[#allocation2 + $0x128] sm:$0xff]
  %v2758 = vld [vmem:[#allocation2 + $0x130] sm:$0xff]
  %v2759 = vld [vmem:[#allocation2 + $0x138] sm:$0xff]
  %v2760 = vld [vmem:[#allocation2 + $0x140] sm:$0xff]
  %v2761 = vld [vmem:[#allocation2 + $0x148] sm:$0xff]
  %v2762 = vld [vmem:[#allocation2 + $0x150] sm:$0xff]
  %v2763 = vld [vmem:[#allocation2 + $0x158] sm:$0xff]
  %v2764 = vld [vmem:[#allocation2 + $0x160] sm:$0xff]
  %v2765 = vld [vmem:[#allocation2 + $0x168] sm:$0xff]
  %v2766 = vld [vmem:[#allocation2 + $0x170] sm:$0xff]
  %v2767 = vld [vmem:[#allocation2 + $0x178] sm:$0xff]
  %s2768 = scalar_lea.vmem %s8, 64
  %v2769 = vld [vmem:[%s2768] sm:$0xff]
  %v2770 = vld [vmem:[%s2768 + $0x8] sm:$0xff]
  %v2771 = vld [vmem:[%s2768 + $0x10] sm:$0xff]
  %v2772 = vld [vmem:[%s2768 + $0x18] sm:$0xff]
  %v2773 = vld [vmem:[%s2768 + $0x20] sm:$0xff]
  %v2774 = vld [vmem:[%s2768 + $0x28] sm:$0xff]
  %v2775 = vld [vmem:[%s2768 + $0x30] sm:$0xff]
  %v2776 = vld [vmem:[%s2768 + $0x38] sm:$0xff]
  %2778 = vset.pattern.permute.xlu0 0
  %2779 = vperm.xlu0 %2778, %v2769
  %v2780 = vpop.permute.xlu0 %2779
  %2783 = vset.pattern.permute.xlu0 0
  %2784 = vperm.xlu0 %2783, %v2770
  %v2785 = vpop.permute.xlu0 %2784
  %2788 = vset.pattern.permute.xlu0 0
  %2789 = vperm.xlu0 %2788, %v2771
  %v2790 = vpop.permute.xlu0 %2789
  %2793 = vset.pattern.permute.xlu0 0
  %2794 = vperm.xlu0 %2793, %v2772
  %v2795 = vpop.permute.xlu0 %2794
  %2798 = vset.pattern.permute.xlu0 0
  %2799 = vperm.xlu0 %2798, %v2773
  %v2800 = vpop.permute.xlu0 %2799
  %2803 = vset.pattern.permute.xlu0 0
  %2804 = vperm.xlu0 %2803, %v2774
  %v2805 = vpop.permute.xlu0 %2804
  %2808 = vset.pattern.permute.xlu0 0
  %2809 = vperm.xlu0 %2808, %v2775
  %v2810 = vpop.permute.xlu0 %2809
  %2813 = vset.pattern.permute.xlu0 0
  %2814 = vperm.xlu0 %2813, %v2776
  %v2815 = vpop.permute.xlu0 %2814
  %v2825 = vunpack.c.l.b16 %v2712
  %v2826 = vunpack.c.h.b16 %v2712
  %v2827 = vunpack.c.l.b16 %v2713
  %v2828 = vunpack.c.h.b16 %v2713
  %v2829 = vunpack.c.l.b16 %v2714
  %v2830 = vunpack.c.h.b16 %v2714
  %v2831 = vunpack.c.l.b16 %v2715
  %v2832 = vunpack.c.h.b16 %v2715
  %v2833 = vunpack.c.l.b16 %v2716
  %v2834 = vunpack.c.h.b16 %v2716
  %v2835 = vunpack.c.l.b16 %v2717
  %v2836 = vunpack.c.h.b16 %v2717
  %v2837 = vunpack.c.l.b16 %v2718
  %v2838 = vunpack.c.h.b16 %v2718
  %v2839 = vunpack.c.l.b16 %v2719
  %v2840 = vunpack.c.h.b16 %v2719
  %v2841 = vpack.c.b16 %v2827, %v2825
  %v2842 = vpack.c.b16 %v2828, %v2826
  %v2843 = vpack.c.b16 %v2831, %v2829
  %v2844 = vpack.c.b16 %v2832, %v2830
  %v2845 = vpack.c.b16 %v2835, %v2833
  %v2846 = vpack.c.b16 %v2836, %v2834
  %v2847 = vpack.c.b16 %v2839, %v2837
  %v2848 = vpack.c.b16 %v2840, %v2838
  %v2901 = vunpack.c.l.b16 %v2720
  %v2902 = vunpack.c.h.b16 %v2720
  %v2903 = vunpack.c.l.b16 %v2721
  %v2904 = vunpack.c.h.b16 %v2721
  %v2905 = vunpack.c.l.b16 %v2722
  %v2906 = vunpack.c.h.b16 %v2722
  %v2907 = vunpack.c.l.b16 %v2723
  %v2908 = vunpack.c.h.b16 %v2723
  %v2909 = vunpack.c.l.b16 %v2724
  %v2910 = vunpack.c.h.b16 %v2724
  %v2911 = vunpack.c.l.b16 %v2725
  %v2912 = vunpack.c.h.b16 %v2725
  %v2913 = vunpack.c.l.b16 %v2726
  %v2914 = vunpack.c.h.b16 %v2726
  %v2915 = vunpack.c.l.b16 %v2727
  %v2916 = vunpack.c.h.b16 %v2727
  %v2917 = vunpack.c.l.b16 %v2728
  %v2918 = vunpack.c.h.b16 %v2728
  %v2919 = vunpack.c.l.b16 %v2729
  %v2920 = vunpack.c.h.b16 %v2729
  %v2921 = vunpack.c.l.b16 %v2730
  %v2922 = vunpack.c.h.b16 %v2730
  %v2923 = vunpack.c.l.b16 %v2731
  %v2924 = vunpack.c.h.b16 %v2731
  %v2925 = vunpack.c.l.b16 %v2732
  %v2926 = vunpack.c.h.b16 %v2732
  %v2927 = vunpack.c.l.b16 %v2733
  %v2928 = vunpack.c.h.b16 %v2733
  %v2929 = vunpack.c.l.b16 %v2734
  %v2930 = vunpack.c.h.b16 %v2734
  %v2931 = vunpack.c.l.b16 %v2735
  %v2932 = vunpack.c.h.b16 %v2735
  %v2933 = vunpack.c.l.b16 %v2736
  %v2934 = vunpack.c.h.b16 %v2736
  %v2935 = vunpack.c.l.b16 %v2737
  %v2936 = vunpack.c.h.b16 %v2737
  %v2937 = vunpack.c.l.b16 %v2738
  %v2938 = vunpack.c.h.b16 %v2738
  %v2939 = vunpack.c.l.b16 %v2739
  %v2940 = vunpack.c.h.b16 %v2739
  %v2941 = vunpack.c.l.b16 %v2740
  %v2942 = vunpack.c.h.b16 %v2740
  %v2943 = vunpack.c.l.b16 %v2741
  %v2944 = vunpack.c.h.b16 %v2741
  %v2945 = vunpack.c.l.b16 %v2742
  %v2946 = vunpack.c.h.b16 %v2742
  %v2947 = vunpack.c.l.b16 %v2743
  %v2948 = vunpack.c.h.b16 %v2743
  %v2949 = vunpack.c.l.b16 %v2744
  %v2950 = vunpack.c.h.b16 %v2744
  %v2951 = vunpack.c.l.b16 %v2745
  %v2952 = vunpack.c.h.b16 %v2745
  %v2953 = vunpack.c.l.b16 %v2746
  %v2954 = vunpack.c.h.b16 %v2746
  %v2955 = vunpack.c.l.b16 %v2747
  %v2956 = vunpack.c.h.b16 %v2747
  %v2957 = vunpack.c.l.b16 %v2748
  %v2958 = vunpack.c.h.b16 %v2748
  %v2959 = vunpack.c.l.b16 %v2749
  %v2960 = vunpack.c.h.b16 %v2749
  %v2961 = vunpack.c.l.b16 %v2750
  %v2962 = vunpack.c.h.b16 %v2750
  %v2963 = vunpack.c.l.b16 %v2751
  %v2964 = vunpack.c.h.b16 %v2751
  %v2965 = vunpack.c.l.b16 %v2752
  %v2966 = vunpack.c.h.b16 %v2752
  %v2967 = vunpack.c.l.b16 %v2753
  %v2968 = vunpack.c.h.b16 %v2753
  %v2969 = vunpack.c.l.b16 %v2754
  %v2970 = vunpack.c.h.b16 %v2754
  %v2971 = vunpack.c.l.b16 %v2755
  %v2972 = vunpack.c.h.b16 %v2755
  %v2973 = vunpack.c.l.b16 %v2756
  %v2974 = vunpack.c.h.b16 %v2756
  %v2975 = vunpack.c.l.b16 %v2757
  %v2976 = vunpack.c.h.b16 %v2757
  %v2977 = vunpack.c.l.b16 %v2758
  %v2978 = vunpack.c.h.b16 %v2758
  %v2979 = vunpack.c.l.b16 %v2759
  %v2980 = vunpack.c.h.b16 %v2759
  %v2981 = vunpack.c.l.b16 %v2760
  %v2982 = vunpack.c.h.b16 %v2760
  %v2983 = vunpack.c.l.b16 %v2761
  %v2984 = vunpack.c.h.b16 %v2761
  %v2985 = vunpack.c.l.b16 %v2762
  %v2986 = vunpack.c.h.b16 %v2762
  %v2987 = vunpack.c.l.b16 %v2763
  %v2988 = vunpack.c.h.b16 %v2763
  %v2989 = vunpack.c.l.b16 %v2764
  %v2990 = vunpack.c.h.b16 %v2764
  %v2991 = vunpack.c.l.b16 %v2765
  %v2992 = vunpack.c.h.b16 %v2765
  %v2993 = vunpack.c.l.b16 %v2766
  %v2994 = vunpack.c.h.b16 %v2766
  %v2995 = vunpack.c.l.b16 %v2767
  %v2996 = vunpack.c.h.b16 %v2767
  %v2997 = vpack.c.b16 %v2905, %v2901
  %v2998 = vpack.c.b16 %v2906, %v2902
  %v2999 = vpack.c.b16 %v2907, %v2903
  %v3000 = vpack.c.b16 %v2908, %v2904
  %v3001 = vpack.c.b16 %v2913, %v2909
  %v3002 = vpack.c.b16 %v2914, %v2910
  %v3003 = vpack.c.b16 %v2915, %v2911
  %v3004 = vpack.c.b16 %v2916, %v2912
  %v3005 = vpack.c.b16 %v2921, %v2917
  %v3006 = vpack.c.b16 %v2922, %v2918
  %v3007 = vpack.c.b16 %v2923, %v2919
  %v3008 = vpack.c.b16 %v2924, %v2920
  %v3009 = vpack.c.b16 %v2929, %v2925
  %v3010 = vpack.c.b16 %v2930, %v2926
  %v3011 = vpack.c.b16 %v2931, %v2927
  %v3012 = vpack.c.b16 %v2932, %v2928
  %v3013 = vpack.c.b16 %v2937, %v2933
  %v3014 = vpack.c.b16 %v2938, %v2934
  %v3015 = vpack.c.b16 %v2939, %v2935
  %v3016 = vpack.c.b16 %v2940, %v2936
  %v3017 = vpack.c.b16 %v2945, %v2941
  %v3018 = vpack.c.b16 %v2946, %v2942
  %v3019 = vpack.c.b16 %v2947, %v2943
  %v3020 = vpack.c.b16 %v2948, %v2944
  %v3021 = vpack.c.b16 %v2953, %v2949
  %v3022 = vpack.c.b16 %v2954, %v2950
  %v3023 = vpack.c.b16 %v2955, %v2951
  %v3024 = vpack.c.b16 %v2956, %v2952
  %v3025 = vpack.c.b16 %v2961, %v2957
  %v3026 = vpack.c.b16 %v2962, %v2958
  %v3027 = vpack.c.b16 %v2963, %v2959
  %v3028 = vpack.c.b16 %v2964, %v2960
  %v3029 = vpack.c.b16 %v2969, %v2965
  %v3030 = vpack.c.b16 %v2970, %v2966
  %v3031 = vpack.c.b16 %v2971, %v2967
  %v3032 = vpack.c.b16 %v2972, %v2968
  %v3033 = vpack.c.b16 %v2977, %v2973
  %v3034 = vpack.c.b16 %v2978, %v2974
  %v3035 = vpack.c.b16 %v2979, %v2975
  %v3036 = vpack.c.b16 %v2980, %v2976
  %v3037 = vpack.c.b16 %v2985, %v2981
  %v3038 = vpack.c.b16 %v2986, %v2982
  %v3039 = vpack.c.b16 %v2987, %v2983
  %v3040 = vpack.c.b16 %v2988, %v2984
  %v3041 = vpack.c.b16 %v2993, %v2989
  %v3042 = vpack.c.b16 %v2994, %v2990
  %v3043 = vpack.c.b16 %v2995, %v2991
  %v3044 = vpack.c.b16 %v2996, %v2992
  %v3094 = vsel %vm1552, %v2842, 0
  %v3097 = vsel %vm1552, %v2844, 0
  %v3100 = vsel %vm1552, %v2846, 0
  %v3103 = vsel %vm1552, %v2848, 0
  %3105 = vmatprep.subr.bf16.mxu0 %v3026
  %3106 = vmatpush1.bf16.msra.mxu0 %v3025
  %3107 = vmatprep.subr.bf16.mxu0 %v3022
  %3108 = vmatpush1.bf16.msra.mxu0 %v3021
  %3109 = vmatprep.subr.bf16.mxu0 %v3018
  %3110 = vmatpush1.bf16.msra.mxu0 %v3017
  %3111 = vmatprep.subr.bf16.mxu0 %v3014
  %3112 = vmatpush1.bf16.msra.mxu0 %v3013
  %3113 = vmatprep.subr.bf16.mxu0 %v3010
  %3114 = vmatpush1.bf16.msra.mxu0 %v3009
  %3115 = vmatprep.subr.bf16.mxu0 %v3006
  %3116 = vmatpush1.bf16.msra.mxu0 %v3005
  %3117 = vmatprep.subr.bf16.mxu0 %v3002
  %3118 = vmatpush1.bf16.msra.mxu0 %v3001
  %3119 = vmatprep.subr.bf16.mxu0 %v2998
  %3120 = vmatpush1.bf16.msra.mxu0 %v2997
  %3121 = vmatprep.subr.bf16.mxu0 0
  %3122 = vmatpush2.bf16.msra.mxu0 0
  %3123 = vmatprep.subr.bf16.mxu0 0
  %3124 = vmatpush2.bf16.msra.mxu0 0
  %3125 = vmatprep.subr.bf16.mxu0 0
  %3126 = vmatpush2.bf16.msra.mxu0 0
  %3127 = vmatprep.subr.bf16.mxu0 0
  %3128 = vmatpush2.bf16.msra.mxu0 0
  %3129 = vmatprep.subr.bf16.mxu0 %v3042
  %3130 = vmatpush2.bf16.msra.mxu0 %v3041
  %3131 = vmatprep.subr.bf16.mxu0 %v3038
  %3132 = vmatpush2.bf16.msra.mxu0 %v3037
  %3133 = vmatprep.subr.bf16.mxu0 %v3034
  %3134 = vmatpush2.bf16.msra.mxu0 %v3033
  %3135 = vmatprep.subr.bf16.mxu0 %v3030
  %3136 = vmatpush2.bf16.msra.mxu0 %v3029
  %3137 = vmatprep.mubr.bf16.mxu0 %v3094
  %3138 = vmatmul.mubr.bf16.gmra.mxu0 %v2841
  %v3139 = vpop.f32.mrf.mxu0
  %v3140 = vadd.f32 %v2780, %v3139
  %v3141 = vpop.f32.mrf.mxu0
  %v3142 = vadd.f32 %v2780, %v3141
  %v3143 = vpop.f32.mrf.mxu0
  %v3144 = vadd.f32 %v2785, %v3143
  %v3145 = vpop.f32.mrf.mxu0
  %v3146 = vadd.f32 %v2785, %v3145
  %3147 = vmatprep.mubr.bf16.mxu0 %v3097
  %3148 = vmatmul.mubr.bf16.gmra.mxu0 %v2843
  %v3149 = vpop.f32.mrf.mxu0
  %v3150 = vadd.f32 %v2790, %v3149
  %v3151 = vpop.f32.mrf.mxu0
  %v3152 = vadd.f32 %v2790, %v3151
  %v3153 = vpop.f32.mrf.mxu0
  %v3154 = vadd.f32 %v2795, %v3153
  %v3155 = vpop.f32.mrf.mxu0
  %v3156 = vadd.f32 %v2795, %v3155
  %3157 = vmatprep.mubr.bf16.mxu0 %v3100
  %3158 = vmatmul.mubr.bf16.gmra.mxu0 %v2845
  %v3159 = vpop.f32.mrf.mxu0
  %v3160 = vadd.f32 %v2800, %v3159
  %v3161 = vpop.f32.mrf.mxu0
  %v3162 = vadd.f32 %v2800, %v3161
  %v3163 = vpop.f32.mrf.mxu0
  %v3164 = vadd.f32 %v2805, %v3163
  %v3165 = vpop.f32.mrf.mxu0
  %v3166 = vadd.f32 %v2805, %v3165
  %3167 = vmatprep.mubr.bf16.mxu0 %v3103
  %3168 = vmatmul.mubr.bf16.gmra.mxu0 %v2847
  %v3169 = vpop.f32.mrf.mxu0
  %v3170 = vadd.f32 %v2810, %v3169
  %v3171 = vpop.f32.mrf.mxu0
  %v3172 = vadd.f32 %v2810, %v3171
  %v3173 = vpop.f32.mrf.mxu0
  %v3174 = vadd.f32 %v2815, %v3173
  %v3175 = vpop.f32.mrf.mxu0
  %v3176 = vadd.f32 %v2815, %v3175
  %3177 = vdwg.mxu0
  %3178 = vmatprep.subr.bf16.mxu0 %v3028
  %3179 = vmatpush1.bf16.msra.mxu0 %v3027
  %3180 = vmatprep.subr.bf16.mxu0 %v3024
  %3181 = vmatpush1.bf16.msra.mxu0 %v3023
  %3182 = vmatprep.subr.bf16.mxu0 %v3020
  %3183 = vmatpush1.bf16.msra.mxu0 %v3019
  %3184 = vmatprep.subr.bf16.mxu0 %v3016
  %3185 = vmatpush1.bf16.msra.mxu0 %v3015
  %3186 = vmatprep.subr.bf16.mxu0 %v3012
  %3187 = vmatpush1.bf16.msra.mxu0 %v3011
  %3188 = vmatprep.subr.bf16.mxu0 %v3008
  %3189 = vmatpush1.bf16.msra.mxu0 %v3007
  %3190 = vmatprep.subr.bf16.mxu0 %v3004
  %3191 = vmatpush1.bf16.msra.mxu0 %v3003
  %3192 = vmatprep.subr.bf16.mxu0 %v3000
  %3193 = vmatpush1.bf16.msra.mxu0 %v2999
  %3194 = vmatprep.subr.bf16.mxu0 0
  %3195 = vmatpush2.bf16.msra.mxu0 0
  %3196 = vmatprep.subr.bf16.mxu0 0
  %3197 = vmatpush2.bf16.msra.mxu0 0
  %3198 = vmatprep.subr.bf16.mxu0 0
  %3199 = vmatpush2.bf16.msra.mxu0 0
  %3200 = vmatprep.subr.bf16.mxu0 0
  %3201 = vmatpush2.bf16.msra.mxu0 0
  %3202 = vmatprep.subr.bf16.mxu0 %v3044
  %3203 = vmatpush2.bf16.msra.mxu0 %v3043
  %3204 = vmatprep.subr.bf16.mxu0 %v3040
  %3205 = vmatpush2.bf16.msra.mxu0 %v3039
  %3206 = vmatprep.subr.bf16.mxu0 %v3036
  %3207 = vmatpush2.bf16.msra.mxu0 %v3035
  %3208 = vmatprep.subr.bf16.mxu0 %v3032
  %3209 = vmatpush2.bf16.msra.mxu0 %v3031
  %3210 = vmatprep.mubr.bf16.mxu0 %v3094
  %3211 = vmatmul.mubr.bf16.gmra.mxu0 %v2841
  %v3212 = vpop.f32.mrf.mxu0
  %v3213 = vadd.f32 %v2780, %v3212
  %v3214 = vpop.f32.mrf.mxu0
  %v3215 = vadd.f32 %v2780, %v3214
  %v3216 = vpop.f32.mrf.mxu0
  %v3217 = vadd.f32 %v2785, %v3216
  %v3218 = vpop.f32.mrf.mxu0
  %v3219 = vadd.f32 %v2785, %v3218
  %3220 = vmatprep.mubr.bf16.mxu0 %v3097
  %3221 = vmatmul.mubr.bf16.gmra.mxu0 %v2843
  %v3222 = vpop.f32.mrf.mxu0
  %v3223 = vadd.f32 %v2790, %v3222
  %v3224 = vpop.f32.mrf.mxu0
  %v3225 = vadd.f32 %v2790, %v3224
  %v3226 = vpop.f32.mrf.mxu0
  %v3227 = vadd.f32 %v2795, %v3226
  %v3228 = vpop.f32.mrf.mxu0
  %v3229 = vadd.f32 %v2795, %v3228
  %3230 = vmatprep.mubr.bf16.mxu0 %v3100
  %3231 = vmatmul.mubr.bf16.gmra.mxu0 %v2845
  %v3232 = vpop.f32.mrf.mxu0
  %v3233 = vadd.f32 %v2800, %v3232
  %v3234 = vpop.f32.mrf.mxu0
  %v3235 = vadd.f32 %v2800, %v3234
  %v3236 = vpop.f32.mrf.mxu0
  %v3237 = vadd.f32 %v2805, %v3236
  %v3238 = vpop.f32.mrf.mxu0
  %v3239 = vadd.f32 %v2805, %v3238
  %3240 = vmatprep.mubr.bf16.mxu0 %v3103
  %3241 = vmatmul.mubr.bf16.gmra.mxu0 %v2847
  %v3242 = vpop.f32.mrf.mxu0
  %v3243 = vadd.f32 %v2810, %v3242
  %v3244 = vpop.f32.mrf.mxu0
  %v3245 = vadd.f32 %v2810, %v3244
  %v3246 = vpop.f32.mrf.mxu0
  %v3247 = vadd.f32 %v2815, %v3246
  %v3248 = vpop.f32.mrf.mxu0
  %v3249 = vadd.f32 %v2815, %v3248
  %3250 = vdwg.mxu0
  %v3251 = vxor.u32 %v3140, 2147483648
  %v3252 = vxor.u32 %v3142, 2147483648
  %v3253 = vxor.u32 %v3213, 2147483648
  %v3254 = vxor.u32 %v3215, 2147483648
  %v3255 = vxor.u32 %v3144, 2147483648
  %v3256 = vxor.u32 %v3146, 2147483648
  %v3257 = vxor.u32 %v3217, 2147483648
  %v3258 = vxor.u32 %v3219, 2147483648
  %v3259 = vxor.u32 %v3150, 2147483648
  %v3260 = vxor.u32 %v3152, 2147483648
  %v3261 = vxor.u32 %v3223, 2147483648
  %v3262 = vxor.u32 %v3225, 2147483648
  %v3263 = vxor.u32 %v3154, 2147483648
  %v3264 = vxor.u32 %v3156, 2147483648
  %v3265 = vxor.u32 %v3227, 2147483648
  %v3266 = vxor.u32 %v3229, 2147483648
  %v3267 = vmul.f32 %v3251, 1.442695
  %v3268 = vpow.pop %v3267
  %v3269 = vmul.f32 %v3252, 1.442695
  %v3270 = vpow.pop %v3269
  %v3271 = vmul.f32 %v3253, 1.442695
  %v3272 = vpow.pop %v3271
  %v3273 = vmul.f32 %v3254, 1.442695
  %v3274 = vpow.pop %v3273
  %v3275 = vmul.f32 %v3255, 1.442695
  %v3276 = vpow.pop %v3275
  %v3277 = vmul.f32 %v3256, 1.442695
  %v3278 = vpow.pop %v3277
  %v3279 = vmul.f32 %v3257, 1.442695
  %v3280 = vpow.pop %v3279
  %v3281 = vmul.f32 %v3258, 1.442695
  %v3282 = vpow.pop %v3281
  %v3283 = vmul.f32 %v3259, 1.442695
  %v3284 = vpow.pop %v3283
  %v3285 = vmul.f32 %v3260, 1.442695
  %v3286 = vpow.pop %v3285
  %v3287 = vmul.f32 %v3261, 1.442695
  %v3288 = vpow.pop %v3287
  %v3289 = vmul.f32 %v3262, 1.442695
  %v3290 = vpow.pop %v3289
  %v3291 = vmul.f32 %v3263, 1.442695
  %v3292 = vpow.pop %v3291
  %v3293 = vmul.f32 %v3264, 1.442695
  %v3294 = vpow.pop %v3293
  %v3295 = vmul.f32 %v3265, 1.442695
  %v3296 = vpow.pop %v3295
  %v3297 = vmul.f32 %v3266, 1.442695
  %v3298 = vpow.pop %v3297
  %v3299 = vadd.f32 %v3268, 1.0
  %v3300 = vadd.f32 %v3270, 1.0
  %v3301 = vadd.f32 %v3272, 1.0
  %v3302 = vadd.f32 %v3274, 1.0
  %v3303 = vadd.f32 %v3276, 1.0
  %v3304 = vadd.f32 %v3278, 1.0
  %v3305 = vadd.f32 %v3280, 1.0
  %v3306 = vadd.f32 %v3282, 1.0
  %v3307 = vadd.f32 %v3284, 1.0
  %v3308 = vadd.f32 %v3286, 1.0
  %v3309 = vadd.f32 %v3288, 1.0
  %v3310 = vadd.f32 %v3290, 1.0
  %v3311 = vadd.f32 %v3292, 1.0
  %v3312 = vadd.f32 %v3294, 1.0
  %v3313 = vadd.f32 %v3296, 1.0
  %v3314 = vadd.f32 %v3298, 1.0
  %v3315 = vrcp.pop %v3299
  %v3316 = vmul.f32 1.0, %v3315
  %v3317 = vrcp.pop %v3300
  %v3318 = vmul.f32 1.0, %v3317
  %v3319 = vrcp.pop %v3301
  %v3320 = vmul.f32 1.0, %v3319
  %v3321 = vrcp.pop %v3302
  %v3322 = vmul.f32 1.0, %v3321
  %v3323 = vrcp.pop %v3303
  %v3324 = vmul.f32 1.0, %v3323
  %v3325 = vrcp.pop %v3304
  %v3326 = vmul.f32 1.0, %v3325
  %v3327 = vrcp.pop %v3305
  %v3328 = vmul.f32 1.0, %v3327
  %v3329 = vrcp.pop %v3306
  %v3330 = vmul.f32 1.0, %v3329
  %v3331 = vrcp.pop %v3307
  %v3332 = vmul.f32 1.0, %v3331
  %v3333 = vrcp.pop %v3308
  %v3334 = vmul.f32 1.0, %v3333
  %v3335 = vrcp.pop %v3309
  %v3336 = vmul.f32 1.0, %v3335
  %v3337 = vrcp.pop %v3310
  %v3338 = vmul.f32 1.0, %v3337
  %v3339 = vrcp.pop %v3311
  %v3340 = vmul.f32 1.0, %v3339
  %v3341 = vrcp.pop %v3312
  %v3342 = vmul.f32 1.0, %v3341
  %v3343 = vrcp.pop %v3313
  %v3344 = vmul.f32 1.0, %v3343
  %v3345 = vrcp.pop %v3314
  %v3346 = vmul.f32 1.0, %v3345
  %v3347 = vtanh.pop %v3160
  %v3348 = vtanh.pop %v3162
  %v3349 = vtanh.pop %v3233
  %v3350 = vtanh.pop %v3235
  %v3351 = vtanh.pop %v3164
  %v3352 = vtanh.pop %v3166
  %v3353 = vtanh.pop %v3237
  %v3354 = vtanh.pop %v3239
  %v3355 = vtanh.pop %v3170
  %v3356 = vtanh.pop %v3172
  %v3357 = vtanh.pop %v3243
  %v3358 = vtanh.pop %v3245
  %v3359 = vtanh.pop %v3174
  %v3360 = vtanh.pop %v3176
  %v3361 = vtanh.pop %v3247
  %v3362 = vtanh.pop %v3249
  %v3363 = vmul.f32 %v3316, %v3347
  %v3364 = vmul.f32 %v3318, %v3348
  %v3365 = vmul.f32 %v3320, %v3349
  %v3366 = vmul.f32 %v3322, %v3350
  %v3367 = vmul.f32 %v3324, %v3351
  %v3368 = vmul.f32 %v3326, %v3352
  %v3369 = vmul.f32 %v3328, %v3353
  %v3370 = vmul.f32 %v3330, %v3354
  %v3371 = vmul.f32 %v3332, %v3355
  %v3372 = vmul.f32 %v3334, %v3356
  %v3373 = vmul.f32 %v3336, %v3357
  %v3374 = vmul.f32 %v3338, %v3358
  %v3375 = vmul.f32 %v3340, %v3359
  %v3376 = vmul.f32 %v3342, %v3360
  %v3377 = vmul.f32 %v3344, %v3361
  %v3378 = vmul.f32 %v3346, %v3362
  %s3379 = scalar_lea.vmem %s9, 32
  %v3380 = vld [vmem:[%s3379] sm:$0xf]
  %v3381 = vld [vmem:[%s3379 + $0x4] sm:$0xf]
  %v3382 = vld [vmem:[%s3379 + $0x8] sm:$0xf]
  %v3383 = vld [vmem:[%s3379 + $0xc] sm:$0xf]
  %v3384 = vld [vmem:[%s3379 + $0x10] sm:$0xf]
  %v3385 = vld [vmem:[%s3379 + $0x14] sm:$0xf]
  %v3386 = vld [vmem:[%s3379 + $0x18] sm:$0xf]
  %v3387 = vld [vmem:[%s3379 + $0x1c] sm:$0xf]
  %v3388 = vpack.c.bf16 %v3367, %v3363
  %v3389 = vpack.c.bf16 %v3368, %v3364
  %v3390 = vpack.c.bf16 %v3369, %v3365
  %v3391 = vpack.c.bf16 %v3370, %v3366
  %v3392 = vpack.c.bf16 %v3375, %v3371
  %v3393 = vpack.c.bf16 %v3376, %v3372
  %v3394 = vpack.c.bf16 %v3377, %v3373
  %v3395 = vpack.c.bf16 %v3378, %v3374
  %s3396 = scalar_lea.vmem %s10, 64
  %v3397 = vld [vmem:[%s3396] sm:$0xff]
  %v3398 = vld [vmem:[%s3396 + $0x8] sm:$0xff]
  %v3399 = vld [vmem:[%s3396 + $0x10] sm:$0xff]
  %v3400 = vld [vmem:[%s3396 + $0x18] sm:$0xff]
  %v3401 = vld [vmem:[%s3396 + $0x20] sm:$0xff]
  %v3402 = vld [vmem:[%s3396 + $0x28] sm:$0xff]
  %v3403 = vld [vmem:[%s3396 + $0x30] sm:$0xff]
  %v3404 = vld [vmem:[%s3396 + $0x38] sm:$0xff]
  %3406 = vset.pattern.permute.xlu0 0
  %3407 = vperm.xlu0 %3406, %v3397
  %v3408 = vpop.permute.xlu0 %3407
  %3411 = vset.pattern.permute.xlu0 0
  %3412 = vperm.xlu0 %3411, %v3398
  %v3413 = vpop.permute.xlu0 %3412
  %3416 = vset.pattern.permute.xlu0 0
  %3417 = vperm.xlu0 %3416, %v3399
  %v3418 = vpop.permute.xlu0 %3417
  %3421 = vset.pattern.permute.xlu0 0
  %3422 = vperm.xlu0 %3421, %v3400
  %v3423 = vpop.permute.xlu0 %3422
  %3426 = vset.pattern.permute.xlu0 0
  %3427 = vperm.xlu0 %3426, %v3401
  %v3428 = vpop.permute.xlu0 %3427
  %3431 = vset.pattern.permute.xlu0 0
  %3432 = vperm.xlu0 %3431, %v3402
  %v3433 = vpop.permute.xlu0 %3432
  %3436 = vset.pattern.permute.xlu0 0
  %3437 = vperm.xlu0 %3436, %v3403
  %v3438 = vpop.permute.xlu0 %3437
  %3441 = vset.pattern.permute.xlu0 0
  %3442 = vperm.xlu0 %3441, %v3404
  %v3443 = vpop.permute.xlu0 %3442
  %v3453 = vunpack.c.l.b16 %v3380
  %v3454 = vunpack.c.l.b16 %v3381
  %v3455 = vunpack.c.l.b16 %v3382
  %v3456 = vunpack.c.l.b16 %v3383
  %v3457 = vunpack.c.l.b16 %v3384
  %v3458 = vunpack.c.l.b16 %v3385
  %v3459 = vunpack.c.l.b16 %v3386
  %v3460 = vunpack.c.l.b16 %v3387
  %v3461 = vpack.c.b16 %v3454, %v3453
  %v3462 = vpack.c.b16 %v3456, %v3455
  %v3463 = vpack.c.b16 %v3458, %v3457
  %v3464 = vpack.c.b16 %v3460, %v3459
  %v3466 = vsel %vm1923, %v3461, 0
  %v3469 = vsel %vm1923, %v3462, 0
  %v3472 = vsel %vm1923, %v3463, 0
  %v3475 = vsel %vm1923, %v3464, 0
  %3477 = vmatprep.subr.bf16.mxu0 0
  %3478 = vmatpush1.bf16.msra.mxu0 0
  %3479 = vmatprep.subr.bf16.mxu0 0
  %3480 = vmatpush1.bf16.msra.mxu0 0
  %3481 = vmatprep.subr.bf16.mxu0 0
  %3482 = vmatpush1.bf16.msra.mxu0 0
  %3483 = vmatprep.subr.bf16.mxu0 0
  %3484 = vmatpush1.bf16.msra.mxu0 0
  %3485 = vmatprep.subr.bf16.mxu0 0
  %3486 = vmatpush1.bf16.msra.mxu0 0
  %3487 = vmatprep.subr.bf16.mxu0 0
  %3488 = vmatpush1.bf16.msra.mxu0 0
  %3489 = vmatprep.subr.bf16.mxu0 %v3393
  %3490 = vmatpush1.bf16.msra.mxu0 %v3392
  %3491 = vmatprep.subr.bf16.mxu0 %v3389
  %3492 = vmatpush1.bf16.msra.mxu0 %v3388
  %3493 = vmatprep.subr.bf16.mxu0 0
  %3494 = vmatpush2.bf16.msra.mxu0 0
  %3495 = vmatprep.subr.bf16.mxu0 0
  %3496 = vmatpush2.bf16.msra.mxu0 0
  %3497 = vmatprep.subr.bf16.mxu0 0
  %3498 = vmatpush2.bf16.msra.mxu0 0
  %3499 = vmatprep.subr.bf16.mxu0 0
  %3500 = vmatpush2.bf16.msra.mxu0 0
  %3501 = vmatprep.subr.bf16.mxu0 0
  %3502 = vmatpush2.bf16.msra.mxu0 0
  %3503 = vmatprep.subr.bf16.mxu0 0
  %3504 = vmatpush2.bf16.msra.mxu0 0
  %3505 = vmatprep.subr.bf16.mxu0 0
  %3506 = vmatpush2.bf16.msra.mxu0 0
  %3507 = vmatprep.subr.bf16.mxu0 0
  %3508 = vmatpush2.bf16.msra.mxu0 0
  %3509 = vmatprep.mubr.bf16.mxu0 0
  %3510 = vmatmul.mubr.bf16.gmra.mxu0 %v3466
  %v3511 = vpop.f32.mrf.mxu0
  %v3512 = vadd.f32 %v3408, %v3511
  %v3513 = vpop.f32.mrf.mxu0
  %v3514 = vadd.f32 %v3408, %v3513
  %v3515 = vpop.f32.mrf.mxu0
  %v3516 = vadd.f32 %v3413, %v3515
  %v3517 = vpop.f32.mrf.mxu0
  %v3518 = vadd.f32 %v3413, %v3517
  %3519 = vmatprep.mubr.bf16.mxu0 0
  %3520 = vmatmul.mubr.bf16.gmra.mxu0 %v3469
  %v3521 = vpop.f32.mrf.mxu0
  %v3522 = vadd.f32 %v3418, %v3521
  %v3523 = vpop.f32.mrf.mxu0
  %v3524 = vadd.f32 %v3418, %v3523
  %v3525 = vpop.f32.mrf.mxu0
  %v3526 = vadd.f32 %v3423, %v3525
  %v3527 = vpop.f32.mrf.mxu0
  %v3528 = vadd.f32 %v3423, %v3527
  %3529 = vmatprep.mubr.bf16.mxu0 0
  %3530 = vmatmul.mubr.bf16.gmra.mxu0 %v3472
  %v3531 = vpop.f32.mrf.mxu0
  %v3532 = vadd.f32 %v3428, %v3531
  %v3533 = vpop.f32.mrf.mxu0
  %v3534 = vadd.f32 %v3428, %v3533
  %v3535 = vpop.f32.mrf.mxu0
  %v3536 = vadd.f32 %v3433, %v3535
  %v3537 = vpop.f32.mrf.mxu0
  %v3538 = vadd.f32 %v3433, %v3537
  %3539 = vmatprep.mubr.bf16.mxu0 0
  %3540 = vmatmul.mubr.bf16.gmra.mxu0 %v3475
  %v3541 = vpop.f32.mrf.mxu0
  %v3542 = vadd.f32 %v3438, %v3541
  %v3543 = vpop.f32.mrf.mxu0
  %v3544 = vadd.f32 %v3438, %v3543
  %v3545 = vpop.f32.mrf.mxu0
  %v3546 = vadd.f32 %v3443, %v3545
  %v3547 = vpop.f32.mrf.mxu0
  %v3548 = vadd.f32 %v3443, %v3547
  %3549 = vdwg.mxu0
  %3550 = vmatprep.subr.bf16.mxu0 0
  %3551 = vmatpush1.bf16.msra.mxu0 0
  %3552 = vmatprep.subr.bf16.mxu0 0
  %3553 = vmatpush1.bf16.msra.mxu0 0
  %3554 = vmatprep.subr.bf16.mxu0 0
  %3555 = vmatpush1.bf16.msra.mxu0 0
  %3556 = vmatprep.subr.bf16.mxu0 0
  %3557 = vmatpush1.bf16.msra.mxu0 0
  %3558 = vmatprep.subr.bf16.mxu0 0
  %3559 = vmatpush1.bf16.msra.mxu0 0
  %3560 = vmatprep.subr.bf16.mxu0 0
  %3561 = vmatpush1.bf16.msra.mxu0 0
  %3562 = vmatprep.subr.bf16.mxu0 %v3395
  %3563 = vmatpush1.bf16.msra.mxu0 %v3394
  %3564 = vmatprep.subr.bf16.mxu0 %v3391
  %3565 = vmatpush1.bf16.msra.mxu0 %v3390
  %3566 = vmatprep.subr.bf16.mxu0 0
  %3567 = vmatpush2.bf16.msra.mxu0 0
  %3568 = vmatprep.subr.bf16.mxu0 0
  %3569 = vmatpush2.bf16.msra.mxu0 0
  %3570 = vmatprep.subr.bf16.mxu0 0
  %3571 = vmatpush2.bf16.msra.mxu0 0
  %3572 = vmatprep.subr.bf16.mxu0 0
  %3573 = vmatpush2.bf16.msra.mxu0 0
  %3574 = vmatprep.subr.bf16.mxu0 0
  %3575 = vmatpush2.bf16.msra.mxu0 0
  %3576 = vmatprep.subr.bf16.mxu0 0
  %3577 = vmatpush2.bf16.msra.mxu0 0
  %3578 = vmatprep.subr.bf16.mxu0 0
  %3579 = vmatpush2.bf16.msra.mxu0 0
  %3580 = vmatprep.subr.bf16.mxu0 0
  %3581 = vmatpush2.bf16.msra.mxu0 0
  %3582 = vmatprep.mubr.bf16.mxu0 0
  %3583 = vmatmul.mubr.bf16.gmra.mxu0 %v3466
  %v3584 = vpop.f32.mrf.mxu0
  %v3585 = vadd.f32 %v3408, %v3584
  %v3586 = vpop.f32.mrf.mxu0
  %v3587 = vadd.f32 %v3408, %v3586
  %v3588 = vpop.f32.mrf.mxu0
  %v3589 = vadd.f32 %v3413, %v3588
  %v3590 = vpop.f32.mrf.mxu0
  %v3591 = vadd.f32 %v3413, %v3590
  %3592 = vmatprep.mubr.bf16.mxu0 0
  %3593 = vmatmul.mubr.bf16.gmra.mxu0 %v3469
  %v3594 = vpop.f32.mrf.mxu0
  %v3595 = vadd.f32 %v3418, %v3594
  %v3596 = vpop.f32.mrf.mxu0
  %v3597 = vadd.f32 %v3418, %v3596
  %v3598 = vpop.f32.mrf.mxu0
  %v3599 = vadd.f32 %v3423, %v3598
  %v3600 = vpop.f32.mrf.mxu0
  %v3601 = vadd.f32 %v3423, %v3600
  %3602 = vmatprep.mubr.bf16.mxu0 0
  %3603 = vmatmul.mubr.bf16.gmra.mxu0 %v3472
  %v3604 = vpop.f32.mrf.mxu0
  %v3605 = vadd.f32 %v3428, %v3604
  %v3606 = vpop.f32.mrf.mxu0
  %v3607 = vadd.f32 %v3428, %v3606
  %v3608 = vpop.f32.mrf.mxu0
  %v3609 = vadd.f32 %v3433, %v3608
  %v3610 = vpop.f32.mrf.mxu0
  %v3611 = vadd.f32 %v3433, %v3610
  %3612 = vmatprep.mubr.bf16.mxu0 0
  %3613 = vmatmul.mubr.bf16.gmra.mxu0 %v3475
  %v3614 = vpop.f32.mrf.mxu0
  %v3615 = vadd.f32 %v3438, %v3614
  %v3616 = vpop.f32.mrf.mxu0
  %v3617 = vadd.f32 %v3438, %v3616
  %v3618 = vpop.f32.mrf.mxu0
  %v3619 = vadd.f32 %v3443, %v3618
  %v3620 = vpop.f32.mrf.mxu0
  %v3621 = vadd.f32 %v3443, %v3620
  %3622 = vdwg.mxu0
  %v3623 = vadd.f32 %v2098, %v3512
  %v3624 = vadd.f32 %v2099, %v3514
  %v3625 = vadd.f32 %v2100, %v3585
  %v3626 = vadd.f32 %v2101, %v3587
  %v3627 = vadd.f32 %v2102, %v3516
  %v3628 = vadd.f32 %v2103, %v3518
  %v3629 = vadd.f32 %v2104, %v3589
  %v3630 = vadd.f32 %v2105, %v3591
  %v3631 = vadd.f32 %v2106, %v3522
  %v3632 = vadd.f32 %v2107, %v3524
  %v3633 = vadd.f32 %v2108, %v3595
  %v3634 = vadd.f32 %v2109, %v3597
  %v3635 = vadd.f32 %v2110, %v3526
  %v3636 = vadd.f32 %v2111, %v3528
  %v3637 = vadd.f32 %v2112, %v3599
  %v3638 = vadd.f32 %v2113, %v3601
  %v3639 = vmul.f32 %v3623, 0.70710677
  %v3640 = vmul.f32 %v3624, 0.70710677
  %v3641 = vmul.f32 %v3625, 0.70710677
  %v3642 = vmul.f32 %v3626, 0.70710677
  %v3643 = vmul.f32 %v3627, 0.70710677
  %v3644 = vmul.f32 %v3628, 0.70710677
  %v3645 = vmul.f32 %v3629, 0.70710677
  %v3646 = vmul.f32 %v3630, 0.70710677
  %v3647 = vmul.f32 %v3631, 0.70710677
  %v3648 = vmul.f32 %v3632, 0.70710677
  %v3649 = vmul.f32 %v3633, 0.70710677
  %v3650 = vmul.f32 %v3634, 0.70710677
  %v3651 = vmul.f32 %v3635, 0.70710677
  %v3652 = vmul.f32 %v3636, 0.70710677
  %v3653 = vmul.f32 %v3637, 0.70710677
  %v3654 = vmul.f32 %v3638, 0.70710677
  %v3655 = vld [vmem:[#allocation3] sm:$0xff]
  %v3656 = vld [vmem:[#allocation3 + $0x8] sm:$0xff]
  %v3657 = vld [vmem:[#allocation3 + $0x10] sm:$0xff]
  %v3658 = vld [vmem:[#allocation3 + $0x18] sm:$0xff]
  %v3659 = vld [vmem:[#allocation3 + $0x20] sm:$0xff]
  %v3660 = vld [vmem:[#allocation3 + $0x28] sm:$0xff]
  %v3661 = vld [vmem:[#allocation3 + $0x30] sm:$0xff]
  %v3662 = vld [vmem:[#allocation3 + $0x38] sm:$0xff]
  %v3663 = vld [vmem:[#allocation3 + $0x40] sm:$0xff]
  %v3664 = vld [vmem:[#allocation3 + $0x48] sm:$0xff]
  %v3665 = vld [vmem:[#allocation3 + $0x50] sm:$0xff]
  %v3666 = vld [vmem:[#allocation3 + $0x58] sm:$0xff]
  %v3667 = vld [vmem:[#allocation3 + $0x60] sm:$0xff]
  %v3668 = vld [vmem:[#allocation3 + $0x68] sm:$0xff]
  %v3669 = vld [vmem:[#allocation3 + $0x70] sm:$0xff]
  %v3670 = vld [vmem:[#allocation3 + $0x78] sm:$0xff]
  %v3671 = vadd.f32 %v3655, %v3532
  %v3672 = vadd.f32 %v3656, %v3534
  %v3673 = vadd.f32 %v3657, %v3605
  %v3674 = vadd.f32 %v3658, %v3607
  %v3675 = vadd.f32 %v3659, %v3536
  %v3676 = vadd.f32 %v3660, %v3538
  %v3677 = vadd.f32 %v3661, %v3609
  %v3678 = vadd.f32 %v3662, %v3611
  %v3679 = vadd.f32 %v3663, %v3542
  %v3680 = vadd.f32 %v3664, %v3544
  %v3681 = vadd.f32 %v3665, %v3615
  %v3682 = vadd.f32 %v3666, %v3617
  %v3683 = vadd.f32 %v3667, %v3546
  %v3684 = vadd.f32 %v3668, %v3548
  %v3685 = vadd.f32 %v3669, %v3619
  %v3686 = vadd.f32 %v3670, %v3621
  %3687 = vst [vmem:[#allocation3] sm:$0xff] %v3671
  %3688 = vst [vmem:[#allocation3 + $0x8] sm:$0xff] %v3672
  %3689 = vst [vmem:[#allocation3 + $0x10] sm:$0xff] %v3673
  %3690 = vst [vmem:[#allocation3 + $0x18] sm:$0xff] %v3674
  %3691 = vst [vmem:[#allocation3 + $0x20] sm:$0xff] %v3675
  %3692 = vst [vmem:[#allocation3 + $0x28] sm:$0xff] %v3676
  %3693 = vst [vmem:[#allocation3 + $0x30] sm:$0xff] %v3677
  %3694 = vst [vmem:[#allocation3 + $0x38] sm:$0xff] %v3678
  %3695 = vst [vmem:[#allocation3 + $0x40] sm:$0xff] %v3679
  %3696 = vst [vmem:[#allocation3 + $0x48] sm:$0xff] %v3680
  %3697 = vst [vmem:[#allocation3 + $0x50] sm:$0xff] %v3681
  %3698 = vst [vmem:[#allocation3 + $0x58] sm:$0xff] %v3682
  %3699 = vst [vmem:[#allocation3 + $0x60] sm:$0xff] %v3683
  %3700 = vst [vmem:[#allocation3 + $0x68] sm:$0xff] %v3684
  %3701 = vst [vmem:[#allocation3 + $0x70] sm:$0xff] %v3685
  %3702 = vst [vmem:[#allocation3 + $0x78] sm:$0xff] %v3686
  %s3703 = scalar_lea.vmem %s2, 256
  %v3704 = vld [vmem:[%s3703] sm:$0xff]
  %v3705 = vld [vmem:[%s3703 + $0x8] sm:$0xff]
  %v3706 = vld [vmem:[%s3703 + $0x10] sm:$0xff]
  %v3707 = vld [vmem:[%s3703 + $0x18] sm:$0xff]
  %v3708 = vld [vmem:[%s3703 + $0x20] sm:$0xff]
  %v3709 = vld [vmem:[%s3703 + $0x28] sm:$0xff]
  %v3710 = vld [vmem:[%s3703 + $0x30] sm:$0xff]
  %v3711 = vld [vmem:[%s3703 + $0x38] sm:$0xff]
  %v3712 = vld [vmem:[%s3703 + $0x40] sm:$0xff]
  %v3713 = vld [vmem:[%s3703 + $0x48] sm:$0xff]
  %v3714 = vld [vmem:[%s3703 + $0x50] sm:$0xff]
  %v3715 = vld [vmem:[%s3703 + $0x58] sm:$0xff]
  %v3716 = vld [vmem:[%s3703 + $0x60] sm:$0xff]
  %v3717 = vld [vmem:[%s3703 + $0x68] sm:$0xff]
  %v3718 = vld [vmem:[%s3703 + $0x70] sm:$0xff]
  %v3719 = vld [vmem:[%s3703 + $0x78] sm:$0xff]
  %v3720 = vadd.f32 %v3639, %v3704
  %v3721 = vadd.f32 %v3640, %v3705
  %v3722 = vadd.f32 %v3641, %v3706
  %v3723 = vadd.f32 %v3642, %v3707
  %v3724 = vadd.f32 %v3643, %v3708
  %v3725 = vadd.f32 %v3644, %v3709
  %v3726 = vadd.f32 %v3645, %v3710
  %v3727 = vadd.f32 %v3646, %v3711
  %v3728 = vadd.f32 %v3647, %v3712
  %v3729 = vadd.f32 %v3648, %v3713
  %v3730 = vadd.f32 %v3649, %v3714
  %v3731 = vadd.f32 %v3650, %v3715
  %v3732 = vadd.f32 %v3651, %v3716
  %v3733 = vadd.f32 %v3652, %v3717
  %v3734 = vadd.f32 %v3653, %v3718
  %v3735 = vadd.f32 %v3654, %v3719
  %v3736 = vpack.c.bf16 %v3724, %v3720
  %v3737 = vpack.c.bf16 %v3725, %v3721
  %v3738 = vpack.c.bf16 %v3726, %v3722
  %v3739 = vpack.c.bf16 %v3727, %v3723
  %v3740 = vpack.c.bf16 %v3732, %v3728
  %v3741 = vpack.c.bf16 %v3733, %v3729
  %v3742 = vpack.c.bf16 %v3734, %v3730
  %v3743 = vpack.c.bf16 %v3735, %v3731
  %v3752 = vunpack.c.l.b16 %v3736
  %v3753 = vunpack.c.l.b16 %v3737
  %v3754 = vunpack.c.l.b16 %v3738
  %v3755 = vunpack.c.l.b16 %v3739
  %v3756 = vunpack.c.h.b16 %v3736
  %v3757 = vunpack.c.h.b16 %v3737
  %v3758 = vunpack.c.h.b16 %v3738
  %v3759 = vunpack.c.h.b16 %v3739
  %v3760 = vunpack.c.l.b16 %v3740
  %v3761 = vunpack.c.l.b16 %v3741
  %v3762 = vunpack.c.l.b16 %v3742
  %v3763 = vunpack.c.l.b16 %v3743
  %v3764 = vunpack.c.h.b16 %v3740
  %v3765 = vunpack.c.h.b16 %v3741
  %v3766 = vunpack.c.h.b16 %v3742
  %v3767 = vunpack.c.h.b16 %v3743
  %v3768 = vpack.c.b16 %v3753, %v3752
  %v3769 = vpack.c.b16 %v3755, %v3754
  %v3770 = vpack.c.b16 %v3757, %v3756
  %v3771 = vpack.c.b16 %v3759, %v3758
  %v3772 = vpack.c.b16 %v3761, %v3760
  %v3773 = vpack.c.b16 %v3763, %v3762
  %v3774 = vpack.c.b16 %v3765, %v3764
  %v3775 = vpack.c.b16 %v3767, %v3766
  %3784 = vst [vmem:[#allocation2 + $0x40] sm:$0xff] %v3768
  %3785 = vst [vmem:[#allocation2 + $0x48] sm:$0xff] %v3769
  %3786 = vst [vmem:[#allocation2 + $0x50] sm:$0xff] %v3770
  %3787 = vst [vmem:[#allocation2 + $0x58] sm:$0xff] %v3771
  %3788 = vst [vmem:[#allocation2 + $0x60] sm:$0xff] %v3772
  %3789 = vst [vmem:[#allocation2 + $0x68] sm:$0xff] %v3773
  %3790 = vst [vmem:[#allocation2 + $0x70] sm:$0xff] %v3774
  %3791 = vst [vmem:[#allocation2 + $0x78] sm:$0xff] %v3775
  %3792 = vrot.lane.b32.xlu0 %v3739, 1
  %v3793 = vpop.permute.xlu0 %3792
  %3794 = vrot.lane.b32.xlu0 %v3743, 1
  %v3795 = vpop.permute.xlu0 %3794
  %3796 = vrot.lane.b32.xlu0 %v3736, 1
  %v3797 = vpop.permute.xlu0 %3796
  %3798 = vrot.lane.b32.xlu0 %v3737, 1
  %v3799 = vpop.permute.xlu0 %3798
  %3800 = vrot.lane.b32.xlu0 %v3738, 1
  %v3801 = vpop.permute.xlu0 %3800
  %3802 = vrot.lane.b32.xlu0 %v3740, 1
  %v3803 = vpop.permute.xlu0 %3802
  %3804 = vrot.lane.b32.xlu0 %v3741, 1
  %v3805 = vpop.permute.xlu0 %3804
  %3806 = vrot.lane.b32.xlu0 %v3742, 1
  %v3807 = vpop.permute.xlu0 %3806
  %v3808 = vsel %vm728, %v3797, %v3799
  %v3809 = vsel %vm728, %v3799, %v3801
  %v3810 = vsel %vm728, %v3801, %v3793
  %v3811 = vsel %vm728, %v3803, %v3805
  %v3812 = vsel %vm728, %v3805, %v3807
  %v3813 = vsel %vm728, %v3807, %v3795
  %v3822 = vsel %vm741, %v3793, %v3797
  %v3826 = vsel %vm741, %v3795, %v3803
  %v3828 = vsel %vm770, %v3822, 0
  %v3829 = vsel %vm771, %v3808, 0
  %v3830 = vsel %vm772, %v3809, 0
  %v3831 = vsel %vm773, %v3810, 0
  %v3832 = vsel %vm770, %v3826, 0
  %v3833 = vsel %vm771, %v3811, 0
  %v3834 = vsel %vm772, %v3812, 0
  %v3835 = vsel %vm773, %v3813, 0
  %v3844 = vunpack.c.l.b16 %v3828
  %v3845 = vunpack.c.l.b16 %v3829
  %v3846 = vunpack.c.l.b16 %v3830
  %v3847 = vunpack.c.l.b16 %v3831
  %v3848 = vunpack.c.h.b16 %v3828
  %v3849 = vunpack.c.h.b16 %v3829
  %v3850 = vunpack.c.h.b16 %v3830
  %v3851 = vunpack.c.h.b16 %v3831
  %v3852 = vunpack.c.l.b16 %v3832
  %v3853 = vunpack.c.l.b16 %v3833
  %v3854 = vunpack.c.l.b16 %v3834
  %v3855 = vunpack.c.l.b16 %v3835
  %v3856 = vunpack.c.h.b16 %v3832
  %v3857 = vunpack.c.h.b16 %v3833
  %v3858 = vunpack.c.h.b16 %v3834
  %v3859 = vunpack.c.h.b16 %v3835
  %v3860 = vpack.c.b16 %v3845, %v3844
  %v3861 = vpack.c.b16 %v3847, %v3846
  %v3862 = vpack.c.b16 %v3849, %v3848
  %v3863 = vpack.c.b16 %v3851, %v3850
  %v3864 = vpack.c.b16 %v3853, %v3852
  %v3865 = vpack.c.b16 %v3855, %v3854
  %v3866 = vpack.c.b16 %v3857, %v3856
  %v3867 = vpack.c.b16 %v3859, %v3858
  %3876 = vst [vmem:[#allocation2] sm:$0xff] %v3860
  %3877 = vst [vmem:[#allocation2 + $0x8] sm:$0xff] %v3861
  %3878 = vst [vmem:[#allocation2 + $0x10] sm:$0xff] %v3862
  %3879 = vst [vmem:[#allocation2 + $0x18] sm:$0xff] %v3863
  %3880 = vst [vmem:[#allocation2 + $0x20] sm:$0xff] %v3864
  %3881 = vst [vmem:[#allocation2 + $0x28] sm:$0xff] %v3865
  %3882 = vst [vmem:[#allocation2 + $0x30] sm:$0xff] %v3866
  %3883 = vst [vmem:[#allocation2 + $0x38] sm:$0xff] %v3867
  %3884 = vrot.lane.b32.xlu0 %v3736, 127
  %v3885 = vpop.permute.xlu0 %3884
  %3886 = vrot.lane.b32.xlu0 %v3737, 127
  %v3887 = vpop.permute.xlu0 %3886
  %3888 = vrot.lane.b32.xlu0 %v3738, 127
  %v3889 = vpop.permute.xlu0 %3888
  %3890 = vrot.lane.b32.xlu0 %v3739, 127
  %v3891 = vpop.permute.xlu0 %3890
  %3892 = vrot.lane.b32.xlu0 %v3740, 127
  %v3893 = vpop.permute.xlu0 %3892
  %3894 = vrot.lane.b32.xlu0 %v3741, 127
  %v3895 = vpop.permute.xlu0 %3894
  %3896 = vrot.lane.b32.xlu0 %v3742, 127
  %v3897 = vpop.permute.xlu0 %3896
  %3898 = vrot.lane.b32.xlu0 %v3743, 127
  %v3899 = vpop.permute.xlu0 %3898
  %v3900 = vsel %vm846, %v3885, %v3887
  %v3901 = vsel %vm846, %v3887, %v3889
  %v3902 = vsel %vm846, %v3889, %v3891
  %v3903 = vsel %vm846, %v3893, %v3895
  %v3904 = vsel %vm846, %v3895, %v3897
  %v3905 = vsel %vm846, %v3897, %v3899
  %v3914 = vsel %vm859, %v3891, %v3885
  %v3918 = vsel %vm859, %v3899, %v3893
  %v3920 = vsel %vm888, %v3900, 0
  %v3921 = vsel %vm889, %v3901, 0
  %v3922 = vsel %vm890, %v3902, 0
  %v3923 = vsel %vm891, %v3914, 0
  %v3924 = vsel %vm888, %v3903, 0
  %v3925 = vsel %vm889, %v3904, 0
  %v3926 = vsel %vm890, %v3905, 0
  %v3927 = vsel %vm891, %v3918, 0
  %v3936 = vunpack.c.l.b16 %v3920
  %v3937 = vunpack.c.l.b16 %v3921
  %v3938 = vunpack.c.l.b16 %v3922
  %v3939 = vunpack.c.l.b16 %v3923
  %v3940 = vunpack.c.h.b16 %v3920
  %v3941 = vunpack.c.h.b16 %v3921
  %v3942 = vunpack.c.h.b16 %v3922
  %v3943 = vunpack.c.h.b16 %v3923
  %v3944 = vunpack.c.l.b16 %v3924
  %v3945 = vunpack.c.l.b16 %v3925
  %v3946 = vunpack.c.l.b16 %v3926
  %v3947 = vunpack.c.l.b16 %v3927
  %v3948 = vunpack.c.h.b16 %v3924
  %v3949 = vunpack.c.h.b16 %v3925
  %v3950 = vunpack.c.h.b16 %v3926
  %v3951 = vunpack.c.h.b16 %v3927
  %v3952 = vpack.c.b16 %v3937, %v3936
  %v3953 = vpack.c.b16 %v3939, %v3938
  %v3954 = vpack.c.b16 %v3941, %v3940
  %v3955 = vpack.c.b16 %v3943, %v3942
  %v3956 = vpack.c.b16 %v3945, %v3944
  %v3957 = vpack.c.b16 %v3947, %v3946
  %v3958 = vpack.c.b16 %v3949, %v3948
  %v3959 = vpack.c.b16 %v3951, %v3950
  %3968 = vst [vmem:[#allocation2 + $0x80] sm:$0xff] %v3952
  %3969 = vst [vmem:[#allocation2 + $0x88] sm:$0xff] %v3953
  %3970 = vst [vmem:[#allocation2 + $0x90] sm:$0xff] %v3954
  %3971 = vst [vmem:[#allocation2 + $0x98] sm:$0xff] %v3955
  %3972 = vst [vmem:[#allocation2 + $0xa0] sm:$0xff] %v3956
  %3973 = vst [vmem:[#allocation2 + $0xa8] sm:$0xff] %v3957
  %3974 = vst [vmem:[#allocation2 + $0xb0] sm:$0xff] %v3958
  %3975 = vst [vmem:[#allocation2 + $0xb8] sm:$0xff] %v3959
  %v3976 = vld [vmem:[#allocation2 + $0x100] sm:$0xff]
  %v3977 = vld [vmem:[#allocation2 + $0x108] sm:$0xff]
  %v3978 = vld [vmem:[#allocation2 + $0x110] sm:$0xff]
  %v3979 = vld [vmem:[#allocation2 + $0x118] sm:$0xff]
  %v3980 = vld [vmem:[#allocation2 + $0x120] sm:$0xff]
  %v3981 = vld [vmem:[#allocation2 + $0x128] sm:$0xff]
  %v3982 = vld [vmem:[#allocation2 + $0x130] sm:$0xff]
  %v3983 = vld [vmem:[#allocation2 + $0x138] sm:$0xff]
  %v3988 = vunpack.c.h.b16 %v3977
  %v3989 = vunpack.c.h.b16 %v3979
  %v3990 = vunpack.c.h.b16 %v3981
  %v3991 = vunpack.c.h.b16 %v3983
  %v3992 = vpack.c.b16 %v3989, %v3988
  %v3993 = vpack.c.b16 %v3991, %v3990
  %3994 = vrot.lane.b32.xlu0 %v3992, 1
  %v3995 = vpop.permute.xlu0 %3994
  %3996 = vrot.lane.b32.xlu0 %v3993, 1
  %v3997 = vpop.permute.xlu0 %3996
  %v4002 = vunpack.c.l.b16 %v3976
  %v4003 = vunpack.c.h.b16 %v3976
  %v4004 = vunpack.c.l.b16 %v3977
  %v4005 = vunpack.c.l.b16 %v3978
  %v4006 = vunpack.c.h.b16 %v3978
  %v4007 = vunpack.c.l.b16 %v3979
  %v4008 = vunpack.c.l.b16 %v3980
  %v4009 = vunpack.c.h.b16 %v3980
  %v4010 = vunpack.c.l.b16 %v3981
  %v4011 = vunpack.c.l.b16 %v3982
  %v4012 = vunpack.c.h.b16 %v3982
  %v4013 = vunpack.c.l.b16 %v3983
  %v4014 = vpack.c.b16 %v4005, %v4002
  %v4015 = vpack.c.b16 %v4006, %v4003
  %v4016 = vpack.c.b16 %v4007, %v4004
  %v4017 = vpack.c.b16 %v4011, %v4008
  %v4018 = vpack.c.b16 %v4012, %v4009
  %v4019 = vpack.c.b16 %v4013, %v4010
  %4020 = vrot.lane.b32.xlu0 %v4014, 1
  %v4021 = vpop.permute.xlu0 %4020
  %4022 = vrot.lane.b32.xlu0 %v4015, 1
  %v4023 = vpop.permute.xlu0 %4022
  %4024 = vrot.lane.b32.xlu0 %v4016, 1
  %v4025 = vpop.permute.xlu0 %4024
  %4026 = vrot.lane.b32.xlu0 %v4017, 1
  %v4027 = vpop.permute.xlu0 %4026
  %4028 = vrot.lane.b32.xlu0 %v4018, 1
  %v4029 = vpop.permute.xlu0 %4028
  %4030 = vrot.lane.b32.xlu0 %v4019, 1
  %v4031 = vpop.permute.xlu0 %4030
  %v4032 = vsel %vm728, %v4021, %v4023
  %v4033 = vsel %vm728, %v4023, %v4025
  %v4034 = vsel %vm728, %v4025, %v3995
  %v4035 = vsel %vm728, %v4027, %v4029
  %v4036 = vsel %vm728, %v4029, %v4031
  %v4037 = vsel %vm728, %v4031, %v3997
  %v4046 = vsel %vm741, %v3995, %v4021
  %v4050 = vsel %vm741, %v3997, %v4027
  %v4052 = vsel %vm770, %v4046, 0
  %v4053 = vsel %vm771, %v4032, 0
  %v4054 = vsel %vm772, %v4033, 0
  %v4055 = vsel %vm773, %v4034, 0
  %v4056 = vsel %vm770, %v4050, 0
  %v4057 = vsel %vm771, %v4035, 0
  %v4058 = vsel %vm772, %v4036, 0
  %v4059 = vsel %vm773, %v4037, 0
  %v4068 = vunpack.c.l.b16 %v4052
  %v4069 = vunpack.c.l.b16 %v4053
  %v4070 = vunpack.c.l.b16 %v4054
  %v4071 = vunpack.c.l.b16 %v4055
  %v4072 = vunpack.c.h.b16 %v4052
  %v4073 = vunpack.c.h.b16 %v4053
  %v4074 = vunpack.c.h.b16 %v4054
  %v4075 = vunpack.c.h.b16 %v4055
  %v4076 = vunpack.c.l.b16 %v4056
  %v4077 = vunpack.c.l.b16 %v4057
  %v4078 = vunpack.c.l.b16 %v4058
  %v4079 = vunpack.c.l.b16 %v4059
  %v4080 = vunpack.c.h.b16 %v4056
  %v4081 = vunpack.c.h.b16 %v4057
  %v4082 = vunpack.c.h.b16 %v4058
  %v4083 = vunpack.c.h.b16 %v4059
  %v4084 = vpack.c.b16 %v4069, %v4068
  %v4085 = vpack.c.b16 %v4071, %v4070
  %v4086 = vpack.c.b16 %v4073, %v4072
  %v4087 = vpack.c.b16 %v4075, %v4074
  %v4088 = vpack.c.b16 %v4077, %v4076
  %v4089 = vpack.c.b16 %v4079, %v4078
  %v4090 = vpack.c.b16 %v4081, %v4080
  %v4091 = vpack.c.b16 %v4083, %v4082
  %4100 = vst [vmem:[#allocation2 + $0xc0] sm:$0xff] %v4084
  %4101 = vst [vmem:[#allocation2 + $0xc8] sm:$0xff] %v4085
  %4102 = vst [vmem:[#allocation2 + $0xd0] sm:$0xff] %v4086
  %4103 = vst [vmem:[#allocation2 + $0xd8] sm:$0xff] %v4087
  %4104 = vst [vmem:[#allocation2 + $0xe0] sm:$0xff] %v4088
  %4105 = vst [vmem:[#allocation2 + $0xe8] sm:$0xff] %v4089
  %4106 = vst [vmem:[#allocation2 + $0xf0] sm:$0xff] %v4090
  %4107 = vst [vmem:[#allocation2 + $0xf8] sm:$0xff] %v4091
  %4108 = vrot.lane.b32.xlu0 %v4014, 127
  %v4109 = vpop.permute.xlu0 %4108
  %4110 = vrot.lane.b32.xlu0 %v4015, 127
  %v4111 = vpop.permute.xlu0 %4110
  %4112 = vrot.lane.b32.xlu0 %v4016, 127
  %v4113 = vpop.permute.xlu0 %4112
  %4114 = vrot.lane.b32.xlu0 %v3992, 127
  %v4115 = vpop.permute.xlu0 %4114
  %4116 = vrot.lane.b32.xlu0 %v4017, 127
  %v4117 = vpop.permute.xlu0 %4116
  %4118 = vrot.lane.b32.xlu0 %v4018, 127
  %v4119 = vpop.permute.xlu0 %4118
  %4120 = vrot.lane.b32.xlu0 %v4019, 127
  %v4121 = vpop.permute.xlu0 %4120
  %4122 = vrot.lane.b32.xlu0 %v3993, 127
  %v4123 = vpop.permute.xlu0 %4122
  %v4124 = vsel %vm846, %v4109, %v4111
  %v4125 = vsel %vm846, %v4111, %v4113
  %v4126 = vsel %vm846, %v4113, %v4115
  %v4127 = vsel %vm846, %v4117, %v4119
  %v4128 = vsel %vm846, %v4119, %v4121
  %v4129 = vsel %vm846, %v4121, %v4123
  %v4138 = vsel %vm859, %v4115, %v4109
  %v4142 = vsel %vm859, %v4123, %v4117
  %v4144 = vsel %vm888, %v4124, 0
  %v4145 = vsel %vm889, %v4125, 0
  %v4146 = vsel %vm890, %v4126, 0
  %v4147 = vsel %vm891, %v4138, 0
  %v4148 = vsel %vm888, %v4127, 0
  %v4149 = vsel %vm889, %v4128, 0
  %v4150 = vsel %vm890, %v4129, 0
  %v4151 = vsel %vm891, %v4142, 0
  %v4160 = vunpack.c.l.b16 %v4144
  %v4161 = vunpack.c.l.b16 %v4145
  %v4162 = vunpack.c.l.b16 %v4146
  %v4163 = vunpack.c.l.b16 %v4147
  %v4164 = vunpack.c.h.b16 %v4144
  %v4165 = vunpack.c.h.b16 %v4145
  %v4166 = vunpack.c.h.b16 %v4146
  %v4167 = vunpack.c.h.b16 %v4147
  %v4168 = vunpack.c.l.b16 %v4148
  %v4169 = vunpack.c.l.b16 %v4149
  %v4170 = vunpack.c.l.b16 %v4150
  %v4171 = vunpack.c.l.b16 %v4151
  %v4172 = vunpack.c.h.b16 %v4148
  %v4173 = vunpack.c.h.b16 %v4149
  %v4174 = vunpack.c.h.b16 %v4150
  %v4175 = vunpack.c.h.b16 %v4151
  %v4176 = vpack.c.b16 %v4161, %v4160
  %v4177 = vpack.c.b16 %v4163, %v4162
  %v4178 = vpack.c.b16 %v4165, %v4164
  %v4179 = vpack.c.b16 %v4167, %v4166
  %v4180 = vpack.c.b16 %v4169, %v4168
  %v4181 = vpack.c.b16 %v4171, %v4170
  %v4182 = vpack.c.b16 %v4173, %v4172
  %v4183 = vpack.c.b16 %v4175, %v4174
  %4192 = vst [vmem:[#allocation2 + $0x140] sm:$0xff] %v4176
  %4193 = vst [vmem:[#allocation2 + $0x148] sm:$0xff] %v4177
  %4194 = vst [vmem:[#allocation2 + $0x150] sm:$0xff] %v4178
  %4195 = vst [vmem:[#allocation2 + $0x158] sm:$0xff] %v4179
  %4196 = vst [vmem:[#allocation2 + $0x160] sm:$0xff] %v4180
  %4197 = vst [vmem:[#allocation2 + $0x168] sm:$0xff] %v4181
  %4198 = vst [vmem:[#allocation2 + $0x170] sm:$0xff] %v4182
  %4199 = vst [vmem:[#allocation2 + $0x178] sm:$0xff] %v4183
  %s4200 = scalar_lea.vmem %s7, 128
  %v4201 = vld [vmem:[%s4200] sm:$0xff]
  %v4202 = vld [vmem:[%s4200 + $0x8] sm:$0xff]
  %v4203 = vld [vmem:[%s4200 + $0x10] sm:$0xff]
  %v4204 = vld [vmem:[%s4200 + $0x18] sm:$0xff]
  %v4205 = vld [vmem:[%s4200 + $0x20] sm:$0xff]
  %v4206 = vld [vmem:[%s4200 + $0x28] sm:$0xff]
  %v4207 = vld [vmem:[%s4200 + $0x30] sm:$0xff]
  %v4208 = vld [vmem:[%s4200 + $0x38] sm:$0xff]
  %v4209 = vld [vmem:[#allocation2] sm:$0xff]
  %v4210 = vld [vmem:[#allocation2 + $0x8] sm:$0xff]
  %v4211 = vld [vmem:[#allocation2 + $0x10] sm:$0xff]
  %v4212 = vld [vmem:[#allocation2 + $0x18] sm:$0xff]
  %v4213 = vld [vmem:[#allocation2 + $0x20] sm:$0xff]
  %v4214 = vld [vmem:[#allocation2 + $0x28] sm:$0xff]
  %v4215 = vld [vmem:[#allocation2 + $0x30] sm:$0xff]
  %v4216 = vld [vmem:[#allocation2 + $0x38] sm:$0xff]
  %v4217 = vld [vmem:[#allocation2 + $0x40] sm:$0xff]
  %v4218 = vld [vmem:[#allocation2 + $0x48] sm:$0xff]
  %v4219 = vld [vmem:[#allocation2 + $0x50] sm:$0xff]
  %v4220 = vld [vmem:[#allocation2 + $0x58] sm:$0xff]
  %v4221 = vld [vmem:[#allocation2 + $0x60] sm:$0xff]
  %v4222 = vld [vmem:[#allocation2 + $0x68] sm:$0xff]
  %v4223 = vld [vmem:[#allocation2 + $0x70] sm:$0xff]
  %v4224 = vld [vmem:[#allocation2 + $0x78] sm:$0xff]
  %v4225 = vld [vmem:[#allocation2 + $0x80] sm:$0xff]
  %v4226 = vld [vmem:[#allocation2 + $0x88] sm:$0xff]
  %v4227 = vld [vmem:[#allocation2 + $0x90] sm:$0xff]
  %v4228 = vld [vmem:[#allocation2 + $0x98] sm:$0xff]
  %v4229 = vld [vmem:[#allocation2 + $0xa0] sm:$0xff]
  %v4230 = vld [vmem:[#allocation2 + $0xa8] sm:$0xff]
  %v4231 = vld [vmem:[#allocation2 + $0xb0] sm:$0xff]
  %v4232 = vld [vmem:[#allocation2 + $0xb8] sm:$0xff]
  %v4233 = vld [vmem:[#allocation2 + $0xc0] sm:$0xff]
  %v4234 = vld [vmem:[#allocation2 + $0xc8] sm:$0xff]
  %v4235 = vld [vmem:[#allocation2 + $0xd0] sm:$0xff]
  %v4236 = vld [vmem:[#allocation2 + $0xd8] sm:$0xff]
  %v4237 = vld [vmem:[#allocation2 + $0xe0] sm:$0xff]
  %v4238 = vld [vmem:[#allocation2 + $0xe8] sm:$0xff]
  %v4239 = vld [vmem:[#allocation2 + $0xf0] sm:$0xff]
  %v4240 = vld [vmem:[#allocation2 + $0xf8] sm:$0xff]
  %v4241 = vld [vmem:[#allocation2 + $0x100] sm:$0xff]
  %v4242 = vld [vmem:[#allocation2 + $0x108] sm:$0xff]
  %v4243 = vld [vmem:[#allocation2 + $0x110] sm:$0xff]
  %v4244 = vld [vmem:[#allocation2 + $0x118] sm:$0xff]
  %v4245 = vld [vmem:[#allocation2 + $0x120] sm:$0xff]
  %v4246 = vld [vmem:[#allocation2 + $0x128] sm:$0xff]
  %v4247 = vld [vmem:[#allocation2 + $0x130] sm:$0xff]
  %v4248 = vld [vmem:[#allocation2 + $0x138] sm:$0xff]
  %v4249 = vld [vmem:[#allocation2 + $0x140] sm:$0xff]
  %v4250 = vld [vmem:[#allocation2 + $0x148] sm:$0xff]
  %v4251 = vld [vmem:[#allocation2 + $0x150] sm:$0xff]
  %v4252 = vld [vmem:[#allocation2 + $0x158] sm:$0xff]
  %v4253 = vld [vmem:[#allocation2 + $0x160] sm:$0xff]
  %v4254 = vld [vmem:[#allocation2 + $0x168] sm:$0xff]
  %v4255 = vld [vmem:[#allocation2 + $0x170] sm:$0xff]
  %v4256 = vld [vmem:[#allocation2 + $0x178] sm:$0xff]
  %s4257 = scalar_lea.vmem %s8, 128
  %v4258 = vld [vmem:[%s4257] sm:$0xff]
  %v4259 = vld [vmem:[%s4257 + $0x8] sm:$0xff]
  %v4260 = vld [vmem:[%s4257 + $0x10] sm:$0xff]
  %v4261 = vld [vmem:[%s4257 + $0x18] sm:$0xff]
  %v4262 = vld [vmem:[%s4257 + $0x20] sm:$0xff]
  %v4263 = vld [vmem:[%s4257 + $0x28] sm:$0xff]
  %v4264 = vld [vmem:[%s4257 + $0x30] sm:$0xff]
  %v4265 = vld [vmem:[%s4257 + $0x38] sm:$0xff]
  %4267 = vset.pattern.permute.xlu0 0
  %4268 = vperm.xlu0 %4267, %v4258
  %v4269 = vpop.permute.xlu0 %4268
  %4272 = vset.pattern.permute.xlu0 0
  %4273 = vperm.xlu0 %4272, %v4259
  %v4274 = vpop.permute.xlu0 %4273
  %4277 = vset.pattern.permute.xlu0 0
  %4278 = vperm.xlu0 %4277, %v4260
  %v4279 = vpop.permute.xlu0 %4278
  %4282 = vset.pattern.permute.xlu0 0
  %4283 = vperm.xlu0 %4282, %v4261
  %v4284 = vpop.permute.xlu0 %4283
  %4287 = vset.pattern.permute.xlu0 0
  %4288 = vperm.xlu0 %4287, %v4262
  %v4289 = vpop.permute.xlu0 %4288
  %4292 = vset.pattern.permute.xlu0 0
  %4293 = vperm.xlu0 %4292, %v4263
  %v4294 = vpop.permute.xlu0 %4293
  %4297 = vset.pattern.permute.xlu0 0
  %4298 = vperm.xlu0 %4297, %v4264
  %v4299 = vpop.permute.xlu0 %4298
  %4302 = vset.pattern.permute.xlu0 0
  %4303 = vperm.xlu0 %4302, %v4265
  %v4304 = vpop.permute.xlu0 %4303
  %v4314 = vunpack.c.l.b16 %v4201
  %v4315 = vunpack.c.h.b16 %v4201
  %v4316 = vunpack.c.l.b16 %v4202
  %v4317 = vunpack.c.h.b16 %v4202
  %v4318 = vunpack.c.l.b16 %v4203
  %v4319 = vunpack.c.h.b16 %v4203
  %v4320 = vunpack.c.l.b16 %v4204
  %v4321 = vunpack.c.h.b16 %v4204
  %v4322 = vunpack.c.l.b16 %v4205
  %v4323 = vunpack.c.h.b16 %v4205
  %v4324 = vunpack.c.l.b16 %v4206
  %v4325 = vunpack.c.h.b16 %v4206
  %v4326 = vunpack.c.l.b16 %v4207
  %v4327 = vunpack.c.h.b16 %v4207
  %v4328 = vunpack.c.l.b16 %v4208
  %v4329 = vunpack.c.h.b16 %v4208
  %v4330 = vpack.c.b16 %v4316, %v4314
  %v4331 = vpack.c.b16 %v4317, %v4315
  %v4332 = vpack.c.b16 %v4320, %v4318
  %v4333 = vpack.c.b16 %v4321, %v4319
  %v4334 = vpack.c.b16 %v4324, %v4322
  %v4335 = vpack.c.b16 %v4325, %v4323
  %v4336 = vpack.c.b16 %v4328, %v4326
  %v4337 = vpack.c.b16 %v4329, %v4327
  %v4390 = vunpack.c.l.b16 %v4209
  %v4391 = vunpack.c.h.b16 %v4209
  %v4392 = vunpack.c.l.b16 %v4210
  %v4393 = vunpack.c.h.b16 %v4210
  %v4394 = vunpack.c.l.b16 %v4211
  %v4395 = vunpack.c.h.b16 %v4211
  %v4396 = vunpack.c.l.b16 %v4212
  %v4397 = vunpack.c.h.b16 %v4212
  %v4398 = vunpack.c.l.b16 %v4213
  %v4399 = vunpack.c.h.b16 %v4213
  %v4400 = vunpack.c.l.b16 %v4214
  %v4401 = vunpack.c.h.b16 %v4214
  %v4402 = vunpack.c.l.b16 %v4215
  %v4403 = vunpack.c.h.b16 %v4215
  %v4404 = vunpack.c.l.b16 %v4216
  %v4405 = vunpack.c.h.b16 %v4216
  %v4406 = vunpack.c.l.b16 %v4217
  %v4407 = vunpack.c.h.b16 %v4217
  %v4408 = vunpack.c.l.b16 %v4218
  %v4409 = vunpack.c.h.b16 %v4218
  %v4410 = vunpack.c.l.b16 %v4219
  %v4411 = vunpack.c.h.b16 %v4219
  %v4412 = vunpack.c.l.b16 %v4220
  %v4413 = vunpack.c.h.b16 %v4220
  %v4414 = vunpack.c.l.b16 %v4221
  %v4415 = vunpack.c.h.b16 %v4221
  %v4416 = vunpack.c.l.b16 %v4222
  %v4417 = vunpack.c.h.b16 %v4222
  %v4418 = vunpack.c.l.b16 %v4223
  %v4419 = vunpack.c.h.b16 %v4223
  %v4420 = vunpack.c.l.b16 %v4224
  %v4421 = vunpack.c.h.b16 %v4224
  %v4422 = vunpack.c.l.b16 %v4225
  %v4423 = vunpack.c.h.b16 %v4225
  %v4424 = vunpack.c.l.b16 %v4226
  %v4425 = vunpack.c.h.b16 %v4226
  %v4426 = vunpack.c.l.b16 %v4227
  %v4427 = vunpack.c.h.b16 %v4227
  %v4428 = vunpack.c.l.b16 %v4228
  %v4429 = vunpack.c.h.b16 %v4228
  %v4430 = vunpack.c.l.b16 %v4229
  %v4431 = vunpack.c.h.b16 %v4229
  %v4432 = vunpack.c.l.b16 %v4230
  %v4433 = vunpack.c.h.b16 %v4230
  %v4434 = vunpack.c.l.b16 %v4231
  %v4435 = vunpack.c.h.b16 %v4231
  %v4436 = vunpack.c.l.b16 %v4232
  %v4437 = vunpack.c.h.b16 %v4232
  %v4438 = vunpack.c.l.b16 %v4233
  %v4439 = vunpack.c.h.b16 %v4233
  %v4440 = vunpack.c.l.b16 %v4234
  %v4441 = vunpack.c.h.b16 %v4234
  %v4442 = vunpack.c.l.b16 %v4235
  %v4443 = vunpack.c.h.b16 %v4235
  %v4444 = vunpack.c.l.b16 %v4236
  %v4445 = vunpack.c.h.b16 %v4236
  %v4446 = vunpack.c.l.b16 %v4237
  %v4447 = vunpack.c.h.b16 %v4237
  %v4448 = vunpack.c.l.b16 %v4238
  %v4449 = vunpack.c.h.b16 %v4238
  %v4450 = vunpack.c.l.b16 %v4239
  %v4451 = vunpack.c.h.b16 %v4239
  %v4452 = vunpack.c.l.b16 %v4240
  %v4453 = vunpack.c.h.b16 %v4240
  %v4454 = vunpack.c.l.b16 %v4241
  %v4455 = vunpack.c.h.b16 %v4241
  %v4456 = vunpack.c.l.b16 %v4242
  %v4457 = vunpack.c.h.b16 %v4242
  %v4458 = vunpack.c.l.b16 %v4243
  %v4459 = vunpack.c.h.b16 %v4243
  %v4460 = vunpack.c.l.b16 %v4244
  %v4461 = vunpack.c.h.b16 %v4244
  %v4462 = vunpack.c.l.b16 %v4245
  %v4463 = vunpack.c.h.b16 %v4245
  %v4464 = vunpack.c.l.b16 %v4246
  %v4465 = vunpack.c.h.b16 %v4246
  %v4466 = vunpack.c.l.b16 %v4247
  %v4467 = vunpack.c.h.b16 %v4247
  %v4468 = vunpack.c.l.b16 %v4248
  %v4469 = vunpack.c.h.b16 %v4248
  %v4470 = vunpack.c.l.b16 %v4249
  %v4471 = vunpack.c.h.b16 %v4249
  %v4472 = vunpack.c.l.b16 %v4250
  %v4473 = vunpack.c.h.b16 %v4250
  %v4474 = vunpack.c.l.b16 %v4251
  %v4475 = vunpack.c.h.b16 %v4251
  %v4476 = vunpack.c.l.b16 %v4252
  %v4477 = vunpack.c.h.b16 %v4252
  %v4478 = vunpack.c.l.b16 %v4253
  %v4479 = vunpack.c.h.b16 %v4253
  %v4480 = vunpack.c.l.b16 %v4254
  %v4481 = vunpack.c.h.b16 %v4254
  %v4482 = vunpack.c.l.b16 %v4255
  %v4483 = vunpack.c.h.b16 %v4255
  %v4484 = vunpack.c.l.b16 %v4256
  %v4485 = vunpack.c.h.b16 %v4256
  %v4486 = vpack.c.b16 %v4394, %v4390
  %v4487 = vpack.c.b16 %v4395, %v4391
  %v4488 = vpack.c.b16 %v4396, %v4392
  %v4489 = vpack.c.b16 %v4397, %v4393
  %v4490 = vpack.c.b16 %v4402, %v4398
  %v4491 = vpack.c.b16 %v4403, %v4399
  %v4492 = vpack.c.b16 %v4404, %v4400
  %v4493 = vpack.c.b16 %v4405, %v4401
  %v4494 = vpack.c.b16 %v4410, %v4406
  %v4495 = vpack.c.b16 %v4411, %v4407
  %v4496 = vpack.c.b16 %v4412, %v4408
  %v4497 = vpack.c.b16 %v4413, %v4409
  %v4498 = vpack.c.b16 %v4418, %v4414
  %v4499 = vpack.c.b16 %v4419, %v4415
  %v4500 = vpack.c.b16 %v4420, %v4416
  %v4501 = vpack.c.b16 %v4421, %v4417
  %v4502 = vpack.c.b16 %v4426, %v4422
  %v4503 = vpack.c.b16 %v4427, %v4423
  %v4504 = vpack.c.b16 %v4428, %v4424
  %v4505 = vpack.c.b16 %v4429, %v4425
  %v4506 = vpack.c.b16 %v4434, %v4430
  %v4507 = vpack.c.b16 %v4435, %v4431
  %v4508 = vpack.c.b16 %v4436, %v4432
  %v4509 = vpack.c.b16 %v4437, %v4433
  %v4510 = vpack.c.b16 %v4442, %v4438
  %v4511 = vpack.c.b16 %v4443, %v4439
  %v4512 = vpack.c.b16 %v4444, %v4440
  %v4513 = vpack.c.b16 %v4445, %v4441
  %v4514 = vpack.c.b16 %v4450, %v4446
  %v4515 = vpack.c.b16 %v4451, %v4447
  %v4516 = vpack.c.b16 %v4452, %v4448
  %v4517 = vpack.c.b16 %v4453, %v4449
  %v4518 = vpack.c.b16 %v4458, %v4454
  %v4519 = vpack.c.b16 %v4459, %v4455
  %v4520 = vpack.c.b16 %v4460, %v4456
  %v4521 = vpack.c.b16 %v4461, %v4457
  %v4522 = vpack.c.b16 %v4466, %v4462
  %v4523 = vpack.c.b16 %v4467, %v4463
  %v4524 = vpack.c.b16 %v4468, %v4464
  %v4525 = vpack.c.b16 %v4469, %v4465
  %v4526 = vpack.c.b16 %v4474, %v4470
  %v4527 = vpack.c.b16 %v4475, %v4471
  %v4528 = vpack.c.b16 %v4476, %v4472
  %v4529 = vpack.c.b16 %v4477, %v4473
  %v4530 = vpack.c.b16 %v4482, %v4478
  %v4531 = vpack.c.b16 %v4483, %v4479
  %v4532 = vpack.c.b16 %v4484, %v4480
  %v4533 = vpack.c.b16 %v4485, %v4481
  %v4583 = vsel %vm1552, %v4331, 0
  %v4586 = vsel %vm1552, %v4333, 0
  %v4589 = vsel %vm1552, %v4335, 0
  %v4592 = vsel %vm1552, %v4337, 0
  %4594 = vmatprep.subr.bf16.mxu0 %v4515
  %4595 = vmatpush1.bf16.msra.mxu0 %v4514
  %4596 = vmatprep.subr.bf16.mxu0 %v4511
  %4597 = vmatpush1.bf16.msra.mxu0 %v4510
  %4598 = vmatprep.subr.bf16.mxu0 %v4507
  %4599 = vmatpush1.bf16.msra.mxu0 %v4506
  %4600 = vmatprep.subr.bf16.mxu0 %v4503
  %4601 = vmatpush1.bf16.msra.mxu0 %v4502
  %4602 = vmatprep.subr.bf16.mxu0 %v4499
  %4603 = vmatpush1.bf16.msra.mxu0 %v4498
  %4604 = vmatprep.subr.bf16.mxu0 %v4495
  %4605 = vmatpush1.bf16.msra.mxu0 %v4494
  %4606 = vmatprep.subr.bf16.mxu0 %v4491
  %4607 = vmatpush1.bf16.msra.mxu0 %v4490
  %4608 = vmatprep.subr.bf16.mxu0 %v4487
  %4609 = vmatpush1.bf16.msra.mxu0 %v4486
  %4610 = vmatprep.subr.bf16.mxu0 0
  %4611 = vmatpush2.bf16.msra.mxu0 0
  %4612 = vmatprep.subr.bf16.mxu0 0
  %4613 = vmatpush2.bf16.msra.mxu0 0
  %4614 = vmatprep.subr.bf16.mxu0 0
  %4615 = vmatpush2.bf16.msra.mxu0 0
  %4616 = vmatprep.subr.bf16.mxu0 0
  %4617 = vmatpush2.bf16.msra.mxu0 0
  %4618 = vmatprep.subr.bf16.mxu0 %v4531
  %4619 = vmatpush2.bf16.msra.mxu0 %v4530
  %4620 = vmatprep.subr.bf16.mxu0 %v4527
  %4621 = vmatpush2.bf16.msra.mxu0 %v4526
  %4622 = vmatprep.subr.bf16.mxu0 %v4523
  %4623 = vmatpush2.bf16.msra.mxu0 %v4522
  %4624 = vmatprep.subr.bf16.mxu0 %v4519
  %4625 = vmatpush2.bf16.msra.mxu0 %v4518
  %4626 = vmatprep.mubr.bf16.mxu0 %v4583
  %4627 = vmatmul.mubr.bf16.gmra.mxu0 %v4330
  %v4628 = vpop.f32.mrf.mxu0
  %v4629 = vadd.f32 %v4269, %v4628
  %v4630 = vpop.f32.mrf.mxu0
  %v4631 = vadd.f32 %v4269, %v4630
  %v4632 = vpop.f32.mrf.mxu0
  %v4633 = vadd.f32 %v4274, %v4632
  %v4634 = vpop.f32.mrf.mxu0
  %v4635 = vadd.f32 %v4274, %v4634
  %4636 = vmatprep.mubr.bf16.mxu0 %v4586
  %4637 = vmatmul.mubr.bf16.gmra.mxu0 %v4332
  %v4638 = vpop.f32.mrf.mxu0
  %v4639 = vadd.f32 %v4279, %v4638
  %v4640 = vpop.f32.mrf.mxu0
  %v4641 = vadd.f32 %v4279, %v4640
  %v4642 = vpop.f32.mrf.mxu0
  %v4643 = vadd.f32 %v4284, %v4642
  %v4644 = vpop.f32.mrf.mxu0
  %v4645 = vadd.f32 %v4284, %v4644
  %4646 = vmatprep.mubr.bf16.mxu0 %v4589
  %4647 = vmatmul.mubr.bf16.gmra.mxu0 %v4334
  %v4648 = vpop.f32.mrf.mxu0
  %v4649 = vadd.f32 %v4289, %v4648
  %v4650 = vpop.f32.mrf.mxu0
  %v4651 = vadd.f32 %v4289, %v4650
  %v4652 = vpop.f32.mrf.mxu0
  %v4653 = vadd.f32 %v4294, %v4652
  %v4654 = vpop.f32.mrf.mxu0
  %v4655 = vadd.f32 %v4294, %v4654
  %4656 = vmatprep.mubr.bf16.mxu0 %v4592
  %4657 = vmatmul.mubr.bf16.gmra.mxu0 %v4336
  %v4658 = vpop.f32.mrf.mxu0
  %v4659 = vadd.f32 %v4299, %v4658
  %v4660 = vpop.f32.mrf.mxu0
  %v4661 = vadd.f32 %v4299, %v4660
  %v4662 = vpop.f32.mrf.mxu0
  %v4663 = vadd.f32 %v4304, %v4662
  %v4664 = vpop.f32.mrf.mxu0
  %v4665 = vadd.f32 %v4304, %v4664
  %4666 = vdwg.mxu0
  %4667 = vmatprep.subr.bf16.mxu0 %v4517
  %4668 = vmatpush1.bf16.msra.mxu0 %v4516
  %4669 = vmatprep.subr.bf16.mxu0 %v4513
  %4670 = vmatpush1.bf16.msra.mxu0 %v4512
  %4671 = vmatprep.subr.bf16.mxu0 %v4509
  %4672 = vmatpush1.bf16.msra.mxu0 %v4508
  %4673 = vmatprep.subr.bf16.mxu0 %v4505
  %4674 = vmatpush1.bf16.msra.mxu0 %v4504
  %4675 = vmatprep.subr.bf16.mxu0 %v4501
  %4676 = vmatpush1.bf16.msra.mxu0 %v4500
  %4677 = vmatprep.subr.bf16.mxu0 %v4497
  %4678 = vmatpush1.bf16.msra.mxu0 %v4496
  %4679 = vmatprep.subr.bf16.mxu0 %v4493
  %4680 = vmatpush1.bf16.msra.mxu0 %v4492
  %4681 = vmatprep.subr.bf16.mxu0 %v4489
  %4682 = vmatpush1.bf16.msra.mxu0 %v4488
  %4683 = vmatprep.subr.bf16.mxu0 0
  %4684 = vmatpush2.bf16.msra.mxu0 0
  %4685 = vmatprep.subr.bf16.mxu0 0
  %4686 = vmatpush2.bf16.msra.mxu0 0
  %4687 = vmatprep.subr.bf16.mxu0 0
  %4688 = vmatpush2.bf16.msra.mxu0 0
  %4689 = vmatprep.subr.bf16.mxu0 0
  %4690 = vmatpush2.bf16.msra.mxu0 0
  %4691 = vmatprep.subr.bf16.mxu0 %v4533
  %4692 = vmatpush2.bf16.msra.mxu0 %v4532
  %4693 = vmatprep.subr.bf16.mxu0 %v4529
  %4694 = vmatpush2.bf16.msra.mxu0 %v4528
  %4695 = vmatprep.subr.bf16.mxu0 %v4525
  %4696 = vmatpush2.bf16.msra.mxu0 %v4524
  %4697 = vmatprep.subr.bf16.mxu0 %v4521
  %4698 = vmatpush2.bf16.msra.mxu0 %v4520
  %4699 = vmatprep.mubr.bf16.mxu0 %v4583
  %4700 = vmatmul.mubr.bf16.gmra.mxu0 %v4330
  %v4701 = vpop.f32.mrf.mxu0
  %v4702 = vadd.f32 %v4269, %v4701
  %v4703 = vpop.f32.mrf.mxu0
  %v4704 = vadd.f32 %v4269, %v4703
  %v4705 = vpop.f32.mrf.mxu0
  %v4706 = vadd.f32 %v4274, %v4705
  %v4707 = vpop.f32.mrf.mxu0
  %v4708 = vadd.f32 %v4274, %v4707
  %4709 = vmatprep.mubr.bf16.mxu0 %v4586
  %4710 = vmatmul.mubr.bf16.gmra.mxu0 %v4332
  %v4711 = vpop.f32.mrf.mxu0
  %v4712 = vadd.f32 %v4279, %v4711
  %v4713 = vpop.f32.mrf.mxu0
  %v4714 = vadd.f32 %v4279, %v4713
  %v4715 = vpop.f32.mrf.mxu0
  %v4716 = vadd.f32 %v4284, %v4715
  %v4717 = vpop.f32.mrf.mxu0
  %v4718 = vadd.f32 %v4284, %v4717
  %4719 = vmatprep.mubr.bf16.mxu0 %v4589
  %4720 = vmatmul.mubr.bf16.gmra.mxu0 %v4334
  %v4721 = vpop.f32.mrf.mxu0
  %v4722 = vadd.f32 %v4289, %v4721
  %v4723 = vpop.f32.mrf.mxu0
  %v4724 = vadd.f32 %v4289, %v4723
  %v4725 = vpop.f32.mrf.mxu0
  %v4726 = vadd.f32 %v4294, %v4725
  %v4727 = vpop.f32.mrf.mxu0
  %v4728 = vadd.f32 %v4294, %v4727
  %4729 = vmatprep.mubr.bf16.mxu0 %v4592
  %4730 = vmatmul.mubr.bf16.gmra.mxu0 %v4336
  %v4731 = vpop.f32.mrf.mxu0
  %v4732 = vadd.f32 %v4299, %v4731
  %v4733 = vpop.f32.mrf.mxu0
  %v4734 = vadd.f32 %v4299, %v4733
  %v4735 = vpop.f32.mrf.mxu0
  %v4736 = vadd.f32 %v4304, %v4735
  %v4737 = vpop.f32.mrf.mxu0
  %v4738 = vadd.f32 %v4304, %v4737
  %4739 = vdwg.mxu0
  %v4740 = vxor.u32 %v4629, 2147483648
  %v4741 = vxor.u32 %v4631, 2147483648
  %v4742 = vxor.u32 %v4702, 2147483648
  %v4743 = vxor.u32 %v4704, 2147483648
  %v4744 = vxor.u32 %v4633, 2147483648
  %v4745 = vxor.u32 %v4635, 2147483648
  %v4746 = vxor.u32 %v4706, 2147483648
  %v4747 = vxor.u32 %v4708, 2147483648
  %v4748 = vxor.u32 %v4639, 2147483648
  %v4749 = vxor.u32 %v4641, 2147483648
  %v4750 = vxor.u32 %v4712, 2147483648
  %v4751 = vxor.u32 %v4714, 2147483648
  %v4752 = vxor.u32 %v4643, 2147483648
  %v4753 = vxor.u32 %v4645, 2147483648
  %v4754 = vxor.u32 %v4716, 2147483648
  %v4755 = vxor.u32 %v4718, 2147483648
  %v4756 = vmul.f32 %v4740, 1.442695
  %v4757 = vpow.pop %v4756
  %v4758 = vmul.f32 %v4741, 1.442695
  %v4759 = vpow.pop %v4758
  %v4760 = vmul.f32 %v4742, 1.442695
  %v4761 = vpow.pop %v4760
  %v4762 = vmul.f32 %v4743, 1.442695
  %v4763 = vpow.pop %v4762
  %v4764 = vmul.f32 %v4744, 1.442695
  %v4765 = vpow.pop %v4764
  %v4766 = vmul.f32 %v4745, 1.442695
  %v4767 = vpow.pop %v4766
  %v4768 = vmul.f32 %v4746, 1.442695
  %v4769 = vpow.pop %v4768
  %v4770 = vmul.f32 %v4747, 1.442695
  %v4771 = vpow.pop %v4770
  %v4772 = vmul.f32 %v4748, 1.442695
  %v4773 = vpow.pop %v4772
  %v4774 = vmul.f32 %v4749, 1.442695
  %v4775 = vpow.pop %v4774
  %v4776 = vmul.f32 %v4750, 1.442695
  %v4777 = vpow.pop %v4776
  %v4778 = vmul.f32 %v4751, 1.442695
  %v4779 = vpow.pop %v4778
  %v4780 = vmul.f32 %v4752, 1.442695
  %v4781 = vpow.pop %v4780
  %v4782 = vmul.f32 %v4753, 1.442695
  %v4783 = vpow.pop %v4782
  %v4784 = vmul.f32 %v4754, 1.442695
  %v4785 = vpow.pop %v4784
  %v4786 = vmul.f32 %v4755, 1.442695
  %v4787 = vpow.pop %v4786
  %v4788 = vadd.f32 %v4757, 1.0
  %v4789 = vadd.f32 %v4759, 1.0
  %v4790 = vadd.f32 %v4761, 1.0
  %v4791 = vadd.f32 %v4763, 1.0
  %v4792 = vadd.f32 %v4765, 1.0
  %v4793 = vadd.f32 %v4767, 1.0
  %v4794 = vadd.f32 %v4769, 1.0
  %v4795 = vadd.f32 %v4771, 1.0
  %v4796 = vadd.f32 %v4773, 1.0
  %v4797 = vadd.f32 %v4775, 1.0
  %v4798 = vadd.f32 %v4777, 1.0
  %v4799 = vadd.f32 %v4779, 1.0
  %v4800 = vadd.f32 %v4781, 1.0
  %v4801 = vadd.f32 %v4783, 1.0
  %v4802 = vadd.f32 %v4785, 1.0
  %v4803 = vadd.f32 %v4787, 1.0
  %v4804 = vrcp.pop %v4788
  %v4805 = vmul.f32 1.0, %v4804
  %v4806 = vrcp.pop %v4789
  %v4807 = vmul.f32 1.0, %v4806
  %v4808 = vrcp.pop %v4790
  %v4809 = vmul.f32 1.0, %v4808
  %v4810 = vrcp.pop %v4791
  %v4811 = vmul.f32 1.0, %v4810
  %v4812 = vrcp.pop %v4792
  %v4813 = vmul.f32 1.0, %v4812
  %v4814 = vrcp.pop %v4793
  %v4815 = vmul.f32 1.0, %v4814
  %v4816 = vrcp.pop %v4794
  %v4817 = vmul.f32 1.0, %v4816
  %v4818 = vrcp.pop %v4795
  %v4819 = vmul.f32 1.0, %v4818
  %v4820 = vrcp.pop %v4796
  %v4821 = vmul.f32 1.0, %v4820
  %v4822 = vrcp.pop %v4797
  %v4823 = vmul.f32 1.0, %v4822
  %v4824 = vrcp.pop %v4798
  %v4825 = vmul.f32 1.0, %v4824
  %v4826 = vrcp.pop %v4799
  %v4827 = vmul.f32 1.0, %v4826
  %v4828 = vrcp.pop %v4800
  %v4829 = vmul.f32 1.0, %v4828
  %v4830 = vrcp.pop %v4801
  %v4831 = vmul.f32 1.0, %v4830
  %v4832 = vrcp.pop %v4802
  %v4833 = vmul.f32 1.0, %v4832
  %v4834 = vrcp.pop %v4803
  %v4835 = vmul.f32 1.0, %v4834
  %v4836 = vtanh.pop %v4649
  %v4837 = vtanh.pop %v4651
  %v4838 = vtanh.pop %v4722
  %v4839 = vtanh.pop %v4724
  %v4840 = vtanh.pop %v4653
  %v4841 = vtanh.pop %v4655
  %v4842 = vtanh.pop %v4726
  %v4843 = vtanh.pop %v4728
  %v4844 = vtanh.pop %v4659
  %v4845 = vtanh.pop %v4661
  %v4846 = vtanh.pop %v4732
  %v4847 = vtanh.pop %v4734
  %v4848 = vtanh.pop %v4663
  %v4849 = vtanh.pop %v4665
  %v4850 = vtanh.pop %v4736
  %v4851 = vtanh.pop %v4738
  %v4852 = vmul.f32 %v4805, %v4836
  %v4853 = vmul.f32 %v4807, %v4837
  %v4854 = vmul.f32 %v4809, %v4838
  %v4855 = vmul.f32 %v4811, %v4839
  %v4856 = vmul.f32 %v4813, %v4840
  %v4857 = vmul.f32 %v4815, %v4841
  %v4858 = vmul.f32 %v4817, %v4842
  %v4859 = vmul.f32 %v4819, %v4843
  %v4860 = vmul.f32 %v4821, %v4844
  %v4861 = vmul.f32 %v4823, %v4845
  %v4862 = vmul.f32 %v4825, %v4846
  %v4863 = vmul.f32 %v4827, %v4847
  %v4864 = vmul.f32 %v4829, %v4848
  %v4865 = vmul.f32 %v4831, %v4849
  %v4866 = vmul.f32 %v4833, %v4850
  %v4867 = vmul.f32 %v4835, %v4851
  %s4868 = scalar_lea.vmem %s9, 64
  %v4869 = vld [vmem:[%s4868] sm:$0xf]
  %v4870 = vld [vmem:[%s4868 + $0x4] sm:$0xf]
  %v4871 = vld [vmem:[%s4868 + $0x8] sm:$0xf]
  %v4872 = vld [vmem:[%s4868 + $0xc] sm:$0xf]
  %v4873 = vld [vmem:[%s4868 + $0x10] sm:$0xf]
  %v4874 = vld [vmem:[%s4868 + $0x14] sm:$0xf]
  %v4875 = vld [vmem:[%s4868 + $0x18] sm:$0xf]
  %v4876 = vld [vmem:[%s4868 + $0x1c] sm:$0xf]
  %v4877 = vpack.c.bf16 %v4856, %v4852
  %v4878 = vpack.c.bf16 %v4857, %v4853
  %v4879 = vpack.c.bf16 %v4858, %v4854
  %v4880 = vpack.c.bf16 %v4859, %v4855
  %v4881 = vpack.c.bf16 %v4864, %v4860
  %v4882 = vpack.c.bf16 %v4865, %v4861
  %v4883 = vpack.c.bf16 %v4866, %v4862
  %v4884 = vpack.c.bf16 %v4867, %v4863
  %s4885 = scalar_lea.vmem %s10, 128
  %v4886 = vld [vmem:[%s4885] sm:$0xff]
  %v4887 = vld [vmem:[%s4885 + $0x8] sm:$0xff]
  %v4888 = vld [vmem:[%s4885 + $0x10] sm:$0xff]
  %v4889 = vld [vmem:[%s4885 + $0x18] sm:$0xff]
  %v4890 = vld [vmem:[%s4885 + $0x20] sm:$0xff]
  %v4891 = vld [vmem:[%s4885 + $0x28] sm:$0xff]
  %v4892 = vld [vmem:[%s4885 + $0x30] sm:$0xff]
  %v4893 = vld [vmem:[%s4885 + $0x38] sm:$0xff]
  %4895 = vset.pattern.permute.xlu0 0
  %4896 = vperm.xlu0 %4895, %v4886
  %v4897 = vpop.permute.xlu0 %4896
  %4900 = vset.pattern.permute.xlu0 0
  %4901 = vperm.xlu0 %4900, %v4887
  %v4902 = vpop.permute.xlu0 %4901
  %4905 = vset.pattern.permute.xlu0 0
  %4906 = vperm.xlu0 %4905, %v4888
  %v4907 = vpop.permute.xlu0 %4906
  %4910 = vset.pattern.permute.xlu0 0
  %4911 = vperm.xlu0 %4910, %v4889
  %v4912 = vpop.permute.xlu0 %4911
  %4915 = vset.pattern.permute.xlu0 0
  %4916 = vperm.xlu0 %4915, %v4890
  %v4917 = vpop.permute.xlu0 %4916
  %4920 = vset.pattern.permute.xlu0 0
  %4921 = vperm.xlu0 %4920, %v4891
  %v4922 = vpop.permute.xlu0 %4921
  %4925 = vset.pattern.permute.xlu0 0
  %4926 = vperm.xlu0 %4925, %v4892
  %v4927 = vpop.permute.xlu0 %4926
  %4930 = vset.pattern.permute.xlu0 0
  %4931 = vperm.xlu0 %4930, %v4893
  %v4932 = vpop.permute.xlu0 %4931
  %v4942 = vunpack.c.l.b16 %v4869
  %v4943 = vunpack.c.l.b16 %v4870
  %v4944 = vunpack.c.l.b16 %v4871
  %v4945 = vunpack.c.l.b16 %v4872
  %v4946 = vunpack.c.l.b16 %v4873
  %v4947 = vunpack.c.l.b16 %v4874
  %v4948 = vunpack.c.l.b16 %v4875
  %v4949 = vunpack.c.l.b16 %v4876
  %v4950 = vpack.c.b16 %v4943, %v4942
  %v4951 = vpack.c.b16 %v4945, %v4944
  %v4952 = vpack.c.b16 %v4947, %v4946
  %v4953 = vpack.c.b16 %v4949, %v4948
  %v4955 = vsel %vm1923, %v4950, 0
  %v4958 = vsel %vm1923, %v4951, 0
  %v4961 = vsel %vm1923, %v4952, 0
  %v4964 = vsel %vm1923, %v4953, 0
  %4966 = vmatprep.subr.bf16.mxu0 0
  %4967 = vmatpush1.bf16.msra.mxu0 0
  %4968 = vmatprep.subr.bf16.mxu0 0
  %4969 = vmatpush1.bf16.msra.mxu0 0
  %4970 = vmatprep.subr.bf16.mxu0 0
  %4971 = vmatpush1.bf16.msra.mxu0 0
  %4972 = vmatprep.subr.bf16.mxu0 0
  %4973 = vmatpush1.bf16.msra.mxu0 0
  %4974 = vmatprep.subr.bf16.mxu0 0
  %4975 = vmatpush1.bf16.msra.mxu0 0
  %4976 = vmatprep.subr.bf16.mxu0 0
  %4977 = vmatpush1.bf16.msra.mxu0 0
  %4978 = vmatprep.subr.bf16.mxu0 %v4882
  %4979 = vmatpush1.bf16.msra.mxu0 %v4881
  %4980 = vmatprep.subr.bf16.mxu0 %v4878
  %4981 = vmatpush1.bf16.msra.mxu0 %v4877
  %4982 = vmatprep.subr.bf16.mxu0 0
  %4983 = vmatpush2.bf16.msra.mxu0 0
  %4984 = vmatprep.subr.bf16.mxu0 0
  %4985 = vmatpush2.bf16.msra.mxu0 0
  %4986 = vmatprep.subr.bf16.mxu0 0
  %4987 = vmatpush2.bf16.msra.mxu0 0
  %4988 = vmatprep.subr.bf16.mxu0 0
  %4989 = vmatpush2.bf16.msra.mxu0 0
  %4990 = vmatprep.subr.bf16.mxu0 0
  %4991 = vmatpush2.bf16.msra.mxu0 0
  %4992 = vmatprep.subr.bf16.mxu0 0
  %4993 = vmatpush2.bf16.msra.mxu0 0
  %4994 = vmatprep.subr.bf16.mxu0 0
  %4995 = vmatpush2.bf16.msra.mxu0 0
  %4996 = vmatprep.subr.bf16.mxu0 0
  %4997 = vmatpush2.bf16.msra.mxu0 0
  %4998 = vmatprep.mubr.bf16.mxu0 0
  %4999 = vmatmul.mubr.bf16.gmra.mxu0 %v4955
  %v5000 = vpop.f32.mrf.mxu0
  %v5001 = vadd.f32 %v4897, %v5000
  %v5002 = vpop.f32.mrf.mxu0
  %v5003 = vadd.f32 %v4897, %v5002
  %v5004 = vpop.f32.mrf.mxu0
  %v5005 = vadd.f32 %v4902, %v5004
  %v5006 = vpop.f32.mrf.mxu0
  %v5007 = vadd.f32 %v4902, %v5006
  %5008 = vmatprep.mubr.bf16.mxu0 0
  %5009 = vmatmul.mubr.bf16.gmra.mxu0 %v4958
  %v5010 = vpop.f32.mrf.mxu0
  %v5011 = vadd.f32 %v4907, %v5010
  %v5012 = vpop.f32.mrf.mxu0
  %v5013 = vadd.f32 %v4907, %v5012
  %v5014 = vpop.f32.mrf.mxu0
  %v5015 = vadd.f32 %v4912, %v5014
  %v5016 = vpop.f32.mrf.mxu0
  %v5017 = vadd.f32 %v4912, %v5016
  %5018 = vmatprep.mubr.bf16.mxu0 0
  %5019 = vmatmul.mubr.bf16.gmra.mxu0 %v4961
  %v5020 = vpop.f32.mrf.mxu0
  %v5021 = vadd.f32 %v4917, %v5020
  %v5022 = vpop.f32.mrf.mxu0
  %v5023 = vadd.f32 %v4917, %v5022
  %v5024 = vpop.f32.mrf.mxu0
  %v5025 = vadd.f32 %v4922, %v5024
  %v5026 = vpop.f32.mrf.mxu0
  %v5027 = vadd.f32 %v4922, %v5026
  %5028 = vmatprep.mubr.bf16.mxu0 0
  %5029 = vmatmul.mubr.bf16.gmra.mxu0 %v4964
  %v5030 = vpop.f32.mrf.mxu0
  %v5031 = vadd.f32 %v4927, %v5030
  %v5032 = vpop.f32.mrf.mxu0
  %v5033 = vadd.f32 %v4927, %v5032
  %v5034 = vpop.f32.mrf.mxu0
  %v5035 = vadd.f32 %v4932, %v5034
  %v5036 = vpop.f32.mrf.mxu0
  %v5037 = vadd.f32 %v4932, %v5036
  %5038 = vdwg.mxu0
  %5039 = vmatprep.subr.bf16.mxu0 0
  %5040 = vmatpush1.bf16.msra.mxu0 0
  %5041 = vmatprep.subr.bf16.mxu0 0
  %5042 = vmatpush1.bf16.msra.mxu0 0
  %5043 = vmatprep.subr.bf16.mxu0 0
  %5044 = vmatpush1.bf16.msra.mxu0 0
  %5045 = vmatprep.subr.bf16.mxu0 0
  %5046 = vmatpush1.bf16.msra.mxu0 0
  %5047 = vmatprep.subr.bf16.mxu0 0
  %5048 = vmatpush1.bf16.msra.mxu0 0
  %5049 = vmatprep.subr.bf16.mxu0 0
  %5050 = vmatpush1.bf16.msra.mxu0 0
  %5051 = vmatprep.subr.bf16.mxu0 %v4884
  %5052 = vmatpush1.bf16.msra.mxu0 %v4883
  %5053 = vmatprep.subr.bf16.mxu0 %v4880
  %5054 = vmatpush1.bf16.msra.mxu0 %v4879
  %5055 = vmatprep.subr.bf16.mxu0 0
  %5056 = vmatpush2.bf16.msra.mxu0 0
  %5057 = vmatprep.subr.bf16.mxu0 0
  %5058 = vmatpush2.bf16.msra.mxu0 0
  %5059 = vmatprep.subr.bf16.mxu0 0
  %5060 = vmatpush2.bf16.msra.mxu0 0
  %5061 = vmatprep.subr.bf16.mxu0 0
  %5062 = vmatpush2.bf16.msra.mxu0 0
  %5063 = vmatprep.subr.bf16.mxu0 0
  %5064 = vmatpush2.bf16.msra.mxu0 0
  %5065 = vmatprep.subr.bf16.mxu0 0
  %5066 = vmatpush2.bf16.msra.mxu0 0
  %5067 = vmatprep.subr.bf16.mxu0 0
  %5068 = vmatpush2.bf16.msra.mxu0 0
  %5069 = vmatprep.subr.bf16.mxu0 0
  %5070 = vmatpush2.bf16.msra.mxu0 0
  %5071 = vmatprep.mubr.bf16.mxu0 0
  %5072 = vmatmul.mubr.bf16.gmra.mxu0 %v4955
  %v5073 = vpop.f32.mrf.mxu0
  %v5074 = vadd.f32 %v4897, %v5073
  %v5075 = vpop.f32.mrf.mxu0
  %v5076 = vadd.f32 %v4897, %v5075
  %v5077 = vpop.f32.mrf.mxu0
  %v5078 = vadd.f32 %v4902, %v5077
  %v5079 = vpop.f32.mrf.mxu0
  %v5080 = vadd.f32 %v4902, %v5079
  %5081 = vmatprep.mubr.bf16.mxu0 0
  %5082 = vmatmul.mubr.bf16.gmra.mxu0 %v4958
  %v5083 = vpop.f32.mrf.mxu0
  %v5084 = vadd.f32 %v4907, %v5083
  %v5085 = vpop.f32.mrf.mxu0
  %v5086 = vadd.f32 %v4907, %v5085
  %v5087 = vpop.f32.mrf.mxu0
  %v5088 = vadd.f32 %v4912, %v5087
  %v5089 = vpop.f32.mrf.mxu0
  %v5090 = vadd.f32 %v4912, %v5089
  %5091 = vmatprep.mubr.bf16.mxu0 0
  %5092 = vmatmul.mubr.bf16.gmra.mxu0 %v4961
  %v5093 = vpop.f32.mrf.mxu0
  %v5094 = vadd.f32 %v4917, %v5093
  %v5095 = vpop.f32.mrf.mxu0
  %v5096 = vadd.f32 %v4917, %v5095
  %v5097 = vpop.f32.mrf.mxu0
  %v5098 = vadd.f32 %v4922, %v5097
  %v5099 = vpop.f32.mrf.mxu0
  %v5100 = vadd.f32 %v4922, %v5099
  %5101 = vmatprep.mubr.bf16.mxu0 0
  %5102 = vmatmul.mubr.bf16.gmra.mxu0 %v4964
  %v5103 = vpop.f32.mrf.mxu0
  %v5104 = vadd.f32 %v4927, %v5103
  %v5105 = vpop.f32.mrf.mxu0
  %v5106 = vadd.f32 %v4927, %v5105
  %v5107 = vpop.f32.mrf.mxu0
  %v5108 = vadd.f32 %v4932, %v5107
  %v5109 = vpop.f32.mrf.mxu0
  %v5110 = vadd.f32 %v4932, %v5109
  %5111 = vdwg.mxu0
  %v5112 = vadd.f32 %v3639, %v5001
  %v5113 = vadd.f32 %v3640, %v5003
  %v5114 = vadd.f32 %v3641, %v5074
  %v5115 = vadd.f32 %v3642, %v5076
  %v5116 = vadd.f32 %v3643, %v5005
  %v5117 = vadd.f32 %v3644, %v5007
  %v5118 = vadd.f32 %v3645, %v5078
  %v5119 = vadd.f32 %v3646, %v5080
  %v5120 = vadd.f32 %v3647, %v5011
  %v5121 = vadd.f32 %v3648, %v5013
  %v5122 = vadd.f32 %v3649, %v5084
  %v5123 = vadd.f32 %v3650, %v5086
  %v5124 = vadd.f32 %v3651, %v5015
  %v5125 = vadd.f32 %v3652, %v5017
  %v5126 = vadd.f32 %v3653, %v5088
  %v5127 = vadd.f32 %v3654, %v5090
  %v5128 = vmul.f32 %v5112, 0.70710677
  %v5129 = vmul.f32 %v5113, 0.70710677
  %v5130 = vmul.f32 %v5114, 0.70710677
  %v5131 = vmul.f32 %v5115, 0.70710677
  %v5132 = vmul.f32 %v5116, 0.70710677
  %v5133 = vmul.f32 %v5117, 0.70710677
  %v5134 = vmul.f32 %v5118, 0.70710677
  %v5135 = vmul.f32 %v5119, 0.70710677
  %v5136 = vmul.f32 %v5120, 0.70710677
  %v5137 = vmul.f32 %v5121, 0.70710677
  %v5138 = vmul.f32 %v5122, 0.70710677
  %v5139 = vmul.f32 %v5123, 0.70710677
  %v5140 = vmul.f32 %v5124, 0.70710677
  %v5141 = vmul.f32 %v5125, 0.70710677
  %v5142 = vmul.f32 %v5126, 0.70710677
  %v5143 = vmul.f32 %v5127, 0.70710677
  %v5144 = vld [vmem:[#allocation3] sm:$0xff]
  %v5145 = vld [vmem:[#allocation3 + $0x8] sm:$0xff]
  %v5146 = vld [vmem:[#allocation3 + $0x10] sm:$0xff]
  %v5147 = vld [vmem:[#allocation3 + $0x18] sm:$0xff]
  %v5148 = vld [vmem:[#allocation3 + $0x20] sm:$0xff]
  %v5149 = vld [vmem:[#allocation3 + $0x28] sm:$0xff]
  %v5150 = vld [vmem:[#allocation3 + $0x30] sm:$0xff]
  %v5151 = vld [vmem:[#allocation3 + $0x38] sm:$0xff]
  %v5152 = vld [vmem:[#allocation3 + $0x40] sm:$0xff]
  %v5153 = vld [vmem:[#allocation3 + $0x48] sm:$0xff]
  %v5154 = vld [vmem:[#allocation3 + $0x50] sm:$0xff]
  %v5155 = vld [vmem:[#allocation3 + $0x58] sm:$0xff]
  %v5156 = vld [vmem:[#allocation3 + $0x60] sm:$0xff]
  %v5157 = vld [vmem:[#allocation3 + $0x68] sm:$0xff]
  %v5158 = vld [vmem:[#allocation3 + $0x70] sm:$0xff]
  %v5159 = vld [vmem:[#allocation3 + $0x78] sm:$0xff]
  %v5160 = vadd.f32 %v5144, %v5021
  %v5161 = vadd.f32 %v5145, %v5023
  %v5162 = vadd.f32 %v5146, %v5094
  %v5163 = vadd.f32 %v5147, %v5096
  %v5164 = vadd.f32 %v5148, %v5025
  %v5165 = vadd.f32 %v5149, %v5027
  %v5166 = vadd.f32 %v5150, %v5098
  %v5167 = vadd.f32 %v5151, %v5100
  %v5168 = vadd.f32 %v5152, %v5031
  %v5169 = vadd.f32 %v5153, %v5033
  %v5170 = vadd.f32 %v5154, %v5104
  %v5171 = vadd.f32 %v5155, %v5106
  %v5172 = vadd.f32 %v5156, %v5035
  %v5173 = vadd.f32 %v5157, %v5037
  %v5174 = vadd.f32 %v5158, %v5108
  %v5175 = vadd.f32 %v5159, %v5110
  %5176 = vst [vmem:[#allocation3] sm:$0xff] %v5160
  %5177 = vst [vmem:[#allocation3 + $0x8] sm:$0xff] %v5161
  %5178 = vst [vmem:[#allocation3 + $0x10] sm:$0xff] %v5162
  %5179 = vst [vmem:[#allocation3 + $0x18] sm:$0xff] %v5163
  %5180 = vst [vmem:[#allocation3 + $0x20] sm:$0xff] %v5164
  %5181 = vst [vmem:[#allocation3 + $0x28] sm:$0xff] %v5165
  %5182 = vst [vmem:[#allocation3 + $0x30] sm:$0xff] %v5166
  %5183 = vst [vmem:[#allocation3 + $0x38] sm:$0xff] %v5167
  %5184 = vst [vmem:[#allocation3 + $0x40] sm:$0xff] %v5168
  %5185 = vst [vmem:[#allocation3 + $0x48] sm:$0xff] %v5169
  %5186 = vst [vmem:[#allocation3 + $0x50] sm:$0xff] %v5170
  %5187 = vst [vmem:[#allocation3 + $0x58] sm:$0xff] %v5171
  %5188 = vst [vmem:[#allocation3 + $0x60] sm:$0xff] %v5172
  %5189 = vst [vmem:[#allocation3 + $0x68] sm:$0xff] %v5173
  %5190 = vst [vmem:[#allocation3 + $0x70] sm:$0xff] %v5174
  %5191 = vst [vmem:[#allocation3 + $0x78] sm:$0xff] %v5175
  %s5192 = scalar_lea.vmem %s2, 384
  %v5193 = vld [vmem:[%s5192] sm:$0xff]
  %v5194 = vld [vmem:[%s5192 + $0x8] sm:$0xff]
  %v5195 = vld [vmem:[%s5192 + $0x10] sm:$0xff]
  %v5196 = vld [vmem:[%s5192 + $0x18] sm:$0xff]
  %v5197 = vld [vmem:[%s5192 + $0x20] sm:$0xff]
  %v5198 = vld [vmem:[%s5192 + $0x28] sm:$0xff]
  %v5199 = vld [vmem:[%s5192 + $0x30] sm:$0xff]
  %v5200 = vld [vmem:[%s5192 + $0x38] sm:$0xff]
  %v5201 = vld [vmem:[%s5192 + $0x40] sm:$0xff]
  %v5202 = vld [vmem:[%s5192 + $0x48] sm:$0xff]
  %v5203 = vld [vmem:[%s5192 + $0x50] sm:$0xff]
  %v5204 = vld [vmem:[%s5192 + $0x58] sm:$0xff]
  %v5205 = vld [vmem:[%s5192 + $0x60] sm:$0xff]
  %v5206 = vld [vmem:[%s5192 + $0x68] sm:$0xff]
  %v5207 = vld [vmem:[%s5192 + $0x70] sm:$0xff]
  %v5208 = vld [vmem:[%s5192 + $0x78] sm:$0xff]
  %v5209 = vadd.f32 %v5128, %v5193
  %v5210 = vadd.f32 %v5129, %v5194
  %v5211 = vadd.f32 %v5130, %v5195
  %v5212 = vadd.f32 %v5131, %v5196
  %v5213 = vadd.f32 %v5132, %v5197
  %v5214 = vadd.f32 %v5133, %v5198
  %v5215 = vadd.f32 %v5134, %v5199
  %v5216 = vadd.f32 %v5135, %v5200
  %v5217 = vadd.f32 %v5136, %v5201
  %v5218 = vadd.f32 %v5137, %v5202
  %v5219 = vadd.f32 %v5138, %v5203
  %v5220 = vadd.f32 %v5139, %v5204
  %v5221 = vadd.f32 %v5140, %v5205
  %v5222 = vadd.f32 %v5141, %v5206
  %v5223 = vadd.f32 %v5142, %v5207
  %v5224 = vadd.f32 %v5143, %v5208
  %v5225 = vpack.c.bf16 %v5213, %v5209
  %v5226 = vpack.c.bf16 %v5214, %v5210
  %v5227 = vpack.c.bf16 %v5215, %v5211
  %v5228 = vpack.c.bf16 %v5216, %v5212
  %v5229 = vpack.c.bf16 %v5221, %v5217
  %v5230 = vpack.c.bf16 %v5222, %v5218
  %v5231 = vpack.c.bf16 %v5223, %v5219
  %v5232 = vpack.c.bf16 %v5224, %v5220
  %v5241 = vunpack.c.l.b16 %v5225
  %v5242 = vunpack.c.l.b16 %v5226
  %v5243 = vunpack.c.l.b16 %v5227
  %v5244 = vunpack.c.l.b16 %v5228
  %v5245 = vunpack.c.h.b16 %v5225
  %v5246 = vunpack.c.h.b16 %v5226
  %v5247 = vunpack.c.h.b16 %v5227
  %v5248 = vunpack.c.h.b16 %v5228
  %v5249 = vunpack.c.l.b16 %v5229
  %v5250 = vunpack.c.l.b16 %v5230
  %v5251 = vunpack.c.l.b16 %v5231
  %v5252 = vunpack.c.l.b16 %v5232
  %v5253 = vunpack.c.h.b16 %v5229
  %v5254 = vunpack.c.h.b16 %v5230
  %v5255 = vunpack.c.h.b16 %v5231
  %v5256 = vunpack.c.h.b16 %v5232
  %v5257 = vpack.c.b16 %v5242, %v5241
  %v5258 = vpack.c.b16 %v5244, %v5243
  %v5259 = vpack.c.b16 %v5246, %v5245
  %v5260 = vpack.c.b16 %v5248, %v5247
  %v5261 = vpack.c.b16 %v5250, %v5249
  %v5262 = vpack.c.b16 %v5252, %v5251
  %v5263 = vpack.c.b16 %v5254, %v5253
  %v5264 = vpack.c.b16 %v5256, %v5255
  %5273 = vst [vmem:[#allocation2 + $0x40] sm:$0xff] %v5257
  %5274 = vst [vmem:[#allocation2 + $0x48] sm:$0xff] %v5258
  %5275 = vst [vmem:[#allocation2 + $0x50] sm:$0xff] %v5259
  %5276 = vst [vmem:[#allocation2 + $0x58] sm:$0xff] %v5260
  %5277 = vst [vmem:[#allocation2 + $0x60] sm:$0xff] %v5261
  %5278 = vst [vmem:[#allocation2 + $0x68] sm:$0xff] %v5262
  %5279 = vst [vmem:[#allocation2 + $0x70] sm:$0xff] %v5263
  %5280 = vst [vmem:[#allocation2 + $0x78] sm:$0xff] %v5264
  %5281 = vrot.lane.b32.xlu0 %v5228, 2
  %v5282 = vpop.permute.xlu0 %5281
  %5283 = vrot.lane.b32.xlu0 %v5232, 2
  %v5284 = vpop.permute.xlu0 %5283
  %5285 = vrot.lane.b32.xlu0 %v5225, 2
  %v5286 = vpop.permute.xlu0 %5285
  %5287 = vrot.lane.b32.xlu0 %v5226, 2
  %v5288 = vpop.permute.xlu0 %5287
  %5289 = vrot.lane.b32.xlu0 %v5227, 2
  %v5290 = vpop.permute.xlu0 %5289
  %5291 = vrot.lane.b32.xlu0 %v5229, 2
  %v5292 = vpop.permute.xlu0 %5291
  %5293 = vrot.lane.b32.xlu0 %v5230, 2
  %v5294 = vpop.permute.xlu0 %5293
  %5295 = vrot.lane.b32.xlu0 %v5231, 2
  %v5296 = vpop.permute.xlu0 %5295
  %v5297 = vsel %vm2267, %v5286, %v5288
  %v5298 = vsel %vm2267, %v5288, %v5290
  %v5299 = vsel %vm2267, %v5290, %v5282
  %v5300 = vsel %vm2267, %v5292, %v5294
  %v5301 = vsel %vm2267, %v5294, %v5296
  %v5302 = vsel %vm2267, %v5296, %v5284
  %v5311 = vsel %vm2280, %v5282, %v5286
  %v5315 = vsel %vm2280, %v5284, %v5292
  %v5317 = vsel %vm2309, %v5311, 0
  %v5318 = vsel %vm2310, %v5297, 0
  %v5319 = vsel %vm2311, %v5298, 0
  %v5320 = vsel %vm2312, %v5299, 0
  %v5321 = vsel %vm2309, %v5315, 0
  %v5322 = vsel %vm2310, %v5300, 0
  %v5323 = vsel %vm2311, %v5301, 0
  %v5324 = vsel %vm2312, %v5302, 0
  %v5333 = vunpack.c.l.b16 %v5317
  %v5334 = vunpack.c.l.b16 %v5318
  %v5335 = vunpack.c.l.b16 %v5319
  %v5336 = vunpack.c.l.b16 %v5320
  %v5337 = vunpack.c.h.b16 %v5317
  %v5338 = vunpack.c.h.b16 %v5318
  %v5339 = vunpack.c.h.b16 %v5319
  %v5340 = vunpack.c.h.b16 %v5320
  %v5341 = vunpack.c.l.b16 %v5321
  %v5342 = vunpack.c.l.b16 %v5322
  %v5343 = vunpack.c.l.b16 %v5323
  %v5344 = vunpack.c.l.b16 %v5324
  %v5345 = vunpack.c.h.b16 %v5321
  %v5346 = vunpack.c.h.b16 %v5322
  %v5347 = vunpack.c.h.b16 %v5323
  %v5348 = vunpack.c.h.b16 %v5324
  %v5349 = vpack.c.b16 %v5334, %v5333
  %v5350 = vpack.c.b16 %v5336, %v5335
  %v5351 = vpack.c.b16 %v5338, %v5337
  %v5352 = vpack.c.b16 %v5340, %v5339
  %v5353 = vpack.c.b16 %v5342, %v5341
  %v5354 = vpack.c.b16 %v5344, %v5343
  %v5355 = vpack.c.b16 %v5346, %v5345
  %v5356 = vpack.c.b16 %v5348, %v5347
  %5365 = vst [vmem:[#allocation2] sm:$0xff] %v5349
  %5366 = vst [vmem:[#allocation2 + $0x8] sm:$0xff] %v5350
  %5367 = vst [vmem:[#allocation2 + $0x10] sm:$0xff] %v5351
  %5368 = vst [vmem:[#allocation2 + $0x18] sm:$0xff] %v5352
  %5369 = vst [vmem:[#allocation2 + $0x20] sm:$0xff] %v5353
  %5370 = vst [vmem:[#allocation2 + $0x28] sm:$0xff] %v5354
  %5371 = vst [vmem:[#allocation2 + $0x30] sm:$0xff] %v5355
  %5372 = vst [vmem:[#allocation2 + $0x38] sm:$0xff] %v5356
  %5373 = vrot.lane.b32.xlu0 %v5225, 126
  %v5374 = vpop.permute.xlu0 %5373
  %5375 = vrot.lane.b32.xlu0 %v5226, 126
  %v5376 = vpop.permute.xlu0 %5375
  %5377 = vrot.lane.b32.xlu0 %v5227, 126
  %v5378 = vpop.permute.xlu0 %5377
  %5379 = vrot.lane.b32.xlu0 %v5228, 126
  %v5380 = vpop.permute.xlu0 %5379
  %5381 = vrot.lane.b32.xlu0 %v5229, 126
  %v5382 = vpop.permute.xlu0 %5381
  %5383 = vrot.lane.b32.xlu0 %v5230, 126
  %v5384 = vpop.permute.xlu0 %5383
  %5385 = vrot.lane.b32.xlu0 %v5231, 126
  %v5386 = vpop.permute.xlu0 %5385
  %5387 = vrot.lane.b32.xlu0 %v5232, 126
  %v5388 = vpop.permute.xlu0 %5387
  %v5389 = vsel %vm2385, %v5374, %v5376
  %v5390 = vsel %vm2385, %v5376, %v5378
  %v5391 = vsel %vm2385, %v5378, %v5380
  %v5392 = vsel %vm2385, %v5382, %v5384
  %v5393 = vsel %vm2385, %v5384, %v5386
  %v5394 = vsel %vm2385, %v5386, %v5388
  %v5403 = vsel %vm2398, %v5380, %v5374
  %v5407 = vsel %vm2398, %v5388, %v5382
  %v5409 = vsel %vm2427, %v5389, 0
  %v5410 = vsel %vm2428, %v5390, 0
  %v5411 = vsel %vm2429, %v5391, 0
  %v5412 = vsel %vm2430, %v5403, 0
  %v5413 = vsel %vm2427, %v5392, 0
  %v5414 = vsel %vm2428, %v5393, 0
  %v5415 = vsel %vm2429, %v5394, 0
  %v5416 = vsel %vm2430, %v5407, 0
  %v5425 = vunpack.c.l.b16 %v5409
  %v5426 = vunpack.c.l.b16 %v5410
  %v5427 = vunpack.c.l.b16 %v5411
  %v5428 = vunpack.c.l.b16 %v5412
  %v5429 = vunpack.c.h.b16 %v5409
  %v5430 = vunpack.c.h.b16 %v5410
  %v5431 = vunpack.c.h.b16 %v5411
  %v5432 = vunpack.c.h.b16 %v5412
  %v5433 = vunpack.c.l.b16 %v5413
  %v5434 = vunpack.c.l.b16 %v5414
  %v5435 = vunpack.c.l.b16 %v5415
  %v5436 = vunpack.c.l.b16 %v5416
  %v5437 = vunpack.c.h.b16 %v5413
  %v5438 = vunpack.c.h.b16 %v5414
  %v5439 = vunpack.c.h.b16 %v5415
  %v5440 = vunpack.c.h.b16 %v5416
  %v5441 = vpack.c.b16 %v5426, %v5425
  %v5442 = vpack.c.b16 %v5428, %v5427
  %v5443 = vpack.c.b16 %v5430, %v5429
  %v5444 = vpack.c.b16 %v5432, %v5431
  %v5445 = vpack.c.b16 %v5434, %v5433
  %v5446 = vpack.c.b16 %v5436, %v5435
  %v5447 = vpack.c.b16 %v5438, %v5437
  %v5448 = vpack.c.b16 %v5440, %v5439
  %5457 = vst [vmem:[#allocation2 + $0x80] sm:$0xff] %v5441
  %5458 = vst [vmem:[#allocation2 + $0x88] sm:$0xff] %v5442
  %5459 = vst [vmem:[#allocation2 + $0x90] sm:$0xff] %v5443
  %5460 = vst [vmem:[#allocation2 + $0x98] sm:$0xff] %v5444
  %5461 = vst [vmem:[#allocation2 + $0xa0] sm:$0xff] %v5445
  %5462 = vst [vmem:[#allocation2 + $0xa8] sm:$0xff] %v5446
  %5463 = vst [vmem:[#allocation2 + $0xb0] sm:$0xff] %v5447
  %5464 = vst [vmem:[#allocation2 + $0xb8] sm:$0xff] %v5448
  %v5465 = vld [vmem:[#allocation2 + $0x100] sm:$0xff]
  %v5466 = vld [vmem:[#allocation2 + $0x108] sm:$0xff]
  %v5467 = vld [vmem:[#allocation2 + $0x110] sm:$0xff]
  %v5468 = vld [vmem:[#allocation2 + $0x118] sm:$0xff]
  %v5469 = vld [vmem:[#allocation2 + $0x120] sm:$0xff]
  %v5470 = vld [vmem:[#allocation2 + $0x128] sm:$0xff]
  %v5471 = vld [vmem:[#allocation2 + $0x130] sm:$0xff]
  %v5472 = vld [vmem:[#allocation2 + $0x138] sm:$0xff]
  %v5477 = vunpack.c.h.b16 %v5466
  %v5478 = vunpack.c.h.b16 %v5468
  %v5479 = vunpack.c.h.b16 %v5470
  %v5480 = vunpack.c.h.b16 %v5472
  %v5481 = vpack.c.b16 %v5478, %v5477
  %v5482 = vpack.c.b16 %v5480, %v5479
  %5483 = vrot.lane.b32.xlu0 %v5481, 2
  %v5484 = vpop.permute.xlu0 %5483
  %5485 = vrot.lane.b32.xlu0 %v5482, 2
  %v5486 = vpop.permute.xlu0 %5485
  %v5491 = vunpack.c.l.b16 %v5465
  %v5492 = vunpack.c.h.b16 %v5465
  %v5493 = vunpack.c.l.b16 %v5466
  %v5494 = vunpack.c.l.b16 %v5467
  %v5495 = vunpack.c.h.b16 %v5467
  %v5496 = vunpack.c.l.b16 %v5468
  %v5497 = vunpack.c.l.b16 %v5469
  %v5498 = vunpack.c.h.b16 %v5469
  %v5499 = vunpack.c.l.b16 %v5470
  %v5500 = vunpack.c.l.b16 %v5471
  %v5501 = vunpack.c.h.b16 %v5471
  %v5502 = vunpack.c.l.b16 %v5472
  %v5503 = vpack.c.b16 %v5494, %v5491
  %v5504 = vpack.c.b16 %v5495, %v5492
  %v5505 = vpack.c.b16 %v5496, %v5493
  %v5506 = vpack.c.b16 %v5500, %v5497
  %v5507 = vpack.c.b16 %v5501, %v5498
  %v5508 = vpack.c.b16 %v5502, %v5499
  %5509 = vrot.lane.b32.xlu0 %v5503, 2
  %v5510 = vpop.permute.xlu0 %5509
  %5511 = vrot.lane.b32.xlu0 %v5504, 2
  %v5512 = vpop.permute.xlu0 %5511
  %5513 = vrot.lane.b32.xlu0 %v5505, 2
  %v5514 = vpop.permute.xlu0 %5513
  %5515 = vrot.lane.b32.xlu0 %v5506, 2
  %v5516 = vpop.permute.xlu0 %5515
  %5517 = vrot.lane.b32.xlu0 %v5507, 2
  %v5518 = vpop.permute.xlu0 %5517
  %5519 = vrot.lane.b32.xlu0 %v5508, 2
  %v5520 = vpop.permute.xlu0 %5519
  %v5521 = vsel %vm2267, %v5510, %v5512
  %v5522 = vsel %vm2267, %v5512, %v5514
  %v5523 = vsel %vm2267, %v5514, %v5484
  %v5524 = vsel %vm2267, %v5516, %v5518
  %v5525 = vsel %vm2267, %v5518, %v5520
  %v5526 = vsel %vm2267, %v5520, %v5486
  %v5535 = vsel %vm2280, %v5484, %v5510
  %v5539 = vsel %vm2280, %v5486, %v5516
  %v5541 = vsel %vm2309, %v5535, 0
  %v5542 = vsel %vm2310, %v5521, 0
  %v5543 = vsel %vm2311, %v5522, 0
  %v5544 = vsel %vm2312, %v5523, 0
  %v5545 = vsel %vm2309, %v5539, 0
  %v5546 = vsel %vm2310, %v5524, 0
  %v5547 = vsel %vm2311, %v5525, 0
  %v5548 = vsel %vm2312, %v5526, 0
  %v5557 = vunpack.c.l.b16 %v5541
  %v5558 = vunpack.c.l.b16 %v5542
  %v5559 = vunpack.c.l.b16 %v5543
  %v5560 = vunpack.c.l.b16 %v5544
  %v5561 = vunpack.c.h.b16 %v5541
  %v5562 = vunpack.c.h.b16 %v5542
  %v5563 = vunpack.c.h.b16 %v5543
  %v5564 = vunpack.c.h.b16 %v5544
  %v5565 = vunpack.c.l.b16 %v5545
  %v5566 = vunpack.c.l.b16 %v5546
  %v5567 = vunpack.c.l.b16 %v5547
  %v5568 = vunpack.c.l.b16 %v5548
  %v5569 = vunpack.c.h.b16 %v5545
  %v5570 = vunpack.c.h.b16 %v5546
  %v5571 = vunpack.c.h.b16 %v5547
  %v5572 = vunpack.c.h.b16 %v5548
  %v5573 = vpack.c.b16 %v5558, %v5557
  %v5574 = vpack.c.b16 %v5560, %v5559
  %v5575 = vpack.c.b16 %v5562, %v5561
  %v5576 = vpack.c.b16 %v5564, %v5563
  %v5577 = vpack.c.b16 %v5566, %v5565
  %v5578 = vpack.c.b16 %v5568, %v5567
  %v5579 = vpack.c.b16 %v5570, %v5569
  %v5580 = vpack.c.b16 %v5572, %v5571
  %5589 = vst [vmem:[#allocation2 + $0xc0] sm:$0xff] %v5573
  %5590 = vst [vmem:[#allocation2 + $0xc8] sm:$0xff] %v5574
  %5591 = vst [vmem:[#allocation2 + $0xd0] sm:$0xff] %v5575
  %5592 = vst [vmem:[#allocation2 + $0xd8] sm:$0xff] %v5576
  %5593 = vst [vmem:[#allocation2 + $0xe0] sm:$0xff] %v5577
  %5594 = vst [vmem:[#allocation2 + $0xe8] sm:$0xff] %v5578
  %5595 = vst [vmem:[#allocation2 + $0xf0] sm:$0xff] %v5579
  %5596 = vst [vmem:[#allocation2 + $0xf8] sm:$0xff] %v5580
  %5597 = vrot.lane.b32.xlu0 %v5503, 126
  %v5598 = vpop.permute.xlu0 %5597
  %5599 = vrot.lane.b32.xlu0 %v5504, 126
  %v5600 = vpop.permute.xlu0 %5599
  %5601 = vrot.lane.b32.xlu0 %v5505, 126
  %v5602 = vpop.permute.xlu0 %5601
  %5603 = vrot.lane.b32.xlu0 %v5481, 126
  %v5604 = vpop.permute.xlu0 %5603
  %5605 = vrot.lane.b32.xlu0 %v5506, 126
  %v5606 = vpop.permute.xlu0 %5605
  %5607 = vrot.lane.b32.xlu0 %v5507, 126
  %v5608 = vpop.permute.xlu0 %5607
  %5609 = vrot.lane.b32.xlu0 %v5508, 126
  %v5610 = vpop.permute.xlu0 %5609
  %5611 = vrot.lane.b32.xlu0 %v5482, 126
  %v5612 = vpop.permute.xlu0 %5611
  %v5613 = vsel %vm2385, %v5598, %v5600
  %v5614 = vsel %vm2385, %v5600, %v5602
  %v5615 = vsel %vm2385, %v5602, %v5604
  %v5616 = vsel %vm2385, %v5606, %v5608
  %v5617 = vsel %vm2385, %v5608, %v5610
  %v5618 = vsel %vm2385, %v5610, %v5612
  %v5627 = vsel %vm2398, %v5604, %v5598
  %v5631 = vsel %vm2398, %v5612, %v5606
  %v5633 = vsel %vm2427, %v5613, 0
  %v5634 = vsel %vm2428, %v5614, 0
  %v5635 = vsel %vm2429, %v5615, 0
  %v5636 = vsel %vm2430, %v5627, 0
  %v5637 = vsel %vm2427, %v5616, 0
  %v5638 = vsel %vm2428, %v5617, 0
  %v5639 = vsel %vm2429, %v5618, 0
  %v5640 = vsel %vm2430, %v5631, 0
  %v5649 = vunpack.c.l.b16 %v5633
  %v5650 = vunpack.c.l.b16 %v5634
  %v5651 = vunpack.c.l.b16 %v5635
  %v5652 = vunpack.c.l.b16 %v5636
  %v5653 = vunpack.c.h.b16 %v5633
  %v5654 = vunpack.c.h.b16 %v5634
  %v5655 = vunpack.c.h.b16 %v5635
  %v5656 = vunpack.c.h.b16 %v5636
  %v5657 = vunpack.c.l.b16 %v5637
  %v5658 = vunpack.c.l.b16 %v5638
  %v5659 = vunpack.c.l.b16 %v5639
  %v5660 = vunpack.c.l.b16 %v5640
  %v5661 = vunpack.c.h.b16 %v5637
  %v5662 = vunpack.c.h.b16 %v5638
  %v5663 = vunpack.c.h.b16 %v5639
  %v5664 = vunpack.c.h.b16 %v5640
  %v5665 = vpack.c.b16 %v5650, %v5649
  %v5666 = vpack.c.b16 %v5652, %v5651
  %v5667 = vpack.c.b16 %v5654, %v5653
  %v5668 = vpack.c.b16 %v5656, %v5655
  %v5669 = vpack.c.b16 %v5658, %v5657
  %v5670 = vpack.c.b16 %v5660, %v5659
  %v5671 = vpack.c.b16 %v5662, %v5661
  %v5672 = vpack.c.b16 %v5664, %v5663
  %5681 = vst [vmem:[#allocation2 + $0x140] sm:$0xff] %v5665
  %5682 = vst [vmem:[#allocation2 + $0x148] sm:$0xff] %v5666
  %5683 = vst [vmem:[#allocation2 + $0x150] sm:$0xff] %v5667
  %5684 = vst [vmem:[#allocation2 + $0x158] sm:$0xff] %v5668
  %5685 = vst [vmem:[#allocation2 + $0x160] sm:$0xff] %v5669
  %5686 = vst [vmem:[#allocation2 + $0x168] sm:$0xff] %v5670
  %5687 = vst [vmem:[#allocation2 + $0x170] sm:$0xff] %v5671
  %5688 = vst [vmem:[#allocation2 + $0x178] sm:$0xff] %v5672
  %s5689 = scalar_lea.vmem %s7, 192
  %v5690 = vld [vmem:[%s5689] sm:$0xff]
  %v5691 = vld [vmem:[%s5689 + $0x8] sm:$0xff]
  %v5692 = vld [vmem:[%s5689 + $0x10] sm:$0xff]
  %v5693 = vld [vmem:[%s5689 + $0x18] sm:$0xff]
  %v5694 = vld [vmem:[%s5689 + $0x20] sm:$0xff]
  %v5695 = vld [vmem:[%s5689 + $0x28] sm:$0xff]
  %v5696 = vld [vmem:[%s5689 + $0x30] sm:$0xff]
  %v5697 = vld [vmem:[%s5689 + $0x38] sm:$0xff]
  %v5698 = vld [vmem:[#allocation2] sm:$0xff]
  %v5699 = vld [vmem:[#allocation2 + $0x8] sm:$0xff]
  %v5700 = vld [vmem:[#allocation2 + $0x10] sm:$0xff]
  %v5701 = vld [vmem:[#allocation2 + $0x18] sm:$0xff]
  %v5702 = vld [vmem:[#allocation2 + $0x20] sm:$0xff]
  %v5703 = vld [vmem:[#allocation2 + $0x28] sm:$0xff]
  %v5704 = vld [vmem:[#allocation2 + $0x30] sm:$0xff]
  %v5705 = vld [vmem:[#allocation2 + $0x38] sm:$0xff]
  %v5706 = vld [vmem:[#allocation2 + $0x40] sm:$0xff]
  %v5707 = vld [vmem:[#allocation2 + $0x48] sm:$0xff]
  %v5708 = vld [vmem:[#allocation2 + $0x50] sm:$0xff]
  %v5709 = vld [vmem:[#allocation2 + $0x58] sm:$0xff]
  %v5710 = vld [vmem:[#allocation2 + $0x60] sm:$0xff]
  %v5711 = vld [vmem:[#allocation2 + $0x68] sm:$0xff]
  %v5712 = vld [vmem:[#allocation2 + $0x70] sm:$0xff]
  %v5713 = vld [vmem:[#allocation2 + $0x78] sm:$0xff]
  %v5714 = vld [vmem:[#allocation2 + $0x80] sm:$0xff]
  %v5715 = vld [vmem:[#allocation2 + $0x88] sm:$0xff]
  %v5716 = vld [vmem:[#allocation2 + $0x90] sm:$0xff]
  %v5717 = vld [vmem:[#allocation2 + $0x98] sm:$0xff]
  %v5718 = vld [vmem:[#allocation2 + $0xa0] sm:$0xff]
  %v5719 = vld [vmem:[#allocation2 + $0xa8] sm:$0xff]
  %v5720 = vld [vmem:[#allocation2 + $0xb0] sm:$0xff]
  %v5721 = vld [vmem:[#allocation2 + $0xb8] sm:$0xff]
  %v5722 = vld [vmem:[#allocation2 + $0xc0] sm:$0xff]
  %v5723 = vld [vmem:[#allocation2 + $0xc8] sm:$0xff]
  %v5724 = vld [vmem:[#allocation2 + $0xd0] sm:$0xff]
  %v5725 = vld [vmem:[#allocation2 + $0xd8] sm:$0xff]
  %v5726 = vld [vmem:[#allocation2 + $0xe0] sm:$0xff]
  %v5727 = vld [vmem:[#allocation2 + $0xe8] sm:$0xff]
  %v5728 = vld [vmem:[#allocation2 + $0xf0] sm:$0xff]
  %v5729 = vld [vmem:[#allocation2 + $0xf8] sm:$0xff]
  %v5730 = vld [vmem:[#allocation2 + $0x100] sm:$0xff]
  %v5731 = vld [vmem:[#allocation2 + $0x108] sm:$0xff]
  %v5732 = vld [vmem:[#allocation2 + $0x110] sm:$0xff]
  %v5733 = vld [vmem:[#allocation2 + $0x118] sm:$0xff]
  %v5734 = vld [vmem:[#allocation2 + $0x120] sm:$0xff]
  %v5735 = vld [vmem:[#allocation2 + $0x128] sm:$0xff]
  %v5736 = vld [vmem:[#allocation2 + $0x130] sm:$0xff]
  %v5737 = vld [vmem:[#allocation2 + $0x138] sm:$0xff]
  %v5738 = vld [vmem:[#allocation2 + $0x140] sm:$0xff]
  %v5739 = vld [vmem:[#allocation2 + $0x148] sm:$0xff]
  %v5740 = vld [vmem:[#allocation2 + $0x150] sm:$0xff]
  %v5741 = vld [vmem:[#allocation2 + $0x158] sm:$0xff]
  %v5742 = vld [vmem:[#allocation2 + $0x160] sm:$0xff]
  %v5743 = vld [vmem:[#allocation2 + $0x168] sm:$0xff]
  %v5744 = vld [vmem:[#allocation2 + $0x170] sm:$0xff]
  %v5745 = vld [vmem:[#allocation2 + $0x178] sm:$0xff]
  %s5746 = scalar_lea.vmem %s8, 192
  %v5747 = vld [vmem:[%s5746] sm:$0xff]
  %v5748 = vld [vmem:[%s5746 + $0x8] sm:$0xff]
  %v5749 = vld [vmem:[%s5746 + $0x10] sm:$0xff]
  %v5750 = vld [vmem:[%s5746 + $0x18] sm:$0xff]
  %v5751 = vld [vmem:[%s5746 + $0x20] sm:$0xff]
  %v5752 = vld [vmem:[%s5746 + $0x28] sm:$0xff]
  %v5753 = vld [vmem:[%s5746 + $0x30] sm:$0xff]
  %v5754 = vld [vmem:[%s5746 + $0x38] sm:$0xff]
  %5756 = vset.pattern.permute.xlu0 0
  %5757 = vperm.xlu0 %5756, %v5747
  %v5758 = vpop.permute.xlu0 %5757
  %5761 = vset.pattern.permute.xlu0 0
  %5762 = vperm.xlu0 %5761, %v5748
  %v5763 = vpop.permute.xlu0 %5762
  %5766 = vset.pattern.permute.xlu0 0
  %5767 = vperm.xlu0 %5766, %v5749
  %v5768 = vpop.permute.xlu0 %5767
  %5771 = vset.pattern.permute.xlu0 0
  %5772 = vperm.xlu0 %5771, %v5750
  %v5773 = vpop.permute.xlu0 %5772
  %5776 = vset.pattern.permute.xlu0 0
  %5777 = vperm.xlu0 %5776, %v5751
  %v5778 = vpop.permute.xlu0 %5777
  %5781 = vset.pattern.permute.xlu0 0
  %5782 = vperm.xlu0 %5781, %v5752
  %v5783 = vpop.permute.xlu0 %5782
  %5786 = vset.pattern.permute.xlu0 0
  %5787 = vperm.xlu0 %5786, %v5753
  %v5788 = vpop.permute.xlu0 %5787
  %5791 = vset.pattern.permute.xlu0 0
  %5792 = vperm.xlu0 %5791, %v5754
  %v5793 = vpop.permute.xlu0 %5792
  %v5803 = vunpack.c.l.b16 %v5690
  %v5804 = vunpack.c.h.b16 %v5690
  %v5805 = vunpack.c.l.b16 %v5691
  %v5806 = vunpack.c.h.b16 %v5691
  %v5807 = vunpack.c.l.b16 %v5692
  %v5808 = vunpack.c.h.b16 %v5692
  %v5809 = vunpack.c.l.b16 %v5693
  %v5810 = vunpack.c.h.b16 %v5693
  %v5811 = vunpack.c.l.b16 %v5694
  %v5812 = vunpack.c.h.b16 %v5694
  %v5813 = vunpack.c.l.b16 %v5695
  %v5814 = vunpack.c.h.b16 %v5695
  %v5815 = vunpack.c.l.b16 %v5696
  %v5816 = vunpack.c.h.b16 %v5696
  %v5817 = vunpack.c.l.b16 %v5697
  %v5818 = vunpack.c.h.b16 %v5697
  %v5819 = vpack.c.b16 %v5805, %v5803
  %v5820 = vpack.c.b16 %v5806, %v5804
  %v5821 = vpack.c.b16 %v5809, %v5807
  %v5822 = vpack.c.b16 %v5810, %v5808
  %v5823 = vpack.c.b16 %v5813, %v5811
  %v5824 = vpack.c.b16 %v5814, %v5812
  %v5825 = vpack.c.b16 %v5817, %v5815
  %v5826 = vpack.c.b16 %v5818, %v5816
  %v5879 = vunpack.c.l.b16 %v5698
  %v5880 = vunpack.c.h.b16 %v5698
  %v5881 = vunpack.c.l.b16 %v5699
  %v5882 = vunpack.c.h.b16 %v5699
  %v5883 = vunpack.c.l.b16 %v5700
  %v5884 = vunpack.c.h.b16 %v5700
  %v5885 = vunpack.c.l.b16 %v5701
  %v5886 = vunpack.c.h.b16 %v5701
  %v5887 = vunpack.c.l.b16 %v5702
  %v5888 = vunpack.c.h.b16 %v5702
  %v5889 = vunpack.c.l.b16 %v5703
  %v5890 = vunpack.c.h.b16 %v5703
  %v5891 = vunpack.c.l.b16 %v5704
  %v5892 = vunpack.c.h.b16 %v5704
  %v5893 = vunpack.c.l.b16 %v5705
  %v5894 = vunpack.c.h.b16 %v5705
  %v5895 = vunpack.c.l.b16 %v5706
  %v5896 = vunpack.c.h.b16 %v5706
  %v5897 = vunpack.c.l.b16 %v5707
  %v5898 = vunpack.c.h.b16 %v5707
  %v5899 = vunpack.c.l.b16 %v5708
  %v5900 = vunpack.c.h.b16 %v5708
  %v5901 = vunpack.c.l.b16 %v5709
  %v5902 = vunpack.c.h.b16 %v5709
  %v5903 = vunpack.c.l.b16 %v5710
  %v5904 = vunpack.c.h.b16 %v5710
  %v5905 = vunpack.c.l.b16 %v5711
  %v5906 = vunpack.c.h.b16 %v5711
  %v5907 = vunpack.c.l.b16 %v5712
  %v5908 = vunpack.c.h.b16 %v5712
  %v5909 = vunpack.c.l.b16 %v5713
  %v5910 = vunpack.c.h.b16 %v5713
  %v5911 = vunpack.c.l.b16 %v5714
  %v5912 = vunpack.c.h.b16 %v5714
  %v5913 = vunpack.c.l.b16 %v5715
  %v5914 = vunpack.c.h.b16 %v5715
  %v5915 = vunpack.c.l.b16 %v5716
  %v5916 = vunpack.c.h.b16 %v5716
  %v5917 = vunpack.c.l.b16 %v5717
  %v5918 = vunpack.c.h.b16 %v5717
  %v5919 = vunpack.c.l.b16 %v5718
  %v5920 = vunpack.c.h.b16 %v5718
  %v5921 = vunpack.c.l.b16 %v5719
  %v5922 = vunpack.c.h.b16 %v5719
  %v5923 = vunpack.c.l.b16 %v5720
  %v5924 = vunpack.c.h.b16 %v5720
  %v5925 = vunpack.c.l.b16 %v5721
  %v5926 = vunpack.c.h.b16 %v5721
  %v5927 = vunpack.c.l.b16 %v5722
  %v5928 = vunpack.c.h.b16 %v5722
  %v5929 = vunpack.c.l.b16 %v5723
  %v5930 = vunpack.c.h.b16 %v5723
  %v5931 = vunpack.c.l.b16 %v5724
  %v5932 = vunpack.c.h.b16 %v5724
  %v5933 = vunpack.c.l.b16 %v5725
  %v5934 = vunpack.c.h.b16 %v5725
  %v5935 = vunpack.c.l.b16 %v5726
  %v5936 = vunpack.c.h.b16 %v5726
  %v5937 = vunpack.c.l.b16 %v5727
  %v5938 = vunpack.c.h.b16 %v5727
  %v5939 = vunpack.c.l.b16 %v5728
  %v5940 = vunpack.c.h.b16 %v5728
  %v5941 = vunpack.c.l.b16 %v5729
  %v5942 = vunpack.c.h.b16 %v5729
  %v5943 = vunpack.c.l.b16 %v5730
  %v5944 = vunpack.c.h.b16 %v5730
  %v5945 = vunpack.c.l.b16 %v5731
  %v5946 = vunpack.c.h.b16 %v5731
  %v5947 = vunpack.c.l.b16 %v5732
  %v5948 = vunpack.c.h.b16 %v5732
  %v5949 = vunpack.c.l.b16 %v5733
  %v5950 = vunpack.c.h.b16 %v5733
  %v5951 = vunpack.c.l.b16 %v5734
  %v5952 = vunpack.c.h.b16 %v5734
  %v5953 = vunpack.c.l.b16 %v5735
  %v5954 = vunpack.c.h.b16 %v5735
  %v5955 = vunpack.c.l.b16 %v5736
  %v5956 = vunpack.c.h.b16 %v5736
  %v5957 = vunpack.c.l.b16 %v5737
  %v5958 = vunpack.c.h.b16 %v5737
  %v5959 = vunpack.c.l.b16 %v5738
  %v5960 = vunpack.c.h.b16 %v5738
  %v5961 = vunpack.c.l.b16 %v5739
  %v5962 = vunpack.c.h.b16 %v5739
  %v5963 = vunpack.c.l.b16 %v5740
  %v5964 = vunpack.c.h.b16 %v5740
  %v5965 = vunpack.c.l.b16 %v5741
  %v5966 = vunpack.c.h.b16 %v5741
  %v5967 = vunpack.c.l.b16 %v5742
  %v5968 = vunpack.c.h.b16 %v5742
  %v5969 = vunpack.c.l.b16 %v5743
  %v5970 = vunpack.c.h.b16 %v5743
  %v5971 = vunpack.c.l.b16 %v5744
  %v5972 = vunpack.c.h.b16 %v5744
  %v5973 = vunpack.c.l.b16 %v5745
  %v5974 = vunpack.c.h.b16 %v5745
  %v5975 = vpack.c.b16 %v5883, %v5879
  %v5976 = vpack.c.b16 %v5884, %v5880
  %v5977 = vpack.c.b16 %v5885, %v5881
  %v5978 = vpack.c.b16 %v5886, %v5882
  %v5979 = vpack.c.b16 %v5891, %v5887
  %v5980 = vpack.c.b16 %v5892, %v5888
  %v5981 = vpack.c.b16 %v5893, %v5889
  %v5982 = vpack.c.b16 %v5894, %v5890
  %v5983 = vpack.c.b16 %v5899, %v5895
  %v5984 = vpack.c.b16 %v5900, %v5896
  %v5985 = vpack.c.b16 %v5901, %v5897
  %v5986 = vpack.c.b16 %v5902, %v5898
  %v5987 = vpack.c.b16 %v5907, %v5903
  %v5988 = vpack.c.b16 %v5908, %v5904
  %v5989 = vpack.c.b16 %v5909, %v5905
  %v5990 = vpack.c.b16 %v5910, %v5906
  %v5991 = vpack.c.b16 %v5915, %v5911
  %v5992 = vpack.c.b16 %v5916, %v5912
  %v5993 = vpack.c.b16 %v5917, %v5913
  %v5994 = vpack.c.b16 %v5918, %v5914
  %v5995 = vpack.c.b16 %v5923, %v5919
  %v5996 = vpack.c.b16 %v5924, %v5920
  %v5997 = vpack.c.b16 %v5925, %v5921
  %v5998 = vpack.c.b16 %v5926, %v5922
  %v5999 = vpack.c.b16 %v5931, %v5927
  %v6000 = vpack.c.b16 %v5932, %v5928
  %v6001 = vpack.c.b16 %v5933, %v5929
  %v6002 = vpack.c.b16 %v5934, %v5930
  %v6003 = vpack.c.b16 %v5939, %v5935
  %v6004 = vpack.c.b16 %v5940, %v5936
  %v6005 = vpack.c.b16 %v5941, %v5937
  %v6006 = vpack.c.b16 %v5942, %v5938
  %v6007 = vpack.c.b16 %v5947, %v5943
  %v6008 = vpack.c.b16 %v5948, %v5944
  %v6009 = vpack.c.b16 %v5949, %v5945
  %v6010 = vpack.c.b16 %v5950, %v5946
  %v6011 = vpack.c.b16 %v5955, %v5951
  %v6012 = vpack.c.b16 %v5956, %v5952
  %v6013 = vpack.c.b16 %v5957, %v5953
  %v6014 = vpack.c.b16 %v5958, %v5954
  %v6015 = vpack.c.b16 %v5963, %v5959
  %v6016 = vpack.c.b16 %v5964, %v5960
  %v6017 = vpack.c.b16 %v5965, %v5961
  %v6018 = vpack.c.b16 %v5966, %v5962
  %v6019 = vpack.c.b16 %v5971, %v5967
  %v6020 = vpack.c.b16 %v5972, %v5968
  %v6021 = vpack.c.b16 %v5973, %v5969
  %v6022 = vpack.c.b16 %v5974, %v5970
  %v6072 = vsel %vm1552, %v5820, 0
  %v6075 = vsel %vm1552, %v5822, 0
  %v6078 = vsel %vm1552, %v5824, 0
  %v6081 = vsel %vm1552, %v5826, 0
  %6083 = vmatprep.subr.bf16.mxu0 %v6004
  %6084 = vmatpush1.bf16.msra.mxu0 %v6003
  %6085 = vmatprep.subr.bf16.mxu0 %v6000
  %6086 = vmatpush1.bf16.msra.mxu0 %v5999
  %6087 = vmatprep.subr.bf16.mxu0 %v5996
  %6088 = vmatpush1.bf16.msra.mxu0 %v5995
  %6089 = vmatprep.subr.bf16.mxu0 %v5992
  %6090 = vmatpush1.bf16.msra.mxu0 %v5991
  %6091 = vmatprep.subr.bf16.mxu0 %v5988
  %6092 = vmatpush1.bf16.msra.mxu0 %v5987
  %6093 = vmatprep.subr.bf16.mxu0 %v5984
  %6094 = vmatpush1.bf16.msra.mxu0 %v5983
  %6095 = vmatprep.subr.bf16.mxu0 %v5980
  %6096 = vmatpush1.bf16.msra.mxu0 %v5979
  %6097 = vmatprep.subr.bf16.mxu0 %v5976
  %6098 = vmatpush1.bf16.msra.mxu0 %v5975
  %6099 = vmatprep.subr.bf16.mxu0 0
  %6100 = vmatpush2.bf16.msra.mxu0 0
  %6101 = vmatprep.subr.bf16.mxu0 0
  %6102 = vmatpush2.bf16.msra.mxu0 0
  %6103 = vmatprep.subr.bf16.mxu0 0
  %6104 = vmatpush2.bf16.msra.mxu0 0
  %6105 = vmatprep.subr.bf16.mxu0 0
  %6106 = vmatpush2.bf16.msra.mxu0 0
  %6107 = vmatprep.subr.bf16.mxu0 %v6020
  %6108 = vmatpush2.bf16.msra.mxu0 %v6019
  %6109 = vmatprep.subr.bf16.mxu0 %v6016
  %6110 = vmatpush2.bf16.msra.mxu0 %v6015
  %6111 = vmatprep.subr.bf16.mxu0 %v6012
  %6112 = vmatpush2.bf16.msra.mxu0 %v6011
  %6113 = vmatprep.subr.bf16.mxu0 %v6008
  %6114 = vmatpush2.bf16.msra.mxu0 %v6007
  %6115 = vmatprep.mubr.bf16.mxu0 %v6072
  %6116 = vmatmul.mubr.bf16.gmra.mxu0 %v5819
  %v6117 = vpop.f32.mrf.mxu0
  %v6118 = vadd.f32 %v5758, %v6117
  %v6119 = vpop.f32.mrf.mxu0
  %v6120 = vadd.f32 %v5758, %v6119
  %v6121 = vpop.f32.mrf.mxu0
  %v6122 = vadd.f32 %v5763, %v6121
  %v6123 = vpop.f32.mrf.mxu0
  %v6124 = vadd.f32 %v5763, %v6123
  %6125 = vmatprep.mubr.bf16.mxu0 %v6075
  %6126 = vmatmul.mubr.bf16.gmra.mxu0 %v5821
  %v6127 = vpop.f32.mrf.mxu0
  %v6128 = vadd.f32 %v5768, %v6127
  %v6129 = vpop.f32.mrf.mxu0
  %v6130 = vadd.f32 %v5768, %v6129
  %v6131 = vpop.f32.mrf.mxu0
  %v6132 = vadd.f32 %v5773, %v6131
  %v6133 = vpop.f32.mrf.mxu0
  %v6134 = vadd.f32 %v5773, %v6133
  %6135 = vmatprep.mubr.bf16.mxu0 %v6078
  %6136 = vmatmul.mubr.bf16.gmra.mxu0 %v5823
  %v6137 = vpop.f32.mrf.mxu0
  %v6138 = vadd.f32 %v5778, %v6137
  %v6139 = vpop.f32.mrf.mxu0
  %v6140 = vadd.f32 %v5778, %v6139
  %v6141 = vpop.f32.mrf.mxu0
  %v6142 = vadd.f32 %v5783, %v6141
  %v6143 = vpop.f32.mrf.mxu0
  %v6144 = vadd.f32 %v5783, %v6143
  %6145 = vmatprep.mubr.bf16.mxu0 %v6081
  %6146 = vmatmul.mubr.bf16.gmra.mxu0 %v5825
  %v6147 = vpop.f32.mrf.mxu0
  %v6148 = vadd.f32 %v5788, %v6147
  %v6149 = vpop.f32.mrf.mxu0
  %v6150 = vadd.f32 %v5788, %v6149
  %v6151 = vpop.f32.mrf.mxu0
  %v6152 = vadd.f32 %v5793, %v6151
  %v6153 = vpop.f32.mrf.mxu0
  %v6154 = vadd.f32 %v5793, %v6153
  %6155 = vdwg.mxu0
  %6156 = vmatprep.subr.bf16.mxu0 %v6006
  %6157 = vmatpush1.bf16.msra.mxu0 %v6005
  %6158 = vmatprep.subr.bf16.mxu0 %v6002
  %6159 = vmatpush1.bf16.msra.mxu0 %v6001
  %6160 = vmatprep.subr.bf16.mxu0 %v5998
  %6161 = vmatpush1.bf16.msra.mxu0 %v5997
  %6162 = vmatprep.subr.bf16.mxu0 %v5994
  %6163 = vmatpush1.bf16.msra.mxu0 %v5993
  %6164 = vmatprep.subr.bf16.mxu0 %v5990
  %6165 = vmatpush1.bf16.msra.mxu0 %v5989
  %6166 = vmatprep.subr.bf16.mxu0 %v5986
  %6167 = vmatpush1.bf16.msra.mxu0 %v5985
  %6168 = vmatprep.subr.bf16.mxu0 %v5982
  %6169 = vmatpush1.bf16.msra.mxu0 %v5981
  %6170 = vmatprep.subr.bf16.mxu0 %v5978
  %6171 = vmatpush1.bf16.msra.mxu0 %v5977
  %6172 = vmatprep.subr.bf16.mxu0 0
  %6173 = vmatpush2.bf16.msra.mxu0 0
  %6174 = vmatprep.subr.bf16.mxu0 0
  %6175 = vmatpush2.bf16.msra.mxu0 0
  %6176 = vmatprep.subr.bf16.mxu0 0
  %6177 = vmatpush2.bf16.msra.mxu0 0
  %6178 = vmatprep.subr.bf16.mxu0 0
  %6179 = vmatpush2.bf16.msra.mxu0 0
  %6180 = vmatprep.subr.bf16.mxu0 %v6022
  %6181 = vmatpush2.bf16.msra.mxu0 %v6021
  %6182 = vmatprep.subr.bf16.mxu0 %v6018
  %6183 = vmatpush2.bf16.msra.mxu0 %v6017
  %6184 = vmatprep.subr.bf16.mxu0 %v6014
  %6185 = vmatpush2.bf16.msra.mxu0 %v6013
  %6186 = vmatprep.subr.bf16.mxu0 %v6010
  %6187 = vmatpush2.bf16.msra.mxu0 %v6009
  %6188 = vmatprep.mubr.bf16.mxu0 %v6072
  %6189 = vmatmul.mubr.bf16.gmra.mxu0 %v5819
  %v6190 = vpop.f32.mrf.mxu0
  %v6191 = vadd.f32 %v5758, %v6190
  %v6192 = vpop.f32.mrf.mxu0
  %v6193 = vadd.f32 %v5758, %v6192
  %v6194 = vpop.f32.mrf.mxu0
  %v6195 = vadd.f32 %v5763, %v6194
  %v6196 = vpop.f32.mrf.mxu0
  %v6197 = vadd.f32 %v5763, %v6196
  %6198 = vmatprep.mubr.bf16.mxu0 %v6075
  %6199 = vmatmul.mubr.bf16.gmra.mxu0 %v5821
  %v6200 = vpop.f32.mrf.mxu0
  %v6201 = vadd.f32 %v5768, %v6200
  %v6202 = vpop.f32.mrf.mxu0
  %v6203 = vadd.f32 %v5768, %v6202
  %v6204 = vpop.f32.mrf.mxu0
  %v6205 = vadd.f32 %v5773, %v6204
  %v6206 = vpop.f32.mrf.mxu0
  %v6207 = vadd.f32 %v5773, %v6206
  %6208 = vmatprep.mubr.bf16.mxu0 %v6078
  %6209 = vmatmul.mubr.bf16.gmra.mxu0 %v5823
  %v6210 = vpop.f32.mrf.mxu0
  %v6211 = vadd.f32 %v5778, %v6210
  %v6212 = vpop.f32.mrf.mxu0
  %v6213 = vadd.f32 %v5778, %v6212
  %v6214 = vpop.f32.mrf.mxu0
  %v6215 = vadd.f32 %v5783, %v6214
  %v6216 = vpop.f32.mrf.mxu0
  %v6217 = vadd.f32 %v5783, %v6216
  %6218 = vmatprep.mubr.bf16.mxu0 %v6081
  %6219 = vmatmul.mubr.bf16.gmra.mxu0 %v5825
  %v6220 = vpop.f32.mrf.mxu0
  %v6221 = vadd.f32 %v5788, %v6220
  %v6222 = vpop.f32.mrf.mxu0
  %v6223 = vadd.f32 %v5788, %v6222
  %v6224 = vpop.f32.mrf.mxu0
  %v6225 = vadd.f32 %v5793, %v6224
  %v6226 = vpop.f32.mrf.mxu0
  %v6227 = vadd.f32 %v5793, %v6226
  %6228 = vdwg.mxu0
  %v6229 = vxor.u32 %v6118, 2147483648
  %v6230 = vxor.u32 %v6120, 2147483648
  %v6231 = vxor.u32 %v6191, 2147483648
  %v6232 = vxor.u32 %v6193, 2147483648
  %v6233 = vxor.u32 %v6122, 2147483648
  %v6234 = vxor.u32 %v6124, 2147483648
  %v6235 = vxor.u32 %v6195, 2147483648
  %v6236 = vxor.u32 %v6197, 2147483648
  %v6237 = vxor.u32 %v6128, 2147483648
  %v6238 = vxor.u32 %v6130, 2147483648
  %v6239 = vxor.u32 %v6201, 2147483648
  %v6240 = vxor.u32 %v6203, 2147483648
  %v6241 = vxor.u32 %v6132, 2147483648
  %v6242 = vxor.u32 %v6134, 2147483648
  %v6243 = vxor.u32 %v6205, 2147483648
  %v6244 = vxor.u32 %v6207, 2147483648
  %v6245 = vmul.f32 %v6229, 1.442695
  %v6246 = vpow.pop %v6245
  %v6247 = vmul.f32 %v6230, 1.442695
  %v6248 = vpow.pop %v6247
  %v6249 = vmul.f32 %v6231, 1.442695
  %v6250 = vpow.pop %v6249
  %v6251 = vmul.f32 %v6232, 1.442695
  %v6252 = vpow.pop %v6251
  %v6253 = vmul.f32 %v6233, 1.442695
  %v6254 = vpow.pop %v6253
  %v6255 = vmul.f32 %v6234, 1.442695
  %v6256 = vpow.pop %v6255
  %v6257 = vmul.f32 %v6235, 1.442695
  %v6258 = vpow.pop %v6257
  %v6259 = vmul.f32 %v6236, 1.442695
  %v6260 = vpow.pop %v6259
  %v6261 = vmul.f32 %v6237, 1.442695
  %v6262 = vpow.pop %v6261
  %v6263 = vmul.f32 %v6238, 1.442695
  %v6264 = vpow.pop %v6263
  %v6265 = vmul.f32 %v6239, 1.442695
  %v6266 = vpow.pop %v6265
  %v6267 = vmul.f32 %v6240, 1.442695
  %v6268 = vpow.pop %v6267
  %v6269 = vmul.f32 %v6241, 1.442695
  %v6270 = vpow.pop %v6269
  %v6271 = vmul.f32 %v6242, 1.442695
  %v6272 = vpow.pop %v6271
  %v6273 = vmul.f32 %v6243, 1.442695
  %v6274 = vpow.pop %v6273
  %v6275 = vmul.f32 %v6244, 1.442695
  %v6276 = vpow.pop %v6275
  %v6277 = vadd.f32 %v6246, 1.0
  %v6278 = vadd.f32 %v6248, 1.0
  %v6279 = vadd.f32 %v6250, 1.0
  %v6280 = vadd.f32 %v6252, 1.0
  %v6281 = vadd.f32 %v6254, 1.0
  %v6282 = vadd.f32 %v6256, 1.0
  %v6283 = vadd.f32 %v6258, 1.0
  %v6284 = vadd.f32 %v6260, 1.0
  %v6285 = vadd.f32 %v6262, 1.0
  %v6286 = vadd.f32 %v6264, 1.0
  %v6287 = vadd.f32 %v6266, 1.0
  %v6288 = vadd.f32 %v6268, 1.0
  %v6289 = vadd.f32 %v6270, 1.0
  %v6290 = vadd.f32 %v6272, 1.0
  %v6291 = vadd.f32 %v6274, 1.0
  %v6292 = vadd.f32 %v6276, 1.0
  %v6293 = vrcp.pop %v6277
  %v6294 = vmul.f32 1.0, %v6293
  %v6295 = vrcp.pop %v6278
  %v6296 = vmul.f32 1.0, %v6295
  %v6297 = vrcp.pop %v6279
  %v6298 = vmul.f32 1.0, %v6297
  %v6299 = vrcp.pop %v6280
  %v6300 = vmul.f32 1.0, %v6299
  %v6301 = vrcp.pop %v6281
  %v6302 = vmul.f32 1.0, %v6301
  %v6303 = vrcp.pop %v6282
  %v6304 = vmul.f32 1.0, %v6303
  %v6305 = vrcp.pop %v6283
  %v6306 = vmul.f32 1.0, %v6305
  %v6307 = vrcp.pop %v6284
  %v6308 = vmul.f32 1.0, %v6307
  %v6309 = vrcp.pop %v6285
  %v6310 = vmul.f32 1.0, %v6309
  %v6311 = vrcp.pop %v6286
  %v6312 = vmul.f32 1.0, %v6311
  %v6313 = vrcp.pop %v6287
  %v6314 = vmul.f32 1.0, %v6313
  %v6315 = vrcp.pop %v6288
  %v6316 = vmul.f32 1.0, %v6315
  %v6317 = vrcp.pop %v6289
  %v6318 = vmul.f32 1.0, %v6317
  %v6319 = vrcp.pop %v6290
  %v6320 = vmul.f32 1.0, %v6319
  %v6321 = vrcp.pop %v6291
  %v6322 = vmul.f32 1.0, %v6321
  %v6323 = vrcp.pop %v6292
  %v6324 = vmul.f32 1.0, %v6323
  %v6325 = vtanh.pop %v6138
  %v6326 = vtanh.pop %v6140
  %v6327 = vtanh.pop %v6211
  %v6328 = vtanh.pop %v6213
  %v6329 = vtanh.pop %v6142
  %v6330 = vtanh.pop %v6144
  %v6331 = vtanh.pop %v6215
  %v6332 = vtanh.pop %v6217
  %v6333 = vtanh.pop %v6148
  %v6334 = vtanh.pop %v6150
  %v6335 = vtanh.pop %v6221
  %v6336 = vtanh.pop %v6223
  %v6337 = vtanh.pop %v6152
  %v6338 = vtanh.pop %v6154
  %v6339 = vtanh.pop %v6225
  %v6340 = vtanh.pop %v6227
  %v6341 = vmul.f32 %v6294, %v6325
  %v6342 = vmul.f32 %v6296, %v6326
  %v6343 = vmul.f32 %v6298, %v6327
  %v6344 = vmul.f32 %v6300, %v6328
  %v6345 = vmul.f32 %v6302, %v6329
  %v6346 = vmul.f32 %v6304, %v6330
  %v6347 = vmul.f32 %v6306, %v6331
  %v6348 = vmul.f32 %v6308, %v6332
  %v6349 = vmul.f32 %v6310, %v6333
  %v6350 = vmul.f32 %v6312, %v6334
  %v6351 = vmul.f32 %v6314, %v6335
  %v6352 = vmul.f32 %v6316, %v6336
  %v6353 = vmul.f32 %v6318, %v6337
  %v6354 = vmul.f32 %v6320, %v6338
  %v6355 = vmul.f32 %v6322, %v6339
  %v6356 = vmul.f32 %v6324, %v6340
  %s6357 = scalar_lea.vmem %s9, 96
  %v6358 = vld [vmem:[%s6357] sm:$0xf]
  %v6359 = vld [vmem:[%s6357 + $0x4] sm:$0xf]
  %v6360 = vld [vmem:[%s6357 + $0x8] sm:$0xf]
  %v6361 = vld [vmem:[%s6357 + $0xc] sm:$0xf]
  %v6362 = vld [vmem:[%s6357 + $0x10] sm:$0xf]
  %v6363 = vld [vmem:[%s6357 + $0x14] sm:$0xf]
  %v6364 = vld [vmem:[%s6357 + $0x18] sm:$0xf]
  %v6365 = vld [vmem:[%s6357 + $0x1c] sm:$0xf]
  %v6366 = vpack.c.bf16 %v6345, %v6341
  %v6367 = vpack.c.bf16 %v6346, %v6342
  %v6368 = vpack.c.bf16 %v6347, %v6343
  %v6369 = vpack.c.bf16 %v6348, %v6344
  %v6370 = vpack.c.bf16 %v6353, %v6349
  %v6371 = vpack.c.bf16 %v6354, %v6350
  %v6372 = vpack.c.bf16 %v6355, %v6351
  %v6373 = vpack.c.bf16 %v6356, %v6352
  %s6374 = scalar_lea.vmem %s10, 192
  %v6375 = vld [vmem:[%s6374] sm:$0xff]
  %v6376 = vld [vmem:[%s6374 + $0x8] sm:$0xff]
  %v6377 = vld [vmem:[%s6374 + $0x10] sm:$0xff]
  %v6378 = vld [vmem:[%s6374 + $0x18] sm:$0xff]
  %v6379 = vld [vmem:[%s6374 + $0x20] sm:$0xff]
  %v6380 = vld [vmem:[%s6374 + $0x28] sm:$0xff]
  %v6381 = vld [vmem:[%s6374 + $0x30] sm:$0xff]
  %v6382 = vld [vmem:[%s6374 + $0x38] sm:$0xff]
  %6384 = vset.pattern.permute.xlu0 0
  %6385 = vperm.xlu0 %6384, %v6375
  %v6386 = vpop.permute.xlu0 %6385
  %6388 = vset.pattern.permute.xlu0 0
  %6389 = vperm.xlu0 %6388, %v6376
  %v6390 = vpop.permute.xlu0 %6389
  %6392 = vset.pattern.permute.xlu0 0
  %6393 = vperm.xlu0 %6392, %v6377
  %v6394 = vpop.permute.xlu0 %6393
  %6396 = vset.pattern.permute.xlu0 0
  %6397 = vperm.xlu0 %6396, %v6378
  %v6398 = vpop.permute.xlu0 %6397
  %6400 = vset.pattern.permute.xlu0 0
  %6401 = vperm.xlu0 %6400, %v6379
  %v6402 = vpop.permute.xlu0 %6401
  %6405 = vset.pattern.permute.xlu0 0
  %6406 = vperm.xlu0 %6405, %v6380
  %v6407 = vpop.permute.xlu0 %6406
  %6410 = vset.pattern.permute.xlu0 0
  %6411 = vperm.xlu0 %6410, %v6381
  %v6412 = vpop.permute.xlu0 %6411
  %6415 = vset.pattern.permute.xlu0 0
  %6416 = vperm.xlu0 %6415, %v6382
  %v6417 = vpop.permute.xlu0 %6416
  %v6427 = vunpack.c.l.b16 %v6358
  %v6428 = vunpack.c.l.b16 %v6359
  %v6429 = vunpack.c.l.b16 %v6360
  %v6430 = vunpack.c.l.b16 %v6361
  %v6431 = vunpack.c.l.b16 %v6362
  %v6432 = vunpack.c.l.b16 %v6363
  %v6433 = vunpack.c.l.b16 %v6364
  %v6434 = vunpack.c.l.b16 %v6365
  %v6435 = vpack.c.b16 %v6428, %v6427
  %v6436 = vpack.c.b16 %v6430, %v6429
  %v6437 = vpack.c.b16 %v6432, %v6431
  %v6438 = vpack.c.b16 %v6434, %v6433
  %v6440 = vsel %vm1923, %v6435, 0
  %v6443 = vsel %vm1923, %v6436, 0
  %v6446 = vsel %vm1923, %v6437, 0
  %v6449 = vsel %vm1923, %v6438, 0
  %6451 = vmatprep.subr.bf16.mxu0 0
  %6452 = vmatpush1.bf16.msra.mxu0 0
  %6453 = vmatprep.subr.bf16.mxu0 0
  %6454 = vmatpush1.bf16.msra.mxu0 0
  %6455 = vmatprep.subr.bf16.mxu0 0
  %6456 = vmatpush1.bf16.msra.mxu0 0
  %6457 = vmatprep.subr.bf16.mxu0 0
  %6458 = vmatpush1.bf16.msra.mxu0 0
  %6459 = vmatprep.subr.bf16.mxu0 0
  %6460 = vmatpush1.bf16.msra.mxu0 0
  %6461 = vmatprep.subr.bf16.mxu0 0
  %6462 = vmatpush1.bf16.msra.mxu0 0
  %6463 = vmatprep.subr.bf16.mxu0 %v6371
  %6464 = vmatpush1.bf16.msra.mxu0 %v6370
  %6465 = vmatprep.subr.bf16.mxu0 %v6367
  %6466 = vmatpush1.bf16.msra.mxu0 %v6366
  %6467 = vmatprep.subr.bf16.mxu0 0
  %6468 = vmatpush2.bf16.msra.mxu0 0
  %6469 = vmatprep.subr.bf16.mxu0 0
  %6470 = vmatpush2.bf16.msra.mxu0 0
  %6471 = vmatprep.subr.bf16.mxu0 0
  %6472 = vmatpush2.bf16.msra.mxu0 0
  %6473 = vmatprep.subr.bf16.mxu0 0
  %6474 = vmatpush2.bf16.msra.mxu0 0
  %6475 = vmatprep.subr.bf16.mxu0 0
  %6476 = vmatpush2.bf16.msra.mxu0 0
  %6477 = vmatprep.subr.bf16.mxu0 0
  %6478 = vmatpush2.bf16.msra.mxu0 0
  %6479 = vmatprep.subr.bf16.mxu0 0
  %6480 = vmatpush2.bf16.msra.mxu0 0
  %6481 = vmatprep.subr.bf16.mxu0 0
  %6482 = vmatpush2.bf16.msra.mxu0 0
  %6483 = vmatprep.mubr.bf16.mxu0 0
  %6484 = vmatmul.mubr.bf16.gmra.mxu0 %v6440
  %v6485 = vpop.f32.mrf.mxu0
  %v6486 = vpop.f32.mrf.mxu0
  %v6487 = vpop.f32.mrf.mxu0
  %v6488 = vpop.f32.mrf.mxu0
  %6489 = vmatprep.mubr.bf16.mxu0 0
  %6490 = vmatmul.mubr.bf16.gmra.mxu0 %v6443
  %v6491 = vpop.f32.mrf.mxu0
  %v6492 = vpop.f32.mrf.mxu0
  %v6493 = vpop.f32.mrf.mxu0
  %v6494 = vpop.f32.mrf.mxu0
  %6495 = vmatprep.mubr.bf16.mxu0 0
  %6496 = vmatmul.mubr.bf16.gmra.mxu0 %v6446
  %v6497 = vpop.f32.mrf.mxu0
  %v6498 = vadd.f32 %v6402, %v6497
  %v6499 = vpop.f32.mrf.mxu0
  %v6500 = vadd.f32 %v6402, %v6499
  %v6501 = vpop.f32.mrf.mxu0
  %v6502 = vadd.f32 %v6407, %v6501
  %v6503 = vpop.f32.mrf.mxu0
  %v6504 = vadd.f32 %v6407, %v6503
  %6505 = vmatprep.mubr.bf16.mxu0 0
  %6506 = vmatmul.mubr.bf16.gmra.mxu0 %v6449
  %v6507 = vpop.f32.mrf.mxu0
  %v6508 = vadd.f32 %v6412, %v6507
  %v6509 = vpop.f32.mrf.mxu0
  %v6510 = vadd.f32 %v6412, %v6509
  %v6511 = vpop.f32.mrf.mxu0
  %v6512 = vadd.f32 %v6417, %v6511
  %v6513 = vpop.f32.mrf.mxu0
  %v6514 = vadd.f32 %v6417, %v6513
  %6515 = vdwg.mxu0
  %6516 = vmatprep.subr.bf16.mxu0 0
  %6517 = vmatpush1.bf16.msra.mxu0 0
  %6518 = vmatprep.subr.bf16.mxu0 0
  %6519 = vmatpush1.bf16.msra.mxu0 0
  %6520 = vmatprep.subr.bf16.mxu0 0
  %6521 = vmatpush1.bf16.msra.mxu0 0
  %6522 = vmatprep.subr.bf16.mxu0 0
  %6523 = vmatpush1.bf16.msra.mxu0 0
  %6524 = vmatprep.subr.bf16.mxu0 0
  %6525 = vmatpush1.bf16.msra.mxu0 0
  %6526 = vmatprep.subr.bf16.mxu0 0
  %6527 = vmatpush1.bf16.msra.mxu0 0
  %6528 = vmatprep.subr.bf16.mxu0 %v6373
  %6529 = vmatpush1.bf16.msra.mxu0 %v6372
  %6530 = vmatprep.subr.bf16.mxu0 %v6369
  %6531 = vmatpush1.bf16.msra.mxu0 %v6368
  %6532 = vmatprep.subr.bf16.mxu0 0
  %6533 = vmatpush2.bf16.msra.mxu0 0
  %6534 = vmatprep.subr.bf16.mxu0 0
  %6535 = vmatpush2.bf16.msra.mxu0 0
  %6536 = vmatprep.subr.bf16.mxu0 0
  %6537 = vmatpush2.bf16.msra.mxu0 0
  %6538 = vmatprep.subr.bf16.mxu0 0
  %6539 = vmatpush2.bf16.msra.mxu0 0
  %6540 = vmatprep.subr.bf16.mxu0 0
  %6541 = vmatpush2.bf16.msra.mxu0 0
  %6542 = vmatprep.subr.bf16.mxu0 0
  %6543 = vmatpush2.bf16.msra.mxu0 0
  %6544 = vmatprep.subr.bf16.mxu0 0
  %6545 = vmatpush2.bf16.msra.mxu0 0
  %6546 = vmatprep.subr.bf16.mxu0 0
  %6547 = vmatpush2.bf16.msra.mxu0 0
  %6548 = vmatprep.mubr.bf16.mxu0 0
  %6549 = vmatmul.mubr.bf16.gmra.mxu0 %v6440
  %v6550 = vpop.f32.mrf.mxu0
  %v6551 = vpop.f32.mrf.mxu0
  %v6552 = vpop.f32.mrf.mxu0
  %v6553 = vpop.f32.mrf.mxu0
  %6554 = vmatprep.mubr.bf16.mxu0 0
  %6555 = vmatmul.mubr.bf16.gmra.mxu0 %v6443
  %v6556 = vpop.f32.mrf.mxu0
  %v6557 = vpop.f32.mrf.mxu0
  %v6558 = vpop.f32.mrf.mxu0
  %v6559 = vpop.f32.mrf.mxu0
  %6560 = vmatprep.mubr.bf16.mxu0 0
  %6561 = vmatmul.mubr.bf16.gmra.mxu0 %v6446
  %v6562 = vpop.f32.mrf.mxu0
  %v6563 = vadd.f32 %v6402, %v6562
  %v6564 = vpop.f32.mrf.mxu0
  %v6565 = vadd.f32 %v6402, %v6564
  %v6566 = vpop.f32.mrf.mxu0
  %v6567 = vadd.f32 %v6407, %v6566
  %v6568 = vpop.f32.mrf.mxu0
  %v6569 = vadd.f32 %v6407, %v6568
  %6570 = vmatprep.mubr.bf16.mxu0 0
  %6571 = vmatmul.mubr.bf16.gmra.mxu0 %v6449
  %v6572 = vpop.f32.mrf.mxu0
  %v6573 = vadd.f32 %v6412, %v6572
  %v6574 = vpop.f32.mrf.mxu0
  %v6575 = vadd.f32 %v6412, %v6574
  %v6576 = vpop.f32.mrf.mxu0
  %v6577 = vadd.f32 %v6417, %v6576
  %v6578 = vpop.f32.mrf.mxu0
  %v6579 = vadd.f32 %v6417, %v6578
  %6580 = vdwg.mxu0
  %v6581 = vld [vmem:[#allocation3] sm:$0xff]
  %v6582 = vld [vmem:[#allocation3 + $0x8] sm:$0xff]
  %v6583 = vld [vmem:[#allocation3 + $0x10] sm:$0xff]
  %v6584 = vld [vmem:[#allocation3 + $0x18] sm:$0xff]
  %v6585 = vld [vmem:[#allocation3 + $0x20] sm:$0xff]
  %v6586 = vld [vmem:[#allocation3 + $0x28] sm:$0xff]
  %v6587 = vld [vmem:[#allocation3 + $0x30] sm:$0xff]
  %v6588 = vld [vmem:[#allocation3 + $0x38] sm:$0xff]
  %v6589 = vld [vmem:[#allocation3 + $0x40] sm:$0xff]
  %v6590 = vld [vmem:[#allocation3 + $0x48] sm:$0xff]
  %v6591 = vld [vmem:[#allocation3 + $0x50] sm:$0xff]
  %v6592 = vld [vmem:[#allocation3 + $0x58] sm:$0xff]
  %v6593 = vld [vmem:[#allocation3 + $0x60] sm:$0xff]
  %v6594 = vld [vmem:[#allocation3 + $0x68] sm:$0xff]
  %v6595 = vld [vmem:[#allocation3 + $0x70] sm:$0xff]
  %v6596 = vld [vmem:[#allocation3 + $0x78] sm:$0xff]
  %v6597 = vadd.f32 %v6581, %v6498
  %v6598 = vadd.f32 %v6582, %v6500
  %v6599 = vadd.f32 %v6583, %v6563
  %v6600 = vadd.f32 %v6584, %v6565
  %v6601 = vadd.f32 %v6585, %v6502
  %v6602 = vadd.f32 %v6586, %v6504
  %v6603 = vadd.f32 %v6587, %v6567
  %v6604 = vadd.f32 %v6588, %v6569
  %v6605 = vadd.f32 %v6589, %v6508
  %v6606 = vadd.f32 %v6590, %v6510
  %v6607 = vadd.f32 %v6591, %v6573
  %v6608 = vadd.f32 %v6592, %v6575
  %v6609 = vadd.f32 %v6593, %v6512
  %v6610 = vadd.f32 %v6594, %v6514
  %v6611 = vadd.f32 %v6595, %v6577
  %v6612 = vadd.f32 %v6596, %v6579
  %6613 = vst [vmem:[#allocation3] sm:$0xff] %v6597
  %6614 = vst [vmem:[#allocation3 + $0x8] sm:$0xff] %v6598
  %6615 = vst [vmem:[#allocation3 + $0x10] sm:$0xff] %v6599
  %6616 = vst [vmem:[#allocation3 + $0x18] sm:$0xff] %v6600
  %6617 = vst [vmem:[#allocation3 + $0x20] sm:$0xff] %v6601
  %6618 = vst [vmem:[#allocation3 + $0x28] sm:$0xff] %v6602
  %6619 = vst [vmem:[#allocation3 + $0x30] sm:$0xff] %v6603
  %6620 = vst [vmem:[#allocation3 + $0x38] sm:$0xff] %v6604
  %6621 = vst [vmem:[#allocation3 + $0x40] sm:$0xff] %v6605
  %6622 = vst [vmem:[#allocation3 + $0x48] sm:$0xff] %v6606
  %6623 = vst [vmem:[#allocation3 + $0x50] sm:$0xff] %v6607
  %6624 = vst [vmem:[#allocation3 + $0x58] sm:$0xff] %v6608
  %6625 = vst [vmem:[#allocation3 + $0x60] sm:$0xff] %v6609
  %6626 = vst [vmem:[#allocation3 + $0x68] sm:$0xff] %v6610
  %6627 = vst [vmem:[#allocation3 + $0x70] sm:$0xff] %v6611
  %6628 = vst [vmem:[#allocation3 + $0x78] sm:$0xff] %v6612
  %v6629 = vld [vmem:[%s11] sm:$0xf]
  %v6630 = vld [vmem:[%s11 + $0x4] sm:$0xf]
  %v6631 = vld [vmem:[%s11 + $0x8] sm:$0xf]
  %v6632 = vld [vmem:[%s11 + $0xc] sm:$0xf]
  %v6633 = vld [vmem:[#allocation3] sm:$0xff]
  %v6634 = vld [vmem:[#allocation3 + $0x8] sm:$0xff]
  %v6635 = vld [vmem:[#allocation3 + $0x10] sm:$0xff]
  %v6636 = vld [vmem:[#allocation3 + $0x18] sm:$0xff]
  %v6637 = vld [vmem:[#allocation3 + $0x20] sm:$0xff]
  %v6638 = vld [vmem:[#allocation3 + $0x28] sm:$0xff]
  %v6639 = vld [vmem:[#allocation3 + $0x30] sm:$0xff]
  %v6640 = vld [vmem:[#allocation3 + $0x38] sm:$0xff]
  %v6641 = vld [vmem:[#allocation3 + $0x40] sm:$0xff]
  %v6642 = vld [vmem:[#allocation3 + $0x48] sm:$0xff]
  %v6643 = vld [vmem:[#allocation3 + $0x50] sm:$0xff]
  %v6644 = vld [vmem:[#allocation3 + $0x58] sm:$0xff]
  %v6645 = vld [vmem:[#allocation3 + $0x60] sm:$0xff]
  %v6646 = vld [vmem:[#allocation3 + $0x68] sm:$0xff]
  %v6647 = vld [vmem:[#allocation3 + $0x70] sm:$0xff]
  %v6648 = vld [vmem:[#allocation3 + $0x78] sm:$0xff]
  %v6649 = vpack.c.bf16 %v6637, %v6633
  %v6650 = vpack.c.bf16 %v6638, %v6634
  %v6651 = vpack.c.bf16 %v6639, %v6635
  %v6652 = vpack.c.bf16 %v6640, %v6636
  %v6653 = vpack.c.bf16 %v6645, %v6641
  %v6654 = vpack.c.bf16 %v6646, %v6642
  %v6655 = vpack.c.bf16 %v6647, %v6643
  %v6656 = vpack.c.bf16 %v6648, %v6644
  %v6657 = vld [vmem:[%s12] sm:$0xff]
  %v6658 = vld [vmem:[%s12 + $0x8] sm:$0xff]
  %v6659 = vld [vmem:[%s12 + $0x10] sm:$0xff]
  %v6660 = vld [vmem:[%s12 + $0x18] sm:$0xff]
  %6662 = vset.pattern.permute.xlu0 0
  %6663 = vperm.xlu0 %6662, %v6657
  %v6664 = vpop.permute.xlu0 %6663
  %6667 = vset.pattern.permute.xlu0 0
  %6668 = vperm.xlu0 %6667, %v6658
  %v6669 = vpop.permute.xlu0 %6668
  %6672 = vset.pattern.permute.xlu0 0
  %6673 = vperm.xlu0 %6672, %v6659
  %v6674 = vpop.permute.xlu0 %6673
  %6677 = vset.pattern.permute.xlu0 0
  %6678 = vperm.xlu0 %6677, %v6660
  %v6679 = vpop.permute.xlu0 %6678
  %v6685 = vunpack.c.l.b16 %v6629
  %v6686 = vunpack.c.l.b16 %v6630
  %v6687 = vunpack.c.l.b16 %v6631
  %v6688 = vunpack.c.l.b16 %v6632
  %v6689 = vpack.c.b16 %v6686, %v6685
  %v6690 = vpack.c.b16 %v6688, %v6687
  %v6692 = vsel %vm1923, %v6689, 0
  %v6695 = vsel %vm1923, %v6690, 0
  %6697 = vmatprep.subr.bf16.mxu0 0
  %6698 = vmatpush1.bf16.msra.mxu0 0
  %6699 = vmatprep.subr.bf16.mxu0 0
  %6700 = vmatpush1.bf16.msra.mxu0 0
  %6701 = vmatprep.subr.bf16.mxu0 0
  %6702 = vmatpush1.bf16.msra.mxu0 0
  %6703 = vmatprep.subr.bf16.mxu0 0
  %6704 = vmatpush1.bf16.msra.mxu0 0
  %6705 = vmatprep.subr.bf16.mxu0 0
  %6706 = vmatpush1.bf16.msra.mxu0 0
  %6707 = vmatprep.subr.bf16.mxu0 0
  %6708 = vmatpush1.bf16.msra.mxu0 0
  %6709 = vmatprep.subr.bf16.mxu0 %v6654
  %6710 = vmatpush1.bf16.msra.mxu0 %v6653
  %6711 = vmatprep.subr.bf16.mxu0 %v6650
  %6712 = vmatpush1.bf16.msra.mxu0 %v6649
  %6713 = vmatprep.subr.bf16.mxu0 0
  %6714 = vmatpush2.bf16.msra.mxu0 0
  %6715 = vmatprep.subr.bf16.mxu0 0
  %6716 = vmatpush2.bf16.msra.mxu0 0
  %6717 = vmatprep.subr.bf16.mxu0 0
  %6718 = vmatpush2.bf16.msra.mxu0 0
  %6719 = vmatprep.subr.bf16.mxu0 0
  %6720 = vmatpush2.bf16.msra.mxu0 0
  %6721 = vmatprep.subr.bf16.mxu0 0
  %6722 = vmatpush2.bf16.msra.mxu0 0
  %6723 = vmatprep.subr.bf16.mxu0 0
  %6724 = vmatpush2.bf16.msra.mxu0 0
  %6725 = vmatprep.subr.bf16.mxu0 0
  %6726 = vmatpush2.bf16.msra.mxu0 0
  %6727 = vmatprep.subr.bf16.mxu0 0
  %6728 = vmatpush2.bf16.msra.mxu0 0
  %6729 = vmatprep.mubr.bf16.mxu0 0
  %6730 = vmatmul.mubr.bf16.gmra.mxu0 %v6692
  %v6731 = vpop.f32.mrf.mxu0
  %v6732 = vadd.f32 %v6664, %v6731
  %v6733 = vpop.f32.mrf.mxu0
  %v6734 = vadd.f32 %v6664, %v6733
  %v6735 = vpop.f32.mrf.mxu0
  %v6736 = vadd.f32 %v6669, %v6735
  %v6737 = vpop.f32.mrf.mxu0
  %v6738 = vadd.f32 %v6669, %v6737
  %6739 = vmatprep.mubr.bf16.mxu0 0
  %6740 = vmatmul.mubr.bf16.gmra.mxu0 %v6695
  %v6741 = vpop.f32.mrf.mxu0
  %v6742 = vadd.f32 %v6674, %v6741
  %v6743 = vpop.f32.mrf.mxu0
  %v6744 = vadd.f32 %v6674, %v6743
  %v6745 = vpop.f32.mrf.mxu0
  %v6746 = vadd.f32 %v6679, %v6745
  %v6747 = vpop.f32.mrf.mxu0
  %v6748 = vadd.f32 %v6679, %v6747
  %6749 = vdwg.mxu0
  %6750 = vmatprep.subr.bf16.mxu0 0
  %6751 = vmatpush1.bf16.msra.mxu0 0
  %6752 = vmatprep.subr.bf16.mxu0 0
  %6753 = vmatpush1.bf16.msra.mxu0 0
  %6754 = vmatprep.subr.bf16.mxu0 0
  %6755 = vmatpush1.bf16.msra.mxu0 0
  %6756 = vmatprep.subr.bf16.mxu0 0
  %6757 = vmatpush1.bf16.msra.mxu0 0
  %6758 = vmatprep.subr.bf16.mxu0 0
  %6759 = vmatpush1.bf16.msra.mxu0 0
  %6760 = vmatprep.subr.bf16.mxu0 0
  %6761 = vmatpush1.bf16.msra.mxu0 0
  %6762 = vmatprep.subr.bf16.mxu0 %v6656
  %6763 = vmatpush1.bf16.msra.mxu0 %v6655
  %6764 = vmatprep.subr.bf16.mxu0 %v6652
  %6765 = vmatpush1.bf16.msra.mxu0 %v6651
  %6766 = vmatprep.subr.bf16.mxu0 0
  %6767 = vmatpush2.bf16.msra.mxu0 0
  %6768 = vmatprep.subr.bf16.mxu0 0
  %6769 = vmatpush2.bf16.msra.mxu0 0
  %6770 = vmatprep.subr.bf16.mxu0 0
  %6771 = vmatpush2.bf16.msra.mxu0 0
  %6772 = vmatprep.subr.bf16.mxu0 0
  %6773 = vmatpush2.bf16.msra.mxu0 0
  %6774 = vmatprep.subr.bf16.mxu0 0
  %6775 = vmatpush2.bf16.msra.mxu0 0
  %6776 = vmatprep.subr.bf16.mxu0 0
  %6777 = vmatpush2.bf16.msra.mxu0 0
  %6778 = vmatprep.subr.bf16.mxu0 0
  %6779 = vmatpush2.bf16.msra.mxu0 0
  %6780 = vmatprep.subr.bf16.mxu0 0
  %6781 = vmatpush2.bf16.msra.mxu0 0
  %6782 = vmatprep.mubr.bf16.mxu0 0
  %6783 = vmatmul.mubr.bf16.gmra.mxu0 %v6692
  %v6784 = vpop.f32.mrf.mxu0
  %v6785 = vadd.f32 %v6664, %v6784
  %v6786 = vpop.f32.mrf.mxu0
  %v6787 = vadd.f32 %v6664, %v6786
  %v6788 = vpop.f32.mrf.mxu0
  %v6789 = vadd.f32 %v6669, %v6788
  %v6790 = vpop.f32.mrf.mxu0
  %v6791 = vadd.f32 %v6669, %v6790
  %6792 = vmatprep.mubr.bf16.mxu0 0
  %6793 = vmatmul.mubr.bf16.gmra.mxu0 %v6695
  %v6794 = vpop.f32.mrf.mxu0
  %v6795 = vadd.f32 %v6674, %v6794
  %v6796 = vpop.f32.mrf.mxu0
  %v6797 = vadd.f32 %v6674, %v6796
  %v6798 = vpop.f32.mrf.mxu0
  %v6799 = vadd.f32 %v6679, %v6798
  %v6800 = vpop.f32.mrf.mxu0
  %v6801 = vadd.f32 %v6679, %v6800
  %6802 = vdwg.mxu0
  %v6803 = vxor.u32 %v6732, 2147483648
  %v6804 = vxor.u32 %v6734, 2147483648
  %v6805 = vxor.u32 %v6785, 2147483648
  %v6806 = vxor.u32 %v6787, 2147483648
  %v6807 = vxor.u32 %v6736, 2147483648
  %v6808 = vxor.u32 %v6738, 2147483648
  %v6809 = vxor.u32 %v6789, 2147483648
  %v6810 = vxor.u32 %v6791, 2147483648
  %v6811 = vxor.u32 %v6742, 2147483648
  %v6812 = vxor.u32 %v6744, 2147483648
  %v6813 = vxor.u32 %v6795, 2147483648
  %v6814 = vxor.u32 %v6797, 2147483648
  %v6815 = vxor.u32 %v6746, 2147483648
  %v6816 = vxor.u32 %v6748, 2147483648
  %v6817 = vxor.u32 %v6799, 2147483648
  %v6818 = vxor.u32 %v6801, 2147483648
  %v6819 = vmul.f32 %v6803, 1.442695
  %v6820 = vpow.pop %v6819
  %v6821 = vmul.f32 %v6804, 1.442695
  %v6822 = vpow.pop %v6821
  %v6823 = vmul.f32 %v6805, 1.442695
  %v6824 = vpow.pop %v6823
  %v6825 = vmul.f32 %v6806, 1.442695
  %v6826 = vpow.pop %v6825
  %v6827 = vmul.f32 %v6807, 1.442695
  %v6828 = vpow.pop %v6827
  %v6829 = vmul.f32 %v6808, 1.442695
  %v6830 = vpow.pop %v6829
  %v6831 = vmul.f32 %v6809, 1.442695
  %v6832 = vpow.pop %v6831
  %v6833 = vmul.f32 %v6810, 1.442695
  %v6834 = vpow.pop %v6833
  %v6835 = vmul.f32 %v6811, 1.442695
  %v6836 = vpow.pop %v6835
  %v6837 = vmul.f32 %v6812, 1.442695
  %v6838 = vpow.pop %v6837
  %v6839 = vmul.f32 %v6813, 1.442695
  %v6840 = vpow.pop %v6839
  %v6841 = vmul.f32 %v6814, 1.442695
  %v6842 = vpow.pop %v6841
  %v6843 = vmul.f32 %v6815, 1.442695
  %v6844 = vpow.pop %v6843
  %v6845 = vmul.f32 %v6816, 1.442695
  %v6846 = vpow.pop %v6845
  %v6847 = vmul.f32 %v6817, 1.442695
  %v6848 = vpow.pop %v6847
  %v6849 = vmul.f32 %v6818, 1.442695
  %v6850 = vpow.pop %v6849
  %v6851 = vadd.f32 %v6820, 1.0
  %v6852 = vadd.f32 %v6822, 1.0
  %v6853 = vadd.f32 %v6824, 1.0
  %v6854 = vadd.f32 %v6826, 1.0
  %v6855 = vadd.f32 %v6828, 1.0
  %v6856 = vadd.f32 %v6830, 1.0
  %v6857 = vadd.f32 %v6832, 1.0
  %v6858 = vadd.f32 %v6834, 1.0
  %v6859 = vadd.f32 %v6836, 1.0
  %v6860 = vadd.f32 %v6838, 1.0
  %v6861 = vadd.f32 %v6840, 1.0
  %v6862 = vadd.f32 %v6842, 1.0
  %v6863 = vadd.f32 %v6844, 1.0
  %v6864 = vadd.f32 %v6846, 1.0
  %v6865 = vadd.f32 %v6848, 1.0
  %v6866 = vadd.f32 %v6850, 1.0
  %v6867 = vrcp.pop %v6851
  %v6868 = vmul.f32 1.0, %v6867
  %v6869 = vrcp.pop %v6852
  %v6870 = vmul.f32 1.0, %v6869
  %v6871 = vrcp.pop %v6853
  %v6872 = vmul.f32 1.0, %v6871
  %v6873 = vrcp.pop %v6854
  %v6874 = vmul.f32 1.0, %v6873
  %v6875 = vrcp.pop %v6855
  %v6876 = vmul.f32 1.0, %v6875
  %v6877 = vrcp.pop %v6856
  %v6878 = vmul.f32 1.0, %v6877
  %v6879 = vrcp.pop %v6857
  %v6880 = vmul.f32 1.0, %v6879
  %v6881 = vrcp.pop %v6858
  %v6882 = vmul.f32 1.0, %v6881
  %v6883 = vrcp.pop %v6859
  %v6884 = vmul.f32 1.0, %v6883
  %v6885 = vrcp.pop %v6860
  %v6886 = vmul.f32 1.0, %v6885
  %v6887 = vrcp.pop %v6861
  %v6888 = vmul.f32 1.0, %v6887
  %v6889 = vrcp.pop %v6862
  %v6890 = vmul.f32 1.0, %v6889
  %v6891 = vrcp.pop %v6863
  %v6892 = vmul.f32 1.0, %v6891
  %v6893 = vrcp.pop %v6864
  %v6894 = vmul.f32 1.0, %v6893
  %v6895 = vrcp.pop %v6865
  %v6896 = vmul.f32 1.0, %v6895
  %v6897 = vrcp.pop %v6866
  %v6898 = vmul.f32 1.0, %v6897
  %v6899 = vmul.f32 %v6732, %v6868
  %v6900 = vmul.f32 %v6734, %v6870
  %v6901 = vmul.f32 %v6785, %v6872
  %v6902 = vmul.f32 %v6787, %v6874
  %v6903 = vmul.f32 %v6736, %v6876
  %v6904 = vmul.f32 %v6738, %v6878
  %v6905 = vmul.f32 %v6789, %v6880
  %v6906 = vmul.f32 %v6791, %v6882
  %v6907 = vmul.f32 %v6742, %v6884
  %v6908 = vmul.f32 %v6744, %v6886
  %v6909 = vmul.f32 %v6795, %v6888
  %v6910 = vmul.f32 %v6797, %v6890
  %v6911 = vmul.f32 %v6746, %v6892
  %v6912 = vmul.f32 %v6748, %v6894
  %v6913 = vmul.f32 %v6799, %v6896
  %v6914 = vmul.f32 %v6801, %v6898
  %v6915 = vld [vmem:[%s13] sm:$0xff]
  %v6916 = vld [vmem:[%s13 + $0x8] sm:$0xff]
  %v6917 = vld [vmem:[%s13 + $0x10] sm:$0xff]
  %v6918 = vld [vmem:[%s13 + $0x18] sm:$0xff]
  %6920 = vset.pattern.permute.xlu0 0
  %6921 = vperm.xlu0 %6920, %v6915
  %v6922 = vpop.permute.xlu0 %6921
  %6925 = vset.pattern.permute.xlu0 0
  %6926 = vperm.xlu0 %6925, %v6916
  %v6927 = vpop.permute.xlu0 %6926
  %6930 = vset.pattern.permute.xlu0 0
  %6931 = vperm.xlu0 %6930, %v6917
  %v6932 = vpop.permute.xlu0 %6931
  %6935 = vset.pattern.permute.xlu0 0
  %6936 = vperm.xlu0 %6935, %v6918
  %v6937 = vpop.permute.xlu0 %6936
  %v6939 = vmul.f32 %v6922, %v6899
  %v6940 = vmul.f32 %v6922, %v6900
  %v6941 = vmul.f32 %v6922, %v6901
  %v6942 = vmul.f32 %v6922, %v6902
  %v6943 = vmul.f32 %v6927, %v6903
  %v6944 = vmul.f32 %v6927, %v6904
  %v6945 = vmul.f32 %v6927, %v6905
  %v6946 = vmul.f32 %v6927, %v6906
  %v6947 = vmul.f32 %v6932, %v6907
  %v6948 = vmul.f32 %v6932, %v6908
  %v6949 = vmul.f32 %v6932, %v6909
  %v6950 = vmul.f32 %v6932, %v6910
  %v6951 = vmul.f32 %v6937, %v6911
  %v6952 = vmul.f32 %v6937, %v6912
  %v6953 = vmul.f32 %v6937, %v6913
  %v6954 = vmul.f32 %v6937, %v6914
  %v6955 = vadd.f32 %v6939, %v6943
  %v6956 = vadd.f32 %v6955, %v6947
  %v6957 = vadd.f32 %v6956, %v6951
  %v6958 = vrot.slane %v6957, 4
  %v6959 = vadd.f32 %v6957, %v6958
  %v6960 = vrot.slane %v6959, 2
  %v6961 = vadd.f32 %v6959, %v6960
  %v6962 = vrot.slane %v6961, 1
  %v6963 = vadd.f32 %v6961, %v6962
  %v6964 = vadd.f32 %v6940, %v6944
  %v6965 = vadd.f32 %v6964, %v6948
  %v6966 = vadd.f32 %v6965, %v6952
  %v6967 = vrot.slane %v6966, 4
  %v6968 = vadd.f32 %v6966, %v6967
  %v6969 = vrot.slane %v6968, 2
  %v6970 = vadd.f32 %v6968, %v6969
  %v6971 = vrot.slane %v6970, 1
  %v6972 = vadd.f32 %v6970, %v6971
  %v6973 = vadd.f32 %v6941, %v6945
  %v6974 = vadd.f32 %v6973, %v6949
  %v6975 = vadd.f32 %v6974, %v6953
  %v6976 = vrot.slane %v6975, 4
  %v6977 = vadd.f32 %v6975, %v6976
  %v6978 = vrot.slane %v6977, 2
  %v6979 = vadd.f32 %v6977, %v6978
  %v6980 = vrot.slane %v6979, 1
  %v6981 = vadd.f32 %v6979, %v6980
  %v6982 = vadd.f32 %v6942, %v6946
  %v6983 = vadd.f32 %v6982, %v6950
  %v6984 = vadd.f32 %v6983, %v6954
  %v6985 = vrot.slane %v6984, 4
  %v6986 = vadd.f32 %v6984, %v6985
  %v6987 = vrot.slane %v6986, 2
  %v6988 = vadd.f32 %v6986, %v6987
  %v6989 = vrot.slane %v6988, 1
  %v6990 = vadd.f32 %v6988, %v6989
  %v6991 = vld [vmem:[#allocation4] sm:$0x1]
  %6993 = vset.pattern.permute.xlu0 0
  %6994 = vperm.xlu0 %6993, %v6991
  %v6995 = vpop.permute.xlu0 %6994
  %v6997 = vlaneseq
  %v6998 = vshrl.u32 %v6997, 7
  %v6999 = vsub.s32 0, %v6998
  %v7000 = vrot.slane %v6995, %v6999
  %v7001 = vadd.f32 %v6963, %v7000
  %v7002 = vadd.f32 %v6972, %v7000
  %v7003 = vadd.f32 %v6981, %v7000
  %v7004 = vadd.f32 %v6990, %v7000
  %v7009 = vcombine.low %v7001, %v7002
  %v7010 = vcombine.low %v7003, %v7004
  %v7012 = vunpack.c.l.s4 1966171168
  %v7013 = vunpack.c.0.s8 %v7012
  %v7014 = vlaneseq
  %v7015 = vshrl.u32 %v7014, 7
  %v7016 = vsub.s32 %v7013, %v7015
  %v7017 = vrot.slane %v7009, %v7016
  %v7019 = vunpack.c.l.s4 1966171168
  %v7020 = vunpack.c.0.s8 %v7019
  %v7021 = vlaneseq
  %v7022 = vshrl.u32 %v7021, 7
  %v7023 = vsub.s32 %v7020, %v7022
  %v7024 = vrot.slane %v7010, %v7023
  %v7025 = vcombine.low %v7017, %v7024
  %v7027 = vunpack.c.l.s4 1966171168
  %v7028 = vunpack.c.0.s8 %v7027
  %v7029 = vlaneseq
  %v7030 = vshrl.u32 %v7029, 7
  %v7031 = vsub.s32 %v7028, %v7030
  %v7032 = vrot.slane %v7025, %v7031
  %v7034 = vlaneseq
  %vm7035 = vcmp.ge.s32.totalorder %v7034, 0
  %vm7036 = vcmp.lt.s32.totalorder %v7034, 512
  %vm7037 = vmand %vm7035, %vm7036
  %7038 = vst.msk [vmem:[%s15] sm:$0xf] %vm7037, %v7032
  // Predicated region
  $region62: #{nuwave_forward.1} parent=0 // pred_check
    _
  $region63: #{nuwave_forward.1} parent=0 // pred_check_branch
    %7040 = sbr.rel (0) target = $region65
  $region64: #{nuwave_forward.1} parent=0 // pred_region
    _
  $region65: #{nuwave_forward.1} parent=0 // pred_fallthru
    _
  // Predicated region
  $region66: #{nuwave_forward.1} parent=0 // pred_check
    _
  $region67: #{nuwave_forward.1} parent=0 // pred_check_branch
    %7042 = sbr.rel (0) target = $region69
  $region68: #{nuwave_forward.1} parent=0 // pred_region
    _
  $region69: #{nuwave_forward.1} parent=0 // pred_fallthru
    _

</llo_original>
